<compile_context>
chip_gen: v7x
topology: tpu7x:2x2x1
jax: 0.10.0
libtpu: 0.0.40
codegen_flags: <defaults>
</compile_context>

<pallas_src>
import functools
import math

import jax
import jax.numpy as jnp
from jax import lax
from jax.experimental import pallas as pl
from jax.experimental.pallas import tpu as pltpu

NEG_INF = -1e9  # exp() underflows to exactly 0 in f32; matches -inf mask semantics

ENC_LAYER_KEYS = ("wqkv", "bqkv", "wo", "bo",
                  "w1", "b1", "w2", "b2",
                  "n1g", "n1b", "n2g", "n2b")
DEC_LAYER_KEYS = ("s_wqkv", "s_bqkv", "s_wo", "s_bo",
                  "c_wq", "c_bq", "c_wkv", "c_bkv", "c_wo", "c_bo",
                  "w1", "b1", "w2", "b2",
                  "n1g", "n1b", "n2g", "n2b", "n3g", "n3b")


# --------------------------- in-kernel helpers ------------------------------

def _layer_norm(x, g, b, eps=1e-5):
    """x: [M, E] f32; g, b: [1, E]. Biased variance, eps=1e-5 (torch LayerNorm)."""
    mean = jnp.mean(x, axis=-1, keepdims=True)
    xc = x - mean
    var = jnp.mean(xc * xc, axis=-1, keepdims=True)
    return xc * lax.rsqrt(var + eps) * g + b


def _mha(q, k, v, wo, bo, *, B, Lq, Lk, nhead, mask_mode, mask=None):
    """q: [B*Lq, E] f32; k, v: [B*Lk, E] f32; wo: [E, E] bf16; bo: [1, E] f32.

    Per-(batch, head) attention; heads are concatenated and projected with a
    single [B*Lq, E] x [E, E] matmul (full-depth MXU contraction)."""
    E = q.shape[-1]
    Dh = E // nhead
    scale = 1.0 / math.sqrt(Dh)

    if mask_mode == "causal":
        rows = lax.broadcasted_iota(jnp.int32, (Lq, Lk), 0)
        cols = lax.broadcasted_iota(jnp.int32, (Lq, Lk), 1)
        add_mask = jnp.where(cols > rows, NEG_INF, 0.0).astype(jnp.float32)
    elif mask_mode == "dense":
        add_mask = mask
    else:
        add_mask = None

    ctx_rows = []
    for b in range(B):
        qb = q[b * Lq:(b + 1) * Lq].astype(jnp.bfloat16)
        kb = k[b * Lk:(b + 1) * Lk].astype(jnp.bfloat16)
        vb = v[b * Lk:(b + 1) * Lk].astype(jnp.bfloat16)
        heads = []
        for h in range(nhead):
            sl = slice(h * Dh, (h + 1) * Dh)
            # QK^T via dot_general — no explicit transpose / XLU relayout.
            s = lax.dot_general(qb[:, sl], kb[:, sl],
                                (((1,), (1,)), ((), ())),
                                preferred_element_type=jnp.float32) * scale
            if add_mask is not None:
                s = s + add_mask
            m = jnp.max(s, axis=-1, keepdims=True)
            p = jnp.exp(s - m)
            denom = jnp.sum(p, axis=-1, keepdims=True)
            attn = p * pl.reciprocal(denom, approx=True)
            heads.append(jnp.dot(attn.astype(jnp.bfloat16), vb[:, sl],
                                 preferred_element_type=jnp.float32))
        ctx_rows.append(jnp.concatenate(heads, axis=-1))
    ctx = jnp.concatenate(ctx_rows, axis=0).astype(jnp.bfloat16)   # [B*Lq, E]
    # Single K=E output projection (vs. nhead K=Dh accumulations).
    return jnp.dot(ctx, wo, preferred_element_type=jnp.float32) + bo


# ------------------------------ stack kernels -------------------------------

def _encoder_stack_kernel(*refs, nhead, B, L, has_mask):
    i = 0
    x_ref = refs[i]; i += 1
    mask_ref = None
    if has_mask:
        mask_ref = refs[i]; i += 1
    (wqkv, bqkv, wo, bo, w1, b1, w2, b2,
     n1g, n1b, n2g, n2b) = refs[i:i + 12]; i += 12
    fng, fnb = refs[i:i + 2]; i += 2
    o_ref = refs[i]; i += 1
    h_scr = refs[i]

    l = pl.program_id(0)

    @pl.when(l == 0)
    def _():
        h_scr[...] = x_ref[...].astype(jnp.float32)

    x = h_scr[...]
    E = x.shape[-1]

    # --- self attention (fused QKV) + residual + LN1 ---
    qkv = jnp.dot(x.astype(jnp.bfloat16), wqkv[0],
                  preferred_element_type=jnp.float32) + bqkv[0]
    a = _mha(qkv[:, :E], qkv[:, E:2 * E], qkv[:, 2 * E:], wo[0], bo[0],
             B=B, Lq=L, Lk=L, nhead=nhead,
             mask_mode="dense" if has_mask else "none",
             mask=mask_ref[...] if has_mask else None)
    h = _layer_norm(x + a, n1g[0], n1b[0])

    # --- feed-forward + residual + LN2 ---
    f = jnp.maximum(jnp.dot(h.astype(jnp.bfloat16), w1[0],
                            preferred_element_type=jnp.float32) + b1[0], 0.0)
    f = jnp.dot(f.astype(jnp.bfloat16), w2[0],
                preferred_element_type=jnp.float32) + b2[0]
    y = _layer_norm(h + f, n2g[0], n2b[0])

    h_scr[...] = y

    @pl.when(l == pl.num_programs(0) - 1)
    def _():
        o_ref[...] = _layer_norm(y, fng[...], fnb[...]).astype(o_ref.dtype)


def _decoder_stack_kernel(*refs, nhead, B, Lt, Ls, tgt_mask_mode, has_mem_mask):
    i = 0
    x_ref = refs[i]; i += 1
    mem_ref = refs[i]; i += 1
    tmask_ref = None
    if tgt_mask_mode == "dense":
        tmask_ref = refs[i]; i += 1
    mmask_ref = None
    if has_mem_mask:
        mmask_ref = refs[i]; i += 1
    (s_wqkv, s_bqkv, s_wo, s_bo,
     c_wq, c_bq, c_wkv, c_bkv, c_wo, c_bo,
     w1, b1, w2, b2,
     n1g, n1b, n2g, n2b, n3g, n3b) = refs[i:i + 20]; i += 20
    fng, fnb = refs[i:i + 2]; i += 2
    o_ref = refs[i]; i += 1
    h_scr = refs[i]

    l = pl.program_id(0)

    @pl.when(l == 0)
    def _():
        h_scr[...] = x_ref[...].astype(jnp.float32)

    x = h_scr[...]
    E = x.shape[-1]
    mem = mem_ref[...].astype(jnp.float32)

    # --- masked self attention (fused QKV) + residual + LN1 ---
    qkv = jnp.dot(x.astype(jnp.bfloat16), s_wqkv[0],
                  preferred_element_type=jnp.float32) + s_bqkv[0]
    a = _mha(qkv[:, :E], qkv[:, E:2 * E], qkv[:, 2 * E:], s_wo[0], s_bo[0],
             B=B, Lq=Lt, Lk=Lt, nhead=nhead, mask_mode=tgt_mask_mode,
             mask=tmask_ref[...] if tgt_mask_mode == "dense" else None)
    h = _layer_norm(x + a, n1g[0], n1b[0])

    # --- cross attention (fused KV) + residual + LN2 ---
    q = jnp.dot(h.astype(jnp.bfloat16), c_wq[0],
                preferred_element_type=jnp.float32) + c_bq[0]
    kv = jnp.dot(mem.astype(jnp.bfloat16), c_wkv[0],
                 preferred_element_type=jnp.float32) + c_bkv[0]
    a = _mha(q, kv[:, :E], kv[:, E:], c_wo[0], c_bo[0],
             B=B, Lq=Lt, Lk=Ls, nhead=nhead,
             mask_mode="dense" if has_mem_mask else "none",
             mask=mmask_ref[...] if has_mem_mask else None)
    h = _layer_norm(h + a, n2g[0], n2b[0])

    # --- feed-forward + residual + LN3 ---
    f = jnp.maximum(jnp.dot(h.astype(jnp.bfloat16), w1[0],
                            preferred_element_type=jnp.float32) + b1[0], 0.0)
    f = jnp.dot(f.astype(jnp.bfloat16), w2[0],
                preferred_element_type=jnp.float32) + b2[0]
    y = _layer_norm(h + f, n3g[0], n3b[0])

    h_scr[...] = y

    @pl.when(l == pl.num_programs(0) - 1)
    def _():
        o_ref[...] = _layer_norm(y, fng[...], fnb[...]).astype(o_ref.dtype)


# ------------------------------ stack wrappers -------------------------------

def _const_spec(a):
    n = a.ndim
    return pl.BlockSpec(a.shape, lambda l, n=n: (0,) * n)


def _layer_spec(a):
    n = a.ndim
    return pl.BlockSpec((1,) + a.shape[1:], lambda l, n=n: (l,) + (0,) * (n - 1))


def encoder_stack(x_flat, src_mask, p, *, nhead, B, L):
    """x_flat: [B*L, E] batch-major flattened; src_mask: None or additive [L, L]."""
    M, E = x_flat.shape
    nl = p["wqkv"].shape[0]
    has_mask = src_mask is not None

    inputs = [x_flat]
    in_specs = [_const_spec(x_flat)]
    if has_mask:
        inputs.append(src_mask.astype(jnp.float32))
        in_specs.append(_const_spec(inputs[-1]))
    for k in ENC_LAYER_KEYS:
        inputs.append(p[k]); in_specs.append(_layer_spec(p[k]))
    for k in ("norm_g", "norm_b"):
        inputs.append(p[k]); in_specs.append(_const_spec(p[k]))

    return pl.pallas_call(
        functools.partial(_encoder_stack_kernel, nhead=nhead, B=B, L=L,
                          has_mask=has_mask),
        grid=(nl,),
        in_specs=in_specs,
        out_specs=pl.BlockSpec((M, E), lambda l: (0, 0)),
        out_shape=jax.ShapeDtypeStruct((M, E), x_flat.dtype),
        scratch_shapes=[pltpu.VMEM((M, E), jnp.float32)],
        compiler_params=pltpu.CompilerParams(dimension_semantics=("arbitrary",)),
    )(*inputs)


def decoder_stack(x_flat, mem_flat, tgt_mask, mem_mask, p, *, nhead, B, Lt, Ls,
                  tgt_mask_mode):
    """x_flat: [B*Lt, E]; mem_flat: [B*Ls, E]; masks: None or additive dense."""
    M, E = x_flat.shape
    nl = p["s_wqkv"].shape[0]
    has_mem_mask = mem_mask is not None

    inputs = [x_flat, mem_flat]
    in_specs = [_const_spec(x_flat), _const_spec(mem_flat)]
    if tgt_mask_mode == "dense":
        inputs.append(tgt_mask.astype(jnp.float32))
        in_specs.append(_const_spec(inputs[-1]))
    if has_mem_mask:
        inputs.append(mem_mask.astype(jnp.float32))
        in_specs.append(_const_spec(inputs[-1]))
    for k in DEC_LAYER_KEYS:
        inputs.append(p[k]); in_specs.append(_layer_spec(p[k]))
    for k in ("norm_g", "norm_b"):
        inputs.append(p[k]); in_specs.append(_const_spec(p[k]))

    return pl.pallas_call(
        functools.partial(_decoder_stack_kernel, nhead=nhead, B=B, Lt=Lt, Ls=Ls,
                          tgt_mask_mode=tgt_mask_mode, has_mem_mask=has_mem_mask),
        grid=(nl,),
        in_specs=in_specs,
        out_specs=pl.BlockSpec((M, E), lambda l: (0, 0)),
        out_shape=jax.ShapeDtypeStruct((M, E), x_flat.dtype),
        scratch_shapes=[pltpu.VMEM((M, E), jnp.float32)],
        compiler_params=pltpu.CompilerParams(dimension_semantics=("arbitrary",)),
    )(*inputs)


# ------------------------- Transformer (forward) ---------------------------

def my_transformer_forward(params, src, tgt, nhead,
                           src_mask=None, tgt_mask=None, memory_mask=None,
                           tgt_is_causal=False):
    """src: [src_len, B, E]; tgt: [tgt_len, B, E] (PyTorch layout). Returns [tgt_len, B, E].

    If tgt_is_causal=True, the standard subsequent (causal) mask is generated
    in-kernel and `tgt_mask` is ignored (equivalent to passing
    generate_square_subsequent_mask(tgt_len))."""
    Ls, B, E = src.shape
    Lt = tgt.shape[0]

    # Single layout change at the model boundary: batch-major + row-flattened.
    src_flat = jnp.transpose(src, (1, 0, 2)).reshape(B * Ls, E)
    tgt_flat = jnp.transpose(tgt, (1, 0, 2)).reshape(B * Lt, E)

    memory = encoder_stack(src_flat, src_mask, params["enc"],
                           nhead=nhead, B=B, L=Ls)

    if tgt_is_causal:
        tmode, tmask = "causal", None
    elif tgt_mask is not None:
        tmode, tmask = "dense", tgt_mask
    else:
        tmode, tmask = "none", None

    out_flat = decoder_stack(tgt_flat, memory, tmask, memory_mask, params["dec"],
                             nhead=nhead, B=B, Lt=Lt, Ls=Ls, tgt_mask_mode=tmode)
    return jnp.transpose(out_flat.reshape(B, Lt, E), (1, 0, 2))


def generate_square_subsequent_mask(sz):
    # torch: lower-triangular True -> 0.0, strict upper -> -inf
    return jnp.where(jnp.tril(jnp.ones((sz, sz), jnp.float32)) == 1.0, 0.0, NEG_INF)


# ------------------------------ Parameters ---------------------------------

def make_params(key, d_model, nhead, num_enc, num_dec, dff,
                weight_dtype=jnp.bfloat16):
    """Per-layer weights stacked on a leading layer axis; matmul weights in bf16."""
    keys = iter(jax.random.split(key, 64))
    E, F = d_model, dff

    def xavier(shape, fan_in, fan_out):
        bound = math.sqrt(6.0 / (fan_in + fan_out))
        return jax.random.uniform(next(keys), shape, jnp.float32,
                                  -bound, bound).astype(weight_dtype)

    def zeros(shape): return jnp.zeros(shape, jnp.float32)
    def ones(shape): return jnp.ones(shape, jnp.float32)

    enc = dict(
        wqkv=xavier((num_enc, E, 3 * E), E, 3 * E),
        bqkv=zeros((num_enc, 1, 3 * E)),
        wo=xavier((num_enc, E, E), E, E), bo=zeros((num_enc, 1, E)),
        w1=xavier((num_enc, E, F), E, F), b1=zeros((num_enc, 1, F)),
        w2=xavier((num_enc, F, E), F, E), b2=zeros((num_enc, 1, E)),
        n1g=ones((num_enc, 1, E)), n1b=zeros((num_enc, 1, E)),
        n2g=ones((num_enc, 1, E)), n2b=zeros((num_enc, 1, E)),
        norm_g=ones((1, E)), norm_b=zeros((1, E)),
    )
    dec = dict(
        s_wqkv=xavier((num_dec, E, 3 * E), E, 3 * E),
        s_bqkv=zeros((num_dec, 1, 3 * E)),
        s_wo=xavier((num_dec, E, E), E, E), s_bo=zeros((num_dec, 1, E)),
        c_wq=xavier((num_dec, E, E), E, E), c_bq=zeros((num_dec, 1, E)),
        c_wkv=xavier((num_dec, E, 2 * E), E, 2 * E),
        c_bkv=zeros((num_dec, 1, 2 * E)),
        c_wo=xavier((num_dec, E, E), E, E), c_bo=zeros((num_dec, 1, E)),
        w1=xavier((num_dec, E, F), E, F), b1=zeros((num_dec, 1, F)),
        w2=xavier((num_dec, F, E), F, E), b2=zeros((num_dec, 1, E)),
        n1g=ones((num_dec, 1, E)), n1b=zeros((num_dec, 1, E)),
        n2g=ones((num_dec, 1, E)), n2b=zeros((num_dec, 1, E)),
        n3g=ones((num_dec, 1, E)), n3b=zeros((num_dec, 1, E)),
        norm_g=ones((1, E)), norm_b=zeros((1, E)),
    )
    return dict(enc=enc, dec=dec)


# --------------------------------- Main -------------------------------------

if __name__ == "__main__":
    d_model, nhead = 32, 4
    num_enc, num_dec, dff = 2, 2, 64
    src_len, tgt_len, batch = 10, 8, 2

    root = jax.random.PRNGKey(0)
    k_par, k_src, k_tgt = jax.random.split(root, 3)

    params = make_params(k_par, d_model, nhead, num_enc, num_dec, dff)
    src = jax.random.normal(k_src, (src_len, batch, d_model), jnp.float32)
    tgt = jax.random.normal(k_tgt, (tgt_len, batch, d_model), jnp.float32)

    # Causal target mask is generated in-kernel (equivalent to passing
    # generate_square_subsequent_mask(tgt_len) as tgt_mask).
    fwd = jax.jit(functools.partial(my_transformer_forward, nhead=nhead,
                                    tgt_is_causal=True))
    out = fwd(params, src, tgt)
    out = jax.block_until_ready(out)

    assert out.shape == (tgt_len, batch, d_model), out.shape
    assert bool(jnp.all(jnp.isfinite(out)))
    print("KERNEL_OK")
</pallas_src>

<mosaic_0001>
module attributes {stable_mosaic.version = 11 : i64} {
  func.func @_encoder_stack_kernel(%arg0: i32, %arg1: memref<20x32xf32, #tpu.memory_space<vmem>>, %arg2: memref<1x32x96xbf16, #tpu.memory_space<vmem>>, %arg3: memref<1x1x96xf32, #tpu.memory_space<vmem>>, %arg4: memref<1x32x32xbf16, #tpu.memory_space<vmem>>, %arg5: memref<1x1x32xf32, #tpu.memory_space<vmem>>, %arg6: memref<1x32x64xbf16, #tpu.memory_space<vmem>>, %arg7: memref<1x1x64xf32, #tpu.memory_space<vmem>>, %arg8: memref<1x64x32xbf16, #tpu.memory_space<vmem>>, %arg9: memref<1x1x32xf32, #tpu.memory_space<vmem>>, %arg10: memref<1x1x32xf32, #tpu.memory_space<vmem>>, %arg11: memref<1x1x32xf32, #tpu.memory_space<vmem>>, %arg12: memref<1x1x32xf32, #tpu.memory_space<vmem>>, %arg13: memref<1x1x32xf32, #tpu.memory_space<vmem>>, %arg14: memref<1x32xf32, #tpu.memory_space<vmem>>, %arg15: memref<1x32xf32, #tpu.memory_space<vmem>>, %arg16: memref<20x32xf32, #tpu.memory_space<vmem>>, %arg17: memref<20x32xf32, #tpu.memory_space<vmem>>) attributes {dimension_semantics = [#tpu.dimension_semantics<arbitrary>], iteration_bounds = array<i64: 2>, scalar_prefetch = 0 : i64, scratch_operands = 1 : i64, tpu.core_type = #tpu.core_type<tc>, window_params = [{pipeline_mode = #tpu.pipeline_mode<synchronous>, transform_indices = @transform_0, window_bounds = array<i64: 20, 32>}, {transform_indices = @transform_1, window_bounds = array<i64: 1, 32, 96>}, {transform_indices = @transform_2, window_bounds = array<i64: 1, 1, 96>}, {transform_indices = @transform_3, window_bounds = array<i64: 1, 32, 32>}, {transform_indices = @transform_4, window_bounds = array<i64: 1, 1, 32>}, {transform_indices = @transform_5, window_bounds = array<i64: 1, 32, 64>}, {transform_indices = @transform_6, window_bounds = array<i64: 1, 1, 64>}, {transform_indices = @transform_7, window_bounds = array<i64: 1, 64, 32>}, {transform_indices = @transform_8, window_bounds = array<i64: 1, 1, 32>}, {transform_indices = @transform_9, window_bounds = array<i64: 1, 1, 32>}, {transform_indices = @transform_10, window_bounds = array<i64: 1, 1, 32>}, {transform_indices = @transform_11, window_bounds = array<i64: 1, 1, 32>}, {transform_indices = @transform_12, window_bounds = array<i64: 1, 1, 32>}, {pipeline_mode = #tpu.pipeline_mode<synchronous>, transform_indices = @transform_13, window_bounds = array<i64: 1, 32>}, {pipeline_mode = #tpu.pipeline_mode<synchronous>, transform_indices = @transform_14, window_bounds = array<i64: 1, 32>}, {pipeline_mode = #tpu.pipeline_mode<synchronous>, transform_indices = @transform_15, window_bounds = array<i64: 20, 32>}]} {
    %c0_i32 = arith.constant 0 : i32
    %0 = arith.cmpi eq, %arg0, %c0_i32 : i32
    %1 = arith.extui %0 : i1 to i32
    %c0_i32_0 = arith.constant 0 : i32
    %2 = arith.cmpi ne, %1, %c0_i32_0 : i32
    scf.if %2 {
      %c0_95 = arith.constant 0 : index
      %c0_96 = arith.constant 0 : index
      %254 = vector.load %arg1[%c0_95, %c0_96] : memref<20x32xf32, #tpu.memory_space<vmem>>, vector<20x32xf32>
      %c0_97 = arith.constant 0 : index
      %c0_98 = arith.constant 0 : index
      %255 = vector.load %arg17[%c0_97, %c0_98] : memref<20x32xf32, #tpu.memory_space<vmem>>, vector<20x32xf32>
      tpu.vector_store %arg17[%c0_97, %c0_98], %254 {strides = array<i32>} : memref<20x32xf32, #tpu.memory_space<vmem>>, vector<20x32xf32>,
    } else {
    }
    %c0 = arith.constant 0 : index
    %c0_1 = arith.constant 0 : index
    %3 = vector.load %arg17[%c0, %c0_1] : memref<20x32xf32, #tpu.memory_space<vmem>>, vector<20x32xf32>
    %4 = arith.truncf %3 : vector<20x32xf32> to vector<20x32xbf16>
    %c0_2 = arith.constant 0 : index
    %c0_3 = arith.constant 0 : index
    %c0_4 = arith.constant 0 : index
    %5 = vector.load %arg2[%c0_2, %c0_3, %c0_4] : memref<1x32x96xbf16, #tpu.memory_space<vmem>>, vector<1x32x96xbf16>
    %6 = vector.shape_cast %5 : vector<1x32x96xbf16> to vector<32x96xbf16>
    %cst = arith.constant dense<0.000000e+00> : vector<20x96xf32>
    %7 = tpu.matmul %4, %6, %cst {dimension_numbers = #tpu.dot_dimension_numbers<[1], [0], [0], [1], [0, 0, 1, 1], [], []>} : vector<20x32xbf16>, vector<32x96xbf16>, vector<20x96xf32> -> vector<20x96xf32>
    %c0_5 = arith.constant 0 : index
    %c0_6 = arith.constant 0 : index
    %c0_7 = arith.constant 0 : index
    %8 = vector.load %arg3[%c0_5, %c0_6, %c0_7] : memref<1x1x96xf32, #tpu.memory_space<vmem>>, vector<1x1x96xf32>
    %9 = vector.shape_cast %8 : vector<1x1x96xf32> to vector<1x96xf32>
    %10 = vector.broadcast %9 : vector<1x96xf32> to vector<20x96xf32>
    %11 = arith.addf %7, %10 : vector<20x96xf32>
    %12 = vector.extract_strided_slice %11 {offsets = [0, 0], sizes = [20, 32], strides = [1, 1]} : vector<20x96xf32> to vector<20x32xf32>
    %13 = vector.extract_strided_slice %11 {offsets = [0, 32], sizes = [20, 32], strides = [1, 1]} : vector<20x96xf32> to vector<20x32xf32>
    %14 = vector.extract_strided_slice %11 {offsets = [0, 64], sizes = [20, 32], strides = [1, 1]} : vector<20x96xf32> to vector<20x32xf32>
    %c0_8 = arith.constant 0 : index
    %c0_9 = arith.constant 0 : index
    %c0_10 = arith.constant 0 : index
    %15 = vector.load %arg4[%c0_8, %c0_9, %c0_10] : memref<1x32x32xbf16, #tpu.memory_space<vmem>>, vector<1x32x32xbf16>
    %16 = vector.shape_cast %15 : vector<1x32x32xbf16> to vector<32x32xbf16>
    %c0_11 = arith.constant 0 : index
    %c0_12 = arith.constant 0 : index
    %c0_13 = arith.constant 0 : index
    %17 = vector.load %arg5[%c0_11, %c0_12, %c0_13] : memref<1x1x32xf32, #tpu.memory_space<vmem>>, vector<1x1x32xf32>
    %18 = vector.shape_cast %17 : vector<1x1x32xf32> to vector<1x32xf32>
    %19 = vector.extract_strided_slice %12 {offsets = [0, 0], sizes = [10, 32], strides = [1, 1]} : vector<20x32xf32> to vector<10x32xf32>
    %20 = arith.truncf %19 : vector<10x32xf32> to vector<10x32xbf16>
    %21 = vector.extract_strided_slice %13 {offsets = [0, 0], sizes = [10, 32], strides = [1, 1]} : vector<20x32xf32> to vector<10x32xf32>
    %22 = arith.truncf %21 : vector<10x32xf32> to vector<10x32xbf16>
    %23 = vector.extract_strided_slice %14 {offsets = [0, 0], sizes = [10, 32], strides = [1, 1]} : vector<20x32xf32> to vector<10x32xf32>
    %24 = arith.truncf %23 : vector<10x32xf32> to vector<10x32xbf16>
    %25 = vector.extract_strided_slice %20 {offsets = [0, 0], sizes = [10, 8], strides = [1, 1]} : vector<10x32xbf16> to vector<10x8xbf16>
    %26 = vector.extract_strided_slice %22 {offsets = [0, 0], sizes = [10, 8], strides = [1, 1]} : vector<10x32xbf16> to vector<10x8xbf16>
    %cst_14 = arith.constant dense<0.000000e+00> : vector<10x10xf32>
    %27 = tpu.matmul %25, %26, %cst_14 {dimension_numbers = #tpu.dot_dimension_numbers<[1], [1], [0], [0], [0, 0, 1, 0], [], []>} : vector<10x8xbf16>, vector<10x8xbf16>, vector<10x10xf32> -> vector<10x10xf32>
    %cst_15 = arith.constant 0.353553385 : f32
    %28 = vector.broadcast %cst_15 : f32 to vector<10x10xf32>
    %29 = arith.mulf %27, %28 : vector<10x10xf32>
    %cst_16 = arith.constant dense<0xFF800000> : vector<10xf32>
    %30 = vector.multi_reduction <maximumf>, %29, %cst_16 [1] : vector<10x10xf32> to vector<10xf32>
    %31 = vector.shape_cast %30 : vector<10xf32> to vector<10x1xf32>
    %32 = vector.broadcast %31 : vector<10x1xf32> to vector<10x10xf32>
    %33 = arith.subf %29, %32 : vector<10x10xf32>
    %34 = math.exp %33 : vector<10x10xf32>
    %cst_17 = arith.constant dense<0.000000e+00> : vector<10xf32>
    %35 = vector.multi_reduction <add>, %34, %cst_17 [1] : vector<10x10xf32> to vector<10xf32>
    %36 = vector.shape_cast %35 : vector<10xf32> to vector<10x1xf32>
    %37 = tpu.reciprocal %36 {approx = true} : vector<10x1xf32> -> vector<10x1xf32>
    %38 = vector.broadcast %37 : vector<10x1xf32> to vector<10x10xf32>
    %39 = arith.mulf %34, %38 : vector<10x10xf32>
    %40 = arith.truncf %39 : vector<10x10xf32> to vector<10x10xbf16>
    %41 = vector.extract_strided_slice %24 {offsets = [0, 0], sizes = [10, 8], strides = [1, 1]} : vector<10x32xbf16> to vector<10x8xbf16>
    %cst_18 = arith.constant dense<0.000000e+00> : vector<10x8xf32>
    %42 = tpu.matmul %40, %41, %cst_18 {dimension_numbers = #tpu.dot_dimension_numbers<[1], [0], [0], [1], [0, 0, 1, 1], [], []>} : vector<10x10xbf16>, vector<10x8xbf16>, vector<10x8xf32> -> vector<10x8xf32>
    %43 = vector.extract_strided_slice %20 {offsets = [0, 8], sizes = [10, 8], strides = [1, 1]} : vector<10x32xbf16> to vector<10x8xbf16>
    %44 = vector.extract_strided_slice %22 {offsets = [0, 8], sizes = [10, 8], strides = [1, 1]} : vector<10x32xbf16> to vector<10x8xbf16>
    %cst_19 = arith.constant dense<0.000000e+00> : vector<10x10xf32>
    %45 = tpu.matmul %43, %44, %cst_19 {dimension_numbers = #tpu.dot_dimension_numbers<[1], [1], [0], [0], [0, 0, 1, 0], [], []>} : vector<10x8xbf16>, vector<10x8xbf16>, vector<10x10xf32> -> vector<10x10xf32>
    %cst_20 = arith.constant 0.353553385 : f32
    %46 = vector.broadcast %cst_20 : f32 to vector<10x10xf32>
    %47 = arith.mulf %45, %46 : vector<10x10xf32>
    %cst_21 = arith.constant dense<0xFF800000> : vector<10xf32>
    %48 = vector.multi_reduction <maximumf>, %47, %cst_21 [1] : vector<10x10xf32> to vector<10xf32>
    %49 = vector.shape_cast %48 : vector<10xf32> to vector<10x1xf32>
    %50 = vector.broadcast %49 : vector<10x1xf32> to vector<10x10xf32>
    %51 = arith.subf %47, %50 : vector<10x10xf32>
    %52 = math.exp %51 : vector<10x10xf32>
    %cst_22 = arith.constant dense<0.000000e+00> : vector<10xf32>
    %53 = vector.multi_reduction <add>, %52, %cst_22 [1] : vector<10x10xf32> to vector<10xf32>
    %54 = vector.shape_cast %53 : vector<10xf32> to vector<10x1xf32>
    %55 = tpu.reciprocal %54 {approx = true} : vector<10x1xf32> -> vector<10x1xf32>
    %56 = vector.broadcast %55 : vector<10x1xf32> to vector<10x10xf32>
    %57 = arith.mulf %52, %56 : vector<10x10xf32>
    %58 = arith.truncf %57 : vector<10x10xf32> to vector<10x10xbf16>
    %59 = vector.extract_strided_slice %24 {offsets = [0, 8], sizes = [10, 8], strides = [1, 1]} : vector<10x32xbf16> to vector<10x8xbf16>
    %cst_23 = arith.constant dense<0.000000e+00> : vector<10x8xf32>
    %60 = tpu.matmul %58, %59, %cst_23 {dimension_numbers = #tpu.dot_dimension_numbers<[1], [0], [0], [1], [0, 0, 1, 1], [], []>} : vector<10x10xbf16>, vector<10x8xbf16>, vector<10x8xf32> -> vector<10x8xf32>
    %61 = vector.extract_strided_slice %20 {offsets = [0, 16], sizes = [10, 8], strides = [1, 1]} : vector<10x32xbf16> to vector<10x8xbf16>
    %62 = vector.extract_strided_slice %22 {offsets = [0, 16], sizes = [10, 8], strides = [1, 1]} : vector<10x32xbf16> to vector<10x8xbf16>
    %cst_24 = arith.constant dense<0.000000e+00> : vector<10x10xf32>
    %63 = tpu.matmul %61, %62, %cst_24 {dimension_numbers = #tpu.dot_dimension_numbers<[1], [1], [0], [0], [0, 0, 1, 0], [], []>} : vector<10x8xbf16>, vector<10x8xbf16>, vector<10x10xf32> -> vector<10x10xf32>
    %cst_25 = arith.constant 0.353553385 : f32
    %64 = vector.broadcast %cst_25 : f32 to vector<10x10xf32>
    %65 = arith.mulf %63, %64 : vector<10x10xf32>
    %cst_26 = arith.constant dense<0xFF800000> : vector<10xf32>
    %66 = vector.multi_reduction <maximumf>, %65, %cst_26 [1] : vector<10x10xf32> to vector<10xf32>
    %67 = vector.shape_cast %66 : vector<10xf32> to vector<10x1xf32>
    %68 = vector.broadcast %67 : vector<10x1xf32> to vector<10x10xf32>
    %69 = arith.subf %65, %68 : vector<10x10xf32>
    %70 = math.exp %69 : vector<10x10xf32>
    %cst_27 = arith.constant dense<0.000000e+00> : vector<10xf32>
    %71 = vector.multi_reduction <add>, %70, %cst_27 [1] : vector<10x10xf32> to vector<10xf32>
    %72 = vector.shape_cast %71 : vector<10xf32> to vector<10x1xf32>
    %73 = tpu.reciprocal %72 {approx = true} : vector<10x1xf32> -> vector<10x1xf32>
    %74 = vector.broadcast %73 : vector<10x1xf32> to vector<10x10xf32>
    %75 = arith.mulf %70, %74 : vector<10x10xf32>
    %76 = arith.truncf %75 : vector<10x10xf32> to vector<10x10xbf16>
    %77 = vector.extract_strided_slice %24 {offsets = [0, 16], sizes = [10, 8], strides = [1, 1]} : vector<10x32xbf16> to vector<10x8xbf16>
    %cst_28 = arith.constant dense<0.000000e+00> : vector<10x8xf32>
    %78 = tpu.matmul %76, %77, %cst_28 {dimension_numbers = #tpu.dot_dimension_numbers<[1], [0], [0], [1], [0, 0, 1, 1], [], []>} : vector<10x10xbf16>, vector<10x8xbf16>, vector<10x8xf32> -> vector<10x8xf32>
    %79 = vector.extract_strided_slice %20 {offsets = [0, 24], sizes = [10, 8], strides = [1, 1]} : vector<10x32xbf16> to vector<10x8xbf16>
    %80 = vector.extract_strided_slice %22 {offsets = [0, 24], sizes = [10, 8], strides = [1, 1]} : vector<10x32xbf16> to vector<10x8xbf16>
    %cst_29 = arith.constant dense<0.000000e+00> : vector<10x10xf32>
    %81 = tpu.matmul %79, %80, %cst_29 {dimension_numbers = #tpu.dot_dimension_numbers<[1], [1], [0], [0], [0, 0, 1, 0], [], []>} : vector<10x8xbf16>, vector<10x8xbf16>, vector<10x10xf32> -> vector<10x10xf32>
    %cst_30 = arith.constant 0.353553385 : f32
    %82 = vector.broadcast %cst_30 : f32 to vector<10x10xf32>
    %83 = arith.mulf %81, %82 : vector<10x10xf32>
    %cst_31 = arith.constant dense<0xFF800000> : vector<10xf32>
    %84 = vector.multi_reduction <maximumf>, %83, %cst_31 [1] : vector<10x10xf32> to vector<10xf32>
    %85 = vector.shape_cast %84 : vector<10xf32> to vector<10x1xf32>
    %86 = vector.broadcast %85 : vector<10x1xf32> to vector<10x10xf32>
    %87 = arith.subf %83, %86 : vector<10x10xf32>
    %88 = math.exp %87 : vector<10x10xf32>
    %cst_32 = arith.constant dense<0.000000e+00> : vector<10xf32>
    %89 = vector.multi_reduction <add>, %88, %cst_32 [1] : vector<10x10xf32> to vector<10xf32>
    %90 = vector.shape_cast %89 : vector<10xf32> to vector<10x1xf32>
    %91 = tpu.reciprocal %90 {approx = true} : vector<10x1xf32> -> vector<10x1xf32>
    %92 = vector.broadcast %91 : vector<10x1xf32> to vector<10x10xf32>
    %93 = arith.mulf %88, %92 : vector<10x10xf32>
    %94 = arith.truncf %93 : vector<10x10xf32> to vector<10x10xbf16>
    %95 = vector.extract_strided_slice %24 {offsets = [0, 24], sizes = [10, 8], strides = [1, 1]} : vector<10x32xbf16> to vector<10x8xbf16>
    %cst_33 = arith.constant dense<0.000000e+00> : vector<10x8xf32>
    %96 = tpu.matmul %94, %95, %cst_33 {dimension_numbers = #tpu.dot_dimension_numbers<[1], [0], [0], [1], [0, 0, 1, 1], [], []>} : vector<10x10xbf16>, vector<10x8xbf16>, vector<10x8xf32> -> vector<10x8xf32>
    %97 = tpu.concatenate %42, %60, %78, %96 in 1 : vector<10x8xf32>, vector<10x8xf32>, vector<10x8xf32>, vector<10x8xf32> -> vector<10x32xf32>
    %98 = vector.extract_strided_slice %12 {offsets = [10, 0], sizes = [10, 32], strides = [1, 1]} : vector<20x32xf32> to vector<10x32xf32>
    %99 = arith.truncf %98 : vector<10x32xf32> to vector<10x32xbf16>
    %100 = vector.extract_strided_slice %13 {offsets = [10, 0], sizes = [10, 32], strides = [1, 1]} : vector<20x32xf32> to vector<10x32xf32>
    %101 = arith.truncf %100 : vector<10x32xf32> to vector<10x32xbf16>
    %102 = vector.extract_strided_slice %14 {offsets = [10, 0], sizes = [10, 32], strides = [1, 1]} : vector<20x32xf32> to vector<10x32xf32>
    %103 = arith.truncf %102 : vector<10x32xf32> to vector<10x32xbf16>
    %104 = vector.extract_strided_slice %99 {offsets = [0, 0], sizes = [10, 8], strides = [1, 1]} : vector<10x32xbf16> to vector<10x8xbf16>
    %105 = vector.extract_strided_slice %101 {offsets = [0, 0], sizes = [10, 8], strides = [1, 1]} : vector<10x32xbf16> to vector<10x8xbf16>
    %cst_34 = arith.constant dense<0.000000e+00> : vector<10x10xf32>
    %106 = tpu.matmul %104, %105, %cst_34 {dimension_numbers = #tpu.dot_dimension_numbers<[1], [1], [0], [0], [0, 0, 1, 0], [], []>} : vector<10x8xbf16>, vector<10x8xbf16>, vector<10x10xf32> -> vector<10x10xf32>
    %cst_35 = arith.constant 0.353553385 : f32
    %107 = vector.broadcast %cst_35 : f32 to vector<10x10xf32>
    %108 = arith.mulf %106, %107 : vector<10x10xf32>
    %cst_36 = arith.constant dense<0xFF800000> : vector<10xf32>
    %109 = vector.multi_reduction <maximumf>, %108, %cst_36 [1] : vector<10x10xf32> to vector<10xf32>
    %110 = vector.shape_cast %109 : vector<10xf32> to vector<10x1xf32>
    %111 = vector.broadcast %110 : vector<10x1xf32> to vector<10x10xf32>
    %112 = arith.subf %108, %111 : vector<10x10xf32>
    %113 = math.exp %112 : vector<10x10xf32>
    %cst_37 = arith.constant dense<0.000000e+00> : vector<10xf32>
    %114 = vector.multi_reduction <add>, %113, %cst_37 [1] : vector<10x10xf32> to vector<10xf32>
    %115 = vector.shape_cast %114 : vector<10xf32> to vector<10x1xf32>
    %116 = tpu.reciprocal %115 {approx = true} : vector<10x1xf32> -> vector<10x1xf32>
    %117 = vector.broadcast %116 : vector<10x1xf32> to vector<10x10xf32>
    %118 = arith.mulf %113, %117 : vector<10x10xf32>
    %119 = arith.truncf %118 : vector<10x10xf32> to vector<10x10xbf16>
    %120 = vector.extract_strided_slice %103 {offsets = [0, 0], sizes = [10, 8], strides = [1, 1]} : vector<10x32xbf16> to vector<10x8xbf16>
    %cst_38 = arith.constant dense<0.000000e+00> : vector<10x8xf32>
    %121 = tpu.matmul %119, %120, %cst_38 {dimension_numbers = #tpu.dot_dimension_numbers<[1], [0], [0], [1], [0, 0, 1, 1], [], []>} : vector<10x10xbf16>, vector<10x8xbf16>, vector<10x8xf32> -> vector<10x8xf32>
    %122 = vector.extract_strided_slice %99 {offsets = [0, 8], sizes = [10, 8], strides = [1, 1]} : vector<10x32xbf16> to vector<10x8xbf16>
    %123 = vector.extract_strided_slice %101 {offsets = [0, 8], sizes = [10, 8], strides = [1, 1]} : vector<10x32xbf16> to vector<10x8xbf16>
    %cst_39 = arith.constant dense<0.000000e+00> : vector<10x10xf32>
    %124 = tpu.matmul %122, %123, %cst_39 {dimension_numbers = #tpu.dot_dimension_numbers<[1], [1], [0], [0], [0, 0, 1, 0], [], []>} : vector<10x8xbf16>, vector<10x8xbf16>, vector<10x10xf32> -> vector<10x10xf32>
    %cst_40 = arith.constant 0.353553385 : f32
    %125 = vector.broadcast %cst_40 : f32 to vector<10x10xf32>
    %126 = arith.mulf %124, %125 : vector<10x10xf32>
    %cst_41 = arith.constant dense<0xFF800000> : vector<10xf32>
    %127 = vector.multi_reduction <maximumf>, %126, %cst_41 [1] : vector<10x10xf32> to vector<10xf32>
    %128 = vector.shape_cast %127 : vector<10xf32> to vector<10x1xf32>
    %129 = vector.broadcast %128 : vector<10x1xf32> to vector<10x10xf32>
    %130 = arith.subf %126, %129 : vector<10x10xf32>
    %131 = math.exp %130 : vector<10x10xf32>
    %cst_42 = arith.constant dense<0.000000e+00> : vector<10xf32>
    %132 = vector.multi_reduction <add>, %131, %cst_42 [1] : vector<10x10xf32> to vector<10xf32>
    %133 = vector.shape_cast %132 : vector<10xf32> to vector<10x1xf32>
    %134 = tpu.reciprocal %133 {approx = true} : vector<10x1xf32> -> vector<10x1xf32>
    %135 = vector.broadcast %134 : vector<10x1xf32> to vector<10x10xf32>
    %136 = arith.mulf %131, %135 : vector<10x10xf32>
    %137 = arith.truncf %136 : vector<10x10xf32> to vector<10x10xbf16>
    %138 = vector.extract_strided_slice %103 {offsets = [0, 8], sizes = [10, 8], strides = [1, 1]} : vector<10x32xbf16> to vector<10x8xbf16>
    %cst_43 = arith.constant dense<0.000000e+00> : vector<10x8xf32>
    %139 = tpu.matmul %137, %138, %cst_43 {dimension_numbers = #tpu.dot_dimension_numbers<[1], [0], [0], [1], [0, 0, 1, 1], [], []>} : vector<10x10xbf16>, vector<10x8xbf16>, vector<10x8xf32> -> vector<10x8xf32>
    %140 = vector.extract_strided_slice %99 {offsets = [0, 16], sizes = [10, 8], strides = [1, 1]} : vector<10x32xbf16> to vector<10x8xbf16>
    %141 = vector.extract_strided_slice %101 {offsets = [0, 16], sizes = [10, 8], strides = [1, 1]} : vector<10x32xbf16> to vector<10x8xbf16>
    %cst_44 = arith.constant dense<0.000000e+00> : vector<10x10xf32>
    %142 = tpu.matmul %140, %141, %cst_44 {dimension_numbers = #tpu.dot_dimension_numbers<[1], [1], [0], [0], [0, 0, 1, 0], [], []>} : vector<10x8xbf16>, vector<10x8xbf16>, vector<10x10xf32> -> vector<10x10xf32>
    %cst_45 = arith.constant 0.353553385 : f32
    %143 = vector.broadcast %cst_45 : f32 to vector<10x10xf32>
    %144 = arith.mulf %142, %143 : vector<10x10xf32>
    %cst_46 = arith.constant dense<0xFF800000> : vector<10xf32>
    %145 = vector.multi_reduction <maximumf>, %144, %cst_46 [1] : vector<10x10xf32> to vector<10xf32>
    %146 = vector.shape_cast %145 : vector<10xf32> to vector<10x1xf32>
    %147 = vector.broadcast %146 : vector<10x1xf32> to vector<10x10xf32>
    %148 = arith.subf %144, %147 : vector<10x10xf32>
    %149 = math.exp %148 : vector<10x10xf32>
    %cst_47 = arith.constant dense<0.000000e+00> : vector<10xf32>
    %150 = vector.multi_reduction <add>, %149, %cst_47 [1] : vector<10x10xf32> to vector<10xf32>
    %151 = vector.shape_cast %150 : vector<10xf32> to vector<10x1xf32>
    %152 = tpu.reciprocal %151 {approx = true} : vector<10x1xf32> -> vector<10x1xf32>
    %153 = vector.broadcast %152 : vector<10x1xf32> to vector<10x10xf32>
    %154 = arith.mulf %149, %153 : vector<10x10xf32>
    %155 = arith.truncf %154 : vector<10x10xf32> to vector<10x10xbf16>
    %156 = vector.extract_strided_slice %103 {offsets = [0, 16], sizes = [10, 8], strides = [1, 1]} : vector<10x32xbf16> to vector<10x8xbf16>
    %cst_48 = arith.constant dense<0.000000e+00> : vector<10x8xf32>
    %157 = tpu.matmul %155, %156, %cst_48 {dimension_numbers = #tpu.dot_dimension_numbers<[1], [0], [0], [1], [0, 0, 1, 1], [], []>} : vector<10x10xbf16>, vector<10x8xbf16>, vector<10x8xf32> -> vector<10x8xf32>
    %158 = vector.extract_strided_slice %99 {offsets = [0, 24], sizes = [10, 8], strides = [1, 1]} : vector<10x32xbf16> to vector<10x8xbf16>
    %159 = vector.extract_strided_slice %101 {offsets = [0, 24], sizes = [10, 8], strides = [1, 1]} : vector<10x32xbf16> to vector<10x8xbf16>
    %cst_49 = arith.constant dense<0.000000e+00> : vector<10x10xf32>
    %160 = tpu.matmul %158, %159, %cst_49 {dimension_numbers = #tpu.dot_dimension_numbers<[1], [1], [0], [0], [0, 0, 1, 0], [], []>} : vector<10x8xbf16>, vector<10x8xbf16>, vector<10x10xf32> -> vector<10x10xf32>
    %cst_50 = arith.constant 0.353553385 : f32
    %161 = vector.broadcast %cst_50 : f32 to vector<10x10xf32>
    %162 = arith.mulf %160, %161 : vector<10x10xf32>
    %cst_51 = arith.constant dense<0xFF800000> : vector<10xf32>
    %163 = vector.multi_reduction <maximumf>, %162, %cst_51 [1] : vector<10x10xf32> to vector<10xf32>
    %164 = vector.shape_cast %163 : vector<10xf32> to vector<10x1xf32>
    %165 = vector.broadcast %164 : vector<10x1xf32> to vector<10x10xf32>
    %166 = arith.subf %162, %165 : vector<10x10xf32>
    %167 = math.exp %166 : vector<10x10xf32>
    %cst_52 = arith.constant dense<0.000000e+00> : vector<10xf32>
    %168 = vector.multi_reduction <add>, %167, %cst_52 [1] : vector<10x10xf32> to vector<10xf32>
    %169 = vector.shape_cast %168 : vector<10xf32> to vector<10x1xf32>
    %170 = tpu.reciprocal %169 {approx = true} : vector<10x1xf32> -> vector<10x1xf32>
    %171 = vector.broadcast %170 : vector<10x1xf32> to vector<10x10xf32>
    %172 = arith.mulf %167, %171 : vector<10x10xf32>
    %173 = arith.truncf %172 : vector<10x10xf32> to vector<10x10xbf16>
    %174 = vector.extract_strided_slice %103 {offsets = [0, 24], sizes = [10, 8], strides = [1, 1]} : vector<10x32xbf16> to vector<10x8xbf16>
    %cst_53 = arith.constant dense<0.000000e+00> : vector<10x8xf32>
    %175 = tpu.matmul %173, %174, %cst_53 {dimension_numbers = #tpu.dot_dimension_numbers<[1], [0], [0], [1], [0, 0, 1, 1], [], []>} : vector<10x10xbf16>, vector<10x8xbf16>, vector<10x8xf32> -> vector<10x8xf32>
    %176 = tpu.concatenate %121, %139, %157, %175 in 1 : vector<10x8xf32>, vector<10x8xf32>, vector<10x8xf32>, vector<10x8xf32> -> vector<10x32xf32>
    %177 = tpu.concatenate %97, %176 in 0 : vector<10x32xf32>, vector<10x32xf32> -> vector<20x32xf32>
    %178 = arith.truncf %177 : vector<20x32xf32> to vector<20x32xbf16>
    %cst_54 = arith.constant dense<0.000000e+00> : vector<20x32xf32>
    %179 = tpu.matmul %178, %16, %cst_54 {dimension_numbers = #tpu.dot_dimension_numbers<[1], [0], [0], [1], [0, 0, 1, 1], [], []>} : vector<20x32xbf16>, vector<32x32xbf16>, vector<20x32xf32> -> vector<20x32xf32>
    %180 = vector.broadcast %18 : vector<1x32xf32> to vector<20x32xf32>
    %181 = arith.addf %179, %180 : vector<20x32xf32>
    %182 = arith.addf %3, %181 : vector<20x32xf32>
    %c0_55 = arith.constant 0 : index
    %c0_56 = arith.constant 0 : index
    %c0_57 = arith.constant 0 : index
    %183 = vector.load %arg10[%c0_55, %c0_56, %c0_57] : memref<1x1x32xf32, #tpu.memory_space<vmem>>, vector<1x1x32xf32>
    %184 = vector.shape_cast %183 : vector<1x1x32xf32> to vector<1x32xf32>
    %c0_58 = arith.constant 0 : index
    %c0_59 = arith.constant 0 : index
    %c0_60 = arith.constant 0 : index
    %185 = vector.load %arg11[%c0_58, %c0_59, %c0_60] : memref<1x1x32xf32, #tpu.memory_space<vmem>>, vector<1x1x32xf32>
    %186 = vector.shape_cast %185 : vector<1x1x32xf32> to vector<1x32xf32>
    %cst_61 = arith.constant dense<0.000000e+00> : vector<20xf32>
    %187 = vector.multi_reduction <add>, %182, %cst_61 [1] : vector<20x32xf32> to vector<20xf32>
    %188 = vector.shape_cast %187 : vector<20xf32> to vector<20x1xf32>
    %cst_62 = arith.constant 3.200000e+01 : f32
    %189 = vector.broadcast %cst_62 : f32 to vector<20x1xf32>
    %190 = arith.divf %188, %189 : vector<20x1xf32>
    %191 = vector.broadcast %190 : vector<20x1xf32> to vector<20x32xf32>
    %192 = arith.subf %182, %191 : vector<20x32xf32>
    %193 = arith.mulf %192, %192 : vector<20x32xf32>
    %cst_63 = arith.constant dense<0.000000e+00> : vector<20xf32>
    %194 = vector.multi_reduction <add>, %193, %cst_63 [1] : vector<20x32xf32> to vector<20xf32>
    %195 = vector.shape_cast %194 : vector<20xf32> to vector<20x1xf32>
    %cst_64 = arith.constant 3.200000e+01 : f32
    %196 = vector.broadcast %cst_64 : f32 to vector<20x1xf32>
    %197 = arith.divf %195, %196 : vector<20x1xf32>
    %cst_65 = arith.constant 9.99999974E-6 : f32
    %198 = vector.broadcast %cst_65 : f32 to vector<20x1xf32>
    %199 = arith.addf %197, %198 : vector<20x1xf32>
    %200 = math.rsqrt %199 : vector<20x1xf32>
    %201 = vector.broadcast %200 : vector<20x1xf32> to vector<20x32xf32>
    %202 = arith.mulf %192, %201 : vector<20x32xf32>
    %203 = vector.broadcast %184 : vector<1x32xf32> to vector<20x32xf32>
    %204 = arith.mulf %202, %203 : vector<20x32xf32>
    %205 = vector.broadcast %186 : vector<1x32xf32> to vector<20x32xf32>
    %206 = arith.addf %204, %205 : vector<20x32xf32>
    %207 = arith.truncf %206 : vector<20x32xf32> to vector<20x32xbf16>
    %c0_66 = arith.constant 0 : index
    %c0_67 = arith.constant 0 : index
    %c0_68 = arith.constant 0 : index
    %208 = vector.load %arg6[%c0_66, %c0_67, %c0_68] : memref<1x32x64xbf16, #tpu.memory_space<vmem>>, vector<1x32x64xbf16>
    %209 = vector.shape_cast %208 : vector<1x32x64xbf16> to vector<32x64xbf16>
    %cst_69 = arith.constant dense<0.000000e+00> : vector<20x64xf32>
    %210 = tpu.matmul %207, %209, %cst_69 {dimension_numbers = #tpu.dot_dimension_numbers<[1], [0], [0], [1], [0, 0, 1, 1], [], []>} : vector<20x32xbf16>, vector<32x64xbf16>, vector<20x64xf32> -> vector<20x64xf32>
    %c0_70 = arith.constant 0 : index
    %c0_71 = arith.constant 0 : index
    %c0_72 = arith.constant 0 : index
    %211 = vector.load %arg7[%c0_70, %c0_71, %c0_72] : memref<1x1x64xf32, #tpu.memory_space<vmem>>, vector<1x1x64xf32>
    %212 = vector.shape_cast %211 : vector<1x1x64xf32> to vector<1x64xf32>
    %213 = vector.broadcast %212 : vector<1x64xf32> to vector<20x64xf32>
    %214 = arith.addf %210, %213 : vector<20x64xf32>
    %cst_73 = arith.constant 0.000000e+00 : f32
    %215 = vector.broadcast %cst_73 : f32 to vector<20x64xf32>
    %216 = arith.maximumf %214, %215 : vector<20x64xf32>
    %217 = arith.truncf %216 : vector<20x64xf32> to vector<20x64xbf16>
    %c0_74 = arith.constant 0 : index
    %c0_75 = arith.constant 0 : index
    %c0_76 = arith.constant 0 : index
    %218 = vector.load %arg8[%c0_74, %c0_75, %c0_76] : memref<1x64x32xbf16, #tpu.memory_space<vmem>>, vector<1x64x32xbf16>
    %219 = vector.shape_cast %218 : vector<1x64x32xbf16> to vector<64x32xbf16>
    %cst_77 = arith.constant dense<0.000000e+00> : vector<20x32xf32>
    %220 = tpu.matmul %217, %219, %cst_77 {dimension_numbers = #tpu.dot_dimension_numbers<[1], [0], [0], [1], [0, 0, 1, 1], [], []>} : vector<20x64xbf16>, vector<64x32xbf16>, vector<20x32xf32> -> vector<20x32xf32>
    %c0_78 = arith.constant 0 : index
    %c0_79 = arith.constant 0 : index
    %c0_80 = arith.constant 0 : index
    %221 = vector.load %arg9[%c0_78, %c0_79, %c0_80] : memref<1x1x32xf32, #tpu.memory_space<vmem>>, vector<1x1x32xf32>
    %222 = vector.shape_cast %221 : vector<1x1x32xf32> to vector<1x32xf32>
    %223 = vector.broadcast %222 : vector<1x32xf32> to vector<20x32xf32>
    %224 = arith.addf %220, %223 : vector<20x32xf32>
    %225 = arith.addf %206, %224 : vector<20x32xf32>
    %c0_81 = arith.constant 0 : index
    %c0_82 = arith.constant 0 : index
    %c0_83 = arith.constant 0 : index
    %226 = vector.load %arg12[%c0_81, %c0_82, %c0_83] : memref<1x1x32xf32, #tpu.memory_space<vmem>>, vector<1x1x32xf32>
    %227 = vector.shape_cast %226 : vector<1x1x32xf32> to vector<1x32xf32>
    %c0_84 = arith.constant 0 : index
    %c0_85 = arith.constant 0 : index
    %c0_86 = arith.constant 0 : index
    %228 = vector.load %arg13[%c0_84, %c0_85, %c0_86] : memref<1x1x32xf32, #tpu.memory_space<vmem>>, vector<1x1x32xf32>
    %229 = vector.shape_cast %228 : vector<1x1x32xf32> to vector<1x32xf32>
    %cst_87 = arith.constant dense<0.000000e+00> : vector<20xf32>
    %230 = vector.multi_reduction <add>, %225, %cst_87 [1] : vector<20x32xf32> to vector<20xf32>
    %231 = vector.shape_cast %230 : vector<20xf32> to vector<20x1xf32>
    %cst_88 = arith.constant 3.200000e+01 : f32
    %232 = vector.broadcast %cst_88 : f32 to vector<20x1xf32>
    %233 = arith.divf %231, %232 : vector<20x1xf32>
    %234 = vector.broadcast %233 : vector<20x1xf32> to vector<20x32xf32>
    %235 = arith.subf %225, %234 : vector<20x32xf32>
    %236 = arith.mulf %235, %235 : vector<20x32xf32>
    %cst_89 = arith.constant dense<0.000000e+00> : vector<20xf32>
    %237 = vector.multi_reduction <add>, %236, %cst_89 [1] : vector<20x32xf32> to vector<20xf32>
    %238 = vector.shape_cast %237 : vector<20xf32> to vector<20x1xf32>
    %cst_90 = arith.constant 3.200000e+01 : f32
    %239 = vector.broadcast %cst_90 : f32 to vector<20x1xf32>
    %240 = arith.divf %238, %239 : vector<20x1xf32>
    %cst_91 = arith.constant 9.99999974E-6 : f32
    %241 = vector.broadcast %cst_91 : f32 to vector<20x1xf32>
    %242 = arith.addf %240, %241 : vector<20x1xf32>
    %243 = math.rsqrt %242 : vector<20x1xf32>
    %244 = vector.broadcast %243 : vector<20x1xf32> to vector<20x32xf32>
    %245 = arith.mulf %235, %244 : vector<20x32xf32>
    %246 = vector.broadcast %227 : vector<1x32xf32> to vector<20x32xf32>
    %247 = arith.mulf %245, %246 : vector<20x32xf32>
    %248 = vector.broadcast %229 : vector<1x32xf32> to vector<20x32xf32>
    %249 = arith.addf %247, %248 : vector<20x32xf32>
    %c0_92 = arith.constant 0 : index
    %c0_93 = arith.constant 0 : index
    %250 = vector.load %arg17[%c0_92, %c0_93] : memref<20x32xf32, #tpu.memory_space<vmem>>, vector<20x32xf32>
    tpu.vector_store %arg17[%c0_92, %c0_93], %249 {strides = array<i32>} : memref<20x32xf32, #tpu.memory_space<vmem>>, vector<20x32xf32>,
    %c1_i32 = arith.constant 1 : i32
    %251 = arith.cmpi eq, %arg0, %c1_i32 : i32
    %252 = arith.extui %251 : i1 to i32
    %c0_i32_94 = arith.constant 0 : i32
    %253 = arith.cmpi ne, %252, %c0_i32_94 : i32
    scf.if %253 {
      %c0_95 = arith.constant 0 : index
      %c0_96 = arith.constant 0 : index
      %254 = vector.load %arg14[%c0_95, %c0_96] : memref<1x32xf32, #tpu.memory_space<vmem>>, vector<1x32xf32>
      %c0_97 = arith.constant 0 : index
      %c0_98 = arith.constant 0 : index
      %255 = vector.load %arg15[%c0_97, %c0_98] : memref<1x32xf32, #tpu.memory_space<vmem>>, vector<1x32xf32>
      %cst_99 = arith.constant dense<0.000000e+00> : vector<20xf32>
      %256 = vector.multi_reduction <add>, %249, %cst_99 [1] : vector<20x32xf32> to vector<20xf32>
      %257 = vector.shape_cast %256 : vector<20xf32> to vector<20x1xf32>
      %cst_100 = arith.constant 3.200000e+01 : f32
      %258 = vector.broadcast %cst_100 : f32 to vector<20x1xf32>
      %259 = arith.divf %257, %258 : vector<20x1xf32>
      %260 = vector.broadcast %259 : vector<20x1xf32> to vector<20x32xf32>
      %261 = arith.subf %249, %260 : vector<20x32xf32>
      %262 = arith.mulf %261, %261 : vector<20x32xf32>
      %cst_101 = arith.constant dense<0.000000e+00> : vector<20xf32>
      %263 = vector.multi_reduction <add>, %262, %cst_101 [1] : vector<20x32xf32> to vector<20xf32>
      %264 = vector.shape_cast %263 : vector<20xf32> to vector<20x1xf32>
      %cst_102 = arith.constant 3.200000e+01 : f32
      %265 = vector.broadcast %cst_102 : f32 to vector<20x1xf32>
      %266 = arith.divf %264, %265 : vector<20x1xf32>
      %cst_103 = arith.constant 9.99999974E-6 : f32
      %267 = vector.broadcast %cst_103 : f32 to vector<20x1xf32>
      %268 = arith.addf %266, %267 : vector<20x1xf32>
      %269 = math.rsqrt %268 : vector<20x1xf32>
      %270 = vector.broadcast %269 : vector<20x1xf32> to vector<20x32xf32>
      %271 = arith.mulf %261, %270 : vector<20x32xf32>
      %272 = vector.broadcast %254 : vector<1x32xf32> to vector<20x32xf32>
      %273 = arith.mulf %271, %272 : vector<20x32xf32>
      %274 = vector.broadcast %255 : vector<1x32xf32> to vector<20x32xf32>
      %275 = arith.addf %273, %274 : vector<20x32xf32>
      %c0_104 = arith.constant 0 : index
      %c0_105 = arith.constant 0 : index
      %276 = vector.load %arg16[%c0_104, %c0_105] : memref<20x32xf32, #tpu.memory_space<vmem>>, vector<20x32xf32>
      tpu.vector_store %arg16[%c0_104, %c0_105], %275 {strides = array<i32>} : memref<20x32xf32, #tpu.memory_space<vmem>>, vector<20x32xf32>,
    } else {
    }
    return
  }
  func.func @transform_0(%arg0: i32) -> (i32, i32) {
    %c0_i32 = arith.constant 0 : i32
    %c0_i32_0 = arith.constant 0 : i32
    %c0_i32_1 = arith.constant 0 : i32
    return %c0_i32, %c0_i32_0 : i32, i32
  }
  func.func @transform_1(%arg0: i32) -> (i32, i32, i32) {
    %c0_i32 = arith.constant 0 : i32
    %c0_i32_0 = arith.constant 0 : i32
    %c0_i32_1 = arith.constant 0 : i32
    return %arg0, %c0_i32, %c0_i32_0 : i32, i32, i32
  }
  func.func @transform_2(%arg0: i32) -> (i32, i32, i32) {
    %c0_i32 = arith.constant 0 : i32
    %c0_i32_0 = arith.constant 0 : i32
    %c0_i32_1 = arith.constant 0 : i32
    return %arg0, %c0_i32, %c0_i32_0 : i32, i32, i32
  }
  func.func @transform_3(%arg0: i32) -> (i32, i32, i32) {
    %c0_i32 = arith.constant 0 : i32
    %c0_i32_0 = arith.constant 0 : i32
    %c0_i32_1 = arith.constant 0 : i32
    return %arg0, %c0_i32, %c0_i32_0 : i32, i32, i32
  }
  func.func @transform_4(%arg0: i32) -> (i32, i32, i32) {
    %c0_i32 = arith.constant 0 : i32
    %c0_i32_0 = arith.constant 0 : i32
    %c0_i32_1 = arith.constant 0 : i32
    return %arg0, %c0_i32, %c0_i32_0 : i32, i32, i32
  }
  func.func @transform_5(%arg0: i32) -> (i32, i32, i32) {
    %c0_i32 = arith.constant 0 : i32
    %c0_i32_0 = arith.constant 0 : i32
    %c0_i32_1 = arith.constant 0 : i32
    return %arg0, %c0_i32, %c0_i32_0 : i32, i32, i32
  }
  func.func @transform_6(%arg0: i32) -> (i32, i32, i32) {
    %c0_i32 = arith.constant 0 : i32
    %c0_i32_0 = arith.constant 0 : i32
    %c0_i32_1 = arith.constant 0 : i32
    return %arg0, %c0_i32, %c0_i32_0 : i32, i32, i32
  }
  func.func @transform_7(%arg0: i32) -> (i32, i32, i32) {
    %c0_i32 = arith.constant 0 : i32
    %c0_i32_0 = arith.constant 0 : i32
    %c0_i32_1 = arith.constant 0 : i32
    return %arg0, %c0_i32, %c0_i32_0 : i32, i32, i32
  }
  func.func @transform_8(%arg0: i32) -> (i32, i32, i32) {
    %c0_i32 = arith.constant 0 : i32
    %c0_i32_0 = arith.constant 0 : i32
    %c0_i32_1 = arith.constant 0 : i32
    return %arg0, %c0_i32, %c0_i32_0 : i32, i32, i32
  }
  func.func @transform_9(%arg0: i32) -> (i32, i32, i32) {
    %c0_i32 = arith.constant 0 : i32
    %c0_i32_0 = arith.constant 0 : i32
    %c0_i32_1 = arith.constant 0 : i32
    return %arg0, %c0_i32, %c0_i32_0 : i32, i32, i32
  }
  func.func @transform_10(%arg0: i32) -> (i32, i32, i32) {
    %c0_i32 = arith.constant 0 : i32
    %c0_i32_0 = arith.constant 0 : i32
    %c0_i32_1 = arith.constant 0 : i32
    return %arg0, %c0_i32, %c0_i32_0 : i32, i32, i32
  }
  func.func @transform_11(%arg0: i32) -> (i32, i32, i32) {
    %c0_i32 = arith.constant 0 : i32
    %c0_i32_0 = arith.constant 0 : i32
    %c0_i32_1 = arith.constant 0 : i32
    return %arg0, %c0_i32, %c0_i32_0 : i32, i32, i32
  }
  func.func @transform_12(%arg0: i32) -> (i32, i32, i32) {
    %c0_i32 = arith.constant 0 : i32
    %c0_i32_0 = arith.constant 0 : i32
    %c0_i32_1 = arith.constant 0 : i32
    return %arg0, %c0_i32, %c0_i32_0 : i32, i32, i32
  }
  func.func @transform_13(%arg0: i32) -> (i32, i32) {
    %c0_i32 = arith.constant 0 : i32
    %c0_i32_0 = arith.constant 0 : i32
    %c0_i32_1 = arith.constant 0 : i32
    return %c0_i32, %c0_i32_0 : i32, i32
  }
  func.func @transform_14(%arg0: i32) -> (i32, i32) {
    %c0_i32 = arith.constant 0 : i32
    %c0_i32_0 = arith.constant 0 : i32
    %c0_i32_1 = arith.constant 0 : i32
    return %c0_i32, %c0_i32_0 : i32, i32
  }
  func.func @transform_15(%arg0: i32) -> (i32, i32) {
    %c0_i32 = arith.constant 0 : i32
    %c0_i32_0 = arith.constant 0 : i32
    %c0_i32_1 = arith.constant 0 : i32
    return %c0_i32, %c0_i32_0 : i32, i32
  }
}

module attributes {stable_mosaic.version = 11 : i64} {
  func.func @_decoder_stack_kernel(%arg0: i32, %arg1: memref<16x32xf32, #tpu.memory_space<vmem>>, %arg2: memref<20x32xf32, #tpu.memory_space<vmem>>, %arg3: memref<1x32x96xbf16, #tpu.memory_space<vmem>>, %arg4: memref<1x1x96xf32, #tpu.memory_space<vmem>>, %arg5: memref<1x32x32xbf16, #tpu.memory_space<vmem>>, %arg6: memref<1x1x32xf32, #tpu.memory_space<vmem>>, %arg7: memref<1x32x32xbf16, #tpu.memory_space<vmem>>, %arg8: memref<1x1x32xf32, #tpu.memory_space<vmem>>, %arg9: memref<1x32x64xbf16, #tpu.memory_space<vmem>>, %arg10: memref<1x1x64xf32, #tpu.memory_space<vmem>>, %arg11: memref<1x32x32xbf16, #tpu.memory_space<vmem>>, %arg12: memref<1x1x32xf32, #tpu.memory_space<vmem>>, %arg13: memref<1x32x64xbf16, #tpu.memory_space<vmem>>, %arg14: memref<1x1x64xf32, #tpu.memory_space<vmem>>, %arg15: memref<1x64x32xbf16, #tpu.memory_space<vmem>>, %arg16: memref<1x1x32xf32, #tpu.memory_space<vmem>>, %arg17: memref<1x1x32xf32, #tpu.memory_space<vmem>>, %arg18: memref<1x1x32xf32, #tpu.memory_space<vmem>>, %arg19: memref<1x1x32xf32, #tpu.memory_space<vmem>>, %arg20: memref<1x1x32xf32, #tpu.memory_space<vmem>>, %arg21: memref<1x1x32xf32, #tpu.memory_space<vmem>>, %arg22: memref<1x1x32xf32, #tpu.memory_space<vmem>>, %arg23: memref<1x32xf32, #tpu.memory_space<vmem>>, %arg24: memref<1x32xf32, #tpu.memory_space<vmem>>, %arg25: memref<16x32xf32, #tpu.memory_space<vmem>>, %arg26: memref<16x32xf32, #tpu.memory_space<vmem>>) attributes {dimension_semantics = [#tpu.dimension_semantics<arbitrary>], iteration_bounds = array<i64: 2>, scalar_prefetch = 0 : i64, scratch_operands = 1 : i64, tpu.core_type = #tpu.core_type<tc>, window_params = [{pipeline_mode = #tpu.pipeline_mode<synchronous>, transform_indices = @transform_0, window_bounds = array<i64: 16, 32>}, {pipeline_mode = #tpu.pipeline_mode<synchronous>, transform_indices = @transform_1, window_bounds = array<i64: 20, 32>}, {transform_indices = @transform_2, window_bounds = array<i64: 1, 32, 96>}, {transform_indices = @transform_3, window_bounds = array<i64: 1, 1, 96>}, {transform_indices = @transform_4, window_bounds = array<i64: 1, 32, 32>}, {transform_indices = @transform_5, window_bounds = array<i64: 1, 1, 32>}, {transform_indices = @transform_6, window_bounds = array<i64: 1, 32, 32>}, {transform_indices = @transform_7, window_bounds = array<i64: 1, 1, 32>}, {transform_indices = @transform_8, window_bounds = array<i64: 1, 32, 64>}, {transform_indices = @transform_9, window_bounds = array<i64: 1, 1, 64>}, {transform_indices = @transform_10, window_bounds = array<i64: 1, 32, 32>}, {transform_indices = @transform_11, window_bounds = array<i64: 1, 1, 32>}, {transform_indices = @transform_12, window_bounds = array<i64: 1, 32, 64>}, {transform_indices = @transform_13, window_bounds = array<i64: 1, 1, 64>}, {transform_indices = @transform_14, window_bounds = array<i64: 1, 64, 32>}, {transform_indices = @transform_15, window_bounds = array<i64: 1, 1, 32>}, {transform_indices = @transform_16, window_bounds = array<i64: 1, 1, 32>}, {transform_indices = @transform_17, window_bounds = array<i64: 1, 1, 32>}, {transform_indices = @transform_18, window_bounds = array<i64: 1, 1, 32>}, {transform_indices = @transform_19, window_bounds = array<i64: 1, 1, 32>}, {transform_indices = @transform_20, window_bounds = array<i64: 1, 1, 32>}, {transform_indices = @transform_21, window_bounds = array<i64: 1, 1, 32>}, {pipeline_mode = #tpu.pipeline_mode<synchronous>, transform_indices = @transform_22, window_bounds = array<i64: 1, 32>}, {pipeline_mode = #tpu.pipeline_mode<synchronous>, transform_indices = @transform_23, window_bounds = array<i64: 1, 32>}, {pipeline_mode = #tpu.pipeline_mode<synchronous>, transform_indices = @transform_24, window_bounds = array<i64: 16, 32>}]} {
    %c0_i32 = arith.constant 0 : i32
    %0 = arith.cmpi eq, %arg0, %c0_i32 : i32
    %1 = arith.extui %0 : i1 to i32
    %c0_i32_0 = arith.constant 0 : i32
    %2 = arith.cmpi ne, %1, %c0_i32_0 : i32
    scf.if %2 {
      %c0_171 = arith.constant 0 : index
      %c0_172 = arith.constant 0 : index
      %479 = vector.load %arg1[%c0_171, %c0_172] : memref<16x32xf32, #tpu.memory_space<vmem>>, vector<16x32xf32>
      %c0_173 = arith.constant 0 : index
      %c0_174 = arith.constant 0 : index
      %480 = vector.load %arg26[%c0_173, %c0_174] : memref<16x32xf32, #tpu.memory_space<vmem>>, vector<16x32xf32>
      tpu.vector_store %arg26[%c0_173, %c0_174], %479 {strides = array<i32>} : memref<16x32xf32, #tpu.memory_space<vmem>>, vector<16x32xf32>,
    } else {
    }
    %c0 = arith.constant 0 : index
    %c0_1 = arith.constant 0 : index
    %3 = vector.load %arg26[%c0, %c0_1] : memref<16x32xf32, #tpu.memory_space<vmem>>, vector<16x32xf32>
    %c0_2 = arith.constant 0 : index
    %c0_3 = arith.constant 0 : index
    %4 = vector.load %arg2[%c0_2, %c0_3] : memref<20x32xf32, #tpu.memory_space<vmem>>, vector<20x32xf32>
    %5 = arith.truncf %3 : vector<16x32xf32> to vector<16x32xbf16>
    %c0_4 = arith.constant 0 : index
    %c0_5 = arith.constant 0 : index
    %c0_6 = arith.constant 0 : index
    %6 = vector.load %arg3[%c0_4, %c0_5, %c0_6] : memref<1x32x96xbf16, #tpu.memory_space<vmem>>, vector<1x32x96xbf16>
    %7 = vector.shape_cast %6 : vector<1x32x96xbf16> to vector<32x96xbf16>
    %cst = arith.constant dense<0.000000e+00> : vector<16x96xf32>
    %8 = tpu.matmul %5, %7, %cst {dimension_numbers = #tpu.dot_dimension_numbers<[1], [0], [0], [1], [0, 0, 1, 1], [], []>} : vector<16x32xbf16>, vector<32x96xbf16>, vector<16x96xf32> -> vector<16x96xf32>
    %c0_7 = arith.constant 0 : index
    %c0_8 = arith.constant 0 : index
    %c0_9 = arith.constant 0 : index
    %9 = vector.load %arg4[%c0_7, %c0_8, %c0_9] : memref<1x1x96xf32, #tpu.memory_space<vmem>>, vector<1x1x96xf32>
    %10 = vector.shape_cast %9 : vector<1x1x96xf32> to vector<1x96xf32>
    %11 = vector.broadcast %10 : vector<1x96xf32> to vector<16x96xf32>
    %12 = arith.addf %8, %11 : vector<16x96xf32>
    %13 = vector.extract_strided_slice %12 {offsets = [0, 0], sizes = [16, 32], strides = [1, 1]} : vector<16x96xf32> to vector<16x32xf32>
    %14 = vector.extract_strided_slice %12 {offsets = [0, 32], sizes = [16, 32], strides = [1, 1]} : vector<16x96xf32> to vector<16x32xf32>
    %15 = vector.extract_strided_slice %12 {offsets = [0, 64], sizes = [16, 32], strides = [1, 1]} : vector<16x96xf32> to vector<16x32xf32>
    %c0_10 = arith.constant 0 : index
    %c0_11 = arith.constant 0 : index
    %c0_12 = arith.constant 0 : index
    %16 = vector.load %arg5[%c0_10, %c0_11, %c0_12] : memref<1x32x32xbf16, #tpu.memory_space<vmem>>, vector<1x32x32xbf16>
    %17 = vector.shape_cast %16 : vector<1x32x32xbf16> to vector<32x32xbf16>
    %c0_13 = arith.constant 0 : index
    %c0_14 = arith.constant 0 : index
    %c0_15 = arith.constant 0 : index
    %18 = vector.load %arg6[%c0_13, %c0_14, %c0_15] : memref<1x1x32xf32, #tpu.memory_space<vmem>>, vector<1x1x32xf32>
    %19 = vector.shape_cast %18 : vector<1x1x32xf32> to vector<1x32xf32>
    %20 = tpu.iota {dimensions = array<i32: 0>} : vector<8x8xi32>
    %21 = tpu.iota {dimensions = array<i32: 1>} : vector<8x8xi32>
    %22 = arith.cmpi sgt, %21, %20 : vector<8x8xi32>
    %cst_16 = arith.constant -1.000000e+09 : f32
    %cst_17 = arith.constant 0.000000e+00 : f32
    %23 = vector.broadcast %cst_16 : f32 to vector<8x8xf32>
    %24 = vector.broadcast %cst_17 : f32 to vector<8x8xf32>
    %25 = arith.select %22, %23, %24 : vector<8x8xi1>, vector<8x8xf32>
    %26 = vector.extract_strided_slice %13 {offsets = [0, 0], sizes = [8, 32], strides = [1, 1]} : vector<16x32xf32> to vector<8x32xf32>
    %27 = arith.truncf %26 : vector<8x32xf32> to vector<8x32xbf16>
    %28 = vector.extract_strided_slice %14 {offsets = [0, 0], sizes = [8, 32], strides = [1, 1]} : vector<16x32xf32> to vector<8x32xf32>
    %29 = arith.truncf %28 : vector<8x32xf32> to vector<8x32xbf16>
    %30 = vector.extract_strided_slice %15 {offsets = [0, 0], sizes = [8, 32], strides = [1, 1]} : vector<16x32xf32> to vector<8x32xf32>
    %31 = arith.truncf %30 : vector<8x32xf32> to vector<8x32xbf16>
    %32 = vector.extract_strided_slice %27 {offsets = [0, 0], sizes = [8, 8], strides = [1, 1]} : vector<8x32xbf16> to vector<8x8xbf16>
    %33 = vector.extract_strided_slice %29 {offsets = [0, 0], sizes = [8, 8], strides = [1, 1]} : vector<8x32xbf16> to vector<8x8xbf16>
    %cst_18 = arith.constant dense<0.000000e+00> : vector<8x8xf32>
    %34 = tpu.matmul %32, %33, %cst_18 {dimension_numbers = #tpu.dot_dimension_numbers<[1], [1], [0], [0], [0, 0, 1, 0], [], []>} : vector<8x8xbf16>, vector<8x8xbf16>, vector<8x8xf32> -> vector<8x8xf32>
    %cst_19 = arith.constant 0.353553385 : f32
    %35 = vector.broadcast %cst_19 : f32 to vector<8x8xf32>
    %36 = arith.mulf %34, %35 : vector<8x8xf32>
    %37 = arith.addf %36, %25 : vector<8x8xf32>
    %cst_20 = arith.constant dense<0xFF800000> : vector<8xf32>
    %38 = vector.multi_reduction <maximumf>, %37, %cst_20 [1] : vector<8x8xf32> to vector<8xf32>
    %39 = vector.shape_cast %38 : vector<8xf32> to vector<8x1xf32>
    %40 = vector.broadcast %39 : vector<8x1xf32> to vector<8x8xf32>
    %41 = arith.subf %37, %40 : vector<8x8xf32>
    %42 = math.exp %41 : vector<8x8xf32>
    %cst_21 = arith.constant dense<0.000000e+00> : vector<8xf32>
    %43 = vector.multi_reduction <add>, %42, %cst_21 [1] : vector<8x8xf32> to vector<8xf32>
    %44 = vector.shape_cast %43 : vector<8xf32> to vector<8x1xf32>
    %45 = tpu.reciprocal %44 {approx = true} : vector<8x1xf32> -> vector<8x1xf32>
    %46 = vector.broadcast %45 : vector<8x1xf32> to vector<8x8xf32>
    %47 = arith.mulf %42, %46 : vector<8x8xf32>
    %48 = arith.truncf %47 : vector<8x8xf32> to vector<8x8xbf16>
    %49 = vector.extract_strided_slice %31 {offsets = [0, 0], sizes = [8, 8], strides = [1, 1]} : vector<8x32xbf16> to vector<8x8xbf16>
    %cst_22 = arith.constant dense<0.000000e+00> : vector<8x8xf32>
    %50 = tpu.matmul %48, %49, %cst_22 {dimension_numbers = #tpu.dot_dimension_numbers<[1], [0], [0], [1], [0, 0, 1, 1], [], []>} : vector<8x8xbf16>, vector<8x8xbf16>, vector<8x8xf32> -> vector<8x8xf32>
    %51 = vector.extract_strided_slice %27 {offsets = [0, 8], sizes = [8, 8], strides = [1, 1]} : vector<8x32xbf16> to vector<8x8xbf16>
    %52 = vector.extract_strided_slice %29 {offsets = [0, 8], sizes = [8, 8], strides = [1, 1]} : vector<8x32xbf16> to vector<8x8xbf16>
    %cst_23 = arith.constant dense<0.000000e+00> : vector<8x8xf32>
    %53 = tpu.matmul %51, %52, %cst_23 {dimension_numbers = #tpu.dot_dimension_numbers<[1], [1], [0], [0], [0, 0, 1, 0], [], []>} : vector<8x8xbf16>, vector<8x8xbf16>, vector<8x8xf32> -> vector<8x8xf32>
    %cst_24 = arith.constant 0.353553385 : f32
    %54 = vector.broadcast %cst_24 : f32 to vector<8x8xf32>
    %55 = arith.mulf %53, %54 : vector<8x8xf32>
    %56 = arith.addf %55, %25 : vector<8x8xf32>
    %cst_25 = arith.constant dense<0xFF800000> : vector<8xf32>
    %57 = vector.multi_reduction <maximumf>, %56, %cst_25 [1] : vector<8x8xf32> to vector<8xf32>
    %58 = vector.shape_cast %57 : vector<8xf32> to vector<8x1xf32>
    %59 = vector.broadcast %58 : vector<8x1xf32> to vector<8x8xf32>
    %60 = arith.subf %56, %59 : vector<8x8xf32>
    %61 = math.exp %60 : vector<8x8xf32>
    %cst_26 = arith.constant dense<0.000000e+00> : vector<8xf32>
    %62 = vector.multi_reduction <add>, %61, %cst_26 [1] : vector<8x8xf32> to vector<8xf32>
    %63 = vector.shape_cast %62 : vector<8xf32> to vector<8x1xf32>
    %64 = tpu.reciprocal %63 {approx = true} : vector<8x1xf32> -> vector<8x1xf32>
    %65 = vector.broadcast %64 : vector<8x1xf32> to vector<8x8xf32>
    %66 = arith.mulf %61, %65 : vector<8x8xf32>
    %67 = arith.truncf %66 : vector<8x8xf32> to vector<8x8xbf16>
    %68 = vector.extract_strided_slice %31 {offsets = [0, 8], sizes = [8, 8], strides = [1, 1]} : vector<8x32xbf16> to vector<8x8xbf16>
    %cst_27 = arith.constant dense<0.000000e+00> : vector<8x8xf32>
    %69 = tpu.matmul %67, %68, %cst_27 {dimension_numbers = #tpu.dot_dimension_numbers<[1], [0], [0], [1], [0, 0, 1, 1], [], []>} : vector<8x8xbf16>, vector<8x8xbf16>, vector<8x8xf32> -> vector<8x8xf32>
    %70 = vector.extract_strided_slice %27 {offsets = [0, 16], sizes = [8, 8], strides = [1, 1]} : vector<8x32xbf16> to vector<8x8xbf16>
    %71 = vector.extract_strided_slice %29 {offsets = [0, 16], sizes = [8, 8], strides = [1, 1]} : vector<8x32xbf16> to vector<8x8xbf16>
    %cst_28 = arith.constant dense<0.000000e+00> : vector<8x8xf32>
    %72 = tpu.matmul %70, %71, %cst_28 {dimension_numbers = #tpu.dot_dimension_numbers<[1], [1], [0], [0], [0, 0, 1, 0], [], []>} : vector<8x8xbf16>, vector<8x8xbf16>, vector<8x8xf32> -> vector<8x8xf32>
    %cst_29 = arith.constant 0.353553385 : f32
    %73 = vector.broadcast %cst_29 : f32 to vector<8x8xf32>
    %74 = arith.mulf %72, %73 : vector<8x8xf32>
    %75 = arith.addf %74, %25 : vector<8x8xf32>
    %cst_30 = arith.constant dense<0xFF800000> : vector<8xf32>
    %76 = vector.multi_reduction <maximumf>, %75, %cst_30 [1] : vector<8x8xf32> to vector<8xf32>
    %77 = vector.shape_cast %76 : vector<8xf32> to vector<8x1xf32>
    %78 = vector.broadcast %77 : vector<8x1xf32> to vector<8x8xf32>
    %79 = arith.subf %75, %78 : vector<8x8xf32>
    %80 = math.exp %79 : vector<8x8xf32>
    %cst_31 = arith.constant dense<0.000000e+00> : vector<8xf32>
    %81 = vector.multi_reduction <add>, %80, %cst_31 [1] : vector<8x8xf32> to vector<8xf32>
    %82 = vector.shape_cast %81 : vector<8xf32> to vector<8x1xf32>
    %83 = tpu.reciprocal %82 {approx = true} : vector<8x1xf32> -> vector<8x1xf32>
    %84 = vector.broadcast %83 : vector<8x1xf32> to vector<8x8xf32>
    %85 = arith.mulf %80, %84 : vector<8x8xf32>
    %86 = arith.truncf %85 : vector<8x8xf32> to vector<8x8xbf16>
    %87 = vector.extract_strided_slice %31 {offsets = [0, 16], sizes = [8, 8], strides = [1, 1]} : vector<8x32xbf16> to vector<8x8xbf16>
    %cst_32 = arith.constant dense<0.000000e+00> : vector<8x8xf32>
    %88 = tpu.matmul %86, %87, %cst_32 {dimension_numbers = #tpu.dot_dimension_numbers<[1], [0], [0], [1], [0, 0, 1, 1], [], []>} : vector<8x8xbf16>, vector<8x8xbf16>, vector<8x8xf32> -> vector<8x8xf32>
    %89 = vector.extract_strided_slice %27 {offsets = [0, 24], sizes = [8, 8], strides = [1, 1]} : vector<8x32xbf16> to vector<8x8xbf16>
    %90 = vector.extract_strided_slice %29 {offsets = [0, 24], sizes = [8, 8], strides = [1, 1]} : vector<8x32xbf16> to vector<8x8xbf16>
    %cst_33 = arith.constant dense<0.000000e+00> : vector<8x8xf32>
    %91 = tpu.matmul %89, %90, %cst_33 {dimension_numbers = #tpu.dot_dimension_numbers<[1], [1], [0], [0], [0, 0, 1, 0], [], []>} : vector<8x8xbf16>, vector<8x8xbf16>, vector<8x8xf32> -> vector<8x8xf32>
    %cst_34 = arith.constant 0.353553385 : f32
    %92 = vector.broadcast %cst_34 : f32 to vector<8x8xf32>
    %93 = arith.mulf %91, %92 : vector<8x8xf32>
    %94 = arith.addf %93, %25 : vector<8x8xf32>
    %cst_35 = arith.constant dense<0xFF800000> : vector<8xf32>
    %95 = vector.multi_reduction <maximumf>, %94, %cst_35 [1] : vector<8x8xf32> to vector<8xf32>
    %96 = vector.shape_cast %95 : vector<8xf32> to vector<8x1xf32>
    %97 = vector.broadcast %96 : vector<8x1xf32> to vector<8x8xf32>
    %98 = arith.subf %94, %97 : vector<8x8xf32>
    %99 = math.exp %98 : vector<8x8xf32>
    %cst_36 = arith.constant dense<0.000000e+00> : vector<8xf32>
    %100 = vector.multi_reduction <add>, %99, %cst_36 [1] : vector<8x8xf32> to vector<8xf32>
    %101 = vector.shape_cast %100 : vector<8xf32> to vector<8x1xf32>
    %102 = tpu.reciprocal %101 {approx = true} : vector<8x1xf32> -> vector<8x1xf32>
    %103 = vector.broadcast %102 : vector<8x1xf32> to vector<8x8xf32>
    %104 = arith.mulf %99, %103 : vector<8x8xf32>
    %105 = arith.truncf %104 : vector<8x8xf32> to vector<8x8xbf16>
    %106 = vector.extract_strided_slice %31 {offsets = [0, 24], sizes = [8, 8], strides = [1, 1]} : vector<8x32xbf16> to vector<8x8xbf16>
    %cst_37 = arith.constant dense<0.000000e+00> : vector<8x8xf32>
    %107 = tpu.matmul %105, %106, %cst_37 {dimension_numbers = #tpu.dot_dimension_numbers<[1], [0], [0], [1], [0, 0, 1, 1], [], []>} : vector<8x8xbf16>, vector<8x8xbf16>, vector<8x8xf32> -> vector<8x8xf32>
    %108 = tpu.concatenate %50, %69, %88, %107 in 1 : vector<8x8xf32>, vector<8x8xf32>, vector<8x8xf32>, vector<8x8xf32> -> vector<8x32xf32>
    %109 = vector.extract_strided_slice %13 {offsets = [8, 0], sizes = [8, 32], strides = [1, 1]} : vector<16x32xf32> to vector<8x32xf32>
    %110 = arith.truncf %109 : vector<8x32xf32> to vector<8x32xbf16>
    %111 = vector.extract_strided_slice %14 {offsets = [8, 0], sizes = [8, 32], strides = [1, 1]} : vector<16x32xf32> to vector<8x32xf32>
    %112 = arith.truncf %111 : vector<8x32xf32> to vector<8x32xbf16>
    %113 = vector.extract_strided_slice %15 {offsets = [8, 0], sizes = [8, 32], strides = [1, 1]} : vector<16x32xf32> to vector<8x32xf32>
    %114 = arith.truncf %113 : vector<8x32xf32> to vector<8x32xbf16>
    %115 = vector.extract_strided_slice %110 {offsets = [0, 0], sizes = [8, 8], strides = [1, 1]} : vector<8x32xbf16> to vector<8x8xbf16>
    %116 = vector.extract_strided_slice %112 {offsets = [0, 0], sizes = [8, 8], strides = [1, 1]} : vector<8x32xbf16> to vector<8x8xbf16>
    %cst_38 = arith.constant dense<0.000000e+00> : vector<8x8xf32>
    %117 = tpu.matmul %115, %116, %cst_38 {dimension_numbers = #tpu.dot_dimension_numbers<[1], [1], [0], [0], [0, 0, 1, 0], [], []>} : vector<8x8xbf16>, vector<8x8xbf16>, vector<8x8xf32> -> vector<8x8xf32>
    %cst_39 = arith.constant 0.353553385 : f32
    %118 = vector.broadcast %cst_39 : f32 to vector<8x8xf32>
    %119 = arith.mulf %117, %118 : vector<8x8xf32>
    %120 = arith.addf %119, %25 : vector<8x8xf32>
    %cst_40 = arith.constant dense<0xFF800000> : vector<8xf32>
    %121 = vector.multi_reduction <maximumf>, %120, %cst_40 [1] : vector<8x8xf32> to vector<8xf32>
    %122 = vector.shape_cast %121 : vector<8xf32> to vector<8x1xf32>
    %123 = vector.broadcast %122 : vector<8x1xf32> to vector<8x8xf32>
    %124 = arith.subf %120, %123 : vector<8x8xf32>
    %125 = math.exp %124 : vector<8x8xf32>
    %cst_41 = arith.constant dense<0.000000e+00> : vector<8xf32>
    %126 = vector.multi_reduction <add>, %125, %cst_41 [1] : vector<8x8xf32> to vector<8xf32>
    %127 = vector.shape_cast %126 : vector<8xf32> to vector<8x1xf32>
    %128 = tpu.reciprocal %127 {approx = true} : vector<8x1xf32> -> vector<8x1xf32>
    %129 = vector.broadcast %128 : vector<8x1xf32> to vector<8x8xf32>
    %130 = arith.mulf %125, %129 : vector<8x8xf32>
    %131 = arith.truncf %130 : vector<8x8xf32> to vector<8x8xbf16>
    %132 = vector.extract_strided_slice %114 {offsets = [0, 0], sizes = [8, 8], strides = [1, 1]} : vector<8x32xbf16> to vector<8x8xbf16>
    %cst_42 = arith.constant dense<0.000000e+00> : vector<8x8xf32>
    %133 = tpu.matmul %131, %132, %cst_42 {dimension_numbers = #tpu.dot_dimension_numbers<[1], [0], [0], [1], [0, 0, 1, 1], [], []>} : vector<8x8xbf16>, vector<8x8xbf16>, vector<8x8xf32> -> vector<8x8xf32>
    %134 = vector.extract_strided_slice %110 {offsets = [0, 8], sizes = [8, 8], strides = [1, 1]} : vector<8x32xbf16> to vector<8x8xbf16>
    %135 = vector.extract_strided_slice %112 {offsets = [0, 8], sizes = [8, 8], strides = [1, 1]} : vector<8x32xbf16> to vector<8x8xbf16>
    %cst_43 = arith.constant dense<0.000000e+00> : vector<8x8xf32>
    %136 = tpu.matmul %134, %135, %cst_43 {dimension_numbers = #tpu.dot_dimension_numbers<[1], [1], [0], [0], [0, 0, 1, 0], [], []>} : vector<8x8xbf16>, vector<8x8xbf16>, vector<8x8xf32> -> vector<8x8xf32>
    %cst_44 = arith.constant 0.353553385 : f32
    %137 = vector.broadcast %cst_44 : f32 to vector<8x8xf32>
    %138 = arith.mulf %136, %137 : vector<8x8xf32>
    %139 = arith.addf %138, %25 : vector<8x8xf32>
    %cst_45 = arith.constant dense<0xFF800000> : vector<8xf32>
    %140 = vector.multi_reduction <maximumf>, %139, %cst_45 [1] : vector<8x8xf32> to vector<8xf32>
    %141 = vector.shape_cast %140 : vector<8xf32> to vector<8x1xf32>
    %142 = vector.broadcast %141 : vector<8x1xf32> to vector<8x8xf32>
    %143 = arith.subf %139, %142 : vector<8x8xf32>
    %144 = math.exp %143 : vector<8x8xf32>
    %cst_46 = arith.constant dense<0.000000e+00> : vector<8xf32>
    %145 = vector.multi_reduction <add>, %144, %cst_46 [1] : vector<8x8xf32> to vector<8xf32>
    %146 = vector.shape_cast %145 : vector<8xf32> to vector<8x1xf32>
    %147 = tpu.reciprocal %146 {approx = true} : vector<8x1xf32> -> vector<8x1xf32>
    %148 = vector.broadcast %147 : vector<8x1xf32> to vector<8x8xf32>
    %149 = arith.mulf %144, %148 : vector<8x8xf32>
    %150 = arith.truncf %149 : vector<8x8xf32> to vector<8x8xbf16>
    %151 = vector.extract_strided_slice %114 {offsets = [0, 8], sizes = [8, 8], strides = [1, 1]} : vector<8x32xbf16> to vector<8x8xbf16>
    %cst_47 = arith.constant dense<0.000000e+00> : vector<8x8xf32>
    %152 = tpu.matmul %150, %151, %cst_47 {dimension_numbers = #tpu.dot_dimension_numbers<[1], [0], [0], [1], [0, 0, 1, 1], [], []>} : vector<8x8xbf16>, vector<8x8xbf16>, vector<8x8xf32> -> vector<8x8xf32>
    %153 = vector.extract_strided_slice %110 {offsets = [0, 16], sizes = [8, 8], strides = [1, 1]} : vector<8x32xbf16> to vector<8x8xbf16>
    %154 = vector.extract_strided_slice %112 {offsets = [0, 16], sizes = [8, 8], strides = [1, 1]} : vector<8x32xbf16> to vector<8x8xbf16>
    %cst_48 = arith.constant dense<0.000000e+00> : vector<8x8xf32>
    %155 = tpu.matmul %153, %154, %cst_48 {dimension_numbers = #tpu.dot_dimension_numbers<[1], [1], [0], [0], [0, 0, 1, 0], [], []>} : vector<8x8xbf16>, vector<8x8xbf16>, vector<8x8xf32> -> vector<8x8xf32>
    %cst_49 = arith.constant 0.353553385 : f32
    %156 = vector.broadcast %cst_49 : f32 to vector<8x8xf32>
    %157 = arith.mulf %155, %156 : vector<8x8xf32>
    %158 = arith.addf %157, %25 : vector<8x8xf32>
    %cst_50 = arith.constant dense<0xFF800000> : vector<8xf32>
    %159 = vector.multi_reduction <maximumf>, %158, %cst_50 [1] : vector<8x8xf32> to vector<8xf32>
    %160 = vector.shape_cast %159 : vector<8xf32> to vector<8x1xf32>
    %161 = vector.broadcast %160 : vector<8x1xf32> to vector<8x8xf32>
    %162 = arith.subf %158, %161 : vector<8x8xf32>
    %163 = math.exp %162 : vector<8x8xf32>
    %cst_51 = arith.constant dense<0.000000e+00> : vector<8xf32>
    %164 = vector.multi_reduction <add>, %163, %cst_51 [1] : vector<8x8xf32> to vector<8xf32>
    %165 = vector.shape_cast %164 : vector<8xf32> to vector<8x1xf32>
    %166 = tpu.reciprocal %165 {approx = true} : vector<8x1xf32> -> vector<8x1xf32>
    %167 = vector.broadcast %166 : vector<8x1xf32> to vector<8x8xf32>
    %168 = arith.mulf %163, %167 : vector<8x8xf32>
    %169 = arith.truncf %168 : vector<8x8xf32> to vector<8x8xbf16>
    %170 = vector.extract_strided_slice %114 {offsets = [0, 16], sizes = [8, 8], strides = [1, 1]} : vector<8x32xbf16> to vector<8x8xbf16>
    %cst_52 = arith.constant dense<0.000000e+00> : vector<8x8xf32>
    %171 = tpu.matmul %169, %170, %cst_52 {dimension_numbers = #tpu.dot_dimension_numbers<[1], [0], [0], [1], [0, 0, 1, 1], [], []>} : vector<8x8xbf16>, vector<8x8xbf16>, vector<8x8xf32> -> vector<8x8xf32>
    %172 = vector.extract_strided_slice %110 {offsets = [0, 24], sizes = [8, 8], strides = [1, 1]} : vector<8x32xbf16> to vector<8x8xbf16>
    %173 = vector.extract_strided_slice %112 {offsets = [0, 24], sizes = [8, 8], strides = [1, 1]} : vector<8x32xbf16> to vector<8x8xbf16>
    %cst_53 = arith.constant dense<0.000000e+00> : vector<8x8xf32>
    %174 = tpu.matmul %172, %173, %cst_53 {dimension_numbers = #tpu.dot_dimension_numbers<[1], [1], [0], [0], [0, 0, 1, 0], [], []>} : vector<8x8xbf16>, vector<8x8xbf16>, vector<8x8xf32> -> vector<8x8xf32>
    %cst_54 = arith.constant 0.353553385 : f32
    %175 = vector.broadcast %cst_54 : f32 to vector<8x8xf32>
    %176 = arith.mulf %174, %175 : vector<8x8xf32>
    %177 = arith.addf %176, %25 : vector<8x8xf32>
    %cst_55 = arith.constant dense<0xFF800000> : vector<8xf32>
    %178 = vector.multi_reduction <maximumf>, %177, %cst_55 [1] : vector<8x8xf32> to vector<8xf32>
    %179 = vector.shape_cast %178 : vector<8xf32> to vector<8x1xf32>
    %180 = vector.broadcast %179 : vector<8x1xf32> to vector<8x8xf32>
    %181 = arith.subf %177, %180 : vector<8x8xf32>
    %182 = math.exp %181 : vector<8x8xf32>
    %cst_56 = arith.constant dense<0.000000e+00> : vector<8xf32>
    %183 = vector.multi_reduction <add>, %182, %cst_56 [1] : vector<8x8xf32> to vector<8xf32>
    %184 = vector.shape_cast %183 : vector<8xf32> to vector<8x1xf32>
    %185 = tpu.reciprocal %184 {approx = true} : vector<8x1xf32> -> vector<8x1xf32>
    %186 = vector.broadcast %185 : vector<8x1xf32> to vector<8x8xf32>
    %187 = arith.mulf %182, %186 : vector<8x8xf32>
    %188 = arith.truncf %187 : vector<8x8xf32> to vector<8x8xbf16>
    %189 = vector.extract_strided_slice %114 {offsets = [0, 24], sizes = [8, 8], strides = [1, 1]} : vector<8x32xbf16> to vector<8x8xbf16>
    %cst_57 = arith.constant dense<0.000000e+00> : vector<8x8xf32>
    %190 = tpu.matmul %188, %189, %cst_57 {dimension_numbers = #tpu.dot_dimension_numbers<[1], [0], [0], [1], [0, 0, 1, 1], [], []>} : vector<8x8xbf16>, vector<8x8xbf16>, vector<8x8xf32> -> vector<8x8xf32>
    %191 = tpu.concatenate %133, %152, %171, %190 in 1 : vector<8x8xf32>, vector<8x8xf32>, vector<8x8xf32>, vector<8x8xf32> -> vector<8x32xf32>
    %192 = tpu.concatenate %108, %191 in 0 : vector<8x32xf32>, vector<8x32xf32> -> vector<16x32xf32>
    %193 = arith.truncf %192 : vector<16x32xf32> to vector<16x32xbf16>
    %cst_58 = arith.constant dense<0.000000e+00> : vector<16x32xf32>
    %194 = tpu.matmul %193, %17, %cst_58 {dimension_numbers = #tpu.dot_dimension_numbers<[1], [0], [0], [1], [0, 0, 1, 1], [], []>} : vector<16x32xbf16>, vector<32x32xbf16>, vector<16x32xf32> -> vector<16x32xf32>
    %195 = vector.broadcast %19 : vector<1x32xf32> to vector<16x32xf32>
    %196 = arith.addf %194, %195 : vector<16x32xf32>
    %197 = arith.addf %3, %196 : vector<16x32xf32>
    %c0_59 = arith.constant 0 : index
    %c0_60 = arith.constant 0 : index
    %c0_61 = arith.constant 0 : index
    %198 = vector.load %arg17[%c0_59, %c0_60, %c0_61] : memref<1x1x32xf32, #tpu.memory_space<vmem>>, vector<1x1x32xf32>
    %199 = vector.shape_cast %198 : vector<1x1x32xf32> to vector<1x32xf32>
    %c0_62 = arith.constant 0 : index
    %c0_63 = arith.constant 0 : index
    %c0_64 = arith.constant 0 : index
    %200 = vector.load %arg18[%c0_62, %c0_63, %c0_64] : memref<1x1x32xf32, #tpu.memory_space<vmem>>, vector<1x1x32xf32>
    %201 = vector.shape_cast %200 : vector<1x1x32xf32> to vector<1x32xf32>
    %cst_65 = arith.constant dense<0.000000e+00> : vector<16xf32>
    %202 = vector.multi_reduction <add>, %197, %cst_65 [1] : vector<16x32xf32> to vector<16xf32>
    %203 = vector.shape_cast %202 : vector<16xf32> to vector<16x1xf32>
    %cst_66 = arith.constant 3.200000e+01 : f32
    %204 = vector.broadcast %cst_66 : f32 to vector<16x1xf32>
    %205 = arith.divf %203, %204 : vector<16x1xf32>
    %206 = vector.broadcast %205 : vector<16x1xf32> to vector<16x32xf32>
    %207 = arith.subf %197, %206 : vector<16x32xf32>
    %208 = arith.mulf %207, %207 : vector<16x32xf32>
    %cst_67 = arith.constant dense<0.000000e+00> : vector<16xf32>
    %209 = vector.multi_reduction <add>, %208, %cst_67 [1] : vector<16x32xf32> to vector<16xf32>
    %210 = vector.shape_cast %209 : vector<16xf32> to vector<16x1xf32>
    %cst_68 = arith.constant 3.200000e+01 : f32
    %211 = vector.broadcast %cst_68 : f32 to vector<16x1xf32>
    %212 = arith.divf %210, %211 : vector<16x1xf32>
    %cst_69 = arith.constant 9.99999974E-6 : f32
    %213 = vector.broadcast %cst_69 : f32 to vector<16x1xf32>
    %214 = arith.addf %212, %213 : vector<16x1xf32>
    %215 = math.rsqrt %214 : vector<16x1xf32>
    %216 = vector.broadcast %215 : vector<16x1xf32> to vector<16x32xf32>
    %217 = arith.mulf %207, %216 : vector<16x32xf32>
    %218 = vector.broadcast %199 : vector<1x32xf32> to vector<16x32xf32>
    %219 = arith.mulf %217, %218 : vector<16x32xf32>
    %220 = vector.broadcast %201 : vector<1x32xf32> to vector<16x32xf32>
    %221 = arith.addf %219, %220 : vector<16x32xf32>
    %222 = arith.truncf %221 : vector<16x32xf32> to vector<16x32xbf16>
    %c0_70 = arith.constant 0 : index
    %c0_71 = arith.constant 0 : index
    %c0_72 = arith.constant 0 : index
    %223 = vector.load %arg7[%c0_70, %c0_71, %c0_72] : memref<1x32x32xbf16, #tpu.memory_space<vmem>>, vector<1x32x32xbf16>
    %224 = vector.shape_cast %223 : vector<1x32x32xbf16> to vector<32x32xbf16>
    %cst_73 = arith.constant dense<0.000000e+00> : vector<16x32xf32>
    %225 = tpu.matmul %222, %224, %cst_73 {dimension_numbers = #tpu.dot_dimension_numbers<[1], [0], [0], [1], [0, 0, 1, 1], [], []>} : vector<16x32xbf16>, vector<32x32xbf16>, vector<16x32xf32> -> vector<16x32xf32>
    %c0_74 = arith.constant 0 : index
    %c0_75 = arith.constant 0 : index
    %c0_76 = arith.constant 0 : index
    %226 = vector.load %arg8[%c0_74, %c0_75, %c0_76] : memref<1x1x32xf32, #tpu.memory_space<vmem>>, vector<1x1x32xf32>
    %227 = vector.shape_cast %226 : vector<1x1x32xf32> to vector<1x32xf32>
    %228 = vector.broadcast %227 : vector<1x32xf32> to vector<16x32xf32>
    %229 = arith.addf %225, %228 : vector<16x32xf32>
    %230 = arith.truncf %4 : vector<20x32xf32> to vector<20x32xbf16>
    %c0_77 = arith.constant 0 : index
    %c0_78 = arith.constant 0 : index
    %c0_79 = arith.constant 0 : index
    %231 = vector.load %arg9[%c0_77, %c0_78, %c0_79] : memref<1x32x64xbf16, #tpu.memory_space<vmem>>, vector<1x32x64xbf16>
    %232 = vector.shape_cast %231 : vector<1x32x64xbf16> to vector<32x64xbf16>
    %cst_80 = arith.constant dense<0.000000e+00> : vector<20x64xf32>
    %233 = tpu.matmul %230, %232, %cst_80 {dimension_numbers = #tpu.dot_dimension_numbers<[1], [0], [0], [1], [0, 0, 1, 1], [], []>} : vector<20x32xbf16>, vector<32x64xbf16>, vector<20x64xf32> -> vector<20x64xf32>
    %c0_81 = arith.constant 0 : index
    %c0_82 = arith.constant 0 : index
    %c0_83 = arith.constant 0 : index
    %234 = vector.load %arg10[%c0_81, %c0_82, %c0_83] : memref<1x1x64xf32, #tpu.memory_space<vmem>>, vector<1x1x64xf32>
    %235 = vector.shape_cast %234 : vector<1x1x64xf32> to vector<1x64xf32>
    %236 = vector.broadcast %235 : vector<1x64xf32> to vector<20x64xf32>
    %237 = arith.addf %233, %236 : vector<20x64xf32>
    %238 = vector.extract_strided_slice %237 {offsets = [0, 0], sizes = [20, 32], strides = [1, 1]} : vector<20x64xf32> to vector<20x32xf32>
    %239 = vector.extract_strided_slice %237 {offsets = [0, 32], sizes = [20, 32], strides = [1, 1]} : vector<20x64xf32> to vector<20x32xf32>
    %c0_84 = arith.constant 0 : index
    %c0_85 = arith.constant 0 : index
    %c0_86 = arith.constant 0 : index
    %240 = vector.load %arg11[%c0_84, %c0_85, %c0_86] : memref<1x32x32xbf16, #tpu.memory_space<vmem>>, vector<1x32x32xbf16>
    %241 = vector.shape_cast %240 : vector<1x32x32xbf16> to vector<32x32xbf16>
    %c0_87 = arith.constant 0 : index
    %c0_88 = arith.constant 0 : index
    %c0_89 = arith.constant 0 : index
    %242 = vector.load %arg12[%c0_87, %c0_88, %c0_89] : memref<1x1x32xf32, #tpu.memory_space<vmem>>, vector<1x1x32xf32>
    %243 = vector.shape_cast %242 : vector<1x1x32xf32> to vector<1x32xf32>
    %244 = vector.extract_strided_slice %229 {offsets = [0, 0], sizes = [8, 32], strides = [1, 1]} : vector<16x32xf32> to vector<8x32xf32>
    %245 = arith.truncf %244 : vector<8x32xf32> to vector<8x32xbf16>
    %246 = vector.extract_strided_slice %238 {offsets = [0, 0], sizes = [10, 32], strides = [1, 1]} : vector<20x32xf32> to vector<10x32xf32>
    %247 = arith.truncf %246 : vector<10x32xf32> to vector<10x32xbf16>
    %248 = vector.extract_strided_slice %239 {offsets = [0, 0], sizes = [10, 32], strides = [1, 1]} : vector<20x32xf32> to vector<10x32xf32>
    %249 = arith.truncf %248 : vector<10x32xf32> to vector<10x32xbf16>
    %250 = vector.extract_strided_slice %245 {offsets = [0, 0], sizes = [8, 8], strides = [1, 1]} : vector<8x32xbf16> to vector<8x8xbf16>
    %251 = vector.extract_strided_slice %247 {offsets = [0, 0], sizes = [10, 8], strides = [1, 1]} : vector<10x32xbf16> to vector<10x8xbf16>
    %cst_90 = arith.constant dense<0.000000e+00> : vector<8x10xf32>
    %252 = tpu.matmul %250, %251, %cst_90 {dimension_numbers = #tpu.dot_dimension_numbers<[1], [1], [0], [0], [0, 0, 1, 0], [], []>} : vector<8x8xbf16>, vector<10x8xbf16>, vector<8x10xf32> -> vector<8x10xf32>
    %cst_91 = arith.constant 0.353553385 : f32
    %253 = vector.broadcast %cst_91 : f32 to vector<8x10xf32>
    %254 = arith.mulf %252, %253 : vector<8x10xf32>
    %cst_92 = arith.constant dense<0xFF800000> : vector<8xf32>
    %255 = vector.multi_reduction <maximumf>, %254, %cst_92 [1] : vector<8x10xf32> to vector<8xf32>
    %256 = vector.shape_cast %255 : vector<8xf32> to vector<8x1xf32>
    %257 = vector.broadcast %256 : vector<8x1xf32> to vector<8x10xf32>
    %258 = arith.subf %254, %257 : vector<8x10xf32>
    %259 = math.exp %258 : vector<8x10xf32>
    %cst_93 = arith.constant dense<0.000000e+00> : vector<8xf32>
    %260 = vector.multi_reduction <add>, %259, %cst_93 [1] : vector<8x10xf32> to vector<8xf32>
    %261 = vector.shape_cast %260 : vector<8xf32> to vector<8x1xf32>
    %262 = tpu.reciprocal %261 {approx = true} : vector<8x1xf32> -> vector<8x1xf32>
    %263 = vector.broadcast %262 : vector<8x1xf32> to vector<8x10xf32>
    %264 = arith.mulf %259, %263 : vector<8x10xf32>
    %265 = arith.truncf %264 : vector<8x10xf32> to vector<8x10xbf16>
    %266 = vector.extract_strided_slice %249 {offsets = [0, 0], sizes = [10, 8], strides = [1, 1]} : vector<10x32xbf16> to vector<10x8xbf16>
    %cst_94 = arith.constant dense<0.000000e+00> : vector<8x8xf32>
    %267 = tpu.matmul %265, %266, %cst_94 {dimension_numbers = #tpu.dot_dimension_numbers<[1], [0], [0], [1], [0, 0, 1, 1], [], []>} : vector<8x10xbf16>, vector<10x8xbf16>, vector<8x8xf32> -> vector<8x8xf32>
    %268 = vector.extract_strided_slice %245 {offsets = [0, 8], sizes = [8, 8], strides = [1, 1]} : vector<8x32xbf16> to vector<8x8xbf16>
    %269 = vector.extract_strided_slice %247 {offsets = [0, 8], sizes = [10, 8], strides = [1, 1]} : vector<10x32xbf16> to vector<10x8xbf16>
    %cst_95 = arith.constant dense<0.000000e+00> : vector<8x10xf32>
    %270 = tpu.matmul %268, %269, %cst_95 {dimension_numbers = #tpu.dot_dimension_numbers<[1], [1], [0], [0], [0, 0, 1, 0], [], []>} : vector<8x8xbf16>, vector<10x8xbf16>, vector<8x10xf32> -> vector<8x10xf32>
    %cst_96 = arith.constant 0.353553385 : f32
    %271 = vector.broadcast %cst_96 : f32 to vector<8x10xf32>
    %272 = arith.mulf %270, %271 : vector<8x10xf32>
    %cst_97 = arith.constant dense<0xFF800000> : vector<8xf32>
    %273 = vector.multi_reduction <maximumf>, %272, %cst_97 [1] : vector<8x10xf32> to vector<8xf32>
    %274 = vector.shape_cast %273 : vector<8xf32> to vector<8x1xf32>
    %275 = vector.broadcast %274 : vector<8x1xf32> to vector<8x10xf32>
    %276 = arith.subf %272, %275 : vector<8x10xf32>
    %277 = math.exp %276 : vector<8x10xf32>
    %cst_98 = arith.constant dense<0.000000e+00> : vector<8xf32>
    %278 = vector.multi_reduction <add>, %277, %cst_98 [1] : vector<8x10xf32> to vector<8xf32>
    %279 = vector.shape_cast %278 : vector<8xf32> to vector<8x1xf32>
    %280 = tpu.reciprocal %279 {approx = true} : vector<8x1xf32> -> vector<8x1xf32>
    %281 = vector.broadcast %280 : vector<8x1xf32> to vector<8x10xf32>
    %282 = arith.mulf %277, %281 : vector<8x10xf32>
    %283 = arith.truncf %282 : vector<8x10xf32> to vector<8x10xbf16>
    %284 = vector.extract_strided_slice %249 {offsets = [0, 8], sizes = [10, 8], strides = [1, 1]} : vector<10x32xbf16> to vector<10x8xbf16>
    %cst_99 = arith.constant dense<0.000000e+00> : vector<8x8xf32>
    %285 = tpu.matmul %283, %284, %cst_99 {dimension_numbers = #tpu.dot_dimension_numbers<[1], [0], [0], [1], [0, 0, 1, 1], [], []>} : vector<8x10xbf16>, vector<10x8xbf16>, vector<8x8xf32> -> vector<8x8xf32>
    %286 = vector.extract_strided_slice %245 {offsets = [0, 16], sizes = [8, 8], strides = [1, 1]} : vector<8x32xbf16> to vector<8x8xbf16>
    %287 = vector.extract_strided_slice %247 {offsets = [0, 16], sizes = [10, 8], strides = [1, 1]} : vector<10x32xbf16> to vector<10x8xbf16>
    %cst_100 = arith.constant dense<0.000000e+00> : vector<8x10xf32>
    %288 = tpu.matmul %286, %287, %cst_100 {dimension_numbers = #tpu.dot_dimension_numbers<[1], [1], [0], [0], [0, 0, 1, 0], [], []>} : vector<8x8xbf16>, vector<10x8xbf16>, vector<8x10xf32> -> vector<8x10xf32>
    %cst_101 = arith.constant 0.353553385 : f32
    %289 = vector.broadcast %cst_101 : f32 to vector<8x10xf32>
    %290 = arith.mulf %288, %289 : vector<8x10xf32>
    %cst_102 = arith.constant dense<0xFF800000> : vector<8xf32>
    %291 = vector.multi_reduction <maximumf>, %290, %cst_102 [1] : vector<8x10xf32> to vector<8xf32>
    %292 = vector.shape_cast %291 : vector<8xf32> to vector<8x1xf32>
    %293 = vector.broadcast %292 : vector<8x1xf32> to vector<8x10xf32>
    %294 = arith.subf %290, %293 : vector<8x10xf32>
    %295 = math.exp %294 : vector<8x10xf32>
    %cst_103 = arith.constant dense<0.000000e+00> : vector<8xf32>
    %296 = vector.multi_reduction <add>, %295, %cst_103 [1] : vector<8x10xf32> to vector<8xf32>
    %297 = vector.shape_cast %296 : vector<8xf32> to vector<8x1xf32>
    %298 = tpu.reciprocal %297 {approx = true} : vector<8x1xf32> -> vector<8x1xf32>
    %299 = vector.broadcast %298 : vector<8x1xf32> to vector<8x10xf32>
    %300 = arith.mulf %295, %299 : vector<8x10xf32>
    %301 = arith.truncf %300 : vector<8x10xf32> to vector<8x10xbf16>
    %302 = vector.extract_strided_slice %249 {offsets = [0, 16], sizes = [10, 8], strides = [1, 1]} : vector<10x32xbf16> to vector<10x8xbf16>
    %cst_104 = arith.constant dense<0.000000e+00> : vector<8x8xf32>
    %303 = tpu.matmul %301, %302, %cst_104 {dimension_numbers = #tpu.dot_dimension_numbers<[1], [0], [0], [1], [0, 0, 1, 1], [], []>} : vector<8x10xbf16>, vector<10x8xbf16>, vector<8x8xf32> -> vector<8x8xf32>
    %304 = vector.extract_strided_slice %245 {offsets = [0, 24], sizes = [8, 8], strides = [1, 1]} : vector<8x32xbf16> to vector<8x8xbf16>
    %305 = vector.extract_strided_slice %247 {offsets = [0, 24], sizes = [10, 8], strides = [1, 1]} : vector<10x32xbf16> to vector<10x8xbf16>
    %cst_105 = arith.constant dense<0.000000e+00> : vector<8x10xf32>
    %306 = tpu.matmul %304, %305, %cst_105 {dimension_numbers = #tpu.dot_dimension_numbers<[1], [1], [0], [0], [0, 0, 1, 0], [], []>} : vector<8x8xbf16>, vector<10x8xbf16>, vector<8x10xf32> -> vector<8x10xf32>
    %cst_106 = arith.constant 0.353553385 : f32
    %307 = vector.broadcast %cst_106 : f32 to vector<8x10xf32>
    %308 = arith.mulf %306, %307 : vector<8x10xf32>
    %cst_107 = arith.constant dense<0xFF800000> : vector<8xf32>
    %309 = vector.multi_reduction <maximumf>, %308, %cst_107 [1] : vector<8x10xf32> to vector<8xf32>
    %310 = vector.shape_cast %309 : vector<8xf32> to vector<8x1xf32>
    %311 = vector.broadcast %310 : vector<8x1xf32> to vector<8x10xf32>
    %312 = arith.subf %308, %311 : vector<8x10xf32>
    %313 = math.exp %312 : vector<8x10xf32>
    %cst_108 = arith.constant dense<0.000000e+00> : vector<8xf32>
    %314 = vector.multi_reduction <add>, %313, %cst_108 [1] : vector<8x10xf32> to vector<8xf32>
    %315 = vector.shape_cast %314 : vector<8xf32> to vector<8x1xf32>
    %316 = tpu.reciprocal %315 {approx = true} : vector<8x1xf32> -> vector<8x1xf32>
    %317 = vector.broadcast %316 : vector<8x1xf32> to vector<8x10xf32>
    %318 = arith.mulf %313, %317 : vector<8x10xf32>
    %319 = arith.truncf %318 : vector<8x10xf32> to vector<8x10xbf16>
    %320 = vector.extract_strided_slice %249 {offsets = [0, 24], sizes = [10, 8], strides = [1, 1]} : vector<10x32xbf16> to vector<10x8xbf16>
    %cst_109 = arith.constant dense<0.000000e+00> : vector<8x8xf32>
    %321 = tpu.matmul %319, %320, %cst_109 {dimension_numbers = #tpu.dot_dimension_numbers<[1], [0], [0], [1], [0, 0, 1, 1], [], []>} : vector<8x10xbf16>, vector<10x8xbf16>, vector<8x8xf32> -> vector<8x8xf32>
    %322 = tpu.concatenate %267, %285, %303, %321 in 1 : vector<8x8xf32>, vector<8x8xf32>, vector<8x8xf32>, vector<8x8xf32> -> vector<8x32xf32>
    %323 = vector.extract_strided_slice %229 {offsets = [8, 0], sizes = [8, 32], strides = [1, 1]} : vector<16x32xf32> to vector<8x32xf32>
    %324 = arith.truncf %323 : vector<8x32xf32> to vector<8x32xbf16>
    %325 = vector.extract_strided_slice %238 {offsets = [10, 0], sizes = [10, 32], strides = [1, 1]} : vector<20x32xf32> to vector<10x32xf32>
    %326 = arith.truncf %325 : vector<10x32xf32> to vector<10x32xbf16>
    %327 = vector.extract_strided_slice %239 {offsets = [10, 0], sizes = [10, 32], strides = [1, 1]} : vector<20x32xf32> to vector<10x32xf32>
    %328 = arith.truncf %327 : vector<10x32xf32> to vector<10x32xbf16>
    %329 = vector.extract_strided_slice %324 {offsets = [0, 0], sizes = [8, 8], strides = [1, 1]} : vector<8x32xbf16> to vector<8x8xbf16>
    %330 = vector.extract_strided_slice %326 {offsets = [0, 0], sizes = [10, 8], strides = [1, 1]} : vector<10x32xbf16> to vector<10x8xbf16>
    %cst_110 = arith.constant dense<0.000000e+00> : vector<8x10xf32>
    %331 = tpu.matmul %329, %330, %cst_110 {dimension_numbers = #tpu.dot_dimension_numbers<[1], [1], [0], [0], [0, 0, 1, 0], [], []>} : vector<8x8xbf16>, vector<10x8xbf16>, vector<8x10xf32> -> vector<8x10xf32>
    %cst_111 = arith.constant 0.353553385 : f32
    %332 = vector.broadcast %cst_111 : f32 to vector<8x10xf32>
    %333 = arith.mulf %331, %332 : vector<8x10xf32>
    %cst_112 = arith.constant dense<0xFF800000> : vector<8xf32>
    %334 = vector.multi_reduction <maximumf>, %333, %cst_112 [1] : vector<8x10xf32> to vector<8xf32>
    %335 = vector.shape_cast %334 : vector<8xf32> to vector<8x1xf32>
    %336 = vector.broadcast %335 : vector<8x1xf32> to vector<8x10xf32>
    %337 = arith.subf %333, %336 : vector<8x10xf32>
    %338 = math.exp %337 : vector<8x10xf32>
    %cst_113 = arith.constant dense<0.000000e+00> : vector<8xf32>
    %339 = vector.multi_reduction <add>, %338, %cst_113 [1] : vector<8x10xf32> to vector<8xf32>
    %340 = vector.shape_cast %339 : vector<8xf32> to vector<8x1xf32>
    %341 = tpu.reciprocal %340 {approx = true} : vector<8x1xf32> -> vector<8x1xf32>
    %342 = vector.broadcast %341 : vector<8x1xf32> to vector<8x10xf32>
    %343 = arith.mulf %338, %342 : vector<8x10xf32>
    %344 = arith.truncf %343 : vector<8x10xf32> to vector<8x10xbf16>
    %345 = vector.extract_strided_slice %328 {offsets = [0, 0], sizes = [10, 8], strides = [1, 1]} : vector<10x32xbf16> to vector<10x8xbf16>
    %cst_114 = arith.constant dense<0.000000e+00> : vector<8x8xf32>
    %346 = tpu.matmul %344, %345, %cst_114 {dimension_numbers = #tpu.dot_dimension_numbers<[1], [0], [0], [1], [0, 0, 1, 1], [], []>} : vector<8x10xbf16>, vector<10x8xbf16>, vector<8x8xf32> -> vector<8x8xf32>
    %347 = vector.extract_strided_slice %324 {offsets = [0, 8], sizes = [8, 8], strides = [1, 1]} : vector<8x32xbf16> to vector<8x8xbf16>
    %348 = vector.extract_strided_slice %326 {offsets = [0, 8], sizes = [10, 8], strides = [1, 1]} : vector<10x32xbf16> to vector<10x8xbf16>
    %cst_115 = arith.constant dense<0.000000e+00> : vector<8x10xf32>
    %349 = tpu.matmul %347, %348, %cst_115 {dimension_numbers = #tpu.dot_dimension_numbers<[1], [1], [0], [0], [0, 0, 1, 0], [], []>} : vector<8x8xbf16>, vector<10x8xbf16>, vector<8x10xf32> -> vector<8x10xf32>
    %cst_116 = arith.constant 0.353553385 : f32
    %350 = vector.broadcast %cst_116 : f32 to vector<8x10xf32>
    %351 = arith.mulf %349, %350 : vector<8x10xf32>
    %cst_117 = arith.constant dense<0xFF800000> : vector<8xf32>
    %352 = vector.multi_reduction <maximumf>, %351, %cst_117 [1] : vector<8x10xf32> to vector<8xf32>
    %353 = vector.shape_cast %352 : vector<8xf32> to vector<8x1xf32>
    %354 = vector.broadcast %353 : vector<8x1xf32> to vector<8x10xf32>
    %355 = arith.subf %351, %354 : vector<8x10xf32>
    %356 = math.exp %355 : vector<8x10xf32>
    %cst_118 = arith.constant dense<0.000000e+00> : vector<8xf32>
    %357 = vector.multi_reduction <add>, %356, %cst_118 [1] : vector<8x10xf32> to vector<8xf32>
    %358 = vector.shape_cast %357 : vector<8xf32> to vector<8x1xf32>
    %359 = tpu.reciprocal %358 {approx = true} : vector<8x1xf32> -> vector<8x1xf32>
    %360 = vector.broadcast %359 : vector<8x1xf32> to vector<8x10xf32>
    %361 = arith.mulf %356, %360 : vector<8x10xf32>
    %362 = arith.truncf %361 : vector<8x10xf32> to vector<8x10xbf16>
    %363 = vector.extract_strided_slice %328 {offsets = [0, 8], sizes = [10, 8], strides = [1, 1]} : vector<10x32xbf16> to vector<10x8xbf16>
    %cst_119 = arith.constant dense<0.000000e+00> : vector<8x8xf32>
    %364 = tpu.matmul %362, %363, %cst_119 {dimension_numbers = #tpu.dot_dimension_numbers<[1], [0], [0], [1], [0, 0, 1, 1], [], []>} : vector<8x10xbf16>, vector<10x8xbf16>, vector<8x8xf32> -> vector<8x8xf32>
    %365 = vector.extract_strided_slice %324 {offsets = [0, 16], sizes = [8, 8], strides = [1, 1]} : vector<8x32xbf16> to vector<8x8xbf16>
    %366 = vector.extract_strided_slice %326 {offsets = [0, 16], sizes = [10, 8], strides = [1, 1]} : vector<10x32xbf16> to vector<10x8xbf16>
    %cst_120 = arith.constant dense<0.000000e+00> : vector<8x10xf32>
    %367 = tpu.matmul %365, %366, %cst_120 {dimension_numbers = #tpu.dot_dimension_numbers<[1], [1], [0], [0], [0, 0, 1, 0], [], []>} : vector<8x8xbf16>, vector<10x8xbf16>, vector<8x10xf32> -> vector<8x10xf32>
    %cst_121 = arith.constant 0.353553385 : f32
    %368 = vector.broadcast %cst_121 : f32 to vector<8x10xf32>
    %369 = arith.mulf %367, %368 : vector<8x10xf32>
    %cst_122 = arith.constant dense<0xFF800000> : vector<8xf32>
    %370 = vector.multi_reduction <maximumf>, %369, %cst_122 [1] : vector<8x10xf32> to vector<8xf32>
    %371 = vector.shape_cast %370 : vector<8xf32> to vector<8x1xf32>
    %372 = vector.broadcast %371 : vector<8x1xf32> to vector<8x10xf32>
    %373 = arith.subf %369, %372 : vector<8x10xf32>
    %374 = math.exp %373 : vector<8x10xf32>
    %cst_123 = arith.constant dense<0.000000e+00> : vector<8xf32>
    %375 = vector.multi_reduction <add>, %374, %cst_123 [1] : vector<8x10xf32> to vector<8xf32>
    %376 = vector.shape_cast %375 : vector<8xf32> to vector<8x1xf32>
    %377 = tpu.reciprocal %376 {approx = true} : vector<8x1xf32> -> vector<8x1xf32>
    %378 = vector.broadcast %377 : vector<8x1xf32> to vector<8x10xf32>
    %379 = arith.mulf %374, %378 : vector<8x10xf32>
    %380 = arith.truncf %379 : vector<8x10xf32> to vector<8x10xbf16>
    %381 = vector.extract_strided_slice %328 {offsets = [0, 16], sizes = [10, 8], strides = [1, 1]} : vector<10x32xbf16> to vector<10x8xbf16>
    %cst_124 = arith.constant dense<0.000000e+00> : vector<8x8xf32>
    %382 = tpu.matmul %380, %381, %cst_124 {dimension_numbers = #tpu.dot_dimension_numbers<[1], [0], [0], [1], [0, 0, 1, 1], [], []>} : vector<8x10xbf16>, vector<10x8xbf16>, vector<8x8xf32> -> vector<8x8xf32>
    %383 = vector.extract_strided_slice %324 {offsets = [0, 24], sizes = [8, 8], strides = [1, 1]} : vector<8x32xbf16> to vector<8x8xbf16>
    %384 = vector.extract_strided_slice %326 {offsets = [0, 24], sizes = [10, 8], strides = [1, 1]} : vector<10x32xbf16> to vector<10x8xbf16>
    %cst_125 = arith.constant dense<0.000000e+00> : vector<8x10xf32>
    %385 = tpu.matmul %383, %384, %cst_125 {dimension_numbers = #tpu.dot_dimension_numbers<[1], [1], [0], [0], [0, 0, 1, 0], [], []>} : vector<8x8xbf16>, vector<10x8xbf16>, vector<8x10xf32> -> vector<8x10xf32>
    %cst_126 = arith.constant 0.353553385 : f32
    %386 = vector.broadcast %cst_126 : f32 to vector<8x10xf32>
    %387 = arith.mulf %385, %386 : vector<8x10xf32>
    %cst_127 = arith.constant dense<0xFF800000> : vector<8xf32>
    %388 = vector.multi_reduction <maximumf>, %387, %cst_127 [1] : vector<8x10xf32> to vector<8xf32>
    %389 = vector.shape_cast %388 : vector<8xf32> to vector<8x1xf32>
    %390 = vector.broadcast %389 : vector<8x1xf32> to vector<8x10xf32>
    %391 = arith.subf %387, %390 : vector<8x10xf32>
    %392 = math.exp %391 : vector<8x10xf32>
    %cst_128 = arith.constant dense<0.000000e+00> : vector<8xf32>
    %393 = vector.multi_reduction <add>, %392, %cst_128 [1] : vector<8x10xf32> to vector<8xf32>
    %394 = vector.shape_cast %393 : vector<8xf32> to vector<8x1xf32>
    %395 = tpu.reciprocal %394 {approx = true} : vector<8x1xf32> -> vector<8x1xf32>
    %396 = vector.broadcast %395 : vector<8x1xf32> to vector<8x10xf32>
    %397 = arith.mulf %392, %396 : vector<8x10xf32>
    %398 = arith.truncf %397 : vector<8x10xf32> to vector<8x10xbf16>
    %399 = vector.extract_strided_slice %328 {offsets = [0, 24], sizes = [10, 8], strides = [1, 1]} : vector<10x32xbf16> to vector<10x8xbf16>
    %cst_129 = arith.constant dense<0.000000e+00> : vector<8x8xf32>
    %400 = tpu.matmul %398, %399, %cst_129 {dimension_numbers = #tpu.dot_dimension_numbers<[1], [0], [0], [1], [0, 0, 1, 1], [], []>} : vector<8x10xbf16>, vector<10x8xbf16>, vector<8x8xf32> -> vector<8x8xf32>
    %401 = tpu.concatenate %346, %364, %382, %400 in 1 : vector<8x8xf32>, vector<8x8xf32>, vector<8x8xf32>, vector<8x8xf32> -> vector<8x32xf32>
    %402 = tpu.concatenate %322, %401 in 0 : vector<8x32xf32>, vector<8x32xf32> -> vector<16x32xf32>
    %403 = arith.truncf %402 : vector<16x32xf32> to vector<16x32xbf16>
    %cst_130 = arith.constant dense<0.000000e+00> : vector<16x32xf32>
    %404 = tpu.matmul %403, %241, %cst_130 {dimension_numbers = #tpu.dot_dimension_numbers<[1], [0], [0], [1], [0, 0, 1, 1], [], []>} : vector<16x32xbf16>, vector<32x32xbf16>, vector<16x32xf32> -> vector<16x32xf32>
    %405 = vector.broadcast %243 : vector<1x32xf32> to vector<16x32xf32>
    %406 = arith.addf %404, %405 : vector<16x32xf32>
    %407 = arith.addf %221, %406 : vector<16x32xf32>
    %c0_131 = arith.constant 0 : index
    %c0_132 = arith.constant 0 : index
    %c0_133 = arith.constant 0 : index
    %408 = vector.load %arg19[%c0_131, %c0_132, %c0_133] : memref<1x1x32xf32, #tpu.memory_space<vmem>>, vector<1x1x32xf32>
    %409 = vector.shape_cast %408 : vector<1x1x32xf32> to vector<1x32xf32>
    %c0_134 = arith.constant 0 : index
    %c0_135 = arith.constant 0 : index
    %c0_136 = arith.constant 0 : index
    %410 = vector.load %arg20[%c0_134, %c0_135, %c0_136] : memref<1x1x32xf32, #tpu.memory_space<vmem>>, vector<1x1x32xf32>
    %411 = vector.shape_cast %410 : vector<1x1x32xf32> to vector<1x32xf32>
    %cst_137 = arith.constant dense<0.000000e+00> : vector<16xf32>
    %412 = vector.multi_reduction <add>, %407, %cst_137 [1] : vector<16x32xf32> to vector<16xf32>
    %413 = vector.shape_cast %412 : vector<16xf32> to vector<16x1xf32>
    %cst_138 = arith.constant 3.200000e+01 : f32
    %414 = vector.broadcast %cst_138 : f32 to vector<16x1xf32>
    %415 = arith.divf %413, %414 : vector<16x1xf32>
    %416 = vector.broadcast %415 : vector<16x1xf32> to vector<16x32xf32>
    %417 = arith.subf %407, %416 : vector<16x32xf32>
    %418 = arith.mulf %417, %417 : vector<16x32xf32>
    %cst_139 = arith.constant dense<0.000000e+00> : vector<16xf32>
    %419 = vector.multi_reduction <add>, %418, %cst_139 [1] : vector<16x32xf32> to vector<16xf32>
    %420 = vector.shape_cast %419 : vector<16xf32> to vector<16x1xf32>
    %cst_140 = arith.constant 3.200000e+01 : f32
    %421 = vector.broadcast %cst_140 : f32 to vector<16x1xf32>
    %422 = arith.divf %420, %421 : vector<16x1xf32>
    %cst_141 = arith.constant 9.99999974E-6 : f32
    %423 = vector.broadcast %cst_141 : f32 to vector<16x1xf32>
    %424 = arith.addf %422, %423 : vector<16x1xf32>
    %425 = math.rsqrt %424 : vector<16x1xf32>
    %426 = vector.broadcast %425 : vector<16x1xf32> to vector<16x32xf32>
    %427 = arith.mulf %417, %426 : vector<16x32xf32>
    %428 = vector.broadcast %409 : vector<1x32xf32> to vector<16x32xf32>
    %429 = arith.mulf %427, %428 : vector<16x32xf32>
    %430 = vector.broadcast %411 : vector<1x32xf32> to vector<16x32xf32>
    %431 = arith.addf %429, %430 : vector<16x32xf32>
    %432 = arith.truncf %431 : vector<16x32xf32> to vector<16x32xbf16>
    %c0_142 = arith.constant 0 : index
    %c0_143 = arith.constant 0 : index
    %c0_144 = arith.constant 0 : index
    %433 = vector.load %arg13[%c0_142, %c0_143, %c0_144] : memref<1x32x64xbf16, #tpu.memory_space<vmem>>, vector<1x32x64xbf16>
    %434 = vector.shape_cast %433 : vector<1x32x64xbf16> to vector<32x64xbf16>
    %cst_145 = arith.constant dense<0.000000e+00> : vector<16x64xf32>
    %435 = tpu.matmul %432, %434, %cst_145 {dimension_numbers = #tpu.dot_dimension_numbers<[1], [0], [0], [1], [0, 0, 1, 1], [], []>} : vector<16x32xbf16>, vector<32x64xbf16>, vector<16x64xf32> -> vector<16x64xf32>
    %c0_146 = arith.constant 0 : index
    %c0_147 = arith.constant 0 : index
    %c0_148 = arith.constant 0 : index
    %436 = vector.load %arg14[%c0_146, %c0_147, %c0_148] : memref<1x1x64xf32, #tpu.memory_space<vmem>>, vector<1x1x64xf32>
    %437 = vector.shape_cast %436 : vector<1x1x64xf32> to vector<1x64xf32>
    %438 = vector.broadcast %437 : vector<1x64xf32> to vector<16x64xf32>
    %439 = arith.addf %435, %438 : vector<16x64xf32>
    %cst_149 = arith.constant 0.000000e+00 : f32
    %440 = vector.broadcast %cst_149 : f32 to vector<16x64xf32>
    %441 = arith.maximumf %439, %440 : vector<16x64xf32>
    %442 = arith.truncf %441 : vector<16x64xf32> to vector<16x64xbf16>
    %c0_150 = arith.constant 0 : index
    %c0_151 = arith.constant 0 : index
    %c0_152 = arith.constant 0 : index
    %443 = vector.load %arg15[%c0_150, %c0_151, %c0_152] : memref<1x64x32xbf16, #tpu.memory_space<vmem>>, vector<1x64x32xbf16>
    %444 = vector.shape_cast %443 : vector<1x64x32xbf16> to vector<64x32xbf16>
    %cst_153 = arith.constant dense<0.000000e+00> : vector<16x32xf32>
    %445 = tpu.matmul %442, %444, %cst_153 {dimension_numbers = #tpu.dot_dimension_numbers<[1], [0], [0], [1], [0, 0, 1, 1], [], []>} : vector<16x64xbf16>, vector<64x32xbf16>, vector<16x32xf32> -> vector<16x32xf32>
    %c0_154 = arith.constant 0 : index
    %c0_155 = arith.constant 0 : index
    %c0_156 = arith.constant 0 : index
    %446 = vector.load %arg16[%c0_154, %c0_155, %c0_156] : memref<1x1x32xf32, #tpu.memory_space<vmem>>, vector<1x1x32xf32>
    %447 = vector.shape_cast %446 : vector<1x1x32xf32> to vector<1x32xf32>
    %448 = vector.broadcast %447 : vector<1x32xf32> to vector<16x32xf32>
    %449 = arith.addf %445, %448 : vector<16x32xf32>
    %450 = arith.addf %431, %449 : vector<16x32xf32>
    %c0_157 = arith.constant 0 : index
    %c0_158 = arith.constant 0 : index
    %c0_159 = arith.constant 0 : index
    %451 = vector.load %arg21[%c0_157, %c0_158, %c0_159] : memref<1x1x32xf32, #tpu.memory_space<vmem>>, vector<1x1x32xf32>
    %452 = vector.shape_cast %451 : vector<1x1x32xf32> to vector<1x32xf32>
    %c0_160 = arith.constant 0 : index
    %c0_161 = arith.constant 0 : index
    %c0_162 = arith.constant 0 : index
    %453 = vector.load %arg22[%c0_160, %c0_161, %c0_162] : memref<1x1x32xf32, #tpu.memory_space<vmem>>, vector<1x1x32xf32>
    %454 = vector.shape_cast %453 : vector<1x1x32xf32> to vector<1x32xf32>
    %cst_163 = arith.constant dense<0.000000e+00> : vector<16xf32>
    %455 = vector.multi_reduction <add>, %450, %cst_163 [1] : vector<16x32xf32> to vector<16xf32>
    %456 = vector.shape_cast %455 : vector<16xf32> to vector<16x1xf32>
    %cst_164 = arith.constant 3.200000e+01 : f32
    %457 = vector.broadcast %cst_164 : f32 to vector<16x1xf32>
    %458 = arith.divf %456, %457 : vector<16x1xf32>
    %459 = vector.broadcast %458 : vector<16x1xf32> to vector<16x32xf32>
    %460 = arith.subf %450, %459 : vector<16x32xf32>
    %461 = arith.mulf %460, %460 : vector<16x32xf32>
    %cst_165 = arith.constant dense<0.000000e+00> : vector<16xf32>
    %462 = vector.multi_reduction <add>, %461, %cst_165 [1] : vector<16x32xf32> to vector<16xf32>
    %463 = vector.shape_cast %462 : vector<16xf32> to vector<16x1xf32>
    %cst_166 = arith.constant 3.200000e+01 : f32
    %464 = vector.broadcast %cst_166 : f32 to vector<16x1xf32>
    %465 = arith.divf %463, %464 : vector<16x1xf32>
    %cst_167 = arith.constant 9.99999974E-6 : f32
    %466 = vector.broadcast %cst_167 : f32 to vector<16x1xf32>
    %467 = arith.addf %465, %466 : vector<16x1xf32>
    %468 = math.rsqrt %467 : vector<16x1xf32>
    %469 = vector.broadcast %468 : vector<16x1xf32> to vector<16x32xf32>
    %470 = arith.mulf %460, %469 : vector<16x32xf32>
    %471 = vector.broadcast %452 : vector<1x32xf32> to vector<16x32xf32>
    %472 = arith.mulf %470, %471 : vector<16x32xf32>
    %473 = vector.broadcast %454 : vector<1x32xf32> to vector<16x32xf32>
    %474 = arith.addf %472, %473 : vector<16x32xf32>
    %c0_168 = arith.constant 0 : index
    %c0_169 = arith.constant 0 : index
    %475 = vector.load %arg26[%c0_168, %c0_169] : memref<16x32xf32, #tpu.memory_space<vmem>>, vector<16x32xf32>
    tpu.vector_store %arg26[%c0_168, %c0_169], %474 {strides = array<i32>} : memref<16x32xf32, #tpu.memory_space<vmem>>, vector<16x32xf32>,
    %c1_i32 = arith.constant 1 : i32
    %476 = arith.cmpi eq, %arg0, %c1_i32 : i32
    %477 = arith.extui %476 : i1 to i32
    %c0_i32_170 = arith.constant 0 : i32
    %478 = arith.cmpi ne, %477, %c0_i32_170 : i32
    scf.if %478 {
      %c0_171 = arith.constant 0 : index
      %c0_172 = arith.constant 0 : index
      %479 = vector.load %arg23[%c0_171, %c0_172] : memref<1x32xf32, #tpu.memory_space<vmem>>, vector<1x32xf32>
      %c0_173 = arith.constant 0 : index
      %c0_174 = arith.constant 0 : index
      %480 = vector.load %arg24[%c0_173, %c0_174] : memref<1x32xf32, #tpu.memory_space<vmem>>, vector<1x32xf32>
      %cst_175 = arith.constant dense<0.000000e+00> : vector<16xf32>
      %481 = vector.multi_reduction <add>, %474, %cst_175 [1] : vector<16x32xf32> to vector<16xf32>
      %482 = vector.shape_cast %481 : vector<16xf32> to vector<16x1xf32>
      %cst_176 = arith.constant 3.200000e+01 : f32
      %483 = vector.broadcast %cst_176 : f32 to vector<16x1xf32>
      %484 = arith.divf %482, %483 : vector<16x1xf32>
      %485 = vector.broadcast %484 : vector<16x1xf32> to vector<16x32xf32>
      %486 = arith.subf %474, %485 : vector<16x32xf32>
      %487 = arith.mulf %486, %486 : vector<16x32xf32>
      %cst_177 = arith.constant dense<0.000000e+00> : vector<16xf32>
      %488 = vector.multi_reduction <add>, %487, %cst_177 [1] : vector<16x32xf32> to vector<16xf32>
      %489 = vector.shape_cast %488 : vector<16xf32> to vector<16x1xf32>
      %cst_178 = arith.constant 3.200000e+01 : f32
      %490 = vector.broadcast %cst_178 : f32 to vector<16x1xf32>
      %491 = arith.divf %489, %490 : vector<16x1xf32>
      %cst_179 = arith.constant 9.99999974E-6 : f32
      %492 = vector.broadcast %cst_179 : f32 to vector<16x1xf32>
      %493 = arith.addf %491, %492 : vector<16x1xf32>
      %494 = math.rsqrt %493 : vector<16x1xf32>
      %495 = vector.broadcast %494 : vector<16x1xf32> to vector<16x32xf32>
      %496 = arith.mulf %486, %495 : vector<16x32xf32>
      %497 = vector.broadcast %479 : vector<1x32xf32> to vector<16x32xf32>
      %498 = arith.mulf %496, %497 : vector<16x32xf32>
      %499 = vector.broadcast %480 : vector<1x32xf32> to vector<16x32xf32>
      %500 = arith.addf %498, %499 : vector<16x32xf32>
      %c0_180 = arith.constant 0 : index
      %c0_181 = arith.constant 0 : index
      %501 = vector.load %arg25[%c0_180, %c0_181] : memref<16x32xf32, #tpu.memory_space<vmem>>, vector<16x32xf32>
      tpu.vector_store %arg25[%c0_180, %c0_181], %500 {strides = array<i32>} : memref<16x32xf32, #tpu.memory_space<vmem>>, vector<16x32xf32>,
    } else {
    }
    return
  }
  func.func @transform_0(%arg0: i32) -> (i32, i32) {
    %c0_i32 = arith.constant 0 : i32
    %c0_i32_0 = arith.constant 0 : i32
    %c0_i32_1 = arith.constant 0 : i32
    return %c0_i32, %c0_i32_0 : i32, i32
  }
  func.func @transform_1(%arg0: i32) -> (i32, i32) {
    %c0_i32 = arith.constant 0 : i32
    %c0_i32_0 = arith.constant 0 : i32
    %c0_i32_1 = arith.constant 0 : i32
    return %c0_i32, %c0_i32_0 : i32, i32
  }
  func.func @transform_2(%arg0: i32) -> (i32, i32, i32) {
    %c0_i32 = arith.constant 0 : i32
    %c0_i32_0 = arith.constant 0 : i32
    %c0_i32_1 = arith.constant 0 : i32
    return %arg0, %c0_i32, %c0_i32_0 : i32, i32, i32
  }
  func.func @transform_3(%arg0: i32) -> (i32, i32, i32) {
    %c0_i32 = arith.constant 0 : i32
    %c0_i32_0 = arith.constant 0 : i32
    %c0_i32_1 = arith.constant 0 : i32
    return %arg0, %c0_i32, %c0_i32_0 : i32, i32, i32
  }
  func.func @transform_4(%arg0: i32) -> (i32, i32, i32) {
    %c0_i32 = arith.constant 0 : i32
    %c0_i32_0 = arith.constant 0 : i32
    %c0_i32_1 = arith.constant 0 : i32
    return %arg0, %c0_i32, %c0_i32_0 : i32, i32, i32
  }
  func.func @transform_5(%arg0: i32) -> (i32, i32, i32) {
    %c0_i32 = arith.constant 0 : i32
    %c0_i32_0 = arith.constant 0 : i32
    %c0_i32_1 = arith.constant 0 : i32
    return %arg0, %c0_i32, %c0_i32_0 : i32, i32, i32
  }
  func.func @transform_6(%arg0: i32) -> (i32, i32, i32) {
    %c0_i32 = arith.constant 0 : i32
    %c0_i32_0 = arith.constant 0 : i32
    %c0_i32_1 = arith.constant 0 : i32
    return %arg0, %c0_i32, %c0_i32_0 : i32, i32, i32
  }
  func.func @transform_7(%arg0: i32) -> (i32, i32, i32) {
    %c0_i32 = arith.constant 0 : i32
    %c0_i32_0 = arith.constant 0 : i32
    %c0_i32_1 = arith.constant 0 : i32
    return %arg0, %c0_i32, %c0_i32_0 : i32, i32, i32
  }
  func.func @transform_8(%arg0: i32) -> (i32, i32, i32) {
    %c0_i32 = arith.constant 0 : i32
    %c0_i32_0 = arith.constant 0 : i32
    %c0_i32_1 = arith.constant 0 : i32
    return %arg0, %c0_i32, %c0_i32_0 : i32, i32, i32
  }
  func.func @transform_9(%arg0: i32) -> (i32, i32, i32) {
    %c0_i32 = arith.constant 0 : i32
    %c0_i32_0 = arith.constant 0 : i32
    %c0_i32_1 = arith.constant 0 : i32
    return %arg0, %c0_i32, %c0_i32_0 : i32, i32, i32
  }
  func.func @transform_10(%arg0: i32) -> (i32, i32, i32) {
    %c0_i32 = arith.constant 0 : i32
    %c0_i32_0 = arith.constant 0 : i32
    %c0_i32_1 = arith.constant 0 : i32
    return %arg0, %c0_i32, %c0_i32_0 : i32, i32, i32
  }
  func.func @transform_11(%arg0: i32) -> (i32, i32, i32) {
    %c0_i32 = arith.constant 0 : i32
    %c0_i32_0 = arith.constant 0 : i32
    %c0_i32_1 = arith.constant 0 : i32
    return %arg0, %c0_i32, %c0_i32_0 : i32, i32, i32
  }
  func.func @transform_12(%arg0: i32) -> (i32, i32, i32) {
    %c0_i32 = arith.constant 0 : i32
    %c0_i32_0 = arith.constant 0 : i32
    %c0_i32_1 = arith.constant 0 : i32
    return %arg0, %c0_i32, %c0_i32_0 : i32, i32, i32
  }
  func.func @transform_13(%arg0: i32) -> (i32, i32, i32) {
    %c0_i32 = arith.constant 0 : i32
    %c0_i32_0 = arith.constant 0 : i32
    %c0_i32_1 = arith.constant 0 : i32
    return %arg0, %c0_i32, %c0_i32_0 : i32, i32, i32
  }
  func.func @transform_14(%arg0: i32) -> (i32, i32, i32) {
    %c0_i32 = arith.constant 0 : i32
    %c0_i32_0 = arith.constant 0 : i32
    %c0_i32_1 = arith.constant 0 : i32
    return %arg0, %c0_i32, %c0_i32_0 : i32, i32, i32
  }
  func.func @transform_15(%arg0: i32) -> (i32, i32, i32) {
    %c0_i32 = arith.constant 0 : i32
    %c0_i32_0 = arith.constant 0 : i32
    %c0_i32_1 = arith.constant 0 : i32
    return %arg0, %c0_i32, %c0_i32_0 : i32, i32, i32
  }
  func.func @transform_16(%arg0: i32) -> (i32, i32, i32) {
    %c0_i32 = arith.constant 0 : i32
    %c0_i32_0 = arith.constant 0 : i32
    %c0_i32_1 = arith.constant 0 : i32
    return %arg0, %c0_i32, %c0_i32_0 : i32, i32, i32
  }
  func.func @transform_17(%arg0: i32) -> (i32, i32, i32) {
    %c0_i32 = arith.constant 0 : i32
    %c0_i32_0 = arith.constant 0 : i32
    %c0_i32_1 = arith.constant 0 : i32
    return %arg0, %c0_i32, %c0_i32_0 : i32, i32, i32
  }
  func.func @transform_18(%arg0: i32) -> (i32, i32, i32) {
    %c0_i32 = arith.constant 0 : i32
    %c0_i32_0 = arith.constant 0 : i32
    %c0_i32_1 = arith.constant 0 : i32
    return %arg0, %c0_i32, %c0_i32_0 : i32, i32, i32
  }
  func.func @transform_19(%arg0: i32) -> (i32, i32, i32) {
    %c0_i32 = arith.constant 0 : i32
    %c0_i32_0 = arith.constant 0 : i32
    %c0_i32_1 = arith.constant 0 : i32
    return %arg0, %c0_i32, %c0_i32_0 : i32, i32, i32
  }
  func.func @transform_20(%arg0: i32) -> (i32, i32, i32) {
    %c0_i32 = arith.constant 0 : i32
    %c0_i32_0 = arith.constant 0 : i32
    %c0_i32_1 = arith.constant 0 : i32
    return %arg0, %c0_i32, %c0_i32_0 : i32, i32, i32
  }
  func.func @transform_21(%arg0: i32) -> (i32, i32, i32) {
    %c0_i32 = arith.constant 0 : i32
    %c0_i32_0 = arith.constant 0 : i32
    %c0_i32_1 = arith.constant 0 : i32
    return %arg0, %c0_i32, %c0_i32_0 : i32, i32, i32
  }
  func.func @transform_22(%arg0: i32) -> (i32, i32) {
    %c0_i32 = arith.constant 0 : i32
    %c0_i32_0 = arith.constant 0 : i32
    %c0_i32_1 = arith.constant 0 : i32
    return %c0_i32, %c0_i32_0 : i32, i32
  }
  func.func @transform_23(%arg0: i32) -> (i32, i32) {
    %c0_i32 = arith.constant 0 : i32
    %c0_i32_0 = arith.constant 0 : i32
    %c0_i32_1 = arith.constant 0 : i32
    return %c0_i32, %c0_i32_0 : i32, i32
  }
  func.func @transform_24(%arg0: i32) -> (i32, i32) {
    %c0_i32 = arith.constant 0 : i32
    %c0_i32_0 = arith.constant 0 : i32
    %c0_i32_1 = arith.constant 0 : i32
    return %c0_i32, %c0_i32_0 : i32, i32
  }
}

</mosaic_0001>

<llo_original>
// kernel: my_transformer_forward.2
$region0: #{my_transformer_forward.2}
  #allocation0 [shape = 'u32[]', space=smem, size = 0x4, offset = 0x4, fixed_abs, tag = 'smem constant byte address 0x4 - core index']
  #allocation1 [shape = 'u32[144,128]{1,0:T(1,128)}', space=vmem, size = 0x12000, scoped, tag = 'internal scratch']
  #allocation2 [shape = 'f32[20,32]{1,0:T(8,128)}', space=vmem, size = 0x3000, scoped, tag = 'scratch operand']
  %s0 = inlined_call_operand.vmem [shape: f32[20,32], index: 0, kind: input, shape index: {}]
  %s1 = inlined_call_operand.vmem [shape: bf16[2,32,96], index: 1, kind: input, shape index: {}]
  %s2 = inlined_call_operand.vmem [shape: f32[2,1,96], index: 2, kind: input, shape index: {}]
  %s3 = inlined_call_operand.vmem [shape: bf16[2,32,32], index: 3, kind: input, shape index: {}]
  %s4 = inlined_call_operand.vmem [shape: f32[2,1,32], index: 4, kind: input, shape index: {}]
  %s5 = inlined_call_operand.vmem [shape: bf16[2,32,64], index: 5, kind: input, shape index: {}]
  %s6 = inlined_call_operand.vmem [shape: f32[2,1,64], index: 6, kind: input, shape index: {}]
  %s7 = inlined_call_operand.vmem [shape: bf16[2,64,32], index: 7, kind: input, shape index: {}]
  %s8 = inlined_call_operand.vmem [shape: f32[2,1,32], index: 8, kind: input, shape index: {}]
  %s9 = inlined_call_operand.vmem [shape: f32[2,1,32], index: 9, kind: input, shape index: {}]
  %s10 = inlined_call_operand.vmem [shape: f32[2,1,32], index: 10, kind: input, shape index: {}]
  %s11 = inlined_call_operand.vmem [shape: f32[2,1,32], index: 11, kind: input, shape index: {}]
  %s12 = inlined_call_operand.vmem [shape: f32[2,1,32], index: 12, kind: input, shape index: {}]
  %s13 = inlined_call_operand.vmem [shape: f32[1,32], index: 13, kind: input, shape index: {}]
  %s14 = inlined_call_operand.vmem [shape: f32[1,32], index: 14, kind: input, shape index: {}]
  %s15 = inlined_call_operand.vmem [shape: f32[20,32], index: 15, kind: output, shape index: {}]
  %s16 = sld [smem:[#allocation0]]
  $region101: #{my_transformer_forward.2} parent=0
    _
  %s18 = ssub.s32 1, %s16
  %s19 = scalar_select 0, %s18, %s16
  loop: start=0, step=1, limit=4
  $region2: #{my_transformer_forward.2} parent=0 // loop_pre_header
    _
  $region3: #{my_transformer_forward.2} parent=0 // loop_header
    %s21 = sphi 0, %s25
    %p22 = scmp.ge.s32.totalorder %s21, 4
    %s29 = sphi 0, %s29
    %s31 = sphi 0, %s29
    %s32 = sphi 0, %s31
    %s46 = sphi 0, %s32
    %s52 = sphi 0, %s54
    %s55 = sphi 0, %s52
    %s56 = sphi 0, %s55
    %s72 = sphi 0, %s56
    %s78 = sphi 0, %s80
    %s81 = sphi 0, %s78
    %s82 = sphi 0, %s81
    %s98 = sphi 0, %s82
    %s104 = sphi 0, %s106
    %s107 = sphi 0, %s104
    %s108 = sphi 0, %s107
    %s124 = sphi 0, %s108
    %s130 = sphi 0, %s132
    %s133 = sphi 0, %s130
    %s134 = sphi 0, %s133
    %s150 = sphi 0, %s134
    %s156 = sphi 0, %s158
    %s159 = sphi 0, %s156
    %s160 = sphi 0, %s159
    %s176 = sphi 0, %s160
    %s182 = sphi 0, %s184
    %s185 = sphi 0, %s182
    %s186 = sphi 0, %s185
    %s202 = sphi 0, %s186
    %s208 = sphi 0, %s210
    %s211 = sphi 0, %s208
    %s212 = sphi 0, %s211
    %s228 = sphi 0, %s212
    %s234 = sphi 0, %s236
    %s237 = sphi 0, %s234
    %s238 = sphi 0, %s237
    %s254 = sphi 0, %s238
    %s260 = sphi 0, %s262
    %s263 = sphi 0, %s260
    %s264 = sphi 0, %s263
    %s280 = sphi 0, %s264
    %s286 = sphi 0, %s288
    %s289 = sphi 0, %s286
    %s290 = sphi 0, %s289
    %s306 = sphi 0, %s290
    %s312 = sphi 0, %s314
    %s315 = sphi 0, %s312
    %s316 = sphi 0, %s315
    %s332 = sphi 0, %s316
    %s338 = sphi 0, %s340
    %s341 = sphi 0, %s338
    %s342 = sphi 0, %s341
    %s358 = sphi 0, %s342
    %s362 = sphi 0, %s362
    %s364 = sphi 0, %s362
    %s365 = sphi 0, %s364
    %s379 = sphi 0, %s365
    %s383 = sphi 0, %s383
    %s385 = sphi 0, %s383
    %s386 = sphi 0, %s385
    %s400 = sphi 0, %s386
    %s404 = sphi 0, %s404
    %s406 = sphi 0, %s404
    %s407 = sphi 0, %s406
    %s421 = sphi 0, %s407
  $region4: #{my_transformer_forward.2} parent=0 // loop_header_branch
    %24 = sbr.rel (%p22) target = $region8
  $region5: #{my_transformer_forward.2} parent=0 // loop_body
    %s26 = ssub.s32 %s21, 1
    %s27 = ssub.s32 %s21, 2
    %s28 = sadd.s32 %s21, 1
    %s30 = sadd.s32 %s29, 1
    %p33 = scmp.eq.s32.totalorder %s21, 1
    %p34 = scmp.ne.s32.totalorder %s29, %s31
    %p35 = scmp.eq.s32.totalorder %s21, 0
    %p36 = por %p34, %p35
    %p37 = scmp.ne.s32.totalorder %s29, %s31
    %p38 = scmp.eq.s32.totalorder %s26, 1
    %p39 = por %p37, %p38
    %p40 = scmp.ne.s32.totalorder %s31, %s32
    %p41 = scmp.eq.s32.totalorder %s26, 0
    %p42 = por %p40, %p41
    %p43 = scmp.ne.s32.totalorder %s31, %s32
    %p44 = scmp.eq.s32.totalorder %s27, 1
    %p45 = por %p43, %p44
    %p47 = scmp.ne.s32.totalorder %s32, %s46
    %p48 = scmp.eq.s32.totalorder %s27, 0
    %p49 = por %p47, %p48
    %s50 = ssub.s32 %s21, %s28
    %p51 = scmp.eq.s32.totalorder %s50, 0
    %s53 = sadd.s32 %s52, 1
    %s54 = scalar_select %p51, %s52, %s53
    %p57 = pneg %p51
    %p58 = scmp.eq.s32.totalorder %s21, 1
    %p59 = por %p57, %p58
    %p60 = scmp.ne.s32.totalorder %s52, %s55
    %p61 = scmp.eq.s32.totalorder %s21, 0
    %p62 = por %p60, %p61
    %p63 = scmp.ne.s32.totalorder %s52, %s55
    %p64 = scmp.eq.s32.totalorder %s26, 1
    %p65 = por %p63, %p64
    %p66 = scmp.ne.s32.totalorder %s55, %s56
    %p67 = scmp.eq.s32.totalorder %s26, 0
    %p68 = por %p66, %p67
    %p69 = scmp.ne.s32.totalorder %s55, %s56
    %p70 = scmp.eq.s32.totalorder %s27, 1
    %p71 = por %p69, %p70
    %p73 = scmp.ne.s32.totalorder %s56, %s72
    %p74 = scmp.eq.s32.totalorder %s27, 0
    %p75 = por %p73, %p74
    %s76 = ssub.s32 %s21, %s28
    %p77 = scmp.eq.s32.totalorder %s76, 0
    %s79 = sadd.s32 %s78, 1
    %s80 = scalar_select %p77, %s78, %s79
    %p83 = pneg %p77
    %p84 = scmp.eq.s32.totalorder %s21, 1
    %p85 = por %p83, %p84
    %p86 = scmp.ne.s32.totalorder %s78, %s81
    %p87 = scmp.eq.s32.totalorder %s21, 0
    %p88 = por %p86, %p87
    %p89 = scmp.ne.s32.totalorder %s78, %s81
    %p90 = scmp.eq.s32.totalorder %s26, 1
    %p91 = por %p89, %p90
    %p92 = scmp.ne.s32.totalorder %s81, %s82
    %p93 = scmp.eq.s32.totalorder %s26, 0
    %p94 = por %p92, %p93
    %p95 = scmp.ne.s32.totalorder %s81, %s82
    %p96 = scmp.eq.s32.totalorder %s27, 1
    %p97 = por %p95, %p96
    %p99 = scmp.ne.s32.totalorder %s82, %s98
    %p100 = scmp.eq.s32.totalorder %s27, 0
    %p101 = por %p99, %p100
    %s102 = ssub.s32 %s21, %s28
    %p103 = scmp.eq.s32.totalorder %s102, 0
    %s105 = sadd.s32 %s104, 1
    %s106 = scalar_select %p103, %s104, %s105
    %p109 = pneg %p103
    %p110 = scmp.eq.s32.totalorder %s21, 1
    %p111 = por %p109, %p110
    %p112 = scmp.ne.s32.totalorder %s104, %s107
    %p113 = scmp.eq.s32.totalorder %s21, 0
    %p114 = por %p112, %p113
    %p115 = scmp.ne.s32.totalorder %s104, %s107
    %p116 = scmp.eq.s32.totalorder %s26, 1
    %p117 = por %p115, %p116
    %p118 = scmp.ne.s32.totalorder %s107, %s108
    %p119 = scmp.eq.s32.totalorder %s26, 0
    %p120 = por %p118, %p119
    %p121 = scmp.ne.s32.totalorder %s107, %s108
    %p122 = scmp.eq.s32.totalorder %s27, 1
    %p123 = por %p121, %p122
    %p125 = scmp.ne.s32.totalorder %s108, %s124
    %p126 = scmp.eq.s32.totalorder %s27, 0
    %p127 = por %p125, %p126
    %s128 = ssub.s32 %s21, %s28
    %p129 = scmp.eq.s32.totalorder %s128, 0
    %s131 = sadd.s32 %s130, 1
    %s132 = scalar_select %p129, %s130, %s131
    %p135 = pneg %p129
    %p136 = scmp.eq.s32.totalorder %s21, 1
    %p137 = por %p135, %p136
    %p138 = scmp.ne.s32.totalorder %s130, %s133
    %p139 = scmp.eq.s32.totalorder %s21, 0
    %p140 = por %p138, %p139
    %p141 = scmp.ne.s32.totalorder %s130, %s133
    %p142 = scmp.eq.s32.totalorder %s26, 1
    %p143 = por %p141, %p142
    %p144 = scmp.ne.s32.totalorder %s133, %s134
    %p145 = scmp.eq.s32.totalorder %s26, 0
    %p146 = por %p144, %p145
    %p147 = scmp.ne.s32.totalorder %s133, %s134
    %p148 = scmp.eq.s32.totalorder %s27, 1
    %p149 = por %p147, %p148
    %p151 = scmp.ne.s32.totalorder %s134, %s150
    %p152 = scmp.eq.s32.totalorder %s27, 0
    %p153 = por %p151, %p152
    %s154 = ssub.s32 %s21, %s28
    %p155 = scmp.eq.s32.totalorder %s154, 0
    %s157 = sadd.s32 %s156, 1
    %s158 = scalar_select %p155, %s156, %s157
    %p161 = pneg %p155
    %p162 = scmp.eq.s32.totalorder %s21, 1
    %p163 = por %p161, %p162
    %p164 = scmp.ne.s32.totalorder %s156, %s159
    %p165 = scmp.eq.s32.totalorder %s21, 0
    %p166 = por %p164, %p165
    %p167 = scmp.ne.s32.totalorder %s156, %s159
    %p168 = scmp.eq.s32.totalorder %s26, 1
    %p169 = por %p167, %p168
    %p170 = scmp.ne.s32.totalorder %s159, %s160
    %p171 = scmp.eq.s32.totalorder %s26, 0
    %p172 = por %p170, %p171
    %p173 = scmp.ne.s32.totalorder %s159, %s160
    %p174 = scmp.eq.s32.totalorder %s27, 1
    %p175 = por %p173, %p174
    %p177 = scmp.ne.s32.totalorder %s160, %s176
    %p178 = scmp.eq.s32.totalorder %s27, 0
    %p179 = por %p177, %p178
    %s180 = ssub.s32 %s21, %s28
    %p181 = scmp.eq.s32.totalorder %s180, 0
    %s183 = sadd.s32 %s182, 1
    %s184 = scalar_select %p181, %s182, %s183
    %p187 = pneg %p181
    %p188 = scmp.eq.s32.totalorder %s21, 1
    %p189 = por %p187, %p188
    %p190 = scmp.ne.s32.totalorder %s182, %s185
    %p191 = scmp.eq.s32.totalorder %s21, 0
    %p192 = por %p190, %p191
    %p193 = scmp.ne.s32.totalorder %s182, %s185
    %p194 = scmp.eq.s32.totalorder %s26, 1
    %p195 = por %p193, %p194
    %p196 = scmp.ne.s32.totalorder %s185, %s186
    %p197 = scmp.eq.s32.totalorder %s26, 0
    %p198 = por %p196, %p197
    %p199 = scmp.ne.s32.totalorder %s185, %s186
    %p200 = scmp.eq.s32.totalorder %s27, 1
    %p201 = por %p199, %p200
    %p203 = scmp.ne.s32.totalorder %s186, %s202
    %p204 = scmp.eq.s32.totalorder %s27, 0
    %p205 = por %p203, %p204
    %s206 = ssub.s32 %s21, %s28
    %p207 = scmp.eq.s32.totalorder %s206, 0
    %s209 = sadd.s32 %s208, 1
    %s210 = scalar_select %p207, %s208, %s209
    %p213 = pneg %p207
    %p214 = scmp.eq.s32.totalorder %s21, 1
    %p215 = por %p213, %p214
    %p216 = scmp.ne.s32.totalorder %s208, %s211
    %p217 = scmp.eq.s32.totalorder %s21, 0
    %p218 = por %p216, %p217
    %p219 = scmp.ne.s32.totalorder %s208, %s211
    %p220 = scmp.eq.s32.totalorder %s26, 1
    %p221 = por %p219, %p220
    %p222 = scmp.ne.s32.totalorder %s211, %s212
    %p223 = scmp.eq.s32.totalorder %s26, 0
    %p224 = por %p222, %p223
    %p225 = scmp.ne.s32.totalorder %s211, %s212
    %p226 = scmp.eq.s32.totalorder %s27, 1
    %p227 = por %p225, %p226
    %p229 = scmp.ne.s32.totalorder %s212, %s228
    %p230 = scmp.eq.s32.totalorder %s27, 0
    %p231 = por %p229, %p230
    %s232 = ssub.s32 %s21, %s28
    %p233 = scmp.eq.s32.totalorder %s232, 0
    %s235 = sadd.s32 %s234, 1
    %s236 = scalar_select %p233, %s234, %s235
    %p239 = pneg %p233
    %p240 = scmp.eq.s32.totalorder %s21, 1
    %p241 = por %p239, %p240
    %p242 = scmp.ne.s32.totalorder %s234, %s237
    %p243 = scmp.eq.s32.totalorder %s21, 0
    %p244 = por %p242, %p243
    %p245 = scmp.ne.s32.totalorder %s234, %s237
    %p246 = scmp.eq.s32.totalorder %s26, 1
    %p247 = por %p245, %p246
    %p248 = scmp.ne.s32.totalorder %s237, %s238
    %p249 = scmp.eq.s32.totalorder %s26, 0
    %p250 = por %p248, %p249
    %p251 = scmp.ne.s32.totalorder %s237, %s238
    %p252 = scmp.eq.s32.totalorder %s27, 1
    %p253 = por %p251, %p252
    %p255 = scmp.ne.s32.totalorder %s238, %s254
    %p256 = scmp.eq.s32.totalorder %s27, 0
    %p257 = por %p255, %p256
    %s258 = ssub.s32 %s21, %s28
    %p259 = scmp.eq.s32.totalorder %s258, 0
    %s261 = sadd.s32 %s260, 1
    %s262 = scalar_select %p259, %s260, %s261
    %p265 = pneg %p259
    %p266 = scmp.eq.s32.totalorder %s21, 1
    %p267 = por %p265, %p266
    %p268 = scmp.ne.s32.totalorder %s260, %s263
    %p269 = scmp.eq.s32.totalorder %s21, 0
    %p270 = por %p268, %p269
    %p271 = scmp.ne.s32.totalorder %s260, %s263
    %p272 = scmp.eq.s32.totalorder %s26, 1
    %p273 = por %p271, %p272
    %p274 = scmp.ne.s32.totalorder %s263, %s264
    %p275 = scmp.eq.s32.totalorder %s26, 0
    %p276 = por %p274, %p275
    %p277 = scmp.ne.s32.totalorder %s263, %s264
    %p278 = scmp.eq.s32.totalorder %s27, 1
    %p279 = por %p277, %p278
    %p281 = scmp.ne.s32.totalorder %s264, %s280
    %p282 = scmp.eq.s32.totalorder %s27, 0
    %p283 = por %p281, %p282
    %s284 = ssub.s32 %s21, %s28
    %p285 = scmp.eq.s32.totalorder %s284, 0
    %s287 = sadd.s32 %s286, 1
    %s288 = scalar_select %p285, %s286, %s287
    %p291 = pneg %p285
    %p292 = scmp.eq.s32.totalorder %s21, 1
    %p293 = por %p291, %p292
    %p294 = scmp.ne.s32.totalorder %s286, %s289
    %p295 = scmp.eq.s32.totalorder %s21, 0
    %p296 = por %p294, %p295
    %p297 = scmp.ne.s32.totalorder %s286, %s289
    %p298 = scmp.eq.s32.totalorder %s26, 1
    %p299 = por %p297, %p298
    %p300 = scmp.ne.s32.totalorder %s289, %s290
    %p301 = scmp.eq.s32.totalorder %s26, 0
    %p302 = por %p300, %p301
    %p303 = scmp.ne.s32.totalorder %s289, %s290
    %p304 = scmp.eq.s32.totalorder %s27, 1
    %p305 = por %p303, %p304
    %p307 = scmp.ne.s32.totalorder %s290, %s306
    %p308 = scmp.eq.s32.totalorder %s27, 0
    %p309 = por %p307, %p308
    %s310 = ssub.s32 %s21, %s28
    %p311 = scmp.eq.s32.totalorder %s310, 0
    %s313 = sadd.s32 %s312, 1
    %s314 = scalar_select %p311, %s312, %s313
    %p317 = pneg %p311
    %p318 = scmp.eq.s32.totalorder %s21, 1
    %p319 = por %p317, %p318
    %p320 = scmp.ne.s32.totalorder %s312, %s315
    %p321 = scmp.eq.s32.totalorder %s21, 0
    %p322 = por %p320, %p321
    %p323 = scmp.ne.s32.totalorder %s312, %s315
    %p324 = scmp.eq.s32.totalorder %s26, 1
    %p325 = por %p323, %p324
    %p326 = scmp.ne.s32.totalorder %s315, %s316
    %p327 = scmp.eq.s32.totalorder %s26, 0
    %p328 = por %p326, %p327
    %p329 = scmp.ne.s32.totalorder %s315, %s316
    %p330 = scmp.eq.s32.totalorder %s27, 1
    %p331 = por %p329, %p330
    %p333 = scmp.ne.s32.totalorder %s316, %s332
    %p334 = scmp.eq.s32.totalorder %s27, 0
    %p335 = por %p333, %p334
    %s336 = ssub.s32 %s21, %s28
    %p337 = scmp.eq.s32.totalorder %s336, 0
    %s339 = sadd.s32 %s338, 1
    %s340 = scalar_select %p337, %s338, %s339
    %p343 = pneg %p337
    %p344 = scmp.eq.s32.totalorder %s21, 1
    %p345 = por %p343, %p344
    %p346 = scmp.ne.s32.totalorder %s338, %s341
    %p347 = scmp.eq.s32.totalorder %s21, 0
    %p348 = por %p346, %p347
    %p349 = scmp.ne.s32.totalorder %s338, %s341
    %p350 = scmp.eq.s32.totalorder %s26, 1
    %p351 = por %p349, %p350
    %p352 = scmp.ne.s32.totalorder %s341, %s342
    %p353 = scmp.eq.s32.totalorder %s26, 0
    %p354 = por %p352, %p353
    %p355 = scmp.ne.s32.totalorder %s341, %s342
    %p356 = scmp.eq.s32.totalorder %s27, 1
    %p357 = por %p355, %p356
    %p359 = scmp.ne.s32.totalorder %s342, %s358
    %p360 = scmp.eq.s32.totalorder %s27, 0
    %p361 = por %p359, %p360
    %s363 = sadd.s32 %s362, 1
    %p366 = scmp.eq.s32.totalorder %s21, 1
    %p367 = scmp.ne.s32.totalorder %s362, %s364
    %p368 = scmp.eq.s32.totalorder %s21, 0
    %p369 = por %p367, %p368
    %p370 = scmp.ne.s32.totalorder %s362, %s364
    %p371 = scmp.eq.s32.totalorder %s26, 1
    %p372 = por %p370, %p371
    %p373 = scmp.ne.s32.totalorder %s364, %s365
    %p374 = scmp.eq.s32.totalorder %s26, 0
    %p375 = por %p373, %p374
    %p376 = scmp.ne.s32.totalorder %s364, %s365
    %p377 = scmp.eq.s32.totalorder %s27, 1
    %p378 = por %p376, %p377
    %p380 = scmp.ne.s32.totalorder %s365, %s379
    %p381 = scmp.eq.s32.totalorder %s27, 0
    %p382 = por %p380, %p381
    %s384 = sadd.s32 %s383, 1
    %p387 = scmp.eq.s32.totalorder %s21, 1
    %p388 = scmp.ne.s32.totalorder %s383, %s385
    %p389 = scmp.eq.s32.totalorder %s21, 0
    %p390 = por %p388, %p389
    %p391 = scmp.ne.s32.totalorder %s383, %s385
    %p392 = scmp.eq.s32.totalorder %s26, 1
    %p393 = por %p391, %p392
    %p394 = scmp.ne.s32.totalorder %s385, %s386
    %p395 = scmp.eq.s32.totalorder %s26, 0
    %p396 = por %p394, %p395
    %p397 = scmp.ne.s32.totalorder %s385, %s386
    %p398 = scmp.eq.s32.totalorder %s27, 1
    %p399 = por %p397, %p398
    %p401 = scmp.ne.s32.totalorder %s386, %s400
    %p402 = scmp.eq.s32.totalorder %s27, 0
    %p403 = por %p401, %p402
    %s405 = sadd.s32 %s404, 1
    %p408 = scmp.eq.s32.totalorder %s21, 1
    %p409 = scmp.ne.s32.totalorder %s404, %s406
    %p410 = scmp.eq.s32.totalorder %s21, 0
    %p411 = por %p409, %p410
    %p412 = scmp.ne.s32.totalorder %s404, %s406
    %p413 = scmp.eq.s32.totalorder %s26, 1
    %p414 = por %p412, %p413
    %p415 = scmp.ne.s32.totalorder %s406, %s407
    %p416 = scmp.eq.s32.totalorder %s26, 0
    %p417 = por %p415, %p416
    %p418 = scmp.ne.s32.totalorder %s406, %s407
    %p419 = scmp.eq.s32.totalorder %s27, 1
    %p420 = por %p418, %p419
    %p422 = scmp.ne.s32.totalorder %s407, %s421
    %p423 = scmp.eq.s32.totalorder %s27, 0
    %p424 = por %p422, %p423
    %p425 = scmp.le.s32.totalorder 1, %s21
    %p426 = scmp.lt.s32.totalorder %s21, 3
    %p427 = pnand %p425, %p426
    %p428 = pneg %p427
    // Predicated region
    $region9: #{my_transformer_forward.2} parent=5 // pred_check
      _
    $region10: #{my_transformer_forward.2} parent=5 // pred_check_branch
      %430 = sbr.rel (%p427) target = $region12
    $region11: #{my_transformer_forward.2} parent=5 // pred_region
      %s431 = ssub.s32 %s21, 1
      // Predicated region
      $region13: #{my_transformer_forward.2} parent=11 // pred_check
        %p432 = pneg %p42
      $region14: #{my_transformer_forward.2} parent=11 // pred_check_branch
        %434 = sbr.rel (%p432) target = $region16
      $region15: #{my_transformer_forward.2} parent=11 // pred_region
        _
      $region16: #{my_transformer_forward.2} parent=11 // pred_fallthru
        _
      // Predicated region
      $region17: #{my_transformer_forward.2} parent=11 // pred_check
        %p435 = pneg %p375
      $region18: #{my_transformer_forward.2} parent=11 // pred_check_branch
        %437 = sbr.rel (%p435) target = $region20
      $region19: #{my_transformer_forward.2} parent=11 // pred_region
        _
      $region20: #{my_transformer_forward.2} parent=11 // pred_fallthru
        _
      // Predicated region
      $region21: #{my_transformer_forward.2} parent=11 // pred_check
        %p438 = pneg %p396
      $region22: #{my_transformer_forward.2} parent=11 // pred_check_branch
        %440 = sbr.rel (%p438) target = $region24
      $region23: #{my_transformer_forward.2} parent=11 // pred_region
        _
      $region24: #{my_transformer_forward.2} parent=11 // pred_fallthru
        _
    $region12: #{my_transformer_forward.2} parent=5 // pred_fallthru
      _
    %p441 = scmp.lt.s32.totalorder %s21, 2
    // Predicated region
    $region25: #{my_transformer_forward.2} parent=5 // pred_check
      %p442 = pneg %p441
    $region26: #{my_transformer_forward.2} parent=5 // pred_check_branch
      %444 = sbr.rel (%p442) target = $region28
    $region27: #{my_transformer_forward.2} parent=5 // pred_region
      // Predicated region
      $region29: #{my_transformer_forward.2} parent=27 // pred_check
        %p445 = pneg %p62
      $region30: #{my_transformer_forward.2} parent=27 // pred_check_branch
        %447 = sbr.rel (%p445) target = $region32
      $region31: #{my_transformer_forward.2} parent=27 // pred_region
        %p448 = scmp.lt.s32.totalorder %s21, 1
        %s449 = scalar_select %p448, %s21, 1
        %s450 = smul.addr %s449, 4
        %s451 = smul.addr %s450, 4
        %s452 = scalar_lea.vmem %s1, %s451
      $region32: #{my_transformer_forward.2} parent=27 // pred_fallthru
        _
      // Predicated region
      $region33: #{my_transformer_forward.2} parent=27 // pred_check
        %p453 = pneg %p88
      $region34: #{my_transformer_forward.2} parent=27 // pred_check_branch
        %455 = sbr.rel (%p453) target = $region36
      $region35: #{my_transformer_forward.2} parent=27 // pred_region
        %p456 = scmp.lt.s32.totalorder %s21, 1
        %s457 = scalar_select %p456, %s21, 1
        %s458 = scalar_lea.vmem %s2, %s457
      $region36: #{my_transformer_forward.2} parent=27 // pred_fallthru
        _
      // Predicated region
      $region37: #{my_transformer_forward.2} parent=27 // pred_check
        %p459 = pneg %p114
      $region38: #{my_transformer_forward.2} parent=27 // pred_check_branch
        %461 = sbr.rel (%p459) target = $region40
      $region39: #{my_transformer_forward.2} parent=27 // pred_region
        %p462 = scmp.lt.s32.totalorder %s21, 1
        %s463 = scalar_select %p462, %s21, 1
        %s464 = smul.addr %s463, 4
        %s465 = smul.addr %s464, 4
        %s466 = scalar_lea.vmem %s3, %s465
      $region40: #{my_transformer_forward.2} parent=27 // pred_fallthru
        _
      // Predicated region
      $region41: #{my_transformer_forward.2} parent=27 // pred_check
        %p467 = pneg %p140
      $region42: #{my_transformer_forward.2} parent=27 // pred_check_branch
        %469 = sbr.rel (%p467) target = $region44
      $region43: #{my_transformer_forward.2} parent=27 // pred_region
        %p470 = scmp.lt.s32.totalorder %s21, 1
        %s471 = scalar_select %p470, %s21, 1
        %s472 = scalar_lea.vmem %s4, %s471
      $region44: #{my_transformer_forward.2} parent=27 // pred_fallthru
        _
      // Predicated region
      $region45: #{my_transformer_forward.2} parent=27 // pred_check
        %p473 = pneg %p166
      $region46: #{my_transformer_forward.2} parent=27 // pred_check_branch
        %475 = sbr.rel (%p473) target = $region48
      $region47: #{my_transformer_forward.2} parent=27 // pred_region
        %p476 = scmp.lt.s32.totalorder %s21, 1
        %s477 = scalar_select %p476, %s21, 1
        %s478 = smul.addr %s477, 4
        %s479 = smul.addr %s478, 4
        %s480 = scalar_lea.vmem %s5, %s479
      $region48: #{my_transformer_forward.2} parent=27 // pred_fallthru
        _
      // Predicated region
      $region49: #{my_transformer_forward.2} parent=27 // pred_check
        %p481 = pneg %p192
      $region50: #{my_transformer_forward.2} parent=27 // pred_check_branch
        %483 = sbr.rel (%p481) target = $region52
      $region51: #{my_transformer_forward.2} parent=27 // pred_region
        %p484 = scmp.lt.s32.totalorder %s21, 1
        %s485 = scalar_select %p484, %s21, 1
        %s486 = scalar_lea.vmem %s6, %s485
      $region52: #{my_transformer_forward.2} parent=27 // pred_fallthru
        _
      // Predicated region
      $region53: #{my_transformer_forward.2} parent=27 // pred_check
        %p487 = pneg %p218
      $region54: #{my_transformer_forward.2} parent=27 // pred_check_branch
        %489 = sbr.rel (%p487) target = $region56
      $region55: #{my_transformer_forward.2} parent=27 // pred_region
        %p490 = scmp.lt.s32.totalorder %s21, 1
        %s491 = scalar_select %p490, %s21, 1
        %s492 = smul.addr %s491, 8
        %s493 = smul.addr %s492, 4
        %s494 = scalar_lea.vmem %s7, %s493
      $region56: #{my_transformer_forward.2} parent=27 // pred_fallthru
        _
      // Predicated region
      $region57: #{my_transformer_forward.2} parent=27 // pred_check
        %p495 = pneg %p244
      $region58: #{my_transformer_forward.2} parent=27 // pred_check_branch
        %497 = sbr.rel (%p495) target = $region60
      $region59: #{my_transformer_forward.2} parent=27 // pred_region
        %p498 = scmp.lt.s32.totalorder %s21, 1
        %s499 = scalar_select %p498, %s21, 1
        %s500 = scalar_lea.vmem %s8, %s499
      $region60: #{my_transformer_forward.2} parent=27 // pred_fallthru
        _
      // Predicated region
      $region61: #{my_transformer_forward.2} parent=27 // pred_check
        %p501 = pneg %p270
      $region62: #{my_transformer_forward.2} parent=27 // pred_check_branch
        %503 = sbr.rel (%p501) target = $region64
      $region63: #{my_transformer_forward.2} parent=27 // pred_region
        %p504 = scmp.lt.s32.totalorder %s21, 1
        %s505 = scalar_select %p504, %s21, 1
        %s506 = scalar_lea.vmem %s9, %s505
      $region64: #{my_transformer_forward.2} parent=27 // pred_fallthru
        _
      // Predicated region
      $region65: #{my_transformer_forward.2} parent=27 // pred_check
        %p507 = pneg %p296
      $region66: #{my_transformer_forward.2} parent=27 // pred_check_branch
        %509 = sbr.rel (%p507) target = $region68
      $region67: #{my_transformer_forward.2} parent=27 // pred_region
        %p510 = scmp.lt.s32.totalorder %s21, 1
        %s511 = scalar_select %p510, %s21, 1
        %s512 = scalar_lea.vmem %s10, %s511
      $region68: #{my_transformer_forward.2} parent=27 // pred_fallthru
        _
      // Predicated region
      $region69: #{my_transformer_forward.2} parent=27 // pred_check
        %p513 = pneg %p322
      $region70: #{my_transformer_forward.2} parent=27 // pred_check_branch
        %515 = sbr.rel (%p513) target = $region72
      $region71: #{my_transformer_forward.2} parent=27 // pred_region
        %p516 = scmp.lt.s32.totalorder %s21, 1
        %s517 = scalar_select %p516, %s21, 1
        %s518 = scalar_lea.vmem %s11, %s517
      $region72: #{my_transformer_forward.2} parent=27 // pred_fallthru
        _
      // Predicated region
      $region73: #{my_transformer_forward.2} parent=27 // pred_check
        %p519 = pneg %p348
      $region74: #{my_transformer_forward.2} parent=27 // pred_check_branch
        %521 = sbr.rel (%p519) target = $region76
      $region75: #{my_transformer_forward.2} parent=27 // pred_region
        %p522 = scmp.lt.s32.totalorder %s21, 1
        %s523 = scalar_select %p522, %s21, 1
        %s524 = scalar_lea.vmem %s12, %s523
      $region76: #{my_transformer_forward.2} parent=27 // pred_fallthru
        _
    $region28: #{my_transformer_forward.2} parent=5 // pred_fallthru
      _
    %p525 = scmp.le.s32.totalorder 1, %s21
    %p526 = scmp.lt.s32.totalorder %s21, 3
    %p527 = pnand %p525, %p526
    %p528 = pneg %p527
    // Predicated region
    $region77: #{my_transformer_forward.2} parent=5 // pred_check
      _
    $region78: #{my_transformer_forward.2} parent=5 // pred_check_branch
      %530 = sbr.rel (%p527) target = $region80
    $region79: #{my_transformer_forward.2} parent=5 // pred_region
      %s531 = ssub.s32 %s21, 1
      %p532 = pneg %p42
      %p533 = pneg %p39
      %p534 = scmp.lt.s32.totalorder %s26, 1
      %s535 = scalar_select %p534, %s26, 1
      %s536 = smul.addr %s535, 4
      %s537 = smul.addr %s536, 4
      %s538 = scalar_lea.vmem %s1, %s537
      %p539 = pneg %p68
      %p540 = pneg %p65
      %p541 = scmp.lt.s32.totalorder %s26, 1
      %s542 = scalar_select %p541, %s26, 1
      %s543 = scalar_lea.vmem %s2, %s542
      %p544 = pneg %p94
      %p545 = pneg %p91
      %p546 = scmp.lt.s32.totalorder %s26, 1
      %s547 = scalar_select %p546, %s26, 1
      %s548 = smul.addr %s547, 4
      %s549 = smul.addr %s548, 4
      %s550 = scalar_lea.vmem %s3, %s549
      %p551 = pneg %p120
      %p552 = pneg %p117
      %p553 = scmp.lt.s32.totalorder %s26, 1
      %s554 = scalar_select %p553, %s26, 1
      %s555 = scalar_lea.vmem %s4, %s554
      %p556 = pneg %p146
      %p557 = pneg %p143
      %p558 = scmp.lt.s32.totalorder %s26, 1
      %s559 = scalar_select %p558, %s26, 1
      %s560 = smul.addr %s559, 4
      %s561 = smul.addr %s560, 4
      %s562 = scalar_lea.vmem %s5, %s561
      %p563 = pneg %p172
      %p564 = pneg %p169
      %p565 = scmp.lt.s32.totalorder %s26, 1
      %s566 = scalar_select %p565, %s26, 1
      %s567 = scalar_lea.vmem %s6, %s566
      %p568 = pneg %p198
      %p569 = pneg %p195
      %p570 = scmp.lt.s32.totalorder %s26, 1
      %s571 = scalar_select %p570, %s26, 1
      %s572 = smul.addr %s571, 8
      %s573 = smul.addr %s572, 4
      %s574 = scalar_lea.vmem %s7, %s573
      %p575 = pneg %p224
      %p576 = pneg %p221
      %p577 = scmp.lt.s32.totalorder %s26, 1
      %s578 = scalar_select %p577, %s26, 1
      %s579 = scalar_lea.vmem %s8, %s578
      %p580 = pneg %p250
      %p581 = pneg %p247
      %p582 = scmp.lt.s32.totalorder %s26, 1
      %s583 = scalar_select %p582, %s26, 1
      %s584 = scalar_lea.vmem %s9, %s583
      %p585 = pneg %p276
      %p586 = pneg %p273
      %p587 = scmp.lt.s32.totalorder %s26, 1
      %s588 = scalar_select %p587, %s26, 1
      %s589 = scalar_lea.vmem %s10, %s588
      %p590 = pneg %p302
      %p591 = pneg %p299
      %p592 = scmp.lt.s32.totalorder %s26, 1
      %s593 = scalar_select %p592, %s26, 1
      %s594 = scalar_lea.vmem %s11, %s593
      %p595 = pneg %p328
      %p596 = pneg %p325
      %p597 = scmp.lt.s32.totalorder %s26, 1
      %s598 = scalar_select %p597, %s26, 1
      %s599 = scalar_lea.vmem %s12, %s598
      %p600 = pneg %p354
      %p601 = pneg %p351
      %p602 = pneg %p375
      %p603 = pneg %p372
      %p604 = pneg %p396
      %p605 = pneg %p393
      %p606 = pneg %p417
      %p607 = pneg %p414
      %p608 = scmp.lt.s32.totalorder %s26, 1
      %s609 = scalar_select %p608, %s26, 1
      %s610 = smul.addr %s609, 4
      %s611 = smul.addr %s610, 4
      %s612 = scalar_lea.vmem %s1, %s611
      %p613 = scmp.lt.s32.totalorder %s26, 1
      %s614 = scalar_select %p613, %s26, 1
      %s615 = scalar_lea.vmem %s2, %s614
      %p616 = scmp.lt.s32.totalorder %s26, 1
      %s617 = scalar_select %p616, %s26, 1
      %s618 = smul.addr %s617, 4
      %s619 = smul.addr %s618, 4
      %s620 = scalar_lea.vmem %s3, %s619
      %p621 = scmp.lt.s32.totalorder %s26, 1
      %s622 = scalar_select %p621, %s26, 1
      %s623 = scalar_lea.vmem %s4, %s622
      %p624 = scmp.lt.s32.totalorder %s26, 1
      %s625 = scalar_select %p624, %s26, 1
      %s626 = smul.addr %s625, 4
      %s627 = smul.addr %s626, 4
      %s628 = scalar_lea.vmem %s5, %s627
      %p629 = scmp.lt.s32.totalorder %s26, 1
      %s630 = scalar_select %p629, %s26, 1
      %s631 = scalar_lea.vmem %s6, %s630
      %p632 = scmp.lt.s32.totalorder %s26, 1
      %s633 = scalar_select %p632, %s26, 1
      %s634 = smul.addr %s633, 8
      %s635 = smul.addr %s634, 4
      %s636 = scalar_lea.vmem %s7, %s635
      %p637 = scmp.lt.s32.totalorder %s26, 1
      %s638 = scalar_select %p637, %s26, 1
      %s639 = scalar_lea.vmem %s8, %s638
      %p640 = scmp.lt.s32.totalorder %s26, 1
      %s641 = scalar_select %p640, %s26, 1
      %s642 = scalar_lea.vmem %s9, %s641
      %p643 = scmp.lt.s32.totalorder %s26, 1
      %s644 = scalar_select %p643, %s26, 1
      %s645 = scalar_lea.vmem %s10, %s644
      %p646 = scmp.lt.s32.totalorder %s26, 1
      %s647 = scalar_select %p646, %s26, 1
      %s648 = scalar_lea.vmem %s11, %s647
      %p649 = scmp.lt.s32.totalorder %s26, 1
      %s650 = scalar_select %p649, %s26, 1
      %s651 = scalar_lea.vmem %s12, %s650
      %p653 = scmp.eq.s32.totalorder %s26, 0
      // Predicated region
      $region81: #{my_transformer_forward.2} parent=79 // pred_check
        %p654 = pneg %p653
      $region82: #{my_transformer_forward.2} parent=79 // pred_check_branch
        %656 = sbr.rel (%p654) target = $region84
      $region83: #{my_transformer_forward.2} parent=79 // pred_region
        %v657 = vld [vmem:[%s0] sm:$0xff]
        %v658 = vld [vmem:[%s0 + $0x8] sm:$0xff]
        %v659 = vld [vmem:[%s0 + $0x10] sm:$0xf]
        %vm660 = vcmask 261120
        %661 = vst.msk [vmem:[#allocation2] sm:$0xff] %vm660, %v657
        %662 = vst.msk [vmem:[#allocation2 + $0x8] sm:$0xff] %vm660, %v658
        %vm663 = vcmask 257024
        %664 = vst.msk [vmem:[#allocation2 + $0x10] sm:$0xf] %vm663, %v659
      $region84: #{my_transformer_forward.2} parent=79 // pred_fallthru
        _
      %v665 = vld [vmem:[#allocation2] sm:$0xff]
      %v666 = vld [vmem:[#allocation2 + $0x8] sm:$0xff]
      %v667 = vld [vmem:[#allocation2 + $0x10] sm:$0xf]
      %v668 = vpack.c.bf16 %v666, %v665
      %v669 = vpack.c.bf16 %v667, %v667
      %v670 = vld [vmem:[%s612] sm:$0xf]
      %v671 = vld [vmem:[%s612 + $0x4] sm:$0xf]
      %v672 = vld [vmem:[%s612 + $0x8] sm:$0xf]
      %v673 = vld [vmem:[%s612 + $0xc] sm:$0xf]
      %v674 = vld [vmem:[%s615] sm:$0x1]
      %v676 = vlaneseq
      %v677 = vshrl.u32 %v676, 7
      %v678 = vsub.s32 0, %v677
      %v679 = vrot.slane %v674, %v678
      %v685 = vunpack.c.l.b16 %v670
      %v686 = vunpack.c.l.b16 %v671
      %v687 = vunpack.c.l.b16 %v672
      %v688 = vunpack.c.l.b16 %v673
      %v689 = vpack.c.b16 %v686, %v685
      %v690 = vpack.c.b16 %v688, %v687
      %vm693 = vcmask 261120
      %v695 = vsel %vm693, %v668, 0
      %v698 = vsel %vm693, %v669, 0
      %700 = vmatprep.subr.bf16.mxu0 0
      %701 = vmatpush1.bf16.msra.mxu0 %v689
      %702 = vmatprep.subr.bf16.mxu0 0
      %703 = vmatpush1.bf16.msra.mxu0 %v690
      %704 = vmatprep.subr.bf16.mxu0 0
      %705 = vmatpush1.bf16.msra.mxu0 0
      %706 = vmatprep.subr.bf16.mxu0 0
      %707 = vmatpush1.bf16.msra.mxu0 0
      %708 = vmatprep.subr.bf16.mxu0 0
      %709 = vmatpush1.bf16.msra.mxu0 0
      %710 = vmatprep.subr.bf16.mxu0 0
      %711 = vmatpush1.bf16.msra.mxu0 0
      %712 = vmatprep.subr.bf16.mxu0 0
      %713 = vmatpush1.bf16.msra.mxu0 0
      %714 = vmatprep.subr.bf16.mxu0 0
      %715 = vmatpush1.bf16.msra.mxu0 0
      %716 = vmatprep.subr.bf16.mxu0 0
      %717 = vmatpush1.bf16.msra.mxu0 0
      %718 = vmatprep.subr.bf16.mxu0 0
      %719 = vmatpush1.bf16.msra.mxu0 0
      %720 = vmatprep.subr.bf16.mxu0 0
      %721 = vmatpush1.bf16.msra.mxu0 0
      %722 = vmatprep.subr.bf16.mxu0 0
      %723 = vmatpush1.bf16.msra.mxu0 0
      %724 = vmatprep.subr.bf16.mxu0 0
      %725 = vmatpush1.bf16.msra.mxu0 0
      %726 = vmatprep.subr.bf16.mxu0 0
      %727 = vmatpush1.bf16.msra.mxu0 0
      %728 = vmatprep.subr.bf16.mxu0 0
      %729 = vmatpush1.bf16.msra.mxu0 0
      %730 = vmatprep.subr.bf16.mxu0 0
      %731 = vmatpush1.bf16.msra.mxu0 0
      %732 = vmatprep.mubr.bf16.mxu0 0
      %733 = vmatmul.mubr.bf16.gmra.mrb[0].mxu0 %v695
      %v734 = vpop.f32.mrb[0].mxu0
      %v735 = vadd.f32 %v679, %v734
      %v736 = vpop.f32.mrb[0].mxu0
      %v737 = vpop.f32.mrb[0].mxu0
      %v738 = vadd.f32 %v679, %v737
      %v739 = vpop.f32.mrb[0].mxu0
      %740 = vmatprep.mubr.bf16.mxu0 0
      %741 = vmatmul.mubr.bf16.gmra.mrb[0].mxu0 %v698
      %v742 = vpop.f32.mrb[0].mxu0
      %v743 = vadd.f32 %v679, %v742
      %v744 = vpop.f32.mrb[0].mxu0
      %v745 = vpop.f32.mrb[0].mxu0
      %v746 = vpop.f32.mrb[0].mxu0
      %747 = vdwg.mxu0
      %v748 = vld [vmem:[%s620] sm:$0xf]
      %v749 = vld [vmem:[%s620 + $0x4] sm:$0xf]
      %v750 = vld [vmem:[%s620 + $0x8] sm:$0xf]
      %v751 = vld [vmem:[%s620 + $0xc] sm:$0xf]
      %v752 = vld [vmem:[%s623] sm:$0x1]
      %v753 = vpack.c.bf16 %v738, %v735
      %755 = vrot.lane.b32.xlu0 %v753, 96
      %v756 = vpop.permute.xlu0 %755
      %vm757 = vcmask 64512
      %v759 = vsel %vm757, %v753, 0
      %v762 = vsel %vm757, %v756, 0
      %764 = vmatprep.subr.bf16.mxu0 0
      %765 = vmatpush1.bf16.xpose.msra.mxu0 %v762
      %766 = vmatprep.subr.bf16.mxu0 0
      %767 = vmatpush1.bf16.xpose.msra.mxu0 0
      %768 = vmatprep.subr.bf16.mxu0 0
      %769 = vmatpush1.bf16.xpose.msra.mxu0 0
      %770 = vmatprep.subr.bf16.mxu0 0
      %771 = vmatpush1.bf16.xpose.msra.mxu0 0
      %772 = vmatprep.subr.bf16.mxu0 0
      %773 = vmatpush1.bf16.xpose.msra.mxu0 0
      %774 = vmatprep.subr.bf16.mxu0 0
      %775 = vmatpush1.bf16.xpose.msra.mxu0 0
      %776 = vmatprep.subr.bf16.mxu0 0
      %777 = vmatpush1.bf16.xpose.msra.mxu0 0
      %778 = vmatprep.subr.bf16.mxu0 0
      %779 = vmatpush1.bf16.xpose.msra.mxu0 0
      %780 = vmatprep.subr.bf16.mxu0 0
      %781 = vmatpush1.bf16.xpose.msra.mxu0 0
      %782 = vmatprep.subr.bf16.mxu0 0
      %783 = vmatpush1.bf16.xpose.msra.mxu0 0
      %784 = vmatprep.subr.bf16.mxu0 0
      %785 = vmatpush1.bf16.xpose.msra.mxu0 0
      %786 = vmatprep.subr.bf16.mxu0 0
      %787 = vmatpush1.bf16.xpose.msra.mxu0 0
      %788 = vmatprep.subr.bf16.mxu0 0
      %789 = vmatpush1.bf16.xpose.msra.mxu0 0
      %790 = vmatprep.subr.bf16.mxu0 0
      %791 = vmatpush1.bf16.xpose.msra.mxu0 0
      %792 = vmatprep.subr.bf16.mxu0 0
      %793 = vmatpush1.bf16.xpose.msra.mxu0 0
      %794 = vmatprep.subr.bf16.mxu0 0
      %795 = vmatpush1.bf16.xpose.msra.mxu0 0
      %796 = vmatprep.mubr.bf16.mxu0 0
      %797 = vmatmul.mubr.bf16.gmra.mrb[0].mxu0 %v759
      %v798 = vpop.f32.mrb[0].mxu0
      %v799 = vadd.f32 0.0, %v798
      %v800 = vpop.f32.mrb[0].mxu0
      %v801 = vpop.f32.mrb[0].mxu0
      %v802 = vadd.f32 0.0, %v801
      %v803 = vpop.f32.mrb[0].mxu0
      %804 = vdwg.mxu0
      %v805 = vmul.f32 %v799, 0.35355338
      %v806 = vmul.f32 %v802, 0.35355338
      %vm807 = vcmask 80896
      %v808 = vsel %vm807, %v805, -inf
      %809 = vmax.xlane.f32.xlu0 %v808
      %v810 = vpop.xlane.xlu0 %809
      %vm811 = vcmask 74752
      %v812 = vsel %vm811, %v806, -inf
      %813 = vmax.xlane.f32.xlu0 %v812
      %v814 = vpop.xlane.xlu0 %813
      %v815 = vsub.f32 %v805, %v810
      %v816 = vsub.f32 %v806, %v814
      %v817 = vmul.f32 %v815, 1.442695
      %v818 = vpow.pop %v817
      %v819 = vmul.f32 %v816, 1.442695
      %v820 = vpow.pop %v819
      %v821 = vsel %vm807, %v818, 0.0
      %822 = vadd.xlane.f32.xlu0 %v821
      %v823 = vpop.xlane.xlu0 %822
      %v824 = vsel %vm811, %v820, 0.0
      %825 = vadd.xlane.f32.xlu0 %v824
      %v826 = vpop.xlane.xlu0 %825
      %v827 = vrcp.pop %v823
      %v828 = vrcp.pop %v826
      %v829 = vmul.f32 %v818, %v827
      %v830 = vmul.f32 %v820, %v828
      %v831 = vpack.c.bf16 %v830, %v829
      %832 = vrot.lane.b32.xlu0 %v753, 64
      %v833 = vpop.permute.xlu0 %832
      %v835 = vsel %vm807, %v831, 0
      %vm837 = vcmask 1044480
      %v839 = vsel %vm837, %v833, 0
      %841 = vmatprep.subr.bf16.mxu0 0
      %842 = vmatpush1.bf16.msra.mxu0 %v839
      %843 = vmatprep.subr.bf16.mxu0 0
      %844 = vmatpush1.bf16.msra.mxu0 0
      %845 = vmatprep.subr.bf16.mxu0 0
      %846 = vmatpush1.bf16.msra.mxu0 0
      %847 = vmatprep.subr.bf16.mxu0 0
      %848 = vmatpush1.bf16.msra.mxu0 0
      %849 = vmatprep.subr.bf16.mxu0 0
      %850 = vmatpush1.bf16.msra.mxu0 0
      %851 = vmatprep.subr.bf16.mxu0 0
      %852 = vmatpush1.bf16.msra.mxu0 0
      %853 = vmatprep.subr.bf16.mxu0 0
      %854 = vmatpush1.bf16.msra.mxu0 0
      %855 = vmatprep.subr.bf16.mxu0 0
      %856 = vmatpush1.bf16.msra.mxu0 0
      %857 = vmatprep.subr.bf16.mxu0 0
      %858 = vmatpush1.bf16.msra.mxu0 0
      %859 = vmatprep.subr.bf16.mxu0 0
      %860 = vmatpush1.bf16.msra.mxu0 0
      %861 = vmatprep.subr.bf16.mxu0 0
      %862 = vmatpush1.bf16.msra.mxu0 0
      %863 = vmatprep.subr.bf16.mxu0 0
      %864 = vmatpush1.bf16.msra.mxu0 0
      %865 = vmatprep.subr.bf16.mxu0 0
      %866 = vmatpush1.bf16.msra.mxu0 0
      %867 = vmatprep.subr.bf16.mxu0 0
      %868 = vmatpush1.bf16.msra.mxu0 0
      %869 = vmatprep.subr.bf16.mxu0 0
      %870 = vmatpush1.bf16.msra.mxu0 0
      %871 = vmatprep.subr.bf16.mxu0 0
      %872 = vmatpush1.bf16.msra.mxu0 0
      %873 = vmatprep.mubr.bf16.mxu0 0
      %874 = vmatmul.mubr.bf16.gmra.mrb[0].mxu0 %v835
      %v875 = vpop.f32.mrb[0].mxu0
      %v876 = vadd.f32 0.0, %v875
      %v877 = vpop.f32.mrb[0].mxu0
      %v878 = vpop.f32.mrb[0].mxu0
      %v879 = vadd.f32 0.0, %v878
      %v880 = vpop.f32.mrb[0].mxu0
      %881 = vdwg.mxu0
      %882 = vrot.lane.b32.xlu0 %v753, 120
      %v883 = vpop.permute.xlu0 %882
      %884 = vrot.lane.b32.xlu0 %v753, 88
      %v885 = vpop.permute.xlu0 %884
      %v887 = vsel %vm757, %v883, 0
      %v890 = vsel %vm757, %v885, 0
      %892 = vmatprep.subr.bf16.mxu0 0
      %893 = vmatpush1.bf16.xpose.msra.mxu0 %v890
      %894 = vmatprep.subr.bf16.mxu0 0
      %895 = vmatpush1.bf16.xpose.msra.mxu0 0
      %896 = vmatprep.subr.bf16.mxu0 0
      %897 = vmatpush1.bf16.xpose.msra.mxu0 0
      %898 = vmatprep.subr.bf16.mxu0 0
      %899 = vmatpush1.bf16.xpose.msra.mxu0 0
      %900 = vmatprep.subr.bf16.mxu0 0
      %901 = vmatpush1.bf16.xpose.msra.mxu0 0
      %902 = vmatprep.subr.bf16.mxu0 0
      %903 = vmatpush1.bf16.xpose.msra.mxu0 0
      %904 = vmatprep.subr.bf16.mxu0 0
      %905 = vmatpush1.bf16.xpose.msra.mxu0 0
      %906 = vmatprep.subr.bf16.mxu0 0
      %907 = vmatpush1.bf16.xpose.msra.mxu0 0
      %908 = vmatprep.subr.bf16.mxu0 0
      %909 = vmatpush1.bf16.xpose.msra.mxu0 0
      %910 = vmatprep.subr.bf16.mxu0 0
      %911 = vmatpush1.bf16.xpose.msra.mxu0 0
      %912 = vmatprep.subr.bf16.mxu0 0
      %913 = vmatpush1.bf16.xpose.msra.mxu0 0
      %914 = vmatprep.subr.bf16.mxu0 0
      %915 = vmatpush1.bf16.xpose.msra.mxu0 0
      %916 = vmatprep.subr.bf16.mxu0 0
      %917 = vmatpush1.bf16.xpose.msra.mxu0 0
      %918 = vmatprep.subr.bf16.mxu0 0
      %919 = vmatpush1.bf16.xpose.msra.mxu0 0
      %920 = vmatprep.subr.bf16.mxu0 0
      %921 = vmatpush1.bf16.xpose.msra.mxu0 0
      %922 = vmatprep.subr.bf16.mxu0 0
      %923 = vmatpush1.bf16.xpose.msra.mxu0 0
      %924 = vmatprep.mubr.bf16.mxu0 0
      %925 = vmatmul.mubr.bf16.gmra.mrb[0].mxu0 %v887
      %v926 = vpop.f32.mrb[0].mxu0
      %v927 = vadd.f32 0.0, %v926
      %v928 = vpop.f32.mrb[0].mxu0
      %v929 = vpop.f32.mrb[0].mxu0
      %v930 = vadd.f32 0.0, %v929
      %v931 = vpop.f32.mrb[0].mxu0
      %932 = vdwg.mxu0
      %v933 = vmul.f32 %v927, 0.35355338
      %v934 = vmul.f32 %v930, 0.35355338
      %v935 = vsel %vm807, %v933, -inf
      %936 = vmax.xlane.f32.xlu0 %v935
      %v937 = vpop.xlane.xlu0 %936
      %v938 = vsel %vm811, %v934, -inf
      %939 = vmax.xlane.f32.xlu0 %v938
      %v940 = vpop.xlane.xlu0 %939
      %v941 = vsub.f32 %v933, %v937
      %v942 = vsub.f32 %v934, %v940
      %v943 = vmul.f32 %v941, 1.442695
      %v944 = vpow.pop %v943
      %v945 = vmul.f32 %v942, 1.442695
      %v946 = vpow.pop %v945
      %v947 = vsel %vm807, %v944, 0.0
      %948 = vadd.xlane.f32.xlu0 %v947
      %v949 = vpop.xlane.xlu0 %948
      %v950 = vsel %vm811, %v946, 0.0
      %951 = vadd.xlane.f32.xlu0 %v950
      %v952 = vpop.xlane.xlu0 %951
      %v953 = vrcp.pop %v949
      %v954 = vrcp.pop %v952
      %v955 = vmul.f32 %v944, %v953
      %v956 = vmul.f32 %v946, %v954
      %v957 = vpack.c.bf16 %v956, %v955
      %958 = vrot.lane.b32.xlu0 %v753, 56
      %v959 = vpop.permute.xlu0 %958
      %v961 = vsel %vm807, %v957, 0
      %v964 = vsel %vm837, %v959, 0
      %966 = vmatprep.subr.bf16.mxu0 0
      %967 = vmatpush1.bf16.msra.mxu0 %v964
      %968 = vmatprep.subr.bf16.mxu0 0
      %969 = vmatpush1.bf16.msra.mxu0 0
      %970 = vmatprep.subr.bf16.mxu0 0
      %971 = vmatpush1.bf16.msra.mxu0 0
      %972 = vmatprep.subr.bf16.mxu0 0
      %973 = vmatpush1.bf16.msra.mxu0 0
      %974 = vmatprep.subr.bf16.mxu0 0
      %975 = vmatpush1.bf16.msra.mxu0 0
      %976 = vmatprep.subr.bf16.mxu0 0
      %977 = vmatpush1.bf16.msra.mxu0 0
      %978 = vmatprep.subr.bf16.mxu0 0
      %979 = vmatpush1.bf16.msra.mxu0 0
      %980 = vmatprep.subr.bf16.mxu0 0
      %981 = vmatpush1.bf16.msra.mxu0 0
      %982 = vmatprep.subr.bf16.mxu0 0
      %983 = vmatpush1.bf16.msra.mxu0 0
      %984 = vmatprep.subr.bf16.mxu0 0
      %985 = vmatpush1.bf16.msra.mxu0 0
      %986 = vmatprep.subr.bf16.mxu0 0
      %987 = vmatpush1.bf16.msra.mxu0 0
      %988 = vmatprep.subr.bf16.mxu0 0
      %989 = vmatpush1.bf16.msra.mxu0 0
      %990 = vmatprep.subr.bf16.mxu0 0
      %991 = vmatpush1.bf16.msra.mxu0 0
      %992 = vmatprep.subr.bf16.mxu0 0
      %993 = vmatpush1.bf16.msra.mxu0 0
      %994 = vmatprep.subr.bf16.mxu0 0
      %995 = vmatpush1.bf16.msra.mxu0 0
      %996 = vmatprep.subr.bf16.mxu0 0
      %997 = vmatpush1.bf16.msra.mxu0 0
      %998 = vmatprep.mubr.bf16.mxu0 0
      %999 = vmatmul.mubr.bf16.gmra.mrb[0].mxu0 %v961
      %v1000 = vpop.f32.mrb[0].mxu0
      %v1001 = vadd.f32 0.0, %v1000
      %v1002 = vpop.f32.mrb[0].mxu0
      %v1003 = vpop.f32.mrb[0].mxu0
      %v1004 = vadd.f32 0.0, %v1003
      %v1005 = vpop.f32.mrb[0].mxu0
      %1006 = vdwg.mxu0
      %1007 = vrot.lane.b32.xlu0 %v753, 112
      %v1008 = vpop.permute.xlu0 %1007
      %1009 = vrot.lane.b32.xlu0 %v753, 80
      %v1010 = vpop.permute.xlu0 %1009
      %v1012 = vsel %vm757, %v1008, 0
      %v1015 = vsel %vm757, %v1010, 0
      %1017 = vmatprep.subr.bf16.mxu0 0
      %1018 = vmatpush1.bf16.xpose.msra.mxu0 %v1015
      %1019 = vmatprep.subr.bf16.mxu0 0
      %1020 = vmatpush1.bf16.xpose.msra.mxu0 0
      %1021 = vmatprep.subr.bf16.mxu0 0
      %1022 = vmatpush1.bf16.xpose.msra.mxu0 0
      %1023 = vmatprep.subr.bf16.mxu0 0
      %1024 = vmatpush1.bf16.xpose.msra.mxu0 0
      %1025 = vmatprep.subr.bf16.mxu0 0
      %1026 = vmatpush1.bf16.xpose.msra.mxu0 0
      %1027 = vmatprep.subr.bf16.mxu0 0
      %1028 = vmatpush1.bf16.xpose.msra.mxu0 0
      %1029 = vmatprep.subr.bf16.mxu0 0
      %1030 = vmatpush1.bf16.xpose.msra.mxu0 0
      %1031 = vmatprep.subr.bf16.mxu0 0
      %1032 = vmatpush1.bf16.xpose.msra.mxu0 0
      %1033 = vmatprep.subr.bf16.mxu0 0
      %1034 = vmatpush1.bf16.xpose.msra.mxu0 0
      %1035 = vmatprep.subr.bf16.mxu0 0
      %1036 = vmatpush1.bf16.xpose.msra.mxu0 0
      %1037 = vmatprep.subr.bf16.mxu0 0
      %1038 = vmatpush1.bf16.xpose.msra.mxu0 0
      %1039 = vmatprep.subr.bf16.mxu0 0
      %1040 = vmatpush1.bf16.xpose.msra.mxu0 0
      %1041 = vmatprep.subr.bf16.mxu0 0
      %1042 = vmatpush1.bf16.xpose.msra.mxu0 0
      %1043 = vmatprep.subr.bf16.mxu0 0
      %1044 = vmatpush1.bf16.xpose.msra.mxu0 0
      %1045 = vmatprep.subr.bf16.mxu0 0
      %1046 = vmatpush1.bf16.xpose.msra.mxu0 0
      %1047 = vmatprep.subr.bf16.mxu0 0
      %1048 = vmatpush1.bf16.xpose.msra.mxu0 0
      %1049 = vmatprep.mubr.bf16.mxu0 0
      %1050 = vmatmul.mubr.bf16.gmra.mrb[0].mxu0 %v1012
      %v1051 = vpop.f32.mrb[0].mxu0
      %v1052 = vadd.f32 0.0, %v1051
      %v1053 = vpop.f32.mrb[0].mxu0
      %v1054 = vpop.f32.mrb[0].mxu0
      %v1055 = vadd.f32 0.0, %v1054
      %v1056 = vpop.f32.mrb[0].mxu0
      %1057 = vdwg.mxu0
      %v1058 = vmul.f32 %v1052, 0.35355338
      %v1059 = vmul.f32 %v1055, 0.35355338
      %v1060 = vsel %vm807, %v1058, -inf
      %1061 = vmax.xlane.f32.xlu0 %v1060
      %v1062 = vpop.xlane.xlu0 %1061
      %v1063 = vsel %vm811, %v1059, -inf
      %1064 = vmax.xlane.f32.xlu0 %v1063
      %v1065 = vpop.xlane.xlu0 %1064
      %v1066 = vsub.f32 %v1058, %v1062
      %v1067 = vsub.f32 %v1059, %v1065
      %v1068 = vmul.f32 %v1066, 1.442695
      %v1069 = vpow.pop %v1068
      %v1070 = vmul.f32 %v1067, 1.442695
      %v1071 = vpow.pop %v1070
      %v1072 = vsel %vm807, %v1069, 0.0
      %1073 = vadd.xlane.f32.xlu0 %v1072
      %v1074 = vpop.xlane.xlu0 %1073
      %v1075 = vsel %vm811, %v1071, 0.0
      %1076 = vadd.xlane.f32.xlu0 %v1075
      %v1077 = vpop.xlane.xlu0 %1076
      %v1078 = vrcp.pop %v1074
      %v1079 = vrcp.pop %v1077
      %v1080 = vmul.f32 %v1069, %v1078
      %v1081 = vmul.f32 %v1071, %v1079
      %v1082 = vpack.c.bf16 %v1081, %v1080
      %1083 = vrot.lane.b32.xlu0 %v753, 48
      %v1084 = vpop.permute.xlu0 %1083
      %v1086 = vsel %vm807, %v1082, 0
      %v1089 = vsel %vm837, %v1084, 0
      %1091 = vmatprep.subr.bf16.mxu0 0
      %1092 = vmatpush1.bf16.msra.mxu0 %v1089
      %1093 = vmatprep.subr.bf16.mxu0 0
      %1094 = vmatpush1.bf16.msra.mxu0 0
      %1095 = vmatprep.subr.bf16.mxu0 0
      %1096 = vmatpush1.bf16.msra.mxu0 0
      %1097 = vmatprep.subr.bf16.mxu0 0
      %1098 = vmatpush1.bf16.msra.mxu0 0
      %1099 = vmatprep.subr.bf16.mxu0 0
      %1100 = vmatpush1.bf16.msra.mxu0 0
      %1101 = vmatprep.subr.bf16.mxu0 0
      %1102 = vmatpush1.bf16.msra.mxu0 0
      %1103 = vmatprep.subr.bf16.mxu0 0
      %1104 = vmatpush1.bf16.msra.mxu0 0
      %1105 = vmatprep.subr.bf16.mxu0 0
      %1106 = vmatpush1.bf16.msra.mxu0 0
      %1107 = vmatprep.subr.bf16.mxu0 0
      %1108 = vmatpush1.bf16.msra.mxu0 0
      %1109 = vmatprep.subr.bf16.mxu0 0
      %1110 = vmatpush1.bf16.msra.mxu0 0
      %1111 = vmatprep.subr.bf16.mxu0 0
      %1112 = vmatpush1.bf16.msra.mxu0 0
      %1113 = vmatprep.subr.bf16.mxu0 0
      %1114 = vmatpush1.bf16.msra.mxu0 0
      %1115 = vmatprep.subr.bf16.mxu0 0
      %1116 = vmatpush1.bf16.msra.mxu0 0
      %1117 = vmatprep.subr.bf16.mxu0 0
      %1118 = vmatpush1.bf16.msra.mxu0 0
      %1119 = vmatprep.subr.bf16.mxu0 0
      %1120 = vmatpush1.bf16.msra.mxu0 0
      %1121 = vmatprep.subr.bf16.mxu0 0
      %1122 = vmatpush1.bf16.msra.mxu0 0
      %1123 = vmatprep.mubr.bf16.mxu0 0
      %1124 = vmatmul.mubr.bf16.gmra.mrb[0].mxu0 %v1086
      %v1125 = vpop.f32.mrb[0].mxu0
      %v1126 = vadd.f32 0.0, %v1125
      %v1127 = vpop.f32.mrb[0].mxu0
      %v1128 = vpop.f32.mrb[0].mxu0
      %v1129 = vadd.f32 0.0, %v1128
      %v1130 = vpop.f32.mrb[0].mxu0
      %1131 = vdwg.mxu0
      %1132 = vrot.lane.b32.xlu0 %v753, 104
      %v1133 = vpop.permute.xlu0 %1132
      %1134 = vrot.lane.b32.xlu0 %v753, 72
      %v1135 = vpop.permute.xlu0 %1134
      %v1137 = vsel %vm757, %v1133, 0
      %v1140 = vsel %vm757, %v1135, 0
      %1142 = vmatprep.subr.bf16.mxu0 0
      %1143 = vmatpush1.bf16.xpose.msra.mxu0 %v1140
      %1144 = vmatprep.subr.bf16.mxu0 0
      %1145 = vmatpush1.bf16.xpose.msra.mxu0 0
      %1146 = vmatprep.subr.bf16.mxu0 0
      %1147 = vmatpush1.bf16.xpose.msra.mxu0 0
      %1148 = vmatprep.subr.bf16.mxu0 0
      %1149 = vmatpush1.bf16.xpose.msra.mxu0 0
      %1150 = vmatprep.subr.bf16.mxu0 0
      %1151 = vmatpush1.bf16.xpose.msra.mxu0 0
      %1152 = vmatprep.subr.bf16.mxu0 0
      %1153 = vmatpush1.bf16.xpose.msra.mxu0 0
      %1154 = vmatprep.subr.bf16.mxu0 0
      %1155 = vmatpush1.bf16.xpose.msra.mxu0 0
      %1156 = vmatprep.subr.bf16.mxu0 0
      %1157 = vmatpush1.bf16.xpose.msra.mxu0 0
      %1158 = vmatprep.subr.bf16.mxu0 0
      %1159 = vmatpush1.bf16.xpose.msra.mxu0 0
      %1160 = vmatprep.subr.bf16.mxu0 0
      %1161 = vmatpush1.bf16.xpose.msra.mxu0 0
      %1162 = vmatprep.subr.bf16.mxu0 0
      %1163 = vmatpush1.bf16.xpose.msra.mxu0 0
      %1164 = vmatprep.subr.bf16.mxu0 0
      %1165 = vmatpush1.bf16.xpose.msra.mxu0 0
      %1166 = vmatprep.subr.bf16.mxu0 0
      %1167 = vmatpush1.bf16.xpose.msra.mxu0 0
      %1168 = vmatprep.subr.bf16.mxu0 0
      %1169 = vmatpush1.bf16.xpose.msra.mxu0 0
      %1170 = vmatprep.subr.bf16.mxu0 0
      %1171 = vmatpush1.bf16.xpose.msra.mxu0 0
      %1172 = vmatprep.subr.bf16.mxu0 0
      %1173 = vmatpush1.bf16.xpose.msra.mxu0 0
      %1174 = vmatprep.mubr.bf16.mxu0 0
      %1175 = vmatmul.mubr.bf16.gmra.mrb[0].mxu0 %v1137
      %v1176 = vpop.f32.mrb[0].mxu0
      %v1177 = vadd.f32 0.0, %v1176
      %v1178 = vpop.f32.mrb[0].mxu0
      %v1179 = vpop.f32.mrb[0].mxu0
      %v1180 = vadd.f32 0.0, %v1179
      %v1181 = vpop.f32.mrb[0].mxu0
      %1182 = vdwg.mxu0
      %v1183 = vmul.f32 %v1177, 0.35355338
      %v1184 = vmul.f32 %v1180, 0.35355338
      %v1185 = vsel %vm807, %v1183, -inf
      %1186 = vmax.xlane.f32.xlu0 %v1185
      %v1187 = vpop.xlane.xlu0 %1186
      %v1188 = vsel %vm811, %v1184, -inf
      %1189 = vmax.xlane.f32.xlu0 %v1188
      %v1190 = vpop.xlane.xlu0 %1189
      %v1191 = vsub.f32 %v1183, %v1187
      %v1192 = vsub.f32 %v1184, %v1190
      %v1193 = vmul.f32 %v1191, 1.442695
      %v1194 = vpow.pop %v1193
      %v1195 = vmul.f32 %v1192, 1.442695
      %v1196 = vpow.pop %v1195
      %v1197 = vsel %vm807, %v1194, 0.0
      %1198 = vadd.xlane.f32.xlu0 %v1197
      %v1199 = vpop.xlane.xlu0 %1198
      %v1200 = vsel %vm811, %v1196, 0.0
      %1201 = vadd.xlane.f32.xlu0 %v1200
      %v1202 = vpop.xlane.xlu0 %1201
      %v1203 = vrcp.pop %v1199
      %v1204 = vrcp.pop %v1202
      %v1205 = vmul.f32 %v1194, %v1203
      %v1206 = vmul.f32 %v1196, %v1204
      %v1207 = vpack.c.bf16 %v1206, %v1205
      %1208 = vrot.lane.b32.xlu0 %v753, 40
      %v1209 = vpop.permute.xlu0 %1208
      %v1211 = vsel %vm807, %v1207, 0
      %v1214 = vsel %vm837, %v1209, 0
      %1216 = vmatprep.subr.bf16.mxu0 0
      %1217 = vmatpush1.bf16.msra.mxu0 %v1214
      %1218 = vmatprep.subr.bf16.mxu0 0
      %1219 = vmatpush1.bf16.msra.mxu0 0
      %1220 = vmatprep.subr.bf16.mxu0 0
      %1221 = vmatpush1.bf16.msra.mxu0 0
      %1222 = vmatprep.subr.bf16.mxu0 0
      %1223 = vmatpush1.bf16.msra.mxu0 0
      %1224 = vmatprep.subr.bf16.mxu0 0
      %1225 = vmatpush1.bf16.msra.mxu0 0
      %1226 = vmatprep.subr.bf16.mxu0 0
      %1227 = vmatpush1.bf16.msra.mxu0 0
      %1228 = vmatprep.subr.bf16.mxu0 0
      %1229 = vmatpush1.bf16.msra.mxu0 0
      %1230 = vmatprep.subr.bf16.mxu0 0
      %1231 = vmatpush1.bf16.msra.mxu0 0
      %1232 = vmatprep.subr.bf16.mxu0 0
      %1233 = vmatpush1.bf16.msra.mxu0 0
      %1234 = vmatprep.subr.bf16.mxu0 0
      %1235 = vmatpush1.bf16.msra.mxu0 0
      %1236 = vmatprep.subr.bf16.mxu0 0
      %1237 = vmatpush1.bf16.msra.mxu0 0
      %1238 = vmatprep.subr.bf16.mxu0 0
      %1239 = vmatpush1.bf16.msra.mxu0 0
      %1240 = vmatprep.subr.bf16.mxu0 0
      %1241 = vmatpush1.bf16.msra.mxu0 0
      %1242 = vmatprep.subr.bf16.mxu0 0
      %1243 = vmatpush1.bf16.msra.mxu0 0
      %1244 = vmatprep.subr.bf16.mxu0 0
      %1245 = vmatpush1.bf16.msra.mxu0 0
      %1246 = vmatprep.subr.bf16.mxu0 0
      %1247 = vmatpush1.bf16.msra.mxu0 0
      %1248 = vmatprep.mubr.bf16.mxu0 0
      %1249 = vmatmul.mubr.bf16.gmra.mrb[0].mxu0 %v1211
      %v1250 = vpop.f32.mrb[0].mxu0
      %v1251 = vadd.f32 0.0, %v1250
      %v1252 = vpop.f32.mrb[0].mxu0
      %v1253 = vpop.f32.mrb[0].mxu0
      %v1254 = vadd.f32 0.0, %v1253
      %v1255 = vpop.f32.mrb[0].mxu0
      %1256 = vdwg.mxu0
      %1259 = vrot.lane.b32.xlu0 %v1001, 8
      %v1260 = vpop.permute.xlu0 %1259
      %1261 = vrot.lane.b32.xlu0 %v1004, 8
      %v1262 = vpop.permute.xlu0 %1261
      %1267 = vrot.lane.b32.xlu0 %v1126, 16
      %v1268 = vpop.permute.xlu0 %1267
      %1269 = vrot.lane.b32.xlu0 %v1129, 16
      %v1270 = vpop.permute.xlu0 %1269
      %1275 = vrot.lane.b32.xlu0 %v1251, 24
      %v1276 = vpop.permute.xlu0 %1275
      %1277 = vrot.lane.b32.xlu0 %v1254, 24
      %v1278 = vpop.permute.xlu0 %1277
      %v1281 = vsel %vm757, %v876, %v1260
      %v1282 = vsel %vm757, %v879, %v1262
      %vm1283 = vcmask 130048
      %v1284 = vsel %vm1283, %v1281, %v1268
      %v1285 = vsel %vm1283, %v1282, %v1270
      %vm1286 = vcmask 195584
      %v1287 = vsel %vm1286, %v1284, %v1276
      %v1288 = vsel %vm1286, %v1285, %v1278
      %v1289 = vpack.c.bf16 %v743, %v738
      %v1291 = vrot.slane %v1289, 1
      %1292 = vrot.lane.b32.xlu0 %v1291, 96
      %v1293 = vpop.permute.xlu0 %1292
      %v1295 = vsel %vm757, %v1291, 0
      %v1298 = vsel %vm757, %v1293, 0
      %1300 = vmatprep.subr.bf16.mxu0 0
      %1301 = vmatpush1.bf16.xpose.msra.mxu0 %v1298
      %1302 = vmatprep.subr.bf16.mxu0 0
      %1303 = vmatpush1.bf16.xpose.msra.mxu0 0
      %1304 = vmatprep.subr.bf16.mxu0 0
      %1305 = vmatpush1.bf16.xpose.msra.mxu0 0
      %1306 = vmatprep.subr.bf16.mxu0 0
      %1307 = vmatpush1.bf16.xpose.msra.mxu0 0
      %1308 = vmatprep.subr.bf16.mxu0 0
      %1309 = vmatpush1.bf16.xpose.msra.mxu0 0
      %1310 = vmatprep.subr.bf16.mxu0 0
      %1311 = vmatpush1.bf16.xpose.msra.mxu0 0
      %1312 = vmatprep.subr.bf16.mxu0 0
      %1313 = vmatpush1.bf16.xpose.msra.mxu0 0
      %1314 = vmatprep.subr.bf16.mxu0 0
      %1315 = vmatpush1.bf16.xpose.msra.mxu0 0
      %1316 = vmatprep.subr.bf16.mxu0 0
      %1317 = vmatpush1.bf16.xpose.msra.mxu0 0
      %1318 = vmatprep.subr.bf16.mxu0 0
      %1319 = vmatpush1.bf16.xpose.msra.mxu0 0
      %1320 = vmatprep.subr.bf16.mxu0 0
      %1321 = vmatpush1.bf16.xpose.msra.mxu0 0
      %1322 = vmatprep.subr.bf16.mxu0 0
      %1323 = vmatpush1.bf16.xpose.msra.mxu0 0
      %1324 = vmatprep.subr.bf16.mxu0 0
      %1325 = vmatpush1.bf16.xpose.msra.mxu0 0
      %1326 = vmatprep.subr.bf16.mxu0 0
      %1327 = vmatpush1.bf16.xpose.msra.mxu0 0
      %1328 = vmatprep.subr.bf16.mxu0 0
      %1329 = vmatpush1.bf16.xpose.msra.mxu0 0
      %1330 = vmatprep.subr.bf16.mxu0 0
      %1331 = vmatpush1.bf16.xpose.msra.mxu0 0
      %1332 = vmatprep.mubr.bf16.mxu0 0
      %1333 = vmatmul.mubr.bf16.gmra.mrb[0].mxu0 %v1295
      %v1334 = vpop.f32.mrb[0].mxu0
      %v1335 = vadd.f32 0.0, %v1334
      %v1336 = vpop.f32.mrb[0].mxu0
      %v1337 = vpop.f32.mrb[0].mxu0
      %v1338 = vadd.f32 0.0, %v1337
      %v1339 = vpop.f32.mrb[0].mxu0
      %1340 = vdwg.mxu0
      %v1341 = vmul.f32 %v1335, 0.35355338
      %v1342 = vmul.f32 %v1338, 0.35355338
      %v1343 = vsel %vm807, %v1341, -inf
      %1344 = vmax.xlane.f32.xlu0 %v1343
      %v1345 = vpop.xlane.xlu0 %1344
      %v1346 = vsel %vm811, %v1342, -inf
      %1347 = vmax.xlane.f32.xlu0 %v1346
      %v1348 = vpop.xlane.xlu0 %1347
      %v1349 = vsub.f32 %v1341, %v1345
      %v1350 = vsub.f32 %v1342, %v1348
      %v1351 = vmul.f32 %v1349, 1.442695
      %v1352 = vpow.pop %v1351
      %v1353 = vmul.f32 %v1350, 1.442695
      %v1354 = vpow.pop %v1353
      %v1355 = vsel %vm807, %v1352, 0.0
      %1356 = vadd.xlane.f32.xlu0 %v1355
      %v1357 = vpop.xlane.xlu0 %1356
      %v1358 = vsel %vm811, %v1354, 0.0
      %1359 = vadd.xlane.f32.xlu0 %v1358
      %v1360 = vpop.xlane.xlu0 %1359
      %v1361 = vrcp.pop %v1357
      %v1362 = vrcp.pop %v1360
      %v1363 = vmul.f32 %v1352, %v1361
      %v1364 = vmul.f32 %v1354, %v1362
      %v1365 = vpack.c.bf16 %v1364, %v1363
      %1366 = vrot.lane.b32.xlu0 %v1291, 64
      %v1367 = vpop.permute.xlu0 %1366
      %v1369 = vsel %vm807, %v1365, 0
      %v1372 = vsel %vm837, %v1367, 0
      %1374 = vmatprep.subr.bf16.mxu0 0
      %1375 = vmatpush1.bf16.msra.mxu0 %v1372
      %1376 = vmatprep.subr.bf16.mxu0 0
      %1377 = vmatpush1.bf16.msra.mxu0 0
      %1378 = vmatprep.subr.bf16.mxu0 0
      %1379 = vmatpush1.bf16.msra.mxu0 0
      %1380 = vmatprep.subr.bf16.mxu0 0
      %1381 = vmatpush1.bf16.msra.mxu0 0
      %1382 = vmatprep.subr.bf16.mxu0 0
      %1383 = vmatpush1.bf16.msra.mxu0 0
      %1384 = vmatprep.subr.bf16.mxu0 0
      %1385 = vmatpush1.bf16.msra.mxu0 0
      %1386 = vmatprep.subr.bf16.mxu0 0
      %1387 = vmatpush1.bf16.msra.mxu0 0
      %1388 = vmatprep.subr.bf16.mxu0 0
      %1389 = vmatpush1.bf16.msra.mxu0 0
      %1390 = vmatprep.subr.bf16.mxu0 0
      %1391 = vmatpush1.bf16.msra.mxu0 0
      %1392 = vmatprep.subr.bf16.mxu0 0
      %1393 = vmatpush1.bf16.msra.mxu0 0
      %1394 = vmatprep.subr.bf16.mxu0 0
      %1395 = vmatpush1.bf16.msra.mxu0 0
      %1396 = vmatprep.subr.bf16.mxu0 0
      %1397 = vmatpush1.bf16.msra.mxu0 0
      %1398 = vmatprep.subr.bf16.mxu0 0
      %1399 = vmatpush1.bf16.msra.mxu0 0
      %1400 = vmatprep.subr.bf16.mxu0 0
      %1401 = vmatpush1.bf16.msra.mxu0 0
      %1402 = vmatprep.subr.bf16.mxu0 0
      %1403 = vmatpush1.bf16.msra.mxu0 0
      %1404 = vmatprep.subr.bf16.mxu0 0
      %1405 = vmatpush1.bf16.msra.mxu0 0
      %1406 = vmatprep.mubr.bf16.mxu0 0
      %1407 = vmatmul.mubr.bf16.gmra.mrb[0].mxu0 %v1369
      %v1408 = vpop.f32.mrb[0].mxu0
      %v1409 = vadd.f32 0.0, %v1408
      %v1410 = vpop.f32.mrb[0].mxu0
      %v1411 = vpop.f32.mrb[0].mxu0
      %v1412 = vadd.f32 0.0, %v1411
      %v1413 = vpop.f32.mrb[0].mxu0
      %1414 = vdwg.mxu0
      %1415 = vrot.lane.b32.xlu0 %v1291, 120
      %v1416 = vpop.permute.xlu0 %1415
      %1417 = vrot.lane.b32.xlu0 %v1291, 88
      %v1418 = vpop.permute.xlu0 %1417
      %v1420 = vsel %vm757, %v1416, 0
      %v1423 = vsel %vm757, %v1418, 0
      %1425 = vmatprep.subr.bf16.mxu0 0
      %1426 = vmatpush1.bf16.xpose.msra.mxu0 %v1423
      %1427 = vmatprep.subr.bf16.mxu0 0
      %1428 = vmatpush1.bf16.xpose.msra.mxu0 0
      %1429 = vmatprep.subr.bf16.mxu0 0
      %1430 = vmatpush1.bf16.xpose.msra.mxu0 0
      %1431 = vmatprep.subr.bf16.mxu0 0
      %1432 = vmatpush1.bf16.xpose.msra.mxu0 0
      %1433 = vmatprep.subr.bf16.mxu0 0
      %1434 = vmatpush1.bf16.xpose.msra.mxu0 0
      %1435 = vmatprep.subr.bf16.mxu0 0
      %1436 = vmatpush1.bf16.xpose.msra.mxu0 0
      %1437 = vmatprep.subr.bf16.mxu0 0
      %1438 = vmatpush1.bf16.xpose.msra.mxu0 0
      %1439 = vmatprep.subr.bf16.mxu0 0
      %1440 = vmatpush1.bf16.xpose.msra.mxu0 0
      %1441 = vmatprep.subr.bf16.mxu0 0
      %1442 = vmatpush1.bf16.xpose.msra.mxu0 0
      %1443 = vmatprep.subr.bf16.mxu0 0
      %1444 = vmatpush1.bf16.xpose.msra.mxu0 0
      %1445 = vmatprep.subr.bf16.mxu0 0
      %1446 = vmatpush1.bf16.xpose.msra.mxu0 0
      %1447 = vmatprep.subr.bf16.mxu0 0
      %1448 = vmatpush1.bf16.xpose.msra.mxu0 0
      %1449 = vmatprep.subr.bf16.mxu0 0
      %1450 = vmatpush1.bf16.xpose.msra.mxu0 0
      %1451 = vmatprep.subr.bf16.mxu0 0
      %1452 = vmatpush1.bf16.xpose.msra.mxu0 0
      %1453 = vmatprep.subr.bf16.mxu0 0
      %1454 = vmatpush1.bf16.xpose.msra.mxu0 0
      %1455 = vmatprep.subr.bf16.mxu0 0
      %1456 = vmatpush1.bf16.xpose.msra.mxu0 0
      %1457 = vmatprep.mubr.bf16.mxu0 0
      %1458 = vmatmul.mubr.bf16.gmra.mrb[0].mxu0 %v1420
      %v1459 = vpop.f32.mrb[0].mxu0
      %v1460 = vadd.f32 0.0, %v1459
      %v1461 = vpop.f32.mrb[0].mxu0
      %v1462 = vpop.f32.mrb[0].mxu0
      %v1463 = vadd.f32 0.0, %v1462
      %v1464 = vpop.f32.mrb[0].mxu0
      %1465 = vdwg.mxu0
      %v1466 = vmul.f32 %v1460, 0.35355338
      %v1467 = vmul.f32 %v1463, 0.35355338
      %v1468 = vsel %vm807, %v1466, -inf
      %1469 = vmax.xlane.f32.xlu0 %v1468
      %v1470 = vpop.xlane.xlu0 %1469
      %v1471 = vsel %vm811, %v1467, -inf
      %1472 = vmax.xlane.f32.xlu0 %v1471
      %v1473 = vpop.xlane.xlu0 %1472
      %v1474 = vsub.f32 %v1466, %v1470
      %v1475 = vsub.f32 %v1467, %v1473
      %v1476 = vmul.f32 %v1474, 1.442695
      %v1477 = vpow.pop %v1476
      %v1478 = vmul.f32 %v1475, 1.442695
      %v1479 = vpow.pop %v1478
      %v1480 = vsel %vm807, %v1477, 0.0
      %1481 = vadd.xlane.f32.xlu0 %v1480
      %v1482 = vpop.xlane.xlu0 %1481
      %v1483 = vsel %vm811, %v1479, 0.0
      %1484 = vadd.xlane.f32.xlu0 %v1483
      %v1485 = vpop.xlane.xlu0 %1484
      %v1486 = vrcp.pop %v1482
      %v1487 = vrcp.pop %v1485
      %v1488 = vmul.f32 %v1477, %v1486
      %v1489 = vmul.f32 %v1479, %v1487
      %v1490 = vpack.c.bf16 %v1489, %v1488
      %1491 = vrot.lane.b32.xlu0 %v1291, 56
      %v1492 = vpop.permute.xlu0 %1491
      %v1494 = vsel %vm807, %v1490, 0
      %v1497 = vsel %vm837, %v1492, 0
      %1499 = vmatprep.subr.bf16.mxu0 0
      %1500 = vmatpush1.bf16.msra.mxu0 %v1497
      %1501 = vmatprep.subr.bf16.mxu0 0
      %1502 = vmatpush1.bf16.msra.mxu0 0
      %1503 = vmatprep.subr.bf16.mxu0 0
      %1504 = vmatpush1.bf16.msra.mxu0 0
      %1505 = vmatprep.subr.bf16.mxu0 0
      %1506 = vmatpush1.bf16.msra.mxu0 0
      %1507 = vmatprep.subr.bf16.mxu0 0
      %1508 = vmatpush1.bf16.msra.mxu0 0
      %1509 = vmatprep.subr.bf16.mxu0 0
      %1510 = vmatpush1.bf16.msra.mxu0 0
      %1511 = vmatprep.subr.bf16.mxu0 0
      %1512 = vmatpush1.bf16.msra.mxu0 0
      %1513 = vmatprep.subr.bf16.mxu0 0
      %1514 = vmatpush1.bf16.msra.mxu0 0
      %1515 = vmatprep.subr.bf16.mxu0 0
      %1516 = vmatpush1.bf16.msra.mxu0 0
      %1517 = vmatprep.subr.bf16.mxu0 0
      %1518 = vmatpush1.bf16.msra.mxu0 0
      %1519 = vmatprep.subr.bf16.mxu0 0
      %1520 = vmatpush1.bf16.msra.mxu0 0
      %1521 = vmatprep.subr.bf16.mxu0 0
      %1522 = vmatpush1.bf16.msra.mxu0 0
      %1523 = vmatprep.subr.bf16.mxu0 0
      %1524 = vmatpush1.bf16.msra.mxu0 0
      %1525 = vmatprep.subr.bf16.mxu0 0
      %1526 = vmatpush1.bf16.msra.mxu0 0
      %1527 = vmatprep.subr.bf16.mxu0 0
      %1528 = vmatpush1.bf16.msra.mxu0 0
      %1529 = vmatprep.subr.bf16.mxu0 0
      %1530 = vmatpush1.bf16.msra.mxu0 0
      %1531 = vmatprep.mubr.bf16.mxu0 0
      %1532 = vmatmul.mubr.bf16.gmra.mrb[0].mxu0 %v1494
      %v1533 = vpop.f32.mrb[0].mxu0
      %v1534 = vadd.f32 0.0, %v1533
      %v1535 = vpop.f32.mrb[0].mxu0
      %v1536 = vpop.f32.mrb[0].mxu0
      %v1537 = vadd.f32 0.0, %v1536
      %v1538 = vpop.f32.mrb[0].mxu0
      %1539 = vdwg.mxu0
      %1540 = vrot.lane.b32.xlu0 %v1291, 112
      %v1541 = vpop.permute.xlu0 %1540
      %1542 = vrot.lane.b32.xlu0 %v1291, 80
      %v1543 = vpop.permute.xlu0 %1542
      %v1545 = vsel %vm757, %v1541, 0
      %v1548 = vsel %vm757, %v1543, 0
      %1550 = vmatprep.subr.bf16.mxu0 0
      %1551 = vmatpush1.bf16.xpose.msra.mxu0 %v1548
      %1552 = vmatprep.subr.bf16.mxu0 0
      %1553 = vmatpush1.bf16.xpose.msra.mxu0 0
      %1554 = vmatprep.subr.bf16.mxu0 0
      %1555 = vmatpush1.bf16.xpose.msra.mxu0 0
      %1556 = vmatprep.subr.bf16.mxu0 0
      %1557 = vmatpush1.bf16.xpose.msra.mxu0 0
      %1558 = vmatprep.subr.bf16.mxu0 0
      %1559 = vmatpush1.bf16.xpose.msra.mxu0 0
      %1560 = vmatprep.subr.bf16.mxu0 0
      %1561 = vmatpush1.bf16.xpose.msra.mxu0 0
      %1562 = vmatprep.subr.bf16.mxu0 0
      %1563 = vmatpush1.bf16.xpose.msra.mxu0 0
      %1564 = vmatprep.subr.bf16.mxu0 0
      %1565 = vmatpush1.bf16.xpose.msra.mxu0 0
      %1566 = vmatprep.subr.bf16.mxu0 0
      %1567 = vmatpush1.bf16.xpose.msra.mxu0 0
      %1568 = vmatprep.subr.bf16.mxu0 0
      %1569 = vmatpush1.bf16.xpose.msra.mxu0 0
      %1570 = vmatprep.subr.bf16.mxu0 0
      %1571 = vmatpush1.bf16.xpose.msra.mxu0 0
      %1572 = vmatprep.subr.bf16.mxu0 0
      %1573 = vmatpush1.bf16.xpose.msra.mxu0 0
      %1574 = vmatprep.subr.bf16.mxu0 0
      %1575 = vmatpush1.bf16.xpose.msra.mxu0 0
      %1576 = vmatprep.subr.bf16.mxu0 0
      %1577 = vmatpush1.bf16.xpose.msra.mxu0 0
      %1578 = vmatprep.subr.bf16.mxu0 0
      %1579 = vmatpush1.bf16.xpose.msra.mxu0 0
      %1580 = vmatprep.subr.bf16.mxu0 0
      %1581 = vmatpush1.bf16.xpose.msra.mxu0 0
      %1582 = vmatprep.mubr.bf16.mxu0 0
      %1583 = vmatmul.mubr.bf16.gmra.mrb[0].mxu0 %v1545
      %v1584 = vpop.f32.mrb[0].mxu0
      %v1585 = vadd.f32 0.0, %v1584
      %v1586 = vpop.f32.mrb[0].mxu0
      %v1587 = vpop.f32.mrb[0].mxu0
      %v1588 = vadd.f32 0.0, %v1587
      %v1589 = vpop.f32.mrb[0].mxu0
      %1590 = vdwg.mxu0
      %v1591 = vmul.f32 %v1585, 0.35355338
      %v1592 = vmul.f32 %v1588, 0.35355338
      %v1593 = vsel %vm807, %v1591, -inf
      %1594 = vmax.xlane.f32.xlu0 %v1593
      %v1595 = vpop.xlane.xlu0 %1594
      %v1596 = vsel %vm811, %v1592, -inf
      %1597 = vmax.xlane.f32.xlu0 %v1596
      %v1598 = vpop.xlane.xlu0 %1597
      %v1599 = vsub.f32 %v1591, %v1595
      %v1600 = vsub.f32 %v1592, %v1598
      %v1601 = vmul.f32 %v1599, 1.442695
      %v1602 = vpow.pop %v1601
      %v1603 = vmul.f32 %v1600, 1.442695
      %v1604 = vpow.pop %v1603
      %v1605 = vsel %vm807, %v1602, 0.0
      %1606 = vadd.xlane.f32.xlu0 %v1605
      %v1607 = vpop.xlane.xlu0 %1606
      %v1608 = vsel %vm811, %v1604, 0.0
      %1609 = vadd.xlane.f32.xlu0 %v1608
      %v1610 = vpop.xlane.xlu0 %1609
      %v1611 = vrcp.pop %v1607
      %v1612 = vrcp.pop %v1610
      %v1613 = vmul.f32 %v1602, %v1611
      %v1614 = vmul.f32 %v1604, %v1612
      %v1615 = vpack.c.bf16 %v1614, %v1613
      %1616 = vrot.lane.b32.xlu0 %v1291, 48
      %v1617 = vpop.permute.xlu0 %1616
      %v1619 = vsel %vm807, %v1615, 0
      %v1622 = vsel %vm837, %v1617, 0
      %1624 = vmatprep.subr.bf16.mxu0 0
      %1625 = vmatpush1.bf16.msra.mxu0 %v1622
      %1626 = vmatprep.subr.bf16.mxu0 0
      %1627 = vmatpush1.bf16.msra.mxu0 0
      %1628 = vmatprep.subr.bf16.mxu0 0
      %1629 = vmatpush1.bf16.msra.mxu0 0
      %1630 = vmatprep.subr.bf16.mxu0 0
      %1631 = vmatpush1.bf16.msra.mxu0 0
      %1632 = vmatprep.subr.bf16.mxu0 0
      %1633 = vmatpush1.bf16.msra.mxu0 0
      %1634 = vmatprep.subr.bf16.mxu0 0
      %1635 = vmatpush1.bf16.msra.mxu0 0
      %1636 = vmatprep.subr.bf16.mxu0 0
      %1637 = vmatpush1.bf16.msra.mxu0 0
      %1638 = vmatprep.subr.bf16.mxu0 0
      %1639 = vmatpush1.bf16.msra.mxu0 0
      %1640 = vmatprep.subr.bf16.mxu0 0
      %1641 = vmatpush1.bf16.msra.mxu0 0
      %1642 = vmatprep.subr.bf16.mxu0 0
      %1643 = vmatpush1.bf16.msra.mxu0 0
      %1644 = vmatprep.subr.bf16.mxu0 0
      %1645 = vmatpush1.bf16.msra.mxu0 0
      %1646 = vmatprep.subr.bf16.mxu0 0
      %1647 = vmatpush1.bf16.msra.mxu0 0
      %1648 = vmatprep.subr.bf16.mxu0 0
      %1649 = vmatpush1.bf16.msra.mxu0 0
      %1650 = vmatprep.subr.bf16.mxu0 0
      %1651 = vmatpush1.bf16.msra.mxu0 0
      %1652 = vmatprep.subr.bf16.mxu0 0
      %1653 = vmatpush1.bf16.msra.mxu0 0
      %1654 = vmatprep.subr.bf16.mxu0 0
      %1655 = vmatpush1.bf16.msra.mxu0 0
      %1656 = vmatprep.mubr.bf16.mxu0 0
      %1657 = vmatmul.mubr.bf16.gmra.mrb[0].mxu0 %v1619
      %v1658 = vpop.f32.mrb[0].mxu0
      %v1659 = vadd.f32 0.0, %v1658
      %v1660 = vpop.f32.mrb[0].mxu0
      %v1661 = vpop.f32.mrb[0].mxu0
      %v1662 = vadd.f32 0.0, %v1661
      %v1663 = vpop.f32.mrb[0].mxu0
      %1664 = vdwg.mxu0
      %1665 = vrot.lane.b32.xlu0 %v1291, 104
      %v1666 = vpop.permute.xlu0 %1665
      %1667 = vrot.lane.b32.xlu0 %v1291, 72
      %v1668 = vpop.permute.xlu0 %1667
      %v1670 = vsel %vm757, %v1666, 0
      %v1673 = vsel %vm757, %v1668, 0
      %1675 = vmatprep.subr.bf16.mxu0 0
      %1676 = vmatpush1.bf16.xpose.msra.mxu0 %v1673
      %1677 = vmatprep.subr.bf16.mxu0 0
      %1678 = vmatpush1.bf16.xpose.msra.mxu0 0
      %1679 = vmatprep.subr.bf16.mxu0 0
      %1680 = vmatpush1.bf16.xpose.msra.mxu0 0
      %1681 = vmatprep.subr.bf16.mxu0 0
      %1682 = vmatpush1.bf16.xpose.msra.mxu0 0
      %1683 = vmatprep.subr.bf16.mxu0 0
      %1684 = vmatpush1.bf16.xpose.msra.mxu0 0
      %1685 = vmatprep.subr.bf16.mxu0 0
      %1686 = vmatpush1.bf16.xpose.msra.mxu0 0
      %1687 = vmatprep.subr.bf16.mxu0 0
      %1688 = vmatpush1.bf16.xpose.msra.mxu0 0
      %1689 = vmatprep.subr.bf16.mxu0 0
      %1690 = vmatpush1.bf16.xpose.msra.mxu0 0
      %1691 = vmatprep.subr.bf16.mxu0 0
      %1692 = vmatpush1.bf16.xpose.msra.mxu0 0
      %1693 = vmatprep.subr.bf16.mxu0 0
      %1694 = vmatpush1.bf16.xpose.msra.mxu0 0
      %1695 = vmatprep.subr.bf16.mxu0 0
      %1696 = vmatpush1.bf16.xpose.msra.mxu0 0
      %1697 = vmatprep.subr.bf16.mxu0 0
      %1698 = vmatpush1.bf16.xpose.msra.mxu0 0
      %1699 = vmatprep.subr.bf16.mxu0 0
      %1700 = vmatpush1.bf16.xpose.msra.mxu0 0
      %1701 = vmatprep.subr.bf16.mxu0 0
      %1702 = vmatpush1.bf16.xpose.msra.mxu0 0
      %1703 = vmatprep.subr.bf16.mxu0 0
      %1704 = vmatpush1.bf16.xpose.msra.mxu0 0
      %1705 = vmatprep.subr.bf16.mxu0 0
      %1706 = vmatpush1.bf16.xpose.msra.mxu0 0
      %1707 = vmatprep.mubr.bf16.mxu0 0
      %1708 = vmatmul.mubr.bf16.gmra.mrb[0].mxu0 %v1670
      %v1709 = vpop.f32.mrb[0].mxu0
      %v1710 = vadd.f32 0.0, %v1709
      %v1711 = vpop.f32.mrb[0].mxu0
      %v1712 = vpop.f32.mrb[0].mxu0
      %v1713 = vadd.f32 0.0, %v1712
      %v1714 = vpop.f32.mrb[0].mxu0
      %1715 = vdwg.mxu0
      %v1716 = vmul.f32 %v1710, 0.35355338
      %v1717 = vmul.f32 %v1713, 0.35355338
      %v1718 = vsel %vm807, %v1716, -inf
      %1719 = vmax.xlane.f32.xlu0 %v1718
      %v1720 = vpop.xlane.xlu0 %1719
      %v1721 = vsel %vm811, %v1717, -inf
      %1722 = vmax.xlane.f32.xlu0 %v1721
      %v1723 = vpop.xlane.xlu0 %1722
      %v1724 = vsub.f32 %v1716, %v1720
      %v1725 = vsub.f32 %v1717, %v1723
      %v1726 = vmul.f32 %v1724, 1.442695
      %v1727 = vpow.pop %v1726
      %v1728 = vmul.f32 %v1725, 1.442695
      %v1729 = vpow.pop %v1728
      %v1730 = vsel %vm807, %v1727, 0.0
      %1731 = vadd.xlane.f32.xlu0 %v1730
      %v1732 = vpop.xlane.xlu0 %1731
      %v1733 = vsel %vm811, %v1729, 0.0
      %1734 = vadd.xlane.f32.xlu0 %v1733
      %v1735 = vpop.xlane.xlu0 %1734
      %v1736 = vrcp.pop %v1732
      %v1737 = vrcp.pop %v1735
      %v1738 = vmul.f32 %v1727, %v1736
      %v1739 = vmul.f32 %v1729, %v1737
      %v1740 = vpack.c.bf16 %v1739, %v1738
      %1741 = vrot.lane.b32.xlu0 %v1291, 40
      %v1742 = vpop.permute.xlu0 %1741
      %v1744 = vsel %vm807, %v1740, 0
      %v1747 = vsel %vm837, %v1742, 0
      %1749 = vmatprep.subr.bf16.mxu0 0
      %1750 = vmatpush1.bf16.msra.mxu0 %v1747
      %1751 = vmatprep.subr.bf16.mxu0 0
      %1752 = vmatpush1.bf16.msra.mxu0 0
      %1753 = vmatprep.subr.bf16.mxu0 0
      %1754 = vmatpush1.bf16.msra.mxu0 0
      %1755 = vmatprep.subr.bf16.mxu0 0
      %1756 = vmatpush1.bf16.msra.mxu0 0
      %1757 = vmatprep.subr.bf16.mxu0 0
      %1758 = vmatpush1.bf16.msra.mxu0 0
      %1759 = vmatprep.subr.bf16.mxu0 0
      %1760 = vmatpush1.bf16.msra.mxu0 0
      %1761 = vmatprep.subr.bf16.mxu0 0
      %1762 = vmatpush1.bf16.msra.mxu0 0
      %1763 = vmatprep.subr.bf16.mxu0 0
      %1764 = vmatpush1.bf16.msra.mxu0 0
      %1765 = vmatprep.subr.bf16.mxu0 0
      %1766 = vmatpush1.bf16.msra.mxu0 0
      %1767 = vmatprep.subr.bf16.mxu0 0
      %1768 = vmatpush1.bf16.msra.mxu0 0
      %1769 = vmatprep.subr.bf16.mxu0 0
      %1770 = vmatpush1.bf16.msra.mxu0 0
      %1771 = vmatprep.subr.bf16.mxu0 0
      %1772 = vmatpush1.bf16.msra.mxu0 0
      %1773 = vmatprep.subr.bf16.mxu0 0
      %1774 = vmatpush1.bf16.msra.mxu0 0
      %1775 = vmatprep.subr.bf16.mxu0 0
      %1776 = vmatpush1.bf16.msra.mxu0 0
      %1777 = vmatprep.subr.bf16.mxu0 0
      %1778 = vmatpush1.bf16.msra.mxu0 0
      %1779 = vmatprep.subr.bf16.mxu0 0
      %1780 = vmatpush1.bf16.msra.mxu0 0
      %1781 = vmatprep.mubr.bf16.mxu0 0
      %1782 = vmatmul.mubr.bf16.gmra.mrb[0].mxu0 %v1744
      %v1783 = vpop.f32.mrb[0].mxu0
      %v1784 = vadd.f32 0.0, %v1783
      %v1785 = vpop.f32.mrb[0].mxu0
      %v1786 = vpop.f32.mrb[0].mxu0
      %v1787 = vadd.f32 0.0, %v1786
      %v1788 = vpop.f32.mrb[0].mxu0
      %1789 = vdwg.mxu0
      %1792 = vrot.lane.b32.xlu0 %v1534, 8
      %v1793 = vpop.permute.xlu0 %1792
      %1794 = vrot.lane.b32.xlu0 %v1537, 8
      %v1795 = vpop.permute.xlu0 %1794
      %1800 = vrot.lane.b32.xlu0 %v1659, 16
      %v1801 = vpop.permute.xlu0 %1800
      %1802 = vrot.lane.b32.xlu0 %v1662, 16
      %v1803 = vpop.permute.xlu0 %1802
      %1808 = vrot.lane.b32.xlu0 %v1784, 24
      %v1809 = vpop.permute.xlu0 %1808
      %1810 = vrot.lane.b32.xlu0 %v1787, 24
      %v1811 = vpop.permute.xlu0 %1810
      %v1814 = vsel %vm757, %v1409, %v1793
      %v1815 = vsel %vm757, %v1412, %v1795
      %v1816 = vsel %vm1283, %v1814, %v1801
      %v1817 = vsel %vm1283, %v1815, %v1803
      %v1818 = vsel %vm1286, %v1816, %v1809
      %v1819 = vsel %vm1286, %v1817, %v1811
      %vm1822 = vcmask 1041408
      %v1823 = vrot.slane %v1818, 6
      %v1824 = vrot.slane %v1819, 6
      %v1825 = vsel %vm1822, %v1823, %v1824
      %v1828 = vsel %vm1822, %v1288, %v1823
      %v1829 = vpack.c.bf16 %v1828, %v1287
      %v1830 = vpack.c.bf16 %v1825, %v1825
      %v1832 = vlaneseq
      %v1833 = vshrl.u32 %v1832, 7
      %v1834 = vsub.s32 0, %v1833
      %v1835 = vrot.slane %v752, %v1834
      %v1841 = vunpack.c.l.b16 %v748
      %v1842 = vunpack.c.l.b16 %v749
      %v1843 = vunpack.c.l.b16 %v750
      %v1844 = vunpack.c.l.b16 %v751
      %v1845 = vpack.c.b16 %v1842, %v1841
      %v1846 = vpack.c.b16 %v1844, %v1843
      %v1850 = vsel %vm693, %v1829, 0
      %v1853 = vsel %vm693, %v1830, 0
      %1855 = vmatprep.subr.bf16.mxu0 0
      %1856 = vmatpush1.bf16.msra.mxu0 %v1845
      %1857 = vmatprep.subr.bf16.mxu0 0
      %1858 = vmatpush1.bf16.msra.mxu0 %v1846
      %1859 = vmatprep.subr.bf16.mxu0 0
      %1860 = vmatpush1.bf16.msra.mxu0 0
      %1861 = vmatprep.subr.bf16.mxu0 0
      %1862 = vmatpush1.bf16.msra.mxu0 0
      %1863 = vmatprep.subr.bf16.mxu0 0
      %1864 = vmatpush1.bf16.msra.mxu0 0
      %1865 = vmatprep.subr.bf16.mxu0 0
      %1866 = vmatpush1.bf16.msra.mxu0 0
      %1867 = vmatprep.subr.bf16.mxu0 0
      %1868 = vmatpush1.bf16.msra.mxu0 0
      %1869 = vmatprep.subr.bf16.mxu0 0
      %1870 = vmatpush1.bf16.msra.mxu0 0
      %1871 = vmatprep.subr.bf16.mxu0 0
      %1872 = vmatpush1.bf16.msra.mxu0 0
      %1873 = vmatprep.subr.bf16.mxu0 0
      %1874 = vmatpush1.bf16.msra.mxu0 0
      %1875 = vmatprep.subr.bf16.mxu0 0
      %1876 = vmatpush1.bf16.msra.mxu0 0
      %1877 = vmatprep.subr.bf16.mxu0 0
      %1878 = vmatpush1.bf16.msra.mxu0 0
      %1879 = vmatprep.subr.bf16.mxu0 0
      %1880 = vmatpush1.bf16.msra.mxu0 0
      %1881 = vmatprep.subr.bf16.mxu0 0
      %1882 = vmatpush1.bf16.msra.mxu0 0
      %1883 = vmatprep.subr.bf16.mxu0 0
      %1884 = vmatpush1.bf16.msra.mxu0 0
      %1885 = vmatprep.subr.bf16.mxu0 0
      %1886 = vmatpush1.bf16.msra.mxu0 0
      %1887 = vmatprep.mubr.bf16.mxu0 0
      %1888 = vmatmul.mubr.bf16.gmra.mrb[0].mxu0 %v1850
      %v1889 = vpop.f32.mrb[0].mxu0
      %v1890 = vadd.f32 %v1835, %v1889
      %v1891 = vpop.f32.mrb[0].mxu0
      %v1892 = vpop.f32.mrb[0].mxu0
      %v1893 = vadd.f32 %v1835, %v1892
      %v1894 = vpop.f32.mrb[0].mxu0
      %1895 = vmatprep.mubr.bf16.mxu0 0
      %1896 = vmatmul.mubr.bf16.gmra.mrb[0].mxu0 %v1853
      %v1897 = vpop.f32.mrb[0].mxu0
      %v1898 = vadd.f32 %v1835, %v1897
      %v1899 = vpop.f32.mrb[0].mxu0
      %v1900 = vpop.f32.mrb[0].mxu0
      %v1901 = vpop.f32.mrb[0].mxu0
      %1902 = vdwg.mxu0
      %v1903 = vadd.f32 %v665, %v1890
      %v1904 = vadd.f32 %v666, %v1893
      %v1905 = vadd.f32 %v667, %v1898
      %v1906 = vld [vmem:[%s642] sm:$0x1]
      %v1907 = vld [vmem:[%s645] sm:$0x1]
      %v1908 = vsel %vm693, %v1903, 0.0
      %1909 = vadd.xlane.f32.xlu0 %v1908
      %v1910 = vpop.xlane.xlu0 %1909
      %v1911 = vsel %vm693, %v1904, 0.0
      %1912 = vadd.xlane.f32.xlu0 %v1911
      %v1913 = vpop.xlane.xlu0 %1912
      %vm1914 = vcmask 257024
      %v1915 = vsel %vm1914, %v1905, 0.0
      %1916 = vadd.xlane.f32.xlu0 %v1915
      %v1917 = vpop.xlane.xlu0 %1916
      %v1918 = vrcp.pop 32.0
      %v1919 = vmul.f32 %v1910, %v1918
      %v1920 = vmul.f32 %v1913, %v1918
      %v1921 = vmul.f32 %v1917, %v1918
      %v1922 = vsub.f32 %v1903, %v1919
      %v1923 = vsub.f32 %v1904, %v1920
      %v1924 = vsub.f32 %v1905, %v1921
      %v1925 = vmul.f32 %v1922, %v1922
      %v1926 = vmul.f32 %v1923, %v1923
      %v1927 = vmul.f32 %v1924, %v1924
      %v1928 = vsel %vm693, %v1925, 0.0
      %1929 = vadd.xlane.f32.xlu0 %v1928
      %v1930 = vpop.xlane.xlu0 %1929
      %v1931 = vsel %vm693, %v1926, 0.0
      %1932 = vadd.xlane.f32.xlu0 %v1931
      %v1933 = vpop.xlane.xlu0 %1932
      %v1934 = vsel %vm1914, %v1927, 0.0
      %1935 = vadd.xlane.f32.xlu0 %v1934
      %v1936 = vpop.xlane.xlu0 %1935
      %v1937 = vmul.f32 %v1930, %v1918
      %v1938 = vmul.f32 %v1933, %v1918
      %v1939 = vmul.f32 %v1936, %v1918
      %v1940 = vadd.f32 %v1937, 1e-05
      %v1941 = vadd.f32 %v1938, 1e-05
      %v1942 = vadd.f32 %v1939, 1e-05
      %v1943 = vrsqrt.pop %v1940
      %v1944 = vrsqrt.pop %v1941
      %v1945 = vrsqrt.pop %v1942
      %v1946 = vmul.f32 %v1922, %v1943
      %v1947 = vmul.f32 %v1923, %v1944
      %v1948 = vmul.f32 %v1924, %v1945
      %v1950 = vlaneseq
      %v1951 = vshrl.u32 %v1950, 7
      %v1952 = vsub.s32 0, %v1951
      %v1953 = vrot.slane %v1906, %v1952
      %v1955 = vmul.f32 %v1946, %v1953
      %v1956 = vmul.f32 %v1947, %v1953
      %v1957 = vmul.f32 %v1948, %v1953
      %v1959 = vlaneseq
      %v1960 = vshrl.u32 %v1959, 7
      %v1961 = vsub.s32 0, %v1960
      %v1962 = vrot.slane %v1907, %v1961
      %v1964 = vadd.f32 %v1955, %v1962
      %v1965 = vadd.f32 %v1956, %v1962
      %v1966 = vadd.f32 %v1957, %v1962
      %v1967 = vpack.c.bf16 %v1965, %v1964
      %v1968 = vpack.c.bf16 %v1966, %v1966
      %v1969 = vld [vmem:[%s628] sm:$0xf]
      %v1970 = vld [vmem:[%s628 + $0x4] sm:$0xf]
      %v1971 = vld [vmem:[%s628 + $0x8] sm:$0xf]
      %v1972 = vld [vmem:[%s628 + $0xc] sm:$0xf]
      %v1973 = vld [vmem:[%s631] sm:$0x1]
      %v1975 = vlaneseq
      %v1976 = vshrl.u32 %v1975, 7
      %v1977 = vsub.s32 0, %v1976
      %v1978 = vrot.slane %v1973, %v1977
      %v1984 = vunpack.c.l.b16 %v1969
      %v1985 = vunpack.c.l.b16 %v1970
      %v1986 = vunpack.c.l.b16 %v1971
      %v1987 = vunpack.c.l.b16 %v1972
      %v1988 = vpack.c.b16 %v1985, %v1984
      %v1989 = vpack.c.b16 %v1987, %v1986
      %v1993 = vsel %vm693, %v1967, 0
      %v1996 = vsel %vm693, %v1968, 0
      %1998 = vmatprep.subr.bf16.mxu0 0
      %1999 = vmatpush1.bf16.msra.mxu0 %v1988
      %2000 = vmatprep.subr.bf16.mxu0 0
      %2001 = vmatpush1.bf16.msra.mxu0 %v1989
      %2002 = vmatprep.subr.bf16.mxu0 0
      %2003 = vmatpush1.bf16.msra.mxu0 0
      %2004 = vmatprep.subr.bf16.mxu0 0
      %2005 = vmatpush1.bf16.msra.mxu0 0
      %2006 = vmatprep.subr.bf16.mxu0 0
      %2007 = vmatpush1.bf16.msra.mxu0 0
      %2008 = vmatprep.subr.bf16.mxu0 0
      %2009 = vmatpush1.bf16.msra.mxu0 0
      %2010 = vmatprep.subr.bf16.mxu0 0
      %2011 = vmatpush1.bf16.msra.mxu0 0
      %2012 = vmatprep.subr.bf16.mxu0 0
      %2013 = vmatpush1.bf16.msra.mxu0 0
      %2014 = vmatprep.subr.bf16.mxu0 0
      %2015 = vmatpush1.bf16.msra.mxu0 0
      %2016 = vmatprep.subr.bf16.mxu0 0
      %2017 = vmatpush1.bf16.msra.mxu0 0
      %2018 = vmatprep.subr.bf16.mxu0 0
      %2019 = vmatpush1.bf16.msra.mxu0 0
      %2020 = vmatprep.subr.bf16.mxu0 0
      %2021 = vmatpush1.bf16.msra.mxu0 0
      %2022 = vmatprep.subr.bf16.mxu0 0
      %2023 = vmatpush1.bf16.msra.mxu0 0
      %2024 = vmatprep.subr.bf16.mxu0 0
      %2025 = vmatpush1.bf16.msra.mxu0 0
      %2026 = vmatprep.subr.bf16.mxu0 0
      %2027 = vmatpush1.bf16.msra.mxu0 0
      %2028 = vmatprep.subr.bf16.mxu0 0
      %2029 = vmatpush1.bf16.msra.mxu0 0
      %2030 = vmatprep.mubr.bf16.mxu0 0
      %2031 = vmatmul.mubr.bf16.gmra.mrb[0].mxu0 %v1993
      %v2032 = vpop.f32.mrb[0].mxu0
      %v2033 = vadd.f32 %v1978, %v2032
      %v2034 = vpop.f32.mrb[0].mxu0
      %v2035 = vpop.f32.mrb[0].mxu0
      %v2036 = vadd.f32 %v1978, %v2035
      %v2037 = vpop.f32.mrb[0].mxu0
      %2038 = vmatprep.mubr.bf16.mxu0 0
      %2039 = vmatmul.mubr.bf16.gmra.mrb[0].mxu0 %v1996
      %v2040 = vpop.f32.mrb[0].mxu0
      %v2041 = vadd.f32 %v1978, %v2040
      %v2042 = vpop.f32.mrb[0].mxu0
      %v2043 = vpop.f32.mrb[0].mxu0
      %v2044 = vpop.f32.mrb[0].mxu0
      %2045 = vdwg.mxu0
      %v2046 = vmax.f32 %v2033, 0.0
      %v2047 = vmax.f32 %v2036, 0.0
      %v2048 = vmax.f32 %v2041, 0.0
      %v2049 = vpack.c.bf16 %v2047, %v2046
      %v2050 = vpack.c.bf16 %v2048, %v2048
      %v2051 = vld [vmem:[%s636] sm:$0xf]
      %v2052 = vld [vmem:[%s636 + $0x4] sm:$0xf]
      %v2053 = vld [vmem:[%s636 + $0x8] sm:$0xf]
      %v2054 = vld [vmem:[%s636 + $0xc] sm:$0xf]
      %v2055 = vld [vmem:[%s636 + $0x10] sm:$0xf]
      %v2056 = vld [vmem:[%s636 + $0x14] sm:$0xf]
      %v2057 = vld [vmem:[%s636 + $0x18] sm:$0xf]
      %v2058 = vld [vmem:[%s636 + $0x1c] sm:$0xf]
      %v2059 = vld [vmem:[%s639] sm:$0x1]
      %v2061 = vlaneseq
      %v2062 = vshrl.u32 %v2061, 7
      %v2063 = vsub.s32 0, %v2062
      %v2064 = vrot.slane %v2059, %v2063
      %v2074 = vunpack.c.l.b16 %v2051
      %v2075 = vunpack.c.l.b16 %v2052
      %v2076 = vunpack.c.l.b16 %v2053
      %v2077 = vunpack.c.l.b16 %v2054
      %v2078 = vunpack.c.l.b16 %v2055
      %v2079 = vunpack.c.l.b16 %v2056
      %v2080 = vunpack.c.l.b16 %v2057
      %v2081 = vunpack.c.l.b16 %v2058
      %v2082 = vpack.c.b16 %v2075, %v2074
      %v2083 = vpack.c.b16 %v2077, %v2076
      %v2084 = vpack.c.b16 %v2079, %v2078
      %v2085 = vpack.c.b16 %v2081, %v2080
      %vm2090 = vcmask 523264
      %v2092 = vsel %vm2090, %v2049, 0
      %v2095 = vsel %vm2090, %v2050, 0
      %2097 = vmatprep.subr.bf16.mxu0 0
      %2098 = vmatpush1.bf16.msra.mxu0 %v2082
      %2099 = vmatprep.subr.bf16.mxu0 0
      %2100 = vmatpush1.bf16.msra.mxu0 %v2083
      %2101 = vmatprep.subr.bf16.mxu0 0
      %2102 = vmatpush1.bf16.msra.mxu0 %v2084
      %2103 = vmatprep.subr.bf16.mxu0 0
      %2104 = vmatpush1.bf16.msra.mxu0 %v2085
      %2105 = vmatprep.subr.bf16.mxu0 0
      %2106 = vmatpush1.bf16.msra.mxu0 0
      %2107 = vmatprep.subr.bf16.mxu0 0
      %2108 = vmatpush1.bf16.msra.mxu0 0
      %2109 = vmatprep.subr.bf16.mxu0 0
      %2110 = vmatpush1.bf16.msra.mxu0 0
      %2111 = vmatprep.subr.bf16.mxu0 0
      %2112 = vmatpush1.bf16.msra.mxu0 0
      %2113 = vmatprep.subr.bf16.mxu0 0
      %2114 = vmatpush1.bf16.msra.mxu0 0
      %2115 = vmatprep.subr.bf16.mxu0 0
      %2116 = vmatpush1.bf16.msra.mxu0 0
      %2117 = vmatprep.subr.bf16.mxu0 0
      %2118 = vmatpush1.bf16.msra.mxu0 0
      %2119 = vmatprep.subr.bf16.mxu0 0
      %2120 = vmatpush1.bf16.msra.mxu0 0
      %2121 = vmatprep.subr.bf16.mxu0 0
      %2122 = vmatpush1.bf16.msra.mxu0 0
      %2123 = vmatprep.subr.bf16.mxu0 0
      %2124 = vmatpush1.bf16.msra.mxu0 0
      %2125 = vmatprep.subr.bf16.mxu0 0
      %2126 = vmatpush1.bf16.msra.mxu0 0
      %2127 = vmatprep.subr.bf16.mxu0 0
      %2128 = vmatpush1.bf16.msra.mxu0 0
      %2129 = vmatprep.mubr.bf16.mxu0 0
      %2130 = vmatmul.mubr.bf16.gmra.mrb[0].mxu0 %v2092
      %v2131 = vpop.f32.mrb[0].mxu0
      %v2132 = vadd.f32 %v2064, %v2131
      %v2133 = vpop.f32.mrb[0].mxu0
      %v2134 = vpop.f32.mrb[0].mxu0
      %v2135 = vadd.f32 %v2064, %v2134
      %v2136 = vpop.f32.mrb[0].mxu0
      %2137 = vmatprep.mubr.bf16.mxu0 0
      %2138 = vmatmul.mubr.bf16.gmra.mrb[0].mxu0 %v2095
      %v2139 = vpop.f32.mrb[0].mxu0
      %v2140 = vadd.f32 %v2064, %v2139
      %v2141 = vpop.f32.mrb[0].mxu0
      %v2142 = vpop.f32.mrb[0].mxu0
      %v2143 = vpop.f32.mrb[0].mxu0
      %2144 = vdwg.mxu0
      %v2145 = vadd.f32 %v1964, %v2132
      %v2146 = vadd.f32 %v1965, %v2135
      %v2147 = vadd.f32 %v1966, %v2140
      %v2148 = vld [vmem:[%s648] sm:$0x1]
      %v2149 = vld [vmem:[%s651] sm:$0x1]
      %v2150 = vsel %vm693, %v2145, 0.0
      %2151 = vadd.xlane.f32.xlu0 %v2150
      %v2152 = vpop.xlane.xlu0 %2151
      %v2153 = vsel %vm693, %v2146, 0.0
      %2154 = vadd.xlane.f32.xlu0 %v2153
      %v2155 = vpop.xlane.xlu0 %2154
      %v2156 = vsel %vm1914, %v2147, 0.0
      %2157 = vadd.xlane.f32.xlu0 %v2156
      %v2158 = vpop.xlane.xlu0 %2157
      %v2159 = vmul.f32 %v2152, %v1918
      %v2160 = vmul.f32 %v2155, %v1918
      %v2161 = vmul.f32 %v2158, %v1918
      %v2162 = vsub.f32 %v2145, %v2159
      %v2163 = vsub.f32 %v2146, %v2160
      %v2164 = vsub.f32 %v2147, %v2161
      %v2165 = vmul.f32 %v2162, %v2162
      %v2166 = vmul.f32 %v2163, %v2163
      %v2167 = vmul.f32 %v2164, %v2164
      %v2168 = vsel %vm693, %v2165, 0.0
      %2169 = vadd.xlane.f32.xlu0 %v2168
      %v2170 = vpop.xlane.xlu0 %2169
      %v2171 = vsel %vm693, %v2166, 0.0
      %2172 = vadd.xlane.f32.xlu0 %v2171
      %v2173 = vpop.xlane.xlu0 %2172
      %v2174 = vsel %vm1914, %v2167, 0.0
      %2175 = vadd.xlane.f32.xlu0 %v2174
      %v2176 = vpop.xlane.xlu0 %2175
      %v2177 = vmul.f32 %v2170, %v1918
      %v2178 = vmul.f32 %v2173, %v1918
      %v2179 = vmul.f32 %v2176, %v1918
      %v2180 = vadd.f32 %v2177, 1e-05
      %v2181 = vadd.f32 %v2178, 1e-05
      %v2182 = vadd.f32 %v2179, 1e-05
      %v2183 = vrsqrt.pop %v2180
      %v2184 = vrsqrt.pop %v2181
      %v2185 = vrsqrt.pop %v2182
      %v2186 = vmul.f32 %v2162, %v2183
      %v2187 = vmul.f32 %v2163, %v2184
      %v2188 = vmul.f32 %v2164, %v2185
      %v2190 = vlaneseq
      %v2191 = vshrl.u32 %v2190, 7
      %v2192 = vsub.s32 0, %v2191
      %v2193 = vrot.slane %v2148, %v2192
      %v2195 = vmul.f32 %v2186, %v2193
      %v2196 = vmul.f32 %v2187, %v2193
      %v2197 = vmul.f32 %v2188, %v2193
      %v2199 = vlaneseq
      %v2200 = vshrl.u32 %v2199, 7
      %v2201 = vsub.s32 0, %v2200
      %v2202 = vrot.slane %v2149, %v2201
      %v2204 = vadd.f32 %v2195, %v2202
      %v2205 = vadd.f32 %v2196, %v2202
      %v2206 = vadd.f32 %v2197, %v2202
      %2207 = vst.msk [vmem:[#allocation2] sm:$0xff] %vm693, %v2204
      %2208 = vst.msk [vmem:[#allocation2 + $0x8] sm:$0xff] %vm693, %v2205
      %2209 = vst.msk [vmem:[#allocation2 + $0x10] sm:$0xf] %vm1914, %v2206
      %p2210 = scmp.eq.s32.totalorder %s26, 1
      // Predicated region
      $region85: #{my_transformer_forward.2} parent=79 // pred_check
        %p2211 = pneg %p2210
      $region86: #{my_transformer_forward.2} parent=79 // pred_check_branch
        %2213 = sbr.rel (%p2211) target = $region88
      $region87: #{my_transformer_forward.2} parent=79 // pred_region
        %v2214 = vld [vmem:[%s13] sm:$0x1]
        %v2215 = vld [vmem:[%s14] sm:$0x1]
        %v2216 = vsel %vm693, %v2204, 0.0
        %2217 = vadd.xlane.f32.xlu0 %v2216
        %v2218 = vpop.xlane.xlu0 %2217
        %v2219 = vsel %vm693, %v2205, 0.0
        %2220 = vadd.xlane.f32.xlu0 %v2219
        %v2221 = vpop.xlane.xlu0 %2220
        %v2222 = vsel %vm1914, %v2206, 0.0
        %2223 = vadd.xlane.f32.xlu0 %v2222
        %v2224 = vpop.xlane.xlu0 %2223
        %v2225 = vmul.f32 %v2218, %v1918
        %v2226 = vmul.f32 %v2221, %v1918
        %v2227 = vmul.f32 %v2224, %v1918
        %v2228 = vsub.f32 %v2204, %v2225
        %v2229 = vsub.f32 %v2205, %v2226
        %v2230 = vsub.f32 %v2206, %v2227
        %v2231 = vmul.f32 %v2228, %v2228
        %v2232 = vmul.f32 %v2229, %v2229
        %v2233 = vmul.f32 %v2230, %v2230
        %v2234 = vsel %vm693, %v2231, 0.0
        %2235 = vadd.xlane.f32.xlu0 %v2234
        %v2236 = vpop.xlane.xlu0 %2235
        %v2237 = vsel %vm693, %v2232, 0.0
        %2238 = vadd.xlane.f32.xlu0 %v2237
        %v2239 = vpop.xlane.xlu0 %2238
        %v2240 = vsel %vm1914, %v2233, 0.0
        %2241 = vadd.xlane.f32.xlu0 %v2240
        %v2242 = vpop.xlane.xlu0 %2241
        %v2243 = vmul.f32 %v2236, %v1918
        %v2244 = vmul.f32 %v2239, %v1918
        %v2245 = vmul.f32 %v2242, %v1918
        %v2246 = vadd.f32 %v2243, 1e-05
        %v2247 = vadd.f32 %v2244, 1e-05
        %v2248 = vadd.f32 %v2245, 1e-05
        %v2249 = vrsqrt.pop %v2246
        %v2250 = vrsqrt.pop %v2247
        %v2251 = vrsqrt.pop %v2248
        %v2252 = vmul.f32 %v2228, %v2249
        %v2253 = vmul.f32 %v2229, %v2250
        %v2254 = vmul.f32 %v2230, %v2251
        %v2256 = vlaneseq
        %v2257 = vshrl.u32 %v2256, 7
        %v2258 = vsub.s32 0, %v2257
        %v2259 = vrot.slane %v2214, %v2258
        %v2261 = vmul.f32 %v2252, %v2259
        %v2262 = vmul.f32 %v2253, %v2259
        %v2263 = vmul.f32 %v2254, %v2259
        %v2265 = vlaneseq
        %v2266 = vshrl.u32 %v2265, 7
        %v2267 = vsub.s32 0, %v2266
        %v2268 = vrot.slane %v2215, %v2267
        %v2270 = vadd.f32 %v2261, %v2268
        %v2271 = vadd.f32 %v2262, %v2268
        %v2272 = vadd.f32 %v2263, %v2268
        %2273 = vst.msk [vmem:[%s15] sm:$0xff] %vm693, %v2270
        %2274 = vst.msk [vmem:[%s15 + $0x8] sm:$0xff] %vm693, %v2271
        %2275 = vst.msk [vmem:[%s15 + $0x10] sm:$0xf] %vm1914, %v2272
      $region88: #{my_transformer_forward.2} parent=79 // pred_fallthru
        _
      // Predicated region
      $region89: #{my_transformer_forward.2} parent=79 // pred_check
        %p2276 = pneg %p414
      $region90: #{my_transformer_forward.2} parent=79 // pred_check_branch
        %2278 = sbr.rel (%p2276) target = $region92
      $region91: #{my_transformer_forward.2} parent=79 // pred_region
        _
      $region92: #{my_transformer_forward.2} parent=79 // pred_fallthru
        _
      // Predicated region
      $region93: #{my_transformer_forward.2} parent=79 // pred_check
        %p2279 = pneg %p414
      $region94: #{my_transformer_forward.2} parent=79 // pred_check_branch
        %2281 = sbr.rel (%p2279) target = $region96
      $region95: #{my_transformer_forward.2} parent=79 // pred_region
        _
      $region96: #{my_transformer_forward.2} parent=79 // pred_fallthru
        _
    $region80: #{my_transformer_forward.2} parent=5 // pred_fallthru
      _
    %p2282 = scmp.le.s32.totalorder 2, %s21
    // Predicated region
    $region97: #{my_transformer_forward.2} parent=5 // pred_check
      %p2283 = pneg %p2282
    $region98: #{my_transformer_forward.2} parent=5 // pred_check_branch
      %2285 = sbr.rel (%p2283) target = $region100
    $region99: #{my_transformer_forward.2} parent=5 // pred_region
      %s2286 = ssub.s32 %s21, 2
    $region100: #{my_transformer_forward.2} parent=5 // pred_fallthru
      _
  $region6: #{my_transformer_forward.2} parent=0 // loop_footer
    %s25 = sadd.s32 1, %s21
  $region7: #{my_transformer_forward.2} parent=0 // loop_footer_branch
    %20 = sbr.rel target = $region3
  $region8: #{my_transformer_forward.2} parent=0 // loop_exit
    _

// kernel: my_transformer_forward.3
$region0: #{my_transformer_forward.3}
  #allocation0 [shape = 'u32[]', space=smem, size = 0x4, offset = 0x4, fixed_abs, tag = 'smem constant byte address 0x4 - core index']
  #allocation1 [shape = 'u32[144,128]{1,0:T(1,128)}', space=vmem, size = 0x12000, scoped, tag = 'internal scratch']
  #allocation2 [shape = 'f32[16,32]{1,0:T(8,128)}', space=vmem, size = 0x2000, scoped, tag = 'scratch operand']
  %s0 = inlined_call_operand.vmem [shape: f32[16,32], index: 0, kind: input, shape index: {}]
  %s1 = inlined_call_operand.vmem [shape: f32[20,32], index: 1, kind: input, shape index: {}]
  %s2 = inlined_call_operand.vmem [shape: bf16[2,32,96], index: 2, kind: input, shape index: {}]
  %s3 = inlined_call_operand.vmem [shape: f32[2,1,96], index: 3, kind: input, shape index: {}]
  %s4 = inlined_call_operand.vmem [shape: bf16[2,32,32], index: 4, kind: input, shape index: {}]
  %s5 = inlined_call_operand.vmem [shape: f32[2,1,32], index: 5, kind: input, shape index: {}]
  %s6 = inlined_call_operand.vmem [shape: bf16[2,32,32], index: 6, kind: input, shape index: {}]
  %s7 = inlined_call_operand.vmem [shape: f32[2,1,32], index: 7, kind: input, shape index: {}]
  %s8 = inlined_call_operand.vmem [shape: bf16[2,32,64], index: 8, kind: input, shape index: {}]
  %s9 = inlined_call_operand.vmem [shape: f32[2,1,64], index: 9, kind: input, shape index: {}]
  %s10 = inlined_call_operand.vmem [shape: bf16[2,32,32], index: 10, kind: input, shape index: {}]
  %s11 = inlined_call_operand.vmem [shape: f32[2,1,32], index: 11, kind: input, shape index: {}]
  %s12 = inlined_call_operand.vmem [shape: bf16[2,32,64], index: 12, kind: input, shape index: {}]
  %s13 = inlined_call_operand.vmem [shape: f32[2,1,64], index: 13, kind: input, shape index: {}]
  %s14 = inlined_call_operand.vmem [shape: bf16[2,64,32], index: 14, kind: input, shape index: {}]
  %s15 = inlined_call_operand.vmem [shape: f32[2,1,32], index: 15, kind: input, shape index: {}]
  %s16 = inlined_call_operand.vmem [shape: f32[2,1,32], index: 16, kind: input, shape index: {}]
  %s17 = inlined_call_operand.vmem [shape: f32[2,1,32], index: 17, kind: input, shape index: {}]
  %s18 = inlined_call_operand.vmem [shape: f32[2,1,32], index: 18, kind: input, shape index: {}]
  %s19 = inlined_call_operand.vmem [shape: f32[2,1,32], index: 19, kind: input, shape index: {}]
  %s20 = inlined_call_operand.vmem [shape: f32[2,1,32], index: 20, kind: input, shape index: {}]
  %s21 = inlined_call_operand.vmem [shape: f32[2,1,32], index: 21, kind: input, shape index: {}]
  %s22 = inlined_call_operand.vmem [shape: f32[1,32], index: 22, kind: input, shape index: {}]
  %s23 = inlined_call_operand.vmem [shape: f32[1,32], index: 23, kind: input, shape index: {}]
  %s24 = inlined_call_operand.vmem [shape: f32[16,32], index: 24, kind: output, shape index: {}]
  %s25 = sld [smem:[#allocation0]]
  $region137: #{my_transformer_forward.3} parent=0
    _
  %s27 = ssub.s32 1, %s25
  %s28 = scalar_select 0, %s27, %s25
  loop: start=0, step=1, limit=4
  $region2: #{my_transformer_forward.3} parent=0 // loop_pre_header
    _
  $region3: #{my_transformer_forward.3} parent=0 // loop_header
    %s30 = sphi 0, %s34
    %p31 = scmp.ge.s32.totalorder %s30, 4
    %s38 = sphi 0, %s38
    %s40 = sphi 0, %s38
    %s41 = sphi 0, %s40
    %s55 = sphi 0, %s41
    %s59 = sphi 0, %s59
    %s61 = sphi 0, %s59
    %s62 = sphi 0, %s61
    %s76 = sphi 0, %s62
    %s82 = sphi 0, %s84
    %s85 = sphi 0, %s82
    %s86 = sphi 0, %s85
    %s102 = sphi 0, %s86
    %s108 = sphi 0, %s110
    %s111 = sphi 0, %s108
    %s112 = sphi 0, %s111
    %s128 = sphi 0, %s112
    %s134 = sphi 0, %s136
    %s137 = sphi 0, %s134
    %s138 = sphi 0, %s137
    %s154 = sphi 0, %s138
    %s160 = sphi 0, %s162
    %s163 = sphi 0, %s160
    %s164 = sphi 0, %s163
    %s180 = sphi 0, %s164
    %s186 = sphi 0, %s188
    %s189 = sphi 0, %s186
    %s190 = sphi 0, %s189
    %s206 = sphi 0, %s190
    %s212 = sphi 0, %s214
    %s215 = sphi 0, %s212
    %s216 = sphi 0, %s215
    %s232 = sphi 0, %s216
    %s238 = sphi 0, %s240
    %s241 = sphi 0, %s238
    %s242 = sphi 0, %s241
    %s258 = sphi 0, %s242
    %s264 = sphi 0, %s266
    %s267 = sphi 0, %s264
    %s268 = sphi 0, %s267
    %s284 = sphi 0, %s268
    %s290 = sphi 0, %s292
    %s293 = sphi 0, %s290
    %s294 = sphi 0, %s293
    %s310 = sphi 0, %s294
    %s316 = sphi 0, %s318
    %s319 = sphi 0, %s316
    %s320 = sphi 0, %s319
    %s336 = sphi 0, %s320
    %s342 = sphi 0, %s344
    %s345 = sphi 0, %s342
    %s346 = sphi 0, %s345
    %s362 = sphi 0, %s346
    %s368 = sphi 0, %s370
    %s371 = sphi 0, %s368
    %s372 = sphi 0, %s371
    %s388 = sphi 0, %s372
    %s394 = sphi 0, %s396
    %s397 = sphi 0, %s394
    %s398 = sphi 0, %s397
    %s414 = sphi 0, %s398
    %s420 = sphi 0, %s422
    %s423 = sphi 0, %s420
    %s424 = sphi 0, %s423
    %s440 = sphi 0, %s424
    %s446 = sphi 0, %s448
    %s449 = sphi 0, %s446
    %s450 = sphi 0, %s449
    %s466 = sphi 0, %s450
    %s472 = sphi 0, %s474
    %s475 = sphi 0, %s472
    %s476 = sphi 0, %s475
    %s492 = sphi 0, %s476
    %s498 = sphi 0, %s500
    %s501 = sphi 0, %s498
    %s502 = sphi 0, %s501
    %s518 = sphi 0, %s502
    %s524 = sphi 0, %s526
    %s527 = sphi 0, %s524
    %s528 = sphi 0, %s527
    %s544 = sphi 0, %s528
    %s550 = sphi 0, %s552
    %s553 = sphi 0, %s550
    %s554 = sphi 0, %s553
    %s570 = sphi 0, %s554
    %s576 = sphi 0, %s578
    %s579 = sphi 0, %s576
    %s580 = sphi 0, %s579
    %s596 = sphi 0, %s580
    %s600 = sphi 0, %s600
    %s602 = sphi 0, %s600
    %s603 = sphi 0, %s602
    %s617 = sphi 0, %s603
    %s621 = sphi 0, %s621
    %s623 = sphi 0, %s621
    %s624 = sphi 0, %s623
    %s638 = sphi 0, %s624
    %s642 = sphi 0, %s642
    %s644 = sphi 0, %s642
    %s645 = sphi 0, %s644
    %s659 = sphi 0, %s645
  $region4: #{my_transformer_forward.3} parent=0 // loop_header_branch
    %33 = sbr.rel (%p31) target = $region8
  $region5: #{my_transformer_forward.3} parent=0 // loop_body
    %s35 = ssub.s32 %s30, 1
    %s36 = ssub.s32 %s30, 2
    %s37 = sadd.s32 %s30, 1
    %s39 = sadd.s32 %s38, 1
    %p42 = scmp.eq.s32.totalorder %s30, 1
    %p43 = scmp.ne.s32.totalorder %s38, %s40
    %p44 = scmp.eq.s32.totalorder %s30, 0
    %p45 = por %p43, %p44
    %p46 = scmp.ne.s32.totalorder %s38, %s40
    %p47 = scmp.eq.s32.totalorder %s35, 1
    %p48 = por %p46, %p47
    %p49 = scmp.ne.s32.totalorder %s40, %s41
    %p50 = scmp.eq.s32.totalorder %s35, 0
    %p51 = por %p49, %p50
    %p52 = scmp.ne.s32.totalorder %s40, %s41
    %p53 = scmp.eq.s32.totalorder %s36, 1
    %p54 = por %p52, %p53
    %p56 = scmp.ne.s32.totalorder %s41, %s55
    %p57 = scmp.eq.s32.totalorder %s36, 0
    %p58 = por %p56, %p57
    %s60 = sadd.s32 %s59, 1
    %p63 = scmp.eq.s32.totalorder %s30, 1
    %p64 = scmp.ne.s32.totalorder %s59, %s61
    %p65 = scmp.eq.s32.totalorder %s30, 0
    %p66 = por %p64, %p65
    %p67 = scmp.ne.s32.totalorder %s59, %s61
    %p68 = scmp.eq.s32.totalorder %s35, 1
    %p69 = por %p67, %p68
    %p70 = scmp.ne.s32.totalorder %s61, %s62
    %p71 = scmp.eq.s32.totalorder %s35, 0
    %p72 = por %p70, %p71
    %p73 = scmp.ne.s32.totalorder %s61, %s62
    %p74 = scmp.eq.s32.totalorder %s36, 1
    %p75 = por %p73, %p74
    %p77 = scmp.ne.s32.totalorder %s62, %s76
    %p78 = scmp.eq.s32.totalorder %s36, 0
    %p79 = por %p77, %p78
    %s80 = ssub.s32 %s30, %s37
    %p81 = scmp.eq.s32.totalorder %s80, 0
    %s83 = sadd.s32 %s82, 1
    %s84 = scalar_select %p81, %s82, %s83
    %p87 = pneg %p81
    %p88 = scmp.eq.s32.totalorder %s30, 1
    %p89 = por %p87, %p88
    %p90 = scmp.ne.s32.totalorder %s82, %s85
    %p91 = scmp.eq.s32.totalorder %s30, 0
    %p92 = por %p90, %p91
    %p93 = scmp.ne.s32.totalorder %s82, %s85
    %p94 = scmp.eq.s32.totalorder %s35, 1
    %p95 = por %p93, %p94
    %p96 = scmp.ne.s32.totalorder %s85, %s86
    %p97 = scmp.eq.s32.totalorder %s35, 0
    %p98 = por %p96, %p97
    %p99 = scmp.ne.s32.totalorder %s85, %s86
    %p100 = scmp.eq.s32.totalorder %s36, 1
    %p101 = por %p99, %p100
    %p103 = scmp.ne.s32.totalorder %s86, %s102
    %p104 = scmp.eq.s32.totalorder %s36, 0
    %p105 = por %p103, %p104
    %s106 = ssub.s32 %s30, %s37
    %p107 = scmp.eq.s32.totalorder %s106, 0
    %s109 = sadd.s32 %s108, 1
    %s110 = scalar_select %p107, %s108, %s109
    %p113 = pneg %p107
    %p114 = scmp.eq.s32.totalorder %s30, 1
    %p115 = por %p113, %p114
    %p116 = scmp.ne.s32.totalorder %s108, %s111
    %p117 = scmp.eq.s32.totalorder %s30, 0
    %p118 = por %p116, %p117
    %p119 = scmp.ne.s32.totalorder %s108, %s111
    %p120 = scmp.eq.s32.totalorder %s35, 1
    %p121 = por %p119, %p120
    %p122 = scmp.ne.s32.totalorder %s111, %s112
    %p123 = scmp.eq.s32.totalorder %s35, 0
    %p124 = por %p122, %p123
    %p125 = scmp.ne.s32.totalorder %s111, %s112
    %p126 = scmp.eq.s32.totalorder %s36, 1
    %p127 = por %p125, %p126
    %p129 = scmp.ne.s32.totalorder %s112, %s128
    %p130 = scmp.eq.s32.totalorder %s36, 0
    %p131 = por %p129, %p130
    %s132 = ssub.s32 %s30, %s37
    %p133 = scmp.eq.s32.totalorder %s132, 0
    %s135 = sadd.s32 %s134, 1
    %s136 = scalar_select %p133, %s134, %s135
    %p139 = pneg %p133
    %p140 = scmp.eq.s32.totalorder %s30, 1
    %p141 = por %p139, %p140
    %p142 = scmp.ne.s32.totalorder %s134, %s137
    %p143 = scmp.eq.s32.totalorder %s30, 0
    %p144 = por %p142, %p143
    %p145 = scmp.ne.s32.totalorder %s134, %s137
    %p146 = scmp.eq.s32.totalorder %s35, 1
    %p147 = por %p145, %p146
    %p148 = scmp.ne.s32.totalorder %s137, %s138
    %p149 = scmp.eq.s32.totalorder %s35, 0
    %p150 = por %p148, %p149
    %p151 = scmp.ne.s32.totalorder %s137, %s138
    %p152 = scmp.eq.s32.totalorder %s36, 1
    %p153 = por %p151, %p152
    %p155 = scmp.ne.s32.totalorder %s138, %s154
    %p156 = scmp.eq.s32.totalorder %s36, 0
    %p157 = por %p155, %p156
    %s158 = ssub.s32 %s30, %s37
    %p159 = scmp.eq.s32.totalorder %s158, 0
    %s161 = sadd.s32 %s160, 1
    %s162 = scalar_select %p159, %s160, %s161
    %p165 = pneg %p159
    %p166 = scmp.eq.s32.totalorder %s30, 1
    %p167 = por %p165, %p166
    %p168 = scmp.ne.s32.totalorder %s160, %s163
    %p169 = scmp.eq.s32.totalorder %s30, 0
    %p170 = por %p168, %p169
    %p171 = scmp.ne.s32.totalorder %s160, %s163
    %p172 = scmp.eq.s32.totalorder %s35, 1
    %p173 = por %p171, %p172
    %p174 = scmp.ne.s32.totalorder %s163, %s164
    %p175 = scmp.eq.s32.totalorder %s35, 0
    %p176 = por %p174, %p175
    %p177 = scmp.ne.s32.totalorder %s163, %s164
    %p178 = scmp.eq.s32.totalorder %s36, 1
    %p179 = por %p177, %p178
    %p181 = scmp.ne.s32.totalorder %s164, %s180
    %p182 = scmp.eq.s32.totalorder %s36, 0
    %p183 = por %p181, %p182
    %s184 = ssub.s32 %s30, %s37
    %p185 = scmp.eq.s32.totalorder %s184, 0
    %s187 = sadd.s32 %s186, 1
    %s188 = scalar_select %p185, %s186, %s187
    %p191 = pneg %p185
    %p192 = scmp.eq.s32.totalorder %s30, 1
    %p193 = por %p191, %p192
    %p194 = scmp.ne.s32.totalorder %s186, %s189
    %p195 = scmp.eq.s32.totalorder %s30, 0
    %p196 = por %p194, %p195
    %p197 = scmp.ne.s32.totalorder %s186, %s189
    %p198 = scmp.eq.s32.totalorder %s35, 1
    %p199 = por %p197, %p198
    %p200 = scmp.ne.s32.totalorder %s189, %s190
    %p201 = scmp.eq.s32.totalorder %s35, 0
    %p202 = por %p200, %p201
    %p203 = scmp.ne.s32.totalorder %s189, %s190
    %p204 = scmp.eq.s32.totalorder %s36, 1
    %p205 = por %p203, %p204
    %p207 = scmp.ne.s32.totalorder %s190, %s206
    %p208 = scmp.eq.s32.totalorder %s36, 0
    %p209 = por %p207, %p208
    %s210 = ssub.s32 %s30, %s37
    %p211 = scmp.eq.s32.totalorder %s210, 0
    %s213 = sadd.s32 %s212, 1
    %s214 = scalar_select %p211, %s212, %s213
    %p217 = pneg %p211
    %p218 = scmp.eq.s32.totalorder %s30, 1
    %p219 = por %p217, %p218
    %p220 = scmp.ne.s32.totalorder %s212, %s215
    %p221 = scmp.eq.s32.totalorder %s30, 0
    %p222 = por %p220, %p221
    %p223 = scmp.ne.s32.totalorder %s212, %s215
    %p224 = scmp.eq.s32.totalorder %s35, 1
    %p225 = por %p223, %p224
    %p226 = scmp.ne.s32.totalorder %s215, %s216
    %p227 = scmp.eq.s32.totalorder %s35, 0
    %p228 = por %p226, %p227
    %p229 = scmp.ne.s32.totalorder %s215, %s216
    %p230 = scmp.eq.s32.totalorder %s36, 1
    %p231 = por %p229, %p230
    %p233 = scmp.ne.s32.totalorder %s216, %s232
    %p234 = scmp.eq.s32.totalorder %s36, 0
    %p235 = por %p233, %p234
    %s236 = ssub.s32 %s30, %s37
    %p237 = scmp.eq.s32.totalorder %s236, 0
    %s239 = sadd.s32 %s238, 1
    %s240 = scalar_select %p237, %s238, %s239
    %p243 = pneg %p237
    %p244 = scmp.eq.s32.totalorder %s30, 1
    %p245 = por %p243, %p244
    %p246 = scmp.ne.s32.totalorder %s238, %s241
    %p247 = scmp.eq.s32.totalorder %s30, 0
    %p248 = por %p246, %p247
    %p249 = scmp.ne.s32.totalorder %s238, %s241
    %p250 = scmp.eq.s32.totalorder %s35, 1
    %p251 = por %p249, %p250
    %p252 = scmp.ne.s32.totalorder %s241, %s242
    %p253 = scmp.eq.s32.totalorder %s35, 0
    %p254 = por %p252, %p253
    %p255 = scmp.ne.s32.totalorder %s241, %s242
    %p256 = scmp.eq.s32.totalorder %s36, 1
    %p257 = por %p255, %p256
    %p259 = scmp.ne.s32.totalorder %s242, %s258
    %p260 = scmp.eq.s32.totalorder %s36, 0
    %p261 = por %p259, %p260
    %s262 = ssub.s32 %s30, %s37
    %p263 = scmp.eq.s32.totalorder %s262, 0
    %s265 = sadd.s32 %s264, 1
    %s266 = scalar_select %p263, %s264, %s265
    %p269 = pneg %p263
    %p270 = scmp.eq.s32.totalorder %s30, 1
    %p271 = por %p269, %p270
    %p272 = scmp.ne.s32.totalorder %s264, %s267
    %p273 = scmp.eq.s32.totalorder %s30, 0
    %p274 = por %p272, %p273
    %p275 = scmp.ne.s32.totalorder %s264, %s267
    %p276 = scmp.eq.s32.totalorder %s35, 1
    %p277 = por %p275, %p276
    %p278 = scmp.ne.s32.totalorder %s267, %s268
    %p279 = scmp.eq.s32.totalorder %s35, 0
    %p280 = por %p278, %p279
    %p281 = scmp.ne.s32.totalorder %s267, %s268
    %p282 = scmp.eq.s32.totalorder %s36, 1
    %p283 = por %p281, %p282
    %p285 = scmp.ne.s32.totalorder %s268, %s284
    %p286 = scmp.eq.s32.totalorder %s36, 0
    %p287 = por %p285, %p286
    %s288 = ssub.s32 %s30, %s37
    %p289 = scmp.eq.s32.totalorder %s288, 0
    %s291 = sadd.s32 %s290, 1
    %s292 = scalar_select %p289, %s290, %s291
    %p295 = pneg %p289
    %p296 = scmp.eq.s32.totalorder %s30, 1
    %p297 = por %p295, %p296
    %p298 = scmp.ne.s32.totalorder %s290, %s293
    %p299 = scmp.eq.s32.totalorder %s30, 0
    %p300 = por %p298, %p299
    %p301 = scmp.ne.s32.totalorder %s290, %s293
    %p302 = scmp.eq.s32.totalorder %s35, 1
    %p303 = por %p301, %p302
    %p304 = scmp.ne.s32.totalorder %s293, %s294
    %p305 = scmp.eq.s32.totalorder %s35, 0
    %p306 = por %p304, %p305
    %p307 = scmp.ne.s32.totalorder %s293, %s294
    %p308 = scmp.eq.s32.totalorder %s36, 1
    %p309 = por %p307, %p308
    %p311 = scmp.ne.s32.totalorder %s294, %s310
    %p312 = scmp.eq.s32.totalorder %s36, 0
    %p313 = por %p311, %p312
    %s314 = ssub.s32 %s30, %s37
    %p315 = scmp.eq.s32.totalorder %s314, 0
    %s317 = sadd.s32 %s316, 1
    %s318 = scalar_select %p315, %s316, %s317
    %p321 = pneg %p315
    %p322 = scmp.eq.s32.totalorder %s30, 1
    %p323 = por %p321, %p322
    %p324 = scmp.ne.s32.totalorder %s316, %s319
    %p325 = scmp.eq.s32.totalorder %s30, 0
    %p326 = por %p324, %p325
    %p327 = scmp.ne.s32.totalorder %s316, %s319
    %p328 = scmp.eq.s32.totalorder %s35, 1
    %p329 = por %p327, %p328
    %p330 = scmp.ne.s32.totalorder %s319, %s320
    %p331 = scmp.eq.s32.totalorder %s35, 0
    %p332 = por %p330, %p331
    %p333 = scmp.ne.s32.totalorder %s319, %s320
    %p334 = scmp.eq.s32.totalorder %s36, 1
    %p335 = por %p333, %p334
    %p337 = scmp.ne.s32.totalorder %s320, %s336
    %p338 = scmp.eq.s32.totalorder %s36, 0
    %p339 = por %p337, %p338
    %s340 = ssub.s32 %s30, %s37
    %p341 = scmp.eq.s32.totalorder %s340, 0
    %s343 = sadd.s32 %s342, 1
    %s344 = scalar_select %p341, %s342, %s343
    %p347 = pneg %p341
    %p348 = scmp.eq.s32.totalorder %s30, 1
    %p349 = por %p347, %p348
    %p350 = scmp.ne.s32.totalorder %s342, %s345
    %p351 = scmp.eq.s32.totalorder %s30, 0
    %p352 = por %p350, %p351
    %p353 = scmp.ne.s32.totalorder %s342, %s345
    %p354 = scmp.eq.s32.totalorder %s35, 1
    %p355 = por %p353, %p354
    %p356 = scmp.ne.s32.totalorder %s345, %s346
    %p357 = scmp.eq.s32.totalorder %s35, 0
    %p358 = por %p356, %p357
    %p359 = scmp.ne.s32.totalorder %s345, %s346
    %p360 = scmp.eq.s32.totalorder %s36, 1
    %p361 = por %p359, %p360
    %p363 = scmp.ne.s32.totalorder %s346, %s362
    %p364 = scmp.eq.s32.totalorder %s36, 0
    %p365 = por %p363, %p364
    %s366 = ssub.s32 %s30, %s37
    %p367 = scmp.eq.s32.totalorder %s366, 0
    %s369 = sadd.s32 %s368, 1
    %s370 = scalar_select %p367, %s368, %s369
    %p373 = pneg %p367
    %p374 = scmp.eq.s32.totalorder %s30, 1
    %p375 = por %p373, %p374
    %p376 = scmp.ne.s32.totalorder %s368, %s371
    %p377 = scmp.eq.s32.totalorder %s30, 0
    %p378 = por %p376, %p377
    %p379 = scmp.ne.s32.totalorder %s368, %s371
    %p380 = scmp.eq.s32.totalorder %s35, 1
    %p381 = por %p379, %p380
    %p382 = scmp.ne.s32.totalorder %s371, %s372
    %p383 = scmp.eq.s32.totalorder %s35, 0
    %p384 = por %p382, %p383
    %p385 = scmp.ne.s32.totalorder %s371, %s372
    %p386 = scmp.eq.s32.totalorder %s36, 1
    %p387 = por %p385, %p386
    %p389 = scmp.ne.s32.totalorder %s372, %s388
    %p390 = scmp.eq.s32.totalorder %s36, 0
    %p391 = por %p389, %p390
    %s392 = ssub.s32 %s30, %s37
    %p393 = scmp.eq.s32.totalorder %s392, 0
    %s395 = sadd.s32 %s394, 1
    %s396 = scalar_select %p393, %s394, %s395
    %p399 = pneg %p393
    %p400 = scmp.eq.s32.totalorder %s30, 1
    %p401 = por %p399, %p400
    %p402 = scmp.ne.s32.totalorder %s394, %s397
    %p403 = scmp.eq.s32.totalorder %s30, 0
    %p404 = por %p402, %p403
    %p405 = scmp.ne.s32.totalorder %s394, %s397
    %p406 = scmp.eq.s32.totalorder %s35, 1
    %p407 = por %p405, %p406
    %p408 = scmp.ne.s32.totalorder %s397, %s398
    %p409 = scmp.eq.s32.totalorder %s35, 0
    %p410 = por %p408, %p409
    %p411 = scmp.ne.s32.totalorder %s397, %s398
    %p412 = scmp.eq.s32.totalorder %s36, 1
    %p413 = por %p411, %p412
    %p415 = scmp.ne.s32.totalorder %s398, %s414
    %p416 = scmp.eq.s32.totalorder %s36, 0
    %p417 = por %p415, %p416
    %s418 = ssub.s32 %s30, %s37
    %p419 = scmp.eq.s32.totalorder %s418, 0
    %s421 = sadd.s32 %s420, 1
    %s422 = scalar_select %p419, %s420, %s421
    %p425 = pneg %p419
    %p426 = scmp.eq.s32.totalorder %s30, 1
    %p427 = por %p425, %p426
    %p428 = scmp.ne.s32.totalorder %s420, %s423
    %p429 = scmp.eq.s32.totalorder %s30, 0
    %p430 = por %p428, %p429
    %p431 = scmp.ne.s32.totalorder %s420, %s423
    %p432 = scmp.eq.s32.totalorder %s35, 1
    %p433 = por %p431, %p432
    %p434 = scmp.ne.s32.totalorder %s423, %s424
    %p435 = scmp.eq.s32.totalorder %s35, 0
    %p436 = por %p434, %p435
    %p437 = scmp.ne.s32.totalorder %s423, %s424
    %p438 = scmp.eq.s32.totalorder %s36, 1
    %p439 = por %p437, %p438
    %p441 = scmp.ne.s32.totalorder %s424, %s440
    %p442 = scmp.eq.s32.totalorder %s36, 0
    %p443 = por %p441, %p442
    %s444 = ssub.s32 %s30, %s37
    %p445 = scmp.eq.s32.totalorder %s444, 0
    %s447 = sadd.s32 %s446, 1
    %s448 = scalar_select %p445, %s446, %s447
    %p451 = pneg %p445
    %p452 = scmp.eq.s32.totalorder %s30, 1
    %p453 = por %p451, %p452
    %p454 = scmp.ne.s32.totalorder %s446, %s449
    %p455 = scmp.eq.s32.totalorder %s30, 0
    %p456 = por %p454, %p455
    %p457 = scmp.ne.s32.totalorder %s446, %s449
    %p458 = scmp.eq.s32.totalorder %s35, 1
    %p459 = por %p457, %p458
    %p460 = scmp.ne.s32.totalorder %s449, %s450
    %p461 = scmp.eq.s32.totalorder %s35, 0
    %p462 = por %p460, %p461
    %p463 = scmp.ne.s32.totalorder %s449, %s450
    %p464 = scmp.eq.s32.totalorder %s36, 1
    %p465 = por %p463, %p464
    %p467 = scmp.ne.s32.totalorder %s450, %s466
    %p468 = scmp.eq.s32.totalorder %s36, 0
    %p469 = por %p467, %p468
    %s470 = ssub.s32 %s30, %s37
    %p471 = scmp.eq.s32.totalorder %s470, 0
    %s473 = sadd.s32 %s472, 1
    %s474 = scalar_select %p471, %s472, %s473
    %p477 = pneg %p471
    %p478 = scmp.eq.s32.totalorder %s30, 1
    %p479 = por %p477, %p478
    %p480 = scmp.ne.s32.totalorder %s472, %s475
    %p481 = scmp.eq.s32.totalorder %s30, 0
    %p482 = por %p480, %p481
    %p483 = scmp.ne.s32.totalorder %s472, %s475
    %p484 = scmp.eq.s32.totalorder %s35, 1
    %p485 = por %p483, %p484
    %p486 = scmp.ne.s32.totalorder %s475, %s476
    %p487 = scmp.eq.s32.totalorder %s35, 0
    %p488 = por %p486, %p487
    %p489 = scmp.ne.s32.totalorder %s475, %s476
    %p490 = scmp.eq.s32.totalorder %s36, 1
    %p491 = por %p489, %p490
    %p493 = scmp.ne.s32.totalorder %s476, %s492
    %p494 = scmp.eq.s32.totalorder %s36, 0
    %p495 = por %p493, %p494
    %s496 = ssub.s32 %s30, %s37
    %p497 = scmp.eq.s32.totalorder %s496, 0
    %s499 = sadd.s32 %s498, 1
    %s500 = scalar_select %p497, %s498, %s499
    %p503 = pneg %p497
    %p504 = scmp.eq.s32.totalorder %s30, 1
    %p505 = por %p503, %p504
    %p506 = scmp.ne.s32.totalorder %s498, %s501
    %p507 = scmp.eq.s32.totalorder %s30, 0
    %p508 = por %p506, %p507
    %p509 = scmp.ne.s32.totalorder %s498, %s501
    %p510 = scmp.eq.s32.totalorder %s35, 1
    %p511 = por %p509, %p510
    %p512 = scmp.ne.s32.totalorder %s501, %s502
    %p513 = scmp.eq.s32.totalorder %s35, 0
    %p514 = por %p512, %p513
    %p515 = scmp.ne.s32.totalorder %s501, %s502
    %p516 = scmp.eq.s32.totalorder %s36, 1
    %p517 = por %p515, %p516
    %p519 = scmp.ne.s32.totalorder %s502, %s518
    %p520 = scmp.eq.s32.totalorder %s36, 0
    %p521 = por %p519, %p520
    %s522 = ssub.s32 %s30, %s37
    %p523 = scmp.eq.s32.totalorder %s522, 0
    %s525 = sadd.s32 %s524, 1
    %s526 = scalar_select %p523, %s524, %s525
    %p529 = pneg %p523
    %p530 = scmp.eq.s32.totalorder %s30, 1
    %p531 = por %p529, %p530
    %p532 = scmp.ne.s32.totalorder %s524, %s527
    %p533 = scmp.eq.s32.totalorder %s30, 0
    %p534 = por %p532, %p533
    %p535 = scmp.ne.s32.totalorder %s524, %s527
    %p536 = scmp.eq.s32.totalorder %s35, 1
    %p537 = por %p535, %p536
    %p538 = scmp.ne.s32.totalorder %s527, %s528
    %p539 = scmp.eq.s32.totalorder %s35, 0
    %p540 = por %p538, %p539
    %p541 = scmp.ne.s32.totalorder %s527, %s528
    %p542 = scmp.eq.s32.totalorder %s36, 1
    %p543 = por %p541, %p542
    %p545 = scmp.ne.s32.totalorder %s528, %s544
    %p546 = scmp.eq.s32.totalorder %s36, 0
    %p547 = por %p545, %p546
    %s548 = ssub.s32 %s30, %s37
    %p549 = scmp.eq.s32.totalorder %s548, 0
    %s551 = sadd.s32 %s550, 1
    %s552 = scalar_select %p549, %s550, %s551
    %p555 = pneg %p549
    %p556 = scmp.eq.s32.totalorder %s30, 1
    %p557 = por %p555, %p556
    %p558 = scmp.ne.s32.totalorder %s550, %s553
    %p559 = scmp.eq.s32.totalorder %s30, 0
    %p560 = por %p558, %p559
    %p561 = scmp.ne.s32.totalorder %s550, %s553
    %p562 = scmp.eq.s32.totalorder %s35, 1
    %p563 = por %p561, %p562
    %p564 = scmp.ne.s32.totalorder %s553, %s554
    %p565 = scmp.eq.s32.totalorder %s35, 0
    %p566 = por %p564, %p565
    %p567 = scmp.ne.s32.totalorder %s553, %s554
    %p568 = scmp.eq.s32.totalorder %s36, 1
    %p569 = por %p567, %p568
    %p571 = scmp.ne.s32.totalorder %s554, %s570
    %p572 = scmp.eq.s32.totalorder %s36, 0
    %p573 = por %p571, %p572
    %s574 = ssub.s32 %s30, %s37
    %p575 = scmp.eq.s32.totalorder %s574, 0
    %s577 = sadd.s32 %s576, 1
    %s578 = scalar_select %p575, %s576, %s577
    %p581 = pneg %p575
    %p582 = scmp.eq.s32.totalorder %s30, 1
    %p583 = por %p581, %p582
    %p584 = scmp.ne.s32.totalorder %s576, %s579
    %p585 = scmp.eq.s32.totalorder %s30, 0
    %p586 = por %p584, %p585
    %p587 = scmp.ne.s32.totalorder %s576, %s579
    %p588 = scmp.eq.s32.totalorder %s35, 1
    %p589 = por %p587, %p588
    %p590 = scmp.ne.s32.totalorder %s579, %s580
    %p591 = scmp.eq.s32.totalorder %s35, 0
    %p592 = por %p590, %p591
    %p593 = scmp.ne.s32.totalorder %s579, %s580
    %p594 = scmp.eq.s32.totalorder %s36, 1
    %p595 = por %p593, %p594
    %p597 = scmp.ne.s32.totalorder %s580, %s596
    %p598 = scmp.eq.s32.totalorder %s36, 0
    %p599 = por %p597, %p598
    %s601 = sadd.s32 %s600, 1
    %p604 = scmp.eq.s32.totalorder %s30, 1
    %p605 = scmp.ne.s32.totalorder %s600, %s602
    %p606 = scmp.eq.s32.totalorder %s30, 0
    %p607 = por %p605, %p606
    %p608 = scmp.ne.s32.totalorder %s600, %s602
    %p609 = scmp.eq.s32.totalorder %s35, 1
    %p610 = por %p608, %p609
    %p611 = scmp.ne.s32.totalorder %s602, %s603
    %p612 = scmp.eq.s32.totalorder %s35, 0
    %p613 = por %p611, %p612
    %p614 = scmp.ne.s32.totalorder %s602, %s603
    %p615 = scmp.eq.s32.totalorder %s36, 1
    %p616 = por %p614, %p615
    %p618 = scmp.ne.s32.totalorder %s603, %s617
    %p619 = scmp.eq.s32.totalorder %s36, 0
    %p620 = por %p618, %p619
    %s622 = sadd.s32 %s621, 1
    %p625 = scmp.eq.s32.totalorder %s30, 1
    %p626 = scmp.ne.s32.totalorder %s621, %s623
    %p627 = scmp.eq.s32.totalorder %s30, 0
    %p628 = por %p626, %p627
    %p629 = scmp.ne.s32.totalorder %s621, %s623
    %p630 = scmp.eq.s32.totalorder %s35, 1
    %p631 = por %p629, %p630
    %p632 = scmp.ne.s32.totalorder %s623, %s624
    %p633 = scmp.eq.s32.totalorder %s35, 0
    %p634 = por %p632, %p633
    %p635 = scmp.ne.s32.totalorder %s623, %s624
    %p636 = scmp.eq.s32.totalorder %s36, 1
    %p637 = por %p635, %p636
    %p639 = scmp.ne.s32.totalorder %s624, %s638
    %p640 = scmp.eq.s32.totalorder %s36, 0
    %p641 = por %p639, %p640
    %s643 = sadd.s32 %s642, 1
    %p646 = scmp.eq.s32.totalorder %s30, 1
    %p647 = scmp.ne.s32.totalorder %s642, %s644
    %p648 = scmp.eq.s32.totalorder %s30, 0
    %p649 = por %p647, %p648
    %p650 = scmp.ne.s32.totalorder %s642, %s644
    %p651 = scmp.eq.s32.totalorder %s35, 1
    %p652 = por %p650, %p651
    %p653 = scmp.ne.s32.totalorder %s644, %s645
    %p654 = scmp.eq.s32.totalorder %s35, 0
    %p655 = por %p653, %p654
    %p656 = scmp.ne.s32.totalorder %s644, %s645
    %p657 = scmp.eq.s32.totalorder %s36, 1
    %p658 = por %p656, %p657
    %p660 = scmp.ne.s32.totalorder %s645, %s659
    %p661 = scmp.eq.s32.totalorder %s36, 0
    %p662 = por %p660, %p661
    %p663 = scmp.le.s32.totalorder 1, %s30
    %p664 = scmp.lt.s32.totalorder %s30, 3
    %p665 = pnand %p663, %p664
    %p666 = pneg %p665
    // Predicated region
    $region9: #{my_transformer_forward.3} parent=5 // pred_check
      _
    $region10: #{my_transformer_forward.3} parent=5 // pred_check_branch
      %668 = sbr.rel (%p665) target = $region12
    $region11: #{my_transformer_forward.3} parent=5 // pred_region
      %s669 = ssub.s32 %s30, 1
      // Predicated region
      $region13: #{my_transformer_forward.3} parent=11 // pred_check
        %p670 = pneg %p51
      $region14: #{my_transformer_forward.3} parent=11 // pred_check_branch
        %672 = sbr.rel (%p670) target = $region16
      $region15: #{my_transformer_forward.3} parent=11 // pred_region
        _
      $region16: #{my_transformer_forward.3} parent=11 // pred_fallthru
        _
      // Predicated region
      $region17: #{my_transformer_forward.3} parent=11 // pred_check
        %p673 = pneg %p72
      $region18: #{my_transformer_forward.3} parent=11 // pred_check_branch
        %675 = sbr.rel (%p673) target = $region20
      $region19: #{my_transformer_forward.3} parent=11 // pred_region
        _
      $region20: #{my_transformer_forward.3} parent=11 // pred_fallthru
        _
      // Predicated region
      $region21: #{my_transformer_forward.3} parent=11 // pred_check
        %p676 = pneg %p613
      $region22: #{my_transformer_forward.3} parent=11 // pred_check_branch
        %678 = sbr.rel (%p676) target = $region24
      $region23: #{my_transformer_forward.3} parent=11 // pred_region
        _
      $region24: #{my_transformer_forward.3} parent=11 // pred_fallthru
        _
      // Predicated region
      $region25: #{my_transformer_forward.3} parent=11 // pred_check
        %p679 = pneg %p634
      $region26: #{my_transformer_forward.3} parent=11 // pred_check_branch
        %681 = sbr.rel (%p679) target = $region28
      $region27: #{my_transformer_forward.3} parent=11 // pred_region
        _
      $region28: #{my_transformer_forward.3} parent=11 // pred_fallthru
        _
    $region12: #{my_transformer_forward.3} parent=5 // pred_fallthru
      _
    %p682 = scmp.lt.s32.totalorder %s30, 2
    // Predicated region
    $region29: #{my_transformer_forward.3} parent=5 // pred_check
      %p683 = pneg %p682
    $region30: #{my_transformer_forward.3} parent=5 // pred_check_branch
      %685 = sbr.rel (%p683) target = $region32
    $region31: #{my_transformer_forward.3} parent=5 // pred_region
      // Predicated region
      $region33: #{my_transformer_forward.3} parent=31 // pred_check
        %p686 = pneg %p92
      $region34: #{my_transformer_forward.3} parent=31 // pred_check_branch
        %688 = sbr.rel (%p686) target = $region36
      $region35: #{my_transformer_forward.3} parent=31 // pred_region
        %p689 = scmp.lt.s32.totalorder %s30, 1
        %s690 = scalar_select %p689, %s30, 1
        %s691 = smul.addr %s690, 4
        %s692 = smul.addr %s691, 4
        %s693 = scalar_lea.vmem %s2, %s692
      $region36: #{my_transformer_forward.3} parent=31 // pred_fallthru
        _
      // Predicated region
      $region37: #{my_transformer_forward.3} parent=31 // pred_check
        %p694 = pneg %p118
      $region38: #{my_transformer_forward.3} parent=31 // pred_check_branch
        %696 = sbr.rel (%p694) target = $region40
      $region39: #{my_transformer_forward.3} parent=31 // pred_region
        %p697 = scmp.lt.s32.totalorder %s30, 1
        %s698 = scalar_select %p697, %s30, 1
        %s699 = scalar_lea.vmem %s3, %s698
      $region40: #{my_transformer_forward.3} parent=31 // pred_fallthru
        _
      // Predicated region
      $region41: #{my_transformer_forward.3} parent=31 // pred_check
        %p700 = pneg %p144
      $region42: #{my_transformer_forward.3} parent=31 // pred_check_branch
        %702 = sbr.rel (%p700) target = $region44
      $region43: #{my_transformer_forward.3} parent=31 // pred_region
        %p703 = scmp.lt.s32.totalorder %s30, 1
        %s704 = scalar_select %p703, %s30, 1
        %s705 = smul.addr %s704, 4
        %s706 = smul.addr %s705, 4
        %s707 = scalar_lea.vmem %s4, %s706
      $region44: #{my_transformer_forward.3} parent=31 // pred_fallthru
        _
      // Predicated region
      $region45: #{my_transformer_forward.3} parent=31 // pred_check
        %p708 = pneg %p170
      $region46: #{my_transformer_forward.3} parent=31 // pred_check_branch
        %710 = sbr.rel (%p708) target = $region48
      $region47: #{my_transformer_forward.3} parent=31 // pred_region
        %p711 = scmp.lt.s32.totalorder %s30, 1
        %s712 = scalar_select %p711, %s30, 1
        %s713 = scalar_lea.vmem %s5, %s712
      $region48: #{my_transformer_forward.3} parent=31 // pred_fallthru
        _
      // Predicated region
      $region49: #{my_transformer_forward.3} parent=31 // pred_check
        %p714 = pneg %p196
      $region50: #{my_transformer_forward.3} parent=31 // pred_check_branch
        %716 = sbr.rel (%p714) target = $region52
      $region51: #{my_transformer_forward.3} parent=31 // pred_region
        %p717 = scmp.lt.s32.totalorder %s30, 1
        %s718 = scalar_select %p717, %s30, 1
        %s719 = smul.addr %s718, 4
        %s720 = smul.addr %s719, 4
        %s721 = scalar_lea.vmem %s6, %s720
      $region52: #{my_transformer_forward.3} parent=31 // pred_fallthru
        _
      // Predicated region
      $region53: #{my_transformer_forward.3} parent=31 // pred_check
        %p722 = pneg %p222
      $region54: #{my_transformer_forward.3} parent=31 // pred_check_branch
        %724 = sbr.rel (%p722) target = $region56
      $region55: #{my_transformer_forward.3} parent=31 // pred_region
        %p725 = scmp.lt.s32.totalorder %s30, 1
        %s726 = scalar_select %p725, %s30, 1
        %s727 = scalar_lea.vmem %s7, %s726
      $region56: #{my_transformer_forward.3} parent=31 // pred_fallthru
        _
      // Predicated region
      $region57: #{my_transformer_forward.3} parent=31 // pred_check
        %p728 = pneg %p248
      $region58: #{my_transformer_forward.3} parent=31 // pred_check_branch
        %730 = sbr.rel (%p728) target = $region60
      $region59: #{my_transformer_forward.3} parent=31 // pred_region
        %p731 = scmp.lt.s32.totalorder %s30, 1
        %s732 = scalar_select %p731, %s30, 1
        %s733 = smul.addr %s732, 4
        %s734 = smul.addr %s733, 4
        %s735 = scalar_lea.vmem %s8, %s734
      $region60: #{my_transformer_forward.3} parent=31 // pred_fallthru
        _
      // Predicated region
      $region61: #{my_transformer_forward.3} parent=31 // pred_check
        %p736 = pneg %p274
      $region62: #{my_transformer_forward.3} parent=31 // pred_check_branch
        %738 = sbr.rel (%p736) target = $region64
      $region63: #{my_transformer_forward.3} parent=31 // pred_region
        %p739 = scmp.lt.s32.totalorder %s30, 1
        %s740 = scalar_select %p739, %s30, 1
        %s741 = scalar_lea.vmem %s9, %s740
      $region64: #{my_transformer_forward.3} parent=31 // pred_fallthru
        _
      // Predicated region
      $region65: #{my_transformer_forward.3} parent=31 // pred_check
        %p742 = pneg %p300
      $region66: #{my_transformer_forward.3} parent=31 // pred_check_branch
        %744 = sbr.rel (%p742) target = $region68
      $region67: #{my_transformer_forward.3} parent=31 // pred_region
        %p745 = scmp.lt.s32.totalorder %s30, 1
        %s746 = scalar_select %p745, %s30, 1
        %s747 = smul.addr %s746, 4
        %s748 = smul.addr %s747, 4
        %s749 = scalar_lea.vmem %s10, %s748
      $region68: #{my_transformer_forward.3} parent=31 // pred_fallthru
        _
      // Predicated region
      $region69: #{my_transformer_forward.3} parent=31 // pred_check
        %p750 = pneg %p326
      $region70: #{my_transformer_forward.3} parent=31 // pred_check_branch
        %752 = sbr.rel (%p750) target = $region72
      $region71: #{my_transformer_forward.3} parent=31 // pred_region
        %p753 = scmp.lt.s32.totalorder %s30, 1
        %s754 = scalar_select %p753, %s30, 1
        %s755 = scalar_lea.vmem %s11, %s754
      $region72: #{my_transformer_forward.3} parent=31 // pred_fallthru
        _
      // Predicated region
      $region73: #{my_transformer_forward.3} parent=31 // pred_check
        %p756 = pneg %p352
      $region74: #{my_transformer_forward.3} parent=31 // pred_check_branch
        %758 = sbr.rel (%p756) target = $region76
      $region75: #{my_transformer_forward.3} parent=31 // pred_region
        %p759 = scmp.lt.s32.totalorder %s30, 1
        %s760 = scalar_select %p759, %s30, 1
        %s761 = smul.addr %s760, 4
        %s762 = smul.addr %s761, 4
        %s763 = scalar_lea.vmem %s12, %s762
      $region76: #{my_transformer_forward.3} parent=31 // pred_fallthru
        _
      // Predicated region
      $region77: #{my_transformer_forward.3} parent=31 // pred_check
        %p764 = pneg %p378
      $region78: #{my_transformer_forward.3} parent=31 // pred_check_branch
        %766 = sbr.rel (%p764) target = $region80
      $region79: #{my_transformer_forward.3} parent=31 // pred_region
        %p767 = scmp.lt.s32.totalorder %s30, 1
        %s768 = scalar_select %p767, %s30, 1
        %s769 = scalar_lea.vmem %s13, %s768
      $region80: #{my_transformer_forward.3} parent=31 // pred_fallthru
        _
      // Predicated region
      $region81: #{my_transformer_forward.3} parent=31 // pred_check
        %p770 = pneg %p404
      $region82: #{my_transformer_forward.3} parent=31 // pred_check_branch
        %772 = sbr.rel (%p770) target = $region84
      $region83: #{my_transformer_forward.3} parent=31 // pred_region
        %p773 = scmp.lt.s32.totalorder %s30, 1
        %s774 = scalar_select %p773, %s30, 1
        %s775 = smul.addr %s774, 8
        %s776 = smul.addr %s775, 4
        %s777 = scalar_lea.vmem %s14, %s776
      $region84: #{my_transformer_forward.3} parent=31 // pred_fallthru
        _
      // Predicated region
      $region85: #{my_transformer_forward.3} parent=31 // pred_check
        %p778 = pneg %p430
      $region86: #{my_transformer_forward.3} parent=31 // pred_check_branch
        %780 = sbr.rel (%p778) target = $region88
      $region87: #{my_transformer_forward.3} parent=31 // pred_region
        %p781 = scmp.lt.s32.totalorder %s30, 1
        %s782 = scalar_select %p781, %s30, 1
        %s783 = scalar_lea.vmem %s15, %s782
      $region88: #{my_transformer_forward.3} parent=31 // pred_fallthru
        _
      // Predicated region
      $region89: #{my_transformer_forward.3} parent=31 // pred_check
        %p784 = pneg %p456
      $region90: #{my_transformer_forward.3} parent=31 // pred_check_branch
        %786 = sbr.rel (%p784) target = $region92
      $region91: #{my_transformer_forward.3} parent=31 // pred_region
        %p787 = scmp.lt.s32.totalorder %s30, 1
        %s788 = scalar_select %p787, %s30, 1
        %s789 = scalar_lea.vmem %s16, %s788
      $region92: #{my_transformer_forward.3} parent=31 // pred_fallthru
        _
      // Predicated region
      $region93: #{my_transformer_forward.3} parent=31 // pred_check
        %p790 = pneg %p482
      $region94: #{my_transformer_forward.3} parent=31 // pred_check_branch
        %792 = sbr.rel (%p790) target = $region96
      $region95: #{my_transformer_forward.3} parent=31 // pred_region
        %p793 = scmp.lt.s32.totalorder %s30, 1
        %s794 = scalar_select %p793, %s30, 1
        %s795 = scalar_lea.vmem %s17, %s794
      $region96: #{my_transformer_forward.3} parent=31 // pred_fallthru
        _
      // Predicated region
      $region97: #{my_transformer_forward.3} parent=31 // pred_check
        %p796 = pneg %p508
      $region98: #{my_transformer_forward.3} parent=31 // pred_check_branch
        %798 = sbr.rel (%p796) target = $region100
      $region99: #{my_transformer_forward.3} parent=31 // pred_region
        %p799 = scmp.lt.s32.totalorder %s30, 1
        %s800 = scalar_select %p799, %s30, 1
        %s801 = scalar_lea.vmem %s18, %s800
      $region100: #{my_transformer_forward.3} parent=31 // pred_fallthru
        _
      // Predicated region
      $region101: #{my_transformer_forward.3} parent=31 // pred_check
        %p802 = pneg %p534
      $region102: #{my_transformer_forward.3} parent=31 // pred_check_branch
        %804 = sbr.rel (%p802) target = $region104
      $region103: #{my_transformer_forward.3} parent=31 // pred_region
        %p805 = scmp.lt.s32.totalorder %s30, 1
        %s806 = scalar_select %p805, %s30, 1
        %s807 = scalar_lea.vmem %s19, %s806
      $region104: #{my_transformer_forward.3} parent=31 // pred_fallthru
        _
      // Predicated region
      $region105: #{my_transformer_forward.3} parent=31 // pred_check
        %p808 = pneg %p560
      $region106: #{my_transformer_forward.3} parent=31 // pred_check_branch
        %810 = sbr.rel (%p808) target = $region108
      $region107: #{my_transformer_forward.3} parent=31 // pred_region
        %p811 = scmp.lt.s32.totalorder %s30, 1
        %s812 = scalar_select %p811, %s30, 1
        %s813 = scalar_lea.vmem %s20, %s812
      $region108: #{my_transformer_forward.3} parent=31 // pred_fallthru
        _
      // Predicated region
      $region109: #{my_transformer_forward.3} parent=31 // pred_check
        %p814 = pneg %p586
      $region110: #{my_transformer_forward.3} parent=31 // pred_check_branch
        %816 = sbr.rel (%p814) target = $region112
      $region111: #{my_transformer_forward.3} parent=31 // pred_region
        %p817 = scmp.lt.s32.totalorder %s30, 1
        %s818 = scalar_select %p817, %s30, 1
        %s819 = scalar_lea.vmem %s21, %s818
      $region112: #{my_transformer_forward.3} parent=31 // pred_fallthru
        _
    $region32: #{my_transformer_forward.3} parent=5 // pred_fallthru
      _
    %p820 = scmp.le.s32.totalorder 1, %s30
    %p821 = scmp.lt.s32.totalorder %s30, 3
    %p822 = pnand %p820, %p821
    %p823 = pneg %p822
    // Predicated region
    $region113: #{my_transformer_forward.3} parent=5 // pred_check
      _
    $region114: #{my_transformer_forward.3} parent=5 // pred_check_branch
      %825 = sbr.rel (%p822) target = $region116
    $region115: #{my_transformer_forward.3} parent=5 // pred_region
      %s826 = ssub.s32 %s30, 1
      %p827 = pneg %p51
      %p828 = pneg %p48
      %p829 = pneg %p72
      %p830 = pneg %p69
      %p831 = scmp.lt.s32.totalorder %s35, 1
      %s832 = scalar_select %p831, %s35, 1
      %s833 = smul.addr %s832, 4
      %s834 = smul.addr %s833, 4
      %s835 = scalar_lea.vmem %s2, %s834
      %p836 = pneg %p98
      %p837 = pneg %p95
      %p838 = scmp.lt.s32.totalorder %s35, 1
      %s839 = scalar_select %p838, %s35, 1
      %s840 = scalar_lea.vmem %s3, %s839
      %p841 = pneg %p124
      %p842 = pneg %p121
      %p843 = scmp.lt.s32.totalorder %s35, 1
      %s844 = scalar_select %p843, %s35, 1
      %s845 = smul.addr %s844, 4
      %s846 = smul.addr %s845, 4
      %s847 = scalar_lea.vmem %s4, %s846
      %p848 = pneg %p150
      %p849 = pneg %p147
      %p850 = scmp.lt.s32.totalorder %s35, 1
      %s851 = scalar_select %p850, %s35, 1
      %s852 = scalar_lea.vmem %s5, %s851
      %p853 = pneg %p176
      %p854 = pneg %p173
      %p855 = scmp.lt.s32.totalorder %s35, 1
      %s856 = scalar_select %p855, %s35, 1
      %s857 = smul.addr %s856, 4
      %s858 = smul.addr %s857, 4
      %s859 = scalar_lea.vmem %s6, %s858
      %p860 = pneg %p202
      %p861 = pneg %p199
      %p862 = scmp.lt.s32.totalorder %s35, 1
      %s863 = scalar_select %p862, %s35, 1
      %s864 = scalar_lea.vmem %s7, %s863
      %p865 = pneg %p228
      %p866 = pneg %p225
      %p867 = scmp.lt.s32.totalorder %s35, 1
      %s868 = scalar_select %p867, %s35, 1
      %s869 = smul.addr %s868, 4
      %s870 = smul.addr %s869, 4
      %s871 = scalar_lea.vmem %s8, %s870
      %p872 = pneg %p254
      %p873 = pneg %p251
      %p874 = scmp.lt.s32.totalorder %s35, 1
      %s875 = scalar_select %p874, %s35, 1
      %s876 = scalar_lea.vmem %s9, %s875
      %p877 = pneg %p280
      %p878 = pneg %p277
      %p879 = scmp.lt.s32.totalorder %s35, 1
      %s880 = scalar_select %p879, %s35, 1
      %s881 = smul.addr %s880, 4
      %s882 = smul.addr %s881, 4
      %s883 = scalar_lea.vmem %s10, %s882
      %p884 = pneg %p306
      %p885 = pneg %p303
      %p886 = scmp.lt.s32.totalorder %s35, 1
      %s887 = scalar_select %p886, %s35, 1
      %s888 = scalar_lea.vmem %s11, %s887
      %p889 = pneg %p332
      %p890 = pneg %p329
      %p891 = scmp.lt.s32.totalorder %s35, 1
      %s892 = scalar_select %p891, %s35, 1
      %s893 = smul.addr %s892, 4
      %s894 = smul.addr %s893, 4
      %s895 = scalar_lea.vmem %s12, %s894
      %p896 = pneg %p358
      %p897 = pneg %p355
      %p898 = scmp.lt.s32.totalorder %s35, 1
      %s899 = scalar_select %p898, %s35, 1
      %s900 = scalar_lea.vmem %s13, %s899
      %p901 = pneg %p384
      %p902 = pneg %p381
      %p903 = scmp.lt.s32.totalorder %s35, 1
      %s904 = scalar_select %p903, %s35, 1
      %s905 = smul.addr %s904, 8
      %s906 = smul.addr %s905, 4
      %s907 = scalar_lea.vmem %s14, %s906
      %p908 = pneg %p410
      %p909 = pneg %p407
      %p910 = scmp.lt.s32.totalorder %s35, 1
      %s911 = scalar_select %p910, %s35, 1
      %s912 = scalar_lea.vmem %s15, %s911
      %p913 = pneg %p436
      %p914 = pneg %p433
      %p915 = scmp.lt.s32.totalorder %s35, 1
      %s916 = scalar_select %p915, %s35, 1
      %s917 = scalar_lea.vmem %s16, %s916
      %p918 = pneg %p462
      %p919 = pneg %p459
      %p920 = scmp.lt.s32.totalorder %s35, 1
      %s921 = scalar_select %p920, %s35, 1
      %s922 = scalar_lea.vmem %s17, %s921
      %p923 = pneg %p488
      %p924 = pneg %p485
      %p925 = scmp.lt.s32.totalorder %s35, 1
      %s926 = scalar_select %p925, %s35, 1
      %s927 = scalar_lea.vmem %s18, %s926
      %p928 = pneg %p514
      %p929 = pneg %p511
      %p930 = scmp.lt.s32.totalorder %s35, 1
      %s931 = scalar_select %p930, %s35, 1
      %s932 = scalar_lea.vmem %s19, %s931
      %p933 = pneg %p540
      %p934 = pneg %p537
      %p935 = scmp.lt.s32.totalorder %s35, 1
      %s936 = scalar_select %p935, %s35, 1
      %s937 = scalar_lea.vmem %s20, %s936
      %p938 = pneg %p566
      %p939 = pneg %p563
      %p940 = scmp.lt.s32.totalorder %s35, 1
      %s941 = scalar_select %p940, %s35, 1
      %s942 = scalar_lea.vmem %s21, %s941
      %p943 = pneg %p592
      %p944 = pneg %p589
      %p945 = pneg %p613
      %p946 = pneg %p610
      %p947 = pneg %p634
      %p948 = pneg %p631
      %p949 = pneg %p655
      %p950 = pneg %p652
      %p951 = scmp.lt.s32.totalorder %s35, 1
      %s952 = scalar_select %p951, %s35, 1
      %s953 = smul.addr %s952, 4
      %s954 = smul.addr %s953, 4
      %s955 = scalar_lea.vmem %s2, %s954
      %p956 = scmp.lt.s32.totalorder %s35, 1
      %s957 = scalar_select %p956, %s35, 1
      %s958 = scalar_lea.vmem %s3, %s957
      %p959 = scmp.lt.s32.totalorder %s35, 1
      %s960 = scalar_select %p959, %s35, 1
      %s961 = smul.addr %s960, 4
      %s962 = smul.addr %s961, 4
      %s963 = scalar_lea.vmem %s4, %s962
      %p964 = scmp.lt.s32.totalorder %s35, 1
      %s965 = scalar_select %p964, %s35, 1
      %s966 = scalar_lea.vmem %s5, %s965
      %p967 = scmp.lt.s32.totalorder %s35, 1
      %s968 = scalar_select %p967, %s35, 1
      %s969 = smul.addr %s968, 4
      %s970 = smul.addr %s969, 4
      %s971 = scalar_lea.vmem %s6, %s970
      %p972 = scmp.lt.s32.totalorder %s35, 1
      %s973 = scalar_select %p972, %s35, 1
      %s974 = scalar_lea.vmem %s7, %s973
      %p975 = scmp.lt.s32.totalorder %s35, 1
      %s976 = scalar_select %p975, %s35, 1
      %s977 = smul.addr %s976, 4
      %s978 = smul.addr %s977, 4
      %s979 = scalar_lea.vmem %s8, %s978
      %p980 = scmp.lt.s32.totalorder %s35, 1
      %s981 = scalar_select %p980, %s35, 1
      %s982 = scalar_lea.vmem %s9, %s981
      %p983 = scmp.lt.s32.totalorder %s35, 1
      %s984 = scalar_select %p983, %s35, 1
      %s985 = smul.addr %s984, 4
      %s986 = smul.addr %s985, 4
      %s987 = scalar_lea.vmem %s10, %s986
      %p988 = scmp.lt.s32.totalorder %s35, 1
      %s989 = scalar_select %p988, %s35, 1
      %s990 = scalar_lea.vmem %s11, %s989
      %p991 = scmp.lt.s32.totalorder %s35, 1
      %s992 = scalar_select %p991, %s35, 1
      %s993 = smul.addr %s992, 4
      %s994 = smul.addr %s993, 4
      %s995 = scalar_lea.vmem %s12, %s994
      %p996 = scmp.lt.s32.totalorder %s35, 1
      %s997 = scalar_select %p996, %s35, 1
      %s998 = scalar_lea.vmem %s13, %s997
      %p999 = scmp.lt.s32.totalorder %s35, 1
      %s1000 = scalar_select %p999, %s35, 1
      %s1001 = smul.addr %s1000, 8
      %s1002 = smul.addr %s1001, 4
      %s1003 = scalar_lea.vmem %s14, %s1002
      %p1004 = scmp.lt.s32.totalorder %s35, 1
      %s1005 = scalar_select %p1004, %s35, 1
      %s1006 = scalar_lea.vmem %s15, %s1005
      %p1007 = scmp.lt.s32.totalorder %s35, 1
      %s1008 = scalar_select %p1007, %s35, 1
      %s1009 = scalar_lea.vmem %s16, %s1008
      %p1010 = scmp.lt.s32.totalorder %s35, 1
      %s1011 = scalar_select %p1010, %s35, 1
      %s1012 = scalar_lea.vmem %s17, %s1011
      %p1013 = scmp.lt.s32.totalorder %s35, 1
      %s1014 = scalar_select %p1013, %s35, 1
      %s1015 = scalar_lea.vmem %s18, %s1014
      %p1016 = scmp.lt.s32.totalorder %s35, 1
      %s1017 = scalar_select %p1016, %s35, 1
      %s1018 = scalar_lea.vmem %s19, %s1017
      %p1019 = scmp.lt.s32.totalorder %s35, 1
      %s1020 = scalar_select %p1019, %s35, 1
      %s1021 = scalar_lea.vmem %s20, %s1020
      %p1022 = scmp.lt.s32.totalorder %s35, 1
      %s1023 = scalar_select %p1022, %s35, 1
      %s1024 = scalar_lea.vmem %s21, %s1023
      %p1026 = scmp.eq.s32.totalorder %s35, 0
      // Predicated region
      $region117: #{my_transformer_forward.3} parent=115 // pred_check
        %p1027 = pneg %p1026
      $region118: #{my_transformer_forward.3} parent=115 // pred_check_branch
        %1029 = sbr.rel (%p1027) target = $region120
      $region119: #{my_transformer_forward.3} parent=115 // pred_region
        %v1030 = vld [vmem:[%s0] sm:$0xff]
        %v1031 = vld [vmem:[%s0 + $0x8] sm:$0xff]
        %vm1032 = vcmask 261120
        %1033 = vst.msk [vmem:[#allocation2] sm:$0xff] %vm1032, %v1030
        %1034 = vst.msk [vmem:[#allocation2 + $0x8] sm:$0xff] %vm1032, %v1031
      $region120: #{my_transformer_forward.3} parent=115 // pred_fallthru
        _
      %v1035 = vld [vmem:[#allocation2] sm:$0xff]
      %v1036 = vld [vmem:[#allocation2 + $0x8] sm:$0xff]
      %v1037 = vld [vmem:[%s1] sm:$0xff]
      %v1038 = vld [vmem:[%s1 + $0x8] sm:$0xff]
      %v1039 = vld [vmem:[%s1 + $0x10] sm:$0xf]
      %v1040 = vpack.c.bf16 %v1036, %v1035
      %v1041 = vld [vmem:[%s955] sm:$0xf]
      %v1042 = vld [vmem:[%s955 + $0x4] sm:$0xf]
      %v1043 = vld [vmem:[%s955 + $0x8] sm:$0xf]
      %v1044 = vld [vmem:[%s955 + $0xc] sm:$0xf]
      %v1045 = vld [vmem:[%s958] sm:$0x1]
      %v1047 = vlaneseq
      %v1048 = vshrl.u32 %v1047, 7
      %v1049 = vsub.s32 0, %v1048
      %v1050 = vrot.slane %v1045, %v1049
      %v1056 = vunpack.c.l.b16 %v1041
      %v1057 = vunpack.c.l.b16 %v1042
      %v1058 = vunpack.c.l.b16 %v1043
      %v1059 = vunpack.c.l.b16 %v1044
      %v1060 = vpack.c.b16 %v1057, %v1056
      %v1061 = vpack.c.b16 %v1059, %v1058
      %vm1064 = vcmask 261120
      %v1066 = vsel %vm1064, %v1040, 0
      %1068 = vmatprep.subr.bf16.mxu0 0
      %1069 = vmatpush1.bf16.msra.mxu0 %v1060
      %1070 = vmatprep.subr.bf16.mxu0 0
      %1071 = vmatpush1.bf16.msra.mxu0 %v1061
      %1072 = vmatprep.subr.bf16.mxu0 0
      %1073 = vmatpush1.bf16.msra.mxu0 0
      %1074 = vmatprep.subr.bf16.mxu0 0
      %1075 = vmatpush1.bf16.msra.mxu0 0
      %1076 = vmatprep.subr.bf16.mxu0 0
      %1077 = vmatpush1.bf16.msra.mxu0 0
      %1078 = vmatprep.subr.bf16.mxu0 0
      %1079 = vmatpush1.bf16.msra.mxu0 0
      %1080 = vmatprep.subr.bf16.mxu0 0
      %1081 = vmatpush1.bf16.msra.mxu0 0
      %1082 = vmatprep.subr.bf16.mxu0 0
      %1083 = vmatpush1.bf16.msra.mxu0 0
      %1084 = vmatprep.subr.bf16.mxu0 0
      %1085 = vmatpush1.bf16.msra.mxu0 0
      %1086 = vmatprep.subr.bf16.mxu0 0
      %1087 = vmatpush1.bf16.msra.mxu0 0
      %1088 = vmatprep.subr.bf16.mxu0 0
      %1089 = vmatpush1.bf16.msra.mxu0 0
      %1090 = vmatprep.subr.bf16.mxu0 0
      %1091 = vmatpush1.bf16.msra.mxu0 0
      %1092 = vmatprep.subr.bf16.mxu0 0
      %1093 = vmatpush1.bf16.msra.mxu0 0
      %1094 = vmatprep.subr.bf16.mxu0 0
      %1095 = vmatpush1.bf16.msra.mxu0 0
      %1096 = vmatprep.subr.bf16.mxu0 0
      %1097 = vmatpush1.bf16.msra.mxu0 0
      %1098 = vmatprep.subr.bf16.mxu0 0
      %1099 = vmatpush1.bf16.msra.mxu0 0
      %1100 = vmatprep.mubr.bf16.mxu0 0
      %1101 = vmatmul.mubr.bf16.gmra.mrb[0].mxu0 %v1066
      %v1102 = vpop.f32.mrb[0].mxu0
      %v1103 = vadd.f32 %v1050, %v1102
      %v1104 = vpop.f32.mrb[0].mxu0
      %v1105 = vpop.f32.mrb[0].mxu0
      %v1106 = vadd.f32 %v1050, %v1105
      %v1107 = vpop.f32.mrb[0].mxu0
      %1108 = vdwg.mxu0
      %v1109 = vld [vmem:[%s963] sm:$0xf]
      %v1110 = vld [vmem:[%s963 + $0x4] sm:$0xf]
      %v1111 = vld [vmem:[%s963 + $0x8] sm:$0xf]
      %v1112 = vld [vmem:[%s963 + $0xc] sm:$0xf]
      %v1113 = vld [vmem:[%s966] sm:$0x1]
      %v1114 = vlaneseq
      %v1115 = vshrl.u32 %v1114, 7
      %v1116 = vlaneseq
      %v1117 = vand.u32 %v1116, 127
      %vm1118 = vcmp.gt.s32.totalorder %v1117, %v1115
      %v1119 = vsel %vm1118, -1e+09, 0.0
      %v1120 = vpack.c.bf16 %v1103, %v1103
      %1122 = vrot.lane.b32.xlu0 %v1120, 96
      %v1123 = vpop.permute.xlu0 %1122
      %vm1124 = vcmask 64512
      %v1126 = vsel %vm1124, %v1120, 0
      %v1129 = vsel %vm1124, %v1123, 0
      %1131 = vmatprep.subr.bf16.mxu0 0
      %1132 = vmatpush1.bf16.xpose.msra.mxu0 %v1129
      %1133 = vmatprep.subr.bf16.mxu0 0
      %1134 = vmatpush1.bf16.xpose.msra.mxu0 0
      %1135 = vmatprep.subr.bf16.mxu0 0
      %1136 = vmatpush1.bf16.xpose.msra.mxu0 0
      %1137 = vmatprep.subr.bf16.mxu0 0
      %1138 = vmatpush1.bf16.xpose.msra.mxu0 0
      %1139 = vmatprep.subr.bf16.mxu0 0
      %1140 = vmatpush1.bf16.xpose.msra.mxu0 0
      %1141 = vmatprep.subr.bf16.mxu0 0
      %1142 = vmatpush1.bf16.xpose.msra.mxu0 0
      %1143 = vmatprep.subr.bf16.mxu0 0
      %1144 = vmatpush1.bf16.xpose.msra.mxu0 0
      %1145 = vmatprep.subr.bf16.mxu0 0
      %1146 = vmatpush1.bf16.xpose.msra.mxu0 0
      %1147 = vmatprep.subr.bf16.mxu0 0
      %1148 = vmatpush1.bf16.xpose.msra.mxu0 0
      %1149 = vmatprep.subr.bf16.mxu0 0
      %1150 = vmatpush1.bf16.xpose.msra.mxu0 0
      %1151 = vmatprep.subr.bf16.mxu0 0
      %1152 = vmatpush1.bf16.xpose.msra.mxu0 0
      %1153 = vmatprep.subr.bf16.mxu0 0
      %1154 = vmatpush1.bf16.xpose.msra.mxu0 0
      %1155 = vmatprep.subr.bf16.mxu0 0
      %1156 = vmatpush1.bf16.xpose.msra.mxu0 0
      %1157 = vmatprep.subr.bf16.mxu0 0
      %1158 = vmatpush1.bf16.xpose.msra.mxu0 0
      %1159 = vmatprep.subr.bf16.mxu0 0
      %1160 = vmatpush1.bf16.xpose.msra.mxu0 0
      %1161 = vmatprep.subr.bf16.mxu0 0
      %1162 = vmatpush1.bf16.xpose.msra.mxu0 0
      %1163 = vmatprep.mubr.bf16.mxu0 0
      %1164 = vmatmul.mubr.bf16.gmra.mrb[0].mxu0 %v1126
      %v1165 = vpop.f32.mrb[0].mxu0
      %v1166 = vadd.f32 0.0, %v1165
      %v1167 = vpop.f32.mrb[0].mxu0
      %v1168 = vpop.f32.mrb[0].mxu0
      %v1169 = vpop.f32.mrb[0].mxu0
      %1170 = vdwg.mxu0
      %v1171 = vmul.f32 %v1166, 0.35355338
      %v1172 = vadd.f32 %v1171, %v1119
      %v1173 = vsel %vm1124, %v1172, -inf
      %1174 = vmax.xlane.f32.xlu0 %v1173
      %v1175 = vpop.xlane.xlu0 %1174
      %v1176 = vsub.f32 %v1172, %v1175
      %v1177 = vmul.f32 %v1176, 1.442695
      %v1178 = vpow.pop %v1177
      %v1179 = vsel %vm1124, %v1178, 0.0
      %1180 = vadd.xlane.f32.xlu0 %v1179
      %v1181 = vpop.xlane.xlu0 %1180
      %v1182 = vrcp.pop %v1181
      %v1183 = vmul.f32 %v1178, %v1182
      %v1184 = vpack.c.bf16 %v1183, %v1183
      %1185 = vrot.lane.b32.xlu0 %v1120, 64
      %v1186 = vpop.permute.xlu0 %1185
      %v1188 = vsel %vm1124, %v1184, 0
      %vm1190 = vcmask 1043456
      %v1192 = vsel %vm1190, %v1186, 0
      %1194 = vmatprep.subr.bf16.mxu0 0
      %1195 = vmatpush1.bf16.msra.mxu0 %v1192
      %1196 = vmatprep.subr.bf16.mxu0 0
      %1197 = vmatpush1.bf16.msra.mxu0 0
      %1198 = vmatprep.subr.bf16.mxu0 0
      %1199 = vmatpush1.bf16.msra.mxu0 0
      %1200 = vmatprep.subr.bf16.mxu0 0
      %1201 = vmatpush1.bf16.msra.mxu0 0
      %1202 = vmatprep.subr.bf16.mxu0 0
      %1203 = vmatpush1.bf16.msra.mxu0 0
      %1204 = vmatprep.subr.bf16.mxu0 0
      %1205 = vmatpush1.bf16.msra.mxu0 0
      %1206 = vmatprep.subr.bf16.mxu0 0
      %1207 = vmatpush1.bf16.msra.mxu0 0
      %1208 = vmatprep.subr.bf16.mxu0 0
      %1209 = vmatpush1.bf16.msra.mxu0 0
      %1210 = vmatprep.subr.bf16.mxu0 0
      %1211 = vmatpush1.bf16.msra.mxu0 0
      %1212 = vmatprep.subr.bf16.mxu0 0
      %1213 = vmatpush1.bf16.msra.mxu0 0
      %1214 = vmatprep.subr.bf16.mxu0 0
      %1215 = vmatpush1.bf16.msra.mxu0 0
      %1216 = vmatprep.subr.bf16.mxu0 0
      %1217 = vmatpush1.bf16.msra.mxu0 0
      %1218 = vmatprep.subr.bf16.mxu0 0
      %1219 = vmatpush1.bf16.msra.mxu0 0
      %1220 = vmatprep.subr.bf16.mxu0 0
      %1221 = vmatpush1.bf16.msra.mxu0 0
      %1222 = vmatprep.subr.bf16.mxu0 0
      %1223 = vmatpush1.bf16.msra.mxu0 0
      %1224 = vmatprep.subr.bf16.mxu0 0
      %1225 = vmatpush1.bf16.msra.mxu0 0
      %1226 = vmatprep.mubr.bf16.mxu0 0
      %1227 = vmatmul.mubr.bf16.gmra.mrb[0].mxu0 %v1188
      %v1228 = vpop.f32.mrb[0].mxu0
      %v1229 = vadd.f32 0.0, %v1228
      %v1230 = vpop.f32.mrb[0].mxu0
      %v1231 = vpop.f32.mrb[0].mxu0
      %v1232 = vpop.f32.mrb[0].mxu0
      %1233 = vdwg.mxu0
      %1234 = vrot.lane.b32.xlu0 %v1120, 120
      %v1235 = vpop.permute.xlu0 %1234
      %1236 = vrot.lane.b32.xlu0 %v1120, 88
      %v1237 = vpop.permute.xlu0 %1236
      %v1239 = vsel %vm1124, %v1235, 0
      %v1242 = vsel %vm1124, %v1237, 0
      %1244 = vmatprep.subr.bf16.mxu0 0
      %1245 = vmatpush1.bf16.xpose.msra.mxu0 %v1242
      %1246 = vmatprep.subr.bf16.mxu0 0
      %1247 = vmatpush1.bf16.xpose.msra.mxu0 0
      %1248 = vmatprep.subr.bf16.mxu0 0
      %1249 = vmatpush1.bf16.xpose.msra.mxu0 0
      %1250 = vmatprep.subr.bf16.mxu0 0
      %1251 = vmatpush1.bf16.xpose.msra.mxu0 0
      %1252 = vmatprep.subr.bf16.mxu0 0
      %1253 = vmatpush1.bf16.xpose.msra.mxu0 0
      %1254 = vmatprep.subr.bf16.mxu0 0
      %1255 = vmatpush1.bf16.xpose.msra.mxu0 0
      %1256 = vmatprep.subr.bf16.mxu0 0
      %1257 = vmatpush1.bf16.xpose.msra.mxu0 0
      %1258 = vmatprep.subr.bf16.mxu0 0
      %1259 = vmatpush1.bf16.xpose.msra.mxu0 0
      %1260 = vmatprep.subr.bf16.mxu0 0
      %1261 = vmatpush1.bf16.xpose.msra.mxu0 0
      %1262 = vmatprep.subr.bf16.mxu0 0
      %1263 = vmatpush1.bf16.xpose.msra.mxu0 0
      %1264 = vmatprep.subr.bf16.mxu0 0
      %1265 = vmatpush1.bf16.xpose.msra.mxu0 0
      %1266 = vmatprep.subr.bf16.mxu0 0
      %1267 = vmatpush1.bf16.xpose.msra.mxu0 0
      %1268 = vmatprep.subr.bf16.mxu0 0
      %1269 = vmatpush1.bf16.xpose.msra.mxu0 0
      %1270 = vmatprep.subr.bf16.mxu0 0
      %1271 = vmatpush1.bf16.xpose.msra.mxu0 0
      %1272 = vmatprep.subr.bf16.mxu0 0
      %1273 = vmatpush1.bf16.xpose.msra.mxu0 0
      %1274 = vmatprep.subr.bf16.mxu0 0
      %1275 = vmatpush1.bf16.xpose.msra.mxu0 0
      %1276 = vmatprep.mubr.bf16.mxu0 0
      %1277 = vmatmul.mubr.bf16.gmra.mrb[0].mxu0 %v1239
      %v1278 = vpop.f32.mrb[0].mxu0
      %v1279 = vadd.f32 0.0, %v1278
      %v1280 = vpop.f32.mrb[0].mxu0
      %v1281 = vpop.f32.mrb[0].mxu0
      %v1282 = vpop.f32.mrb[0].mxu0
      %1283 = vdwg.mxu0
      %v1284 = vmul.f32 %v1279, 0.35355338
      %v1285 = vadd.f32 %v1284, %v1119
      %v1286 = vsel %vm1124, %v1285, -inf
      %1287 = vmax.xlane.f32.xlu0 %v1286
      %v1288 = vpop.xlane.xlu0 %1287
      %v1289 = vsub.f32 %v1285, %v1288
      %v1290 = vmul.f32 %v1289, 1.442695
      %v1291 = vpow.pop %v1290
      %v1292 = vsel %vm1124, %v1291, 0.0
      %1293 = vadd.xlane.f32.xlu0 %v1292
      %v1294 = vpop.xlane.xlu0 %1293
      %v1295 = vrcp.pop %v1294
      %v1296 = vmul.f32 %v1291, %v1295
      %v1297 = vpack.c.bf16 %v1296, %v1296
      %1298 = vrot.lane.b32.xlu0 %v1120, 56
      %v1299 = vpop.permute.xlu0 %1298
      %v1301 = vsel %vm1124, %v1297, 0
      %v1304 = vsel %vm1190, %v1299, 0
      %1306 = vmatprep.subr.bf16.mxu0 0
      %1307 = vmatpush1.bf16.msra.mxu0 %v1304
      %1308 = vmatprep.subr.bf16.mxu0 0
      %1309 = vmatpush1.bf16.msra.mxu0 0
      %1310 = vmatprep.subr.bf16.mxu0 0
      %1311 = vmatpush1.bf16.msra.mxu0 0
      %1312 = vmatprep.subr.bf16.mxu0 0
      %1313 = vmatpush1.bf16.msra.mxu0 0
      %1314 = vmatprep.subr.bf16.mxu0 0
      %1315 = vmatpush1.bf16.msra.mxu0 0
      %1316 = vmatprep.subr.bf16.mxu0 0
      %1317 = vmatpush1.bf16.msra.mxu0 0
      %1318 = vmatprep.subr.bf16.mxu0 0
      %1319 = vmatpush1.bf16.msra.mxu0 0
      %1320 = vmatprep.subr.bf16.mxu0 0
      %1321 = vmatpush1.bf16.msra.mxu0 0
      %1322 = vmatprep.subr.bf16.mxu0 0
      %1323 = vmatpush1.bf16.msra.mxu0 0
      %1324 = vmatprep.subr.bf16.mxu0 0
      %1325 = vmatpush1.bf16.msra.mxu0 0
      %1326 = vmatprep.subr.bf16.mxu0 0
      %1327 = vmatpush1.bf16.msra.mxu0 0
      %1328 = vmatprep.subr.bf16.mxu0 0
      %1329 = vmatpush1.bf16.msra.mxu0 0
      %1330 = vmatprep.subr.bf16.mxu0 0
      %1331 = vmatpush1.bf16.msra.mxu0 0
      %1332 = vmatprep.subr.bf16.mxu0 0
      %1333 = vmatpush1.bf16.msra.mxu0 0
      %1334 = vmatprep.subr.bf16.mxu0 0
      %1335 = vmatpush1.bf16.msra.mxu0 0
      %1336 = vmatprep.subr.bf16.mxu0 0
      %1337 = vmatpush1.bf16.msra.mxu0 0
      %1338 = vmatprep.mubr.bf16.mxu0 0
      %1339 = vmatmul.mubr.bf16.gmra.mrb[0].mxu0 %v1301
      %v1340 = vpop.f32.mrb[0].mxu0
      %v1341 = vadd.f32 0.0, %v1340
      %v1342 = vpop.f32.mrb[0].mxu0
      %v1343 = vpop.f32.mrb[0].mxu0
      %v1344 = vpop.f32.mrb[0].mxu0
      %1345 = vdwg.mxu0
      %1346 = vrot.lane.b32.xlu0 %v1120, 112
      %v1347 = vpop.permute.xlu0 %1346
      %1348 = vrot.lane.b32.xlu0 %v1120, 80
      %v1349 = vpop.permute.xlu0 %1348
      %v1351 = vsel %vm1124, %v1347, 0
      %v1354 = vsel %vm1124, %v1349, 0
      %1356 = vmatprep.subr.bf16.mxu0 0
      %1357 = vmatpush1.bf16.xpose.msra.mxu0 %v1354
      %1358 = vmatprep.subr.bf16.mxu0 0
      %1359 = vmatpush1.bf16.xpose.msra.mxu0 0
      %1360 = vmatprep.subr.bf16.mxu0 0
      %1361 = vmatpush1.bf16.xpose.msra.mxu0 0
      %1362 = vmatprep.subr.bf16.mxu0 0
      %1363 = vmatpush1.bf16.xpose.msra.mxu0 0
      %1364 = vmatprep.subr.bf16.mxu0 0
      %1365 = vmatpush1.bf16.xpose.msra.mxu0 0
      %1366 = vmatprep.subr.bf16.mxu0 0
      %1367 = vmatpush1.bf16.xpose.msra.mxu0 0
      %1368 = vmatprep.subr.bf16.mxu0 0
      %1369 = vmatpush1.bf16.xpose.msra.mxu0 0
      %1370 = vmatprep.subr.bf16.mxu0 0
      %1371 = vmatpush1.bf16.xpose.msra.mxu0 0
      %1372 = vmatprep.subr.bf16.mxu0 0
      %1373 = vmatpush1.bf16.xpose.msra.mxu0 0
      %1374 = vmatprep.subr.bf16.mxu0 0
      %1375 = vmatpush1.bf16.xpose.msra.mxu0 0
      %1376 = vmatprep.subr.bf16.mxu0 0
      %1377 = vmatpush1.bf16.xpose.msra.mxu0 0
      %1378 = vmatprep.subr.bf16.mxu0 0
      %1379 = vmatpush1.bf16.xpose.msra.mxu0 0
      %1380 = vmatprep.subr.bf16.mxu0 0
      %1381 = vmatpush1.bf16.xpose.msra.mxu0 0
      %1382 = vmatprep.subr.bf16.mxu0 0
      %1383 = vmatpush1.bf16.xpose.msra.mxu0 0
      %1384 = vmatprep.subr.bf16.mxu0 0
      %1385 = vmatpush1.bf16.xpose.msra.mxu0 0
      %1386 = vmatprep.subr.bf16.mxu0 0
      %1387 = vmatpush1.bf16.xpose.msra.mxu0 0
      %1388 = vmatprep.mubr.bf16.mxu0 0
      %1389 = vmatmul.mubr.bf16.gmra.mrb[0].mxu0 %v1351
      %v1390 = vpop.f32.mrb[0].mxu0
      %v1391 = vadd.f32 0.0, %v1390
      %v1392 = vpop.f32.mrb[0].mxu0
      %v1393 = vpop.f32.mrb[0].mxu0
      %v1394 = vpop.f32.mrb[0].mxu0
      %1395 = vdwg.mxu0
      %v1396 = vmul.f32 %v1391, 0.35355338
      %v1397 = vadd.f32 %v1396, %v1119
      %v1398 = vsel %vm1124, %v1397, -inf
      %1399 = vmax.xlane.f32.xlu0 %v1398
      %v1400 = vpop.xlane.xlu0 %1399
      %v1401 = vsub.f32 %v1397, %v1400
      %v1402 = vmul.f32 %v1401, 1.442695
      %v1403 = vpow.pop %v1402
      %v1404 = vsel %vm1124, %v1403, 0.0
      %1405 = vadd.xlane.f32.xlu0 %v1404
      %v1406 = vpop.xlane.xlu0 %1405
      %v1407 = vrcp.pop %v1406
      %v1408 = vmul.f32 %v1403, %v1407
      %v1409 = vpack.c.bf16 %v1408, %v1408
      %1410 = vrot.lane.b32.xlu0 %v1120, 48
      %v1411 = vpop.permute.xlu0 %1410
      %v1413 = vsel %vm1124, %v1409, 0
      %v1416 = vsel %vm1190, %v1411, 0
      %1418 = vmatprep.subr.bf16.mxu0 0
      %1419 = vmatpush1.bf16.msra.mxu0 %v1416
      %1420 = vmatprep.subr.bf16.mxu0 0
      %1421 = vmatpush1.bf16.msra.mxu0 0
      %1422 = vmatprep.subr.bf16.mxu0 0
      %1423 = vmatpush1.bf16.msra.mxu0 0
      %1424 = vmatprep.subr.bf16.mxu0 0
      %1425 = vmatpush1.bf16.msra.mxu0 0
      %1426 = vmatprep.subr.bf16.mxu0 0
      %1427 = vmatpush1.bf16.msra.mxu0 0
      %1428 = vmatprep.subr.bf16.mxu0 0
      %1429 = vmatpush1.bf16.msra.mxu0 0
      %1430 = vmatprep.subr.bf16.mxu0 0
      %1431 = vmatpush1.bf16.msra.mxu0 0
      %1432 = vmatprep.subr.bf16.mxu0 0
      %1433 = vmatpush1.bf16.msra.mxu0 0
      %1434 = vmatprep.subr.bf16.mxu0 0
      %1435 = vmatpush1.bf16.msra.mxu0 0
      %1436 = vmatprep.subr.bf16.mxu0 0
      %1437 = vmatpush1.bf16.msra.mxu0 0
      %1438 = vmatprep.subr.bf16.mxu0 0
      %1439 = vmatpush1.bf16.msra.mxu0 0
      %1440 = vmatprep.subr.bf16.mxu0 0
      %1441 = vmatpush1.bf16.msra.mxu0 0
      %1442 = vmatprep.subr.bf16.mxu0 0
      %1443 = vmatpush1.bf16.msra.mxu0 0
      %1444 = vmatprep.subr.bf16.mxu0 0
      %1445 = vmatpush1.bf16.msra.mxu0 0
      %1446 = vmatprep.subr.bf16.mxu0 0
      %1447 = vmatpush1.bf16.msra.mxu0 0
      %1448 = vmatprep.subr.bf16.mxu0 0
      %1449 = vmatpush1.bf16.msra.mxu0 0
      %1450 = vmatprep.mubr.bf16.mxu0 0
      %1451 = vmatmul.mubr.bf16.gmra.mrb[0].mxu0 %v1413
      %v1452 = vpop.f32.mrb[0].mxu0
      %v1453 = vadd.f32 0.0, %v1452
      %v1454 = vpop.f32.mrb[0].mxu0
      %v1455 = vpop.f32.mrb[0].mxu0
      %v1456 = vpop.f32.mrb[0].mxu0
      %1457 = vdwg.mxu0
      %1458 = vrot.lane.b32.xlu0 %v1120, 104
      %v1459 = vpop.permute.xlu0 %1458
      %1460 = vrot.lane.b32.xlu0 %v1120, 72
      %v1461 = vpop.permute.xlu0 %1460
      %v1463 = vsel %vm1124, %v1459, 0
      %v1466 = vsel %vm1124, %v1461, 0
      %1468 = vmatprep.subr.bf16.mxu0 0
      %1469 = vmatpush1.bf16.xpose.msra.mxu0 %v1466
      %1470 = vmatprep.subr.bf16.mxu0 0
      %1471 = vmatpush1.bf16.xpose.msra.mxu0 0
      %1472 = vmatprep.subr.bf16.mxu0 0
      %1473 = vmatpush1.bf16.xpose.msra.mxu0 0
      %1474 = vmatprep.subr.bf16.mxu0 0
      %1475 = vmatpush1.bf16.xpose.msra.mxu0 0
      %1476 = vmatprep.subr.bf16.mxu0 0
      %1477 = vmatpush1.bf16.xpose.msra.mxu0 0
      %1478 = vmatprep.subr.bf16.mxu0 0
      %1479 = vmatpush1.bf16.xpose.msra.mxu0 0
      %1480 = vmatprep.subr.bf16.mxu0 0
      %1481 = vmatpush1.bf16.xpose.msra.mxu0 0
      %1482 = vmatprep.subr.bf16.mxu0 0
      %1483 = vmatpush1.bf16.xpose.msra.mxu0 0
      %1484 = vmatprep.subr.bf16.mxu0 0
      %1485 = vmatpush1.bf16.xpose.msra.mxu0 0
      %1486 = vmatprep.subr.bf16.mxu0 0
      %1487 = vmatpush1.bf16.xpose.msra.mxu0 0
      %1488 = vmatprep.subr.bf16.mxu0 0
      %1489 = vmatpush1.bf16.xpose.msra.mxu0 0
      %1490 = vmatprep.subr.bf16.mxu0 0
      %1491 = vmatpush1.bf16.xpose.msra.mxu0 0
      %1492 = vmatprep.subr.bf16.mxu0 0
      %1493 = vmatpush1.bf16.xpose.msra.mxu0 0
      %1494 = vmatprep.subr.bf16.mxu0 0
      %1495 = vmatpush1.bf16.xpose.msra.mxu0 0
      %1496 = vmatprep.subr.bf16.mxu0 0
      %1497 = vmatpush1.bf16.xpose.msra.mxu0 0
      %1498 = vmatprep.subr.bf16.mxu0 0
      %1499 = vmatpush1.bf16.xpose.msra.mxu0 0
      %1500 = vmatprep.mubr.bf16.mxu0 0
      %1501 = vmatmul.mubr.bf16.gmra.mrb[0].mxu0 %v1463
      %v1502 = vpop.f32.mrb[0].mxu0
      %v1503 = vadd.f32 0.0, %v1502
      %v1504 = vpop.f32.mrb[0].mxu0
      %v1505 = vpop.f32.mrb[0].mxu0
      %v1506 = vpop.f32.mrb[0].mxu0
      %1507 = vdwg.mxu0
      %v1508 = vmul.f32 %v1503, 0.35355338
      %v1509 = vadd.f32 %v1508, %v1119
      %v1510 = vsel %vm1124, %v1509, -inf
      %1511 = vmax.xlane.f32.xlu0 %v1510
      %v1512 = vpop.xlane.xlu0 %1511
      %v1513 = vsub.f32 %v1509, %v1512
      %v1514 = vmul.f32 %v1513, 1.442695
      %v1515 = vpow.pop %v1514
      %v1516 = vsel %vm1124, %v1515, 0.0
      %1517 = vadd.xlane.f32.xlu0 %v1516
      %v1518 = vpop.xlane.xlu0 %1517
      %v1519 = vrcp.pop %v1518
      %v1520 = vmul.f32 %v1515, %v1519
      %v1521 = vpack.c.bf16 %v1520, %v1520
      %1522 = vrot.lane.b32.xlu0 %v1120, 40
      %v1523 = vpop.permute.xlu0 %1522
      %v1525 = vsel %vm1124, %v1521, 0
      %v1528 = vsel %vm1190, %v1523, 0
      %1530 = vmatprep.subr.bf16.mxu0 0
      %1531 = vmatpush1.bf16.msra.mxu0 %v1528
      %1532 = vmatprep.subr.bf16.mxu0 0
      %1533 = vmatpush1.bf16.msra.mxu0 0
      %1534 = vmatprep.subr.bf16.mxu0 0
      %1535 = vmatpush1.bf16.msra.mxu0 0
      %1536 = vmatprep.subr.bf16.mxu0 0
      %1537 = vmatpush1.bf16.msra.mxu0 0
      %1538 = vmatprep.subr.bf16.mxu0 0
      %1539 = vmatpush1.bf16.msra.mxu0 0
      %1540 = vmatprep.subr.bf16.mxu0 0
      %1541 = vmatpush1.bf16.msra.mxu0 0
      %1542 = vmatprep.subr.bf16.mxu0 0
      %1543 = vmatpush1.bf16.msra.mxu0 0
      %1544 = vmatprep.subr.bf16.mxu0 0
      %1545 = vmatpush1.bf16.msra.mxu0 0
      %1546 = vmatprep.subr.bf16.mxu0 0
      %1547 = vmatpush1.bf16.msra.mxu0 0
      %1548 = vmatprep.subr.bf16.mxu0 0
      %1549 = vmatpush1.bf16.msra.mxu0 0
      %1550 = vmatprep.subr.bf16.mxu0 0
      %1551 = vmatpush1.bf16.msra.mxu0 0
      %1552 = vmatprep.subr.bf16.mxu0 0
      %1553 = vmatpush1.bf16.msra.mxu0 0
      %1554 = vmatprep.subr.bf16.mxu0 0
      %1555 = vmatpush1.bf16.msra.mxu0 0
      %1556 = vmatprep.subr.bf16.mxu0 0
      %1557 = vmatpush1.bf16.msra.mxu0 0
      %1558 = vmatprep.subr.bf16.mxu0 0
      %1559 = vmatpush1.bf16.msra.mxu0 0
      %1560 = vmatprep.subr.bf16.mxu0 0
      %1561 = vmatpush1.bf16.msra.mxu0 0
      %1562 = vmatprep.mubr.bf16.mxu0 0
      %1563 = vmatmul.mubr.bf16.gmra.mrb[0].mxu0 %v1525
      %v1564 = vpop.f32.mrb[0].mxu0
      %v1565 = vadd.f32 0.0, %v1564
      %v1566 = vpop.f32.mrb[0].mxu0
      %v1567 = vpop.f32.mrb[0].mxu0
      %v1568 = vpop.f32.mrb[0].mxu0
      %1569 = vdwg.mxu0
      %1571 = vrot.lane.b32.xlu0 %v1341, 8
      %v1572 = vpop.permute.xlu0 %1571
      %1575 = vrot.lane.b32.xlu0 %v1453, 16
      %v1576 = vpop.permute.xlu0 %1575
      %1579 = vrot.lane.b32.xlu0 %v1565, 24
      %v1580 = vpop.permute.xlu0 %1579
      %v1582 = vsel %vm1124, %v1229, %v1572
      %vm1583 = vcmask 130048
      %v1584 = vsel %vm1583, %v1582, %v1576
      %vm1585 = vcmask 195584
      %v1586 = vsel %vm1585, %v1584, %v1580
      %v1587 = vpack.c.bf16 %v1106, %v1106
      %1589 = vrot.lane.b32.xlu0 %v1587, 96
      %v1590 = vpop.permute.xlu0 %1589
      %v1592 = vsel %vm1124, %v1587, 0
      %v1595 = vsel %vm1124, %v1590, 0
      %1597 = vmatprep.subr.bf16.mxu0 0
      %1598 = vmatpush1.bf16.xpose.msra.mxu0 %v1595
      %1599 = vmatprep.subr.bf16.mxu0 0
      %1600 = vmatpush1.bf16.xpose.msra.mxu0 0
      %1601 = vmatprep.subr.bf16.mxu0 0
      %1602 = vmatpush1.bf16.xpose.msra.mxu0 0
      %1603 = vmatprep.subr.bf16.mxu0 0
      %1604 = vmatpush1.bf16.xpose.msra.mxu0 0
      %1605 = vmatprep.subr.bf16.mxu0 0
      %1606 = vmatpush1.bf16.xpose.msra.mxu0 0
      %1607 = vmatprep.subr.bf16.mxu0 0
      %1608 = vmatpush1.bf16.xpose.msra.mxu0 0
      %1609 = vmatprep.subr.bf16.mxu0 0
      %1610 = vmatpush1.bf16.xpose.msra.mxu0 0
      %1611 = vmatprep.subr.bf16.mxu0 0
      %1612 = vmatpush1.bf16.xpose.msra.mxu0 0
      %1613 = vmatprep.subr.bf16.mxu0 0
      %1614 = vmatpush1.bf16.xpose.msra.mxu0 0
      %1615 = vmatprep.subr.bf16.mxu0 0
      %1616 = vmatpush1.bf16.xpose.msra.mxu0 0
      %1617 = vmatprep.subr.bf16.mxu0 0
      %1618 = vmatpush1.bf16.xpose.msra.mxu0 0
      %1619 = vmatprep.subr.bf16.mxu0 0
      %1620 = vmatpush1.bf16.xpose.msra.mxu0 0
      %1621 = vmatprep.subr.bf16.mxu0 0
      %1622 = vmatpush1.bf16.xpose.msra.mxu0 0
      %1623 = vmatprep.subr.bf16.mxu0 0
      %1624 = vmatpush1.bf16.xpose.msra.mxu0 0
      %1625 = vmatprep.subr.bf16.mxu0 0
      %1626 = vmatpush1.bf16.xpose.msra.mxu0 0
      %1627 = vmatprep.subr.bf16.mxu0 0
      %1628 = vmatpush1.bf16.xpose.msra.mxu0 0
      %1629 = vmatprep.mubr.bf16.mxu0 0
      %1630 = vmatmul.mubr.bf16.gmra.mrb[0].mxu0 %v1592
      %v1631 = vpop.f32.mrb[0].mxu0
      %v1632 = vadd.f32 0.0, %v1631
      %v1633 = vpop.f32.mrb[0].mxu0
      %v1634 = vpop.f32.mrb[0].mxu0
      %v1635 = vpop.f32.mrb[0].mxu0
      %1636 = vdwg.mxu0
      %v1637 = vmul.f32 %v1632, 0.35355338
      %v1638 = vadd.f32 %v1637, %v1119
      %v1639 = vsel %vm1124, %v1638, -inf
      %1640 = vmax.xlane.f32.xlu0 %v1639
      %v1641 = vpop.xlane.xlu0 %1640
      %v1642 = vsub.f32 %v1638, %v1641
      %v1643 = vmul.f32 %v1642, 1.442695
      %v1644 = vpow.pop %v1643
      %v1645 = vsel %vm1124, %v1644, 0.0
      %1646 = vadd.xlane.f32.xlu0 %v1645
      %v1647 = vpop.xlane.xlu0 %1646
      %v1648 = vrcp.pop %v1647
      %v1649 = vmul.f32 %v1644, %v1648
      %v1650 = vpack.c.bf16 %v1649, %v1649
      %1651 = vrot.lane.b32.xlu0 %v1587, 64
      %v1652 = vpop.permute.xlu0 %1651
      %v1654 = vsel %vm1124, %v1650, 0
      %v1657 = vsel %vm1190, %v1652, 0
      %1659 = vmatprep.subr.bf16.mxu0 0
      %1660 = vmatpush1.bf16.msra.mxu0 %v1657
      %1661 = vmatprep.subr.bf16.mxu0 0
      %1662 = vmatpush1.bf16.msra.mxu0 0
      %1663 = vmatprep.subr.bf16.mxu0 0
      %1664 = vmatpush1.bf16.msra.mxu0 0
      %1665 = vmatprep.subr.bf16.mxu0 0
      %1666 = vmatpush1.bf16.msra.mxu0 0
      %1667 = vmatprep.subr.bf16.mxu0 0
      %1668 = vmatpush1.bf16.msra.mxu0 0
      %1669 = vmatprep.subr.bf16.mxu0 0
      %1670 = vmatpush1.bf16.msra.mxu0 0
      %1671 = vmatprep.subr.bf16.mxu0 0
      %1672 = vmatpush1.bf16.msra.mxu0 0
      %1673 = vmatprep.subr.bf16.mxu0 0
      %1674 = vmatpush1.bf16.msra.mxu0 0
      %1675 = vmatprep.subr.bf16.mxu0 0
      %1676 = vmatpush1.bf16.msra.mxu0 0
      %1677 = vmatprep.subr.bf16.mxu0 0
      %1678 = vmatpush1.bf16.msra.mxu0 0
      %1679 = vmatprep.subr.bf16.mxu0 0
      %1680 = vmatpush1.bf16.msra.mxu0 0
      %1681 = vmatprep.subr.bf16.mxu0 0
      %1682 = vmatpush1.bf16.msra.mxu0 0
      %1683 = vmatprep.subr.bf16.mxu0 0
      %1684 = vmatpush1.bf16.msra.mxu0 0
      %1685 = vmatprep.subr.bf16.mxu0 0
      %1686 = vmatpush1.bf16.msra.mxu0 0
      %1687 = vmatprep.subr.bf16.mxu0 0
      %1688 = vmatpush1.bf16.msra.mxu0 0
      %1689 = vmatprep.subr.bf16.mxu0 0
      %1690 = vmatpush1.bf16.msra.mxu0 0
      %1691 = vmatprep.mubr.bf16.mxu0 0
      %1692 = vmatmul.mubr.bf16.gmra.mrb[0].mxu0 %v1654
      %v1693 = vpop.f32.mrb[0].mxu0
      %v1694 = vadd.f32 0.0, %v1693
      %v1695 = vpop.f32.mrb[0].mxu0
      %v1696 = vpop.f32.mrb[0].mxu0
      %v1697 = vpop.f32.mrb[0].mxu0
      %1698 = vdwg.mxu0
      %1699 = vrot.lane.b32.xlu0 %v1587, 120
      %v1700 = vpop.permute.xlu0 %1699
      %1701 = vrot.lane.b32.xlu0 %v1587, 88
      %v1702 = vpop.permute.xlu0 %1701
      %v1704 = vsel %vm1124, %v1700, 0
      %v1707 = vsel %vm1124, %v1702, 0
      %1709 = vmatprep.subr.bf16.mxu0 0
      %1710 = vmatpush1.bf16.xpose.msra.mxu0 %v1707
      %1711 = vmatprep.subr.bf16.mxu0 0
      %1712 = vmatpush1.bf16.xpose.msra.mxu0 0
      %1713 = vmatprep.subr.bf16.mxu0 0
      %1714 = vmatpush1.bf16.xpose.msra.mxu0 0
      %1715 = vmatprep.subr.bf16.mxu0 0
      %1716 = vmatpush1.bf16.xpose.msra.mxu0 0
      %1717 = vmatprep.subr.bf16.mxu0 0
      %1718 = vmatpush1.bf16.xpose.msra.mxu0 0
      %1719 = vmatprep.subr.bf16.mxu0 0
      %1720 = vmatpush1.bf16.xpose.msra.mxu0 0
      %1721 = vmatprep.subr.bf16.mxu0 0
      %1722 = vmatpush1.bf16.xpose.msra.mxu0 0
      %1723 = vmatprep.subr.bf16.mxu0 0
      %1724 = vmatpush1.bf16.xpose.msra.mxu0 0
      %1725 = vmatprep.subr.bf16.mxu0 0
      %1726 = vmatpush1.bf16.xpose.msra.mxu0 0
      %1727 = vmatprep.subr.bf16.mxu0 0
      %1728 = vmatpush1.bf16.xpose.msra.mxu0 0
      %1729 = vmatprep.subr.bf16.mxu0 0
      %1730 = vmatpush1.bf16.xpose.msra.mxu0 0
      %1731 = vmatprep.subr.bf16.mxu0 0
      %1732 = vmatpush1.bf16.xpose.msra.mxu0 0
      %1733 = vmatprep.subr.bf16.mxu0 0
      %1734 = vmatpush1.bf16.xpose.msra.mxu0 0
      %1735 = vmatprep.subr.bf16.mxu0 0
      %1736 = vmatpush1.bf16.xpose.msra.mxu0 0
      %1737 = vmatprep.subr.bf16.mxu0 0
      %1738 = vmatpush1.bf16.xpose.msra.mxu0 0
      %1739 = vmatprep.subr.bf16.mxu0 0
      %1740 = vmatpush1.bf16.xpose.msra.mxu0 0
      %1741 = vmatprep.mubr.bf16.mxu0 0
      %1742 = vmatmul.mubr.bf16.gmra.mrb[0].mxu0 %v1704
      %v1743 = vpop.f32.mrb[0].mxu0
      %v1744 = vadd.f32 0.0, %v1743
      %v1745 = vpop.f32.mrb[0].mxu0
      %v1746 = vpop.f32.mrb[0].mxu0
      %v1747 = vpop.f32.mrb[0].mxu0
      %1748 = vdwg.mxu0
      %v1749 = vmul.f32 %v1744, 0.35355338
      %v1750 = vadd.f32 %v1749, %v1119
      %v1751 = vsel %vm1124, %v1750, -inf
      %1752 = vmax.xlane.f32.xlu0 %v1751
      %v1753 = vpop.xlane.xlu0 %1752
      %v1754 = vsub.f32 %v1750, %v1753
      %v1755 = vmul.f32 %v1754, 1.442695
      %v1756 = vpow.pop %v1755
      %v1757 = vsel %vm1124, %v1756, 0.0
      %1758 = vadd.xlane.f32.xlu0 %v1757
      %v1759 = vpop.xlane.xlu0 %1758
      %v1760 = vrcp.pop %v1759
      %v1761 = vmul.f32 %v1756, %v1760
      %v1762 = vpack.c.bf16 %v1761, %v1761
      %1763 = vrot.lane.b32.xlu0 %v1587, 56
      %v1764 = vpop.permute.xlu0 %1763
      %v1766 = vsel %vm1124, %v1762, 0
      %v1769 = vsel %vm1190, %v1764, 0
      %1771 = vmatprep.subr.bf16.mxu0 0
      %1772 = vmatpush1.bf16.msra.mxu0 %v1769
      %1773 = vmatprep.subr.bf16.mxu0 0
      %1774 = vmatpush1.bf16.msra.mxu0 0
      %1775 = vmatprep.subr.bf16.mxu0 0
      %1776 = vmatpush1.bf16.msra.mxu0 0
      %1777 = vmatprep.subr.bf16.mxu0 0
      %1778 = vmatpush1.bf16.msra.mxu0 0
      %1779 = vmatprep.subr.bf16.mxu0 0
      %1780 = vmatpush1.bf16.msra.mxu0 0
      %1781 = vmatprep.subr.bf16.mxu0 0
      %1782 = vmatpush1.bf16.msra.mxu0 0
      %1783 = vmatprep.subr.bf16.mxu0 0
      %1784 = vmatpush1.bf16.msra.mxu0 0
      %1785 = vmatprep.subr.bf16.mxu0 0
      %1786 = vmatpush1.bf16.msra.mxu0 0
      %1787 = vmatprep.subr.bf16.mxu0 0
      %1788 = vmatpush1.bf16.msra.mxu0 0
      %1789 = vmatprep.subr.bf16.mxu0 0
      %1790 = vmatpush1.bf16.msra.mxu0 0
      %1791 = vmatprep.subr.bf16.mxu0 0
      %1792 = vmatpush1.bf16.msra.mxu0 0
      %1793 = vmatprep.subr.bf16.mxu0 0
      %1794 = vmatpush1.bf16.msra.mxu0 0
      %1795 = vmatprep.subr.bf16.mxu0 0
      %1796 = vmatpush1.bf16.msra.mxu0 0
      %1797 = vmatprep.subr.bf16.mxu0 0
      %1798 = vmatpush1.bf16.msra.mxu0 0
      %1799 = vmatprep.subr.bf16.mxu0 0
      %1800 = vmatpush1.bf16.msra.mxu0 0
      %1801 = vmatprep.subr.bf16.mxu0 0
      %1802 = vmatpush1.bf16.msra.mxu0 0
      %1803 = vmatprep.mubr.bf16.mxu0 0
      %1804 = vmatmul.mubr.bf16.gmra.mrb[0].mxu0 %v1766
      %v1805 = vpop.f32.mrb[0].mxu0
      %v1806 = vadd.f32 0.0, %v1805
      %v1807 = vpop.f32.mrb[0].mxu0
      %v1808 = vpop.f32.mrb[0].mxu0
      %v1809 = vpop.f32.mrb[0].mxu0
      %1810 = vdwg.mxu0
      %1811 = vrot.lane.b32.xlu0 %v1587, 112
      %v1812 = vpop.permute.xlu0 %1811
      %1813 = vrot.lane.b32.xlu0 %v1587, 80
      %v1814 = vpop.permute.xlu0 %1813
      %v1816 = vsel %vm1124, %v1812, 0
      %v1819 = vsel %vm1124, %v1814, 0
      %1821 = vmatprep.subr.bf16.mxu0 0
      %1822 = vmatpush1.bf16.xpose.msra.mxu0 %v1819
      %1823 = vmatprep.subr.bf16.mxu0 0
      %1824 = vmatpush1.bf16.xpose.msra.mxu0 0
      %1825 = vmatprep.subr.bf16.mxu0 0
      %1826 = vmatpush1.bf16.xpose.msra.mxu0 0
      %1827 = vmatprep.subr.bf16.mxu0 0
      %1828 = vmatpush1.bf16.xpose.msra.mxu0 0
      %1829 = vmatprep.subr.bf16.mxu0 0
      %1830 = vmatpush1.bf16.xpose.msra.mxu0 0
      %1831 = vmatprep.subr.bf16.mxu0 0
      %1832 = vmatpush1.bf16.xpose.msra.mxu0 0
      %1833 = vmatprep.subr.bf16.mxu0 0
      %1834 = vmatpush1.bf16.xpose.msra.mxu0 0
      %1835 = vmatprep.subr.bf16.mxu0 0
      %1836 = vmatpush1.bf16.xpose.msra.mxu0 0
      %1837 = vmatprep.subr.bf16.mxu0 0
      %1838 = vmatpush1.bf16.xpose.msra.mxu0 0
      %1839 = vmatprep.subr.bf16.mxu0 0
      %1840 = vmatpush1.bf16.xpose.msra.mxu0 0
      %1841 = vmatprep.subr.bf16.mxu0 0
      %1842 = vmatpush1.bf16.xpose.msra.mxu0 0
      %1843 = vmatprep.subr.bf16.mxu0 0
      %1844 = vmatpush1.bf16.xpose.msra.mxu0 0
      %1845 = vmatprep.subr.bf16.mxu0 0
      %1846 = vmatpush1.bf16.xpose.msra.mxu0 0
      %1847 = vmatprep.subr.bf16.mxu0 0
      %1848 = vmatpush1.bf16.xpose.msra.mxu0 0
      %1849 = vmatprep.subr.bf16.mxu0 0
      %1850 = vmatpush1.bf16.xpose.msra.mxu0 0
      %1851 = vmatprep.subr.bf16.mxu0 0
      %1852 = vmatpush1.bf16.xpose.msra.mxu0 0
      %1853 = vmatprep.mubr.bf16.mxu0 0
      %1854 = vmatmul.mubr.bf16.gmra.mrb[0].mxu0 %v1816
      %v1855 = vpop.f32.mrb[0].mxu0
      %v1856 = vadd.f32 0.0, %v1855
      %v1857 = vpop.f32.mrb[0].mxu0
      %v1858 = vpop.f32.mrb[0].mxu0
      %v1859 = vpop.f32.mrb[0].mxu0
      %1860 = vdwg.mxu0
      %v1861 = vmul.f32 %v1856, 0.35355338
      %v1862 = vadd.f32 %v1861, %v1119
      %v1863 = vsel %vm1124, %v1862, -inf
      %1864 = vmax.xlane.f32.xlu0 %v1863
      %v1865 = vpop.xlane.xlu0 %1864
      %v1866 = vsub.f32 %v1862, %v1865
      %v1867 = vmul.f32 %v1866, 1.442695
      %v1868 = vpow.pop %v1867
      %v1869 = vsel %vm1124, %v1868, 0.0
      %1870 = vadd.xlane.f32.xlu0 %v1869
      %v1871 = vpop.xlane.xlu0 %1870
      %v1872 = vrcp.pop %v1871
      %v1873 = vmul.f32 %v1868, %v1872
      %v1874 = vpack.c.bf16 %v1873, %v1873
      %1875 = vrot.lane.b32.xlu0 %v1587, 48
      %v1876 = vpop.permute.xlu0 %1875
      %v1878 = vsel %vm1124, %v1874, 0
      %v1881 = vsel %vm1190, %v1876, 0
      %1883 = vmatprep.subr.bf16.mxu0 0
      %1884 = vmatpush1.bf16.msra.mxu0 %v1881
      %1885 = vmatprep.subr.bf16.mxu0 0
      %1886 = vmatpush1.bf16.msra.mxu0 0
      %1887 = vmatprep.subr.bf16.mxu0 0
      %1888 = vmatpush1.bf16.msra.mxu0 0
      %1889 = vmatprep.subr.bf16.mxu0 0
      %1890 = vmatpush1.bf16.msra.mxu0 0
      %1891 = vmatprep.subr.bf16.mxu0 0
      %1892 = vmatpush1.bf16.msra.mxu0 0
      %1893 = vmatprep.subr.bf16.mxu0 0
      %1894 = vmatpush1.bf16.msra.mxu0 0
      %1895 = vmatprep.subr.bf16.mxu0 0
      %1896 = vmatpush1.bf16.msra.mxu0 0
      %1897 = vmatprep.subr.bf16.mxu0 0
      %1898 = vmatpush1.bf16.msra.mxu0 0
      %1899 = vmatprep.subr.bf16.mxu0 0
      %1900 = vmatpush1.bf16.msra.mxu0 0
      %1901 = vmatprep.subr.bf16.mxu0 0
      %1902 = vmatpush1.bf16.msra.mxu0 0
      %1903 = vmatprep.subr.bf16.mxu0 0
      %1904 = vmatpush1.bf16.msra.mxu0 0
      %1905 = vmatprep.subr.bf16.mxu0 0
      %1906 = vmatpush1.bf16.msra.mxu0 0
      %1907 = vmatprep.subr.bf16.mxu0 0
      %1908 = vmatpush1.bf16.msra.mxu0 0
      %1909 = vmatprep.subr.bf16.mxu0 0
      %1910 = vmatpush1.bf16.msra.mxu0 0
      %1911 = vmatprep.subr.bf16.mxu0 0
      %1912 = vmatpush1.bf16.msra.mxu0 0
      %1913 = vmatprep.subr.bf16.mxu0 0
      %1914 = vmatpush1.bf16.msra.mxu0 0
      %1915 = vmatprep.mubr.bf16.mxu0 0
      %1916 = vmatmul.mubr.bf16.gmra.mrb[0].mxu0 %v1878
      %v1917 = vpop.f32.mrb[0].mxu0
      %v1918 = vadd.f32 0.0, %v1917
      %v1919 = vpop.f32.mrb[0].mxu0
      %v1920 = vpop.f32.mrb[0].mxu0
      %v1921 = vpop.f32.mrb[0].mxu0
      %1922 = vdwg.mxu0
      %1923 = vrot.lane.b32.xlu0 %v1587, 104
      %v1924 = vpop.permute.xlu0 %1923
      %1925 = vrot.lane.b32.xlu0 %v1587, 72
      %v1926 = vpop.permute.xlu0 %1925
      %v1928 = vsel %vm1124, %v1924, 0
      %v1931 = vsel %vm1124, %v1926, 0
      %1933 = vmatprep.subr.bf16.mxu0 0
      %1934 = vmatpush1.bf16.xpose.msra.mxu0 %v1931
      %1935 = vmatprep.subr.bf16.mxu0 0
      %1936 = vmatpush1.bf16.xpose.msra.mxu0 0
      %1937 = vmatprep.subr.bf16.mxu0 0
      %1938 = vmatpush1.bf16.xpose.msra.mxu0 0
      %1939 = vmatprep.subr.bf16.mxu0 0
      %1940 = vmatpush1.bf16.xpose.msra.mxu0 0
      %1941 = vmatprep.subr.bf16.mxu0 0
      %1942 = vmatpush1.bf16.xpose.msra.mxu0 0
      %1943 = vmatprep.subr.bf16.mxu0 0
      %1944 = vmatpush1.bf16.xpose.msra.mxu0 0
      %1945 = vmatprep.subr.bf16.mxu0 0
      %1946 = vmatpush1.bf16.xpose.msra.mxu0 0
      %1947 = vmatprep.subr.bf16.mxu0 0
      %1948 = vmatpush1.bf16.xpose.msra.mxu0 0
      %1949 = vmatprep.subr.bf16.mxu0 0
      %1950 = vmatpush1.bf16.xpose.msra.mxu0 0
      %1951 = vmatprep.subr.bf16.mxu0 0
      %1952 = vmatpush1.bf16.xpose.msra.mxu0 0
      %1953 = vmatprep.subr.bf16.mxu0 0
      %1954 = vmatpush1.bf16.xpose.msra.mxu0 0
      %1955 = vmatprep.subr.bf16.mxu0 0
      %1956 = vmatpush1.bf16.xpose.msra.mxu0 0
      %1957 = vmatprep.subr.bf16.mxu0 0
      %1958 = vmatpush1.bf16.xpose.msra.mxu0 0
      %1959 = vmatprep.subr.bf16.mxu0 0
      %1960 = vmatpush1.bf16.xpose.msra.mxu0 0
      %1961 = vmatprep.subr.bf16.mxu0 0
      %1962 = vmatpush1.bf16.xpose.msra.mxu0 0
      %1963 = vmatprep.subr.bf16.mxu0 0
      %1964 = vmatpush1.bf16.xpose.msra.mxu0 0
      %1965 = vmatprep.mubr.bf16.mxu0 0
      %1966 = vmatmul.mubr.bf16.gmra.mrb[0].mxu0 %v1928
      %v1967 = vpop.f32.mrb[0].mxu0
      %v1968 = vadd.f32 0.0, %v1967
      %v1969 = vpop.f32.mrb[0].mxu0
      %v1970 = vpop.f32.mrb[0].mxu0
      %v1971 = vpop.f32.mrb[0].mxu0
      %1972 = vdwg.mxu0
      %v1973 = vmul.f32 %v1968, 0.35355338
      %v1974 = vadd.f32 %v1973, %v1119
      %v1975 = vsel %vm1124, %v1974, -inf
      %1976 = vmax.xlane.f32.xlu0 %v1975
      %v1977 = vpop.xlane.xlu0 %1976
      %v1978 = vsub.f32 %v1974, %v1977
      %v1979 = vmul.f32 %v1978, 1.442695
      %v1980 = vpow.pop %v1979
      %v1981 = vsel %vm1124, %v1980, 0.0
      %1982 = vadd.xlane.f32.xlu0 %v1981
      %v1983 = vpop.xlane.xlu0 %1982
      %v1984 = vrcp.pop %v1983
      %v1985 = vmul.f32 %v1980, %v1984
      %v1986 = vpack.c.bf16 %v1985, %v1985
      %1987 = vrot.lane.b32.xlu0 %v1587, 40
      %v1988 = vpop.permute.xlu0 %1987
      %v1990 = vsel %vm1124, %v1986, 0
      %v1993 = vsel %vm1190, %v1988, 0
      %1995 = vmatprep.subr.bf16.mxu0 0
      %1996 = vmatpush1.bf16.msra.mxu0 %v1993
      %1997 = vmatprep.subr.bf16.mxu0 0
      %1998 = vmatpush1.bf16.msra.mxu0 0
      %1999 = vmatprep.subr.bf16.mxu0 0
      %2000 = vmatpush1.bf16.msra.mxu0 0
      %2001 = vmatprep.subr.bf16.mxu0 0
      %2002 = vmatpush1.bf16.msra.mxu0 0
      %2003 = vmatprep.subr.bf16.mxu0 0
      %2004 = vmatpush1.bf16.msra.mxu0 0
      %2005 = vmatprep.subr.bf16.mxu0 0
      %2006 = vmatpush1.bf16.msra.mxu0 0
      %2007 = vmatprep.subr.bf16.mxu0 0
      %2008 = vmatpush1.bf16.msra.mxu0 0
      %2009 = vmatprep.subr.bf16.mxu0 0
      %2010 = vmatpush1.bf16.msra.mxu0 0
      %2011 = vmatprep.subr.bf16.mxu0 0
      %2012 = vmatpush1.bf16.msra.mxu0 0
      %2013 = vmatprep.subr.bf16.mxu0 0
      %2014 = vmatpush1.bf16.msra.mxu0 0
      %2015 = vmatprep.subr.bf16.mxu0 0
      %2016 = vmatpush1.bf16.msra.mxu0 0
      %2017 = vmatprep.subr.bf16.mxu0 0
      %2018 = vmatpush1.bf16.msra.mxu0 0
      %2019 = vmatprep.subr.bf16.mxu0 0
      %2020 = vmatpush1.bf16.msra.mxu0 0
      %2021 = vmatprep.subr.bf16.mxu0 0
      %2022 = vmatpush1.bf16.msra.mxu0 0
      %2023 = vmatprep.subr.bf16.mxu0 0
      %2024 = vmatpush1.bf16.msra.mxu0 0
      %2025 = vmatprep.subr.bf16.mxu0 0
      %2026 = vmatpush1.bf16.msra.mxu0 0
      %2027 = vmatprep.mubr.bf16.mxu0 0
      %2028 = vmatmul.mubr.bf16.gmra.mrb[0].mxu0 %v1990
      %v2029 = vpop.f32.mrb[0].mxu0
      %v2030 = vadd.f32 0.0, %v2029
      %v2031 = vpop.f32.mrb[0].mxu0
      %v2032 = vpop.f32.mrb[0].mxu0
      %v2033 = vpop.f32.mrb[0].mxu0
      %2034 = vdwg.mxu0
      %2036 = vrot.lane.b32.xlu0 %v1806, 8
      %v2037 = vpop.permute.xlu0 %2036
      %2040 = vrot.lane.b32.xlu0 %v1918, 16
      %v2041 = vpop.permute.xlu0 %2040
      %2044 = vrot.lane.b32.xlu0 %v2030, 24
      %v2045 = vpop.permute.xlu0 %2044
      %v2047 = vsel %vm1124, %v1694, %v2037
      %v2048 = vsel %vm1583, %v2047, %v2041
      %v2049 = vsel %vm1585, %v2048, %v2045
      %v2050 = vpack.c.bf16 %v2049, %v1586
      %v2052 = vlaneseq
      %v2053 = vshrl.u32 %v2052, 7
      %v2054 = vsub.s32 0, %v2053
      %v2055 = vrot.slane %v1113, %v2054
      %v2061 = vunpack.c.l.b16 %v1109
      %v2062 = vunpack.c.l.b16 %v1110
      %v2063 = vunpack.c.l.b16 %v1111
      %v2064 = vunpack.c.l.b16 %v1112
      %v2065 = vpack.c.b16 %v2062, %v2061
      %v2066 = vpack.c.b16 %v2064, %v2063
      %v2070 = vsel %vm1064, %v2050, 0
      %2072 = vmatprep.subr.bf16.mxu0 0
      %2073 = vmatpush1.bf16.msra.mxu0 %v2065
      %2074 = vmatprep.subr.bf16.mxu0 0
      %2075 = vmatpush1.bf16.msra.mxu0 %v2066
      %2076 = vmatprep.subr.bf16.mxu0 0
      %2077 = vmatpush1.bf16.msra.mxu0 0
      %2078 = vmatprep.subr.bf16.mxu0 0
      %2079 = vmatpush1.bf16.msra.mxu0 0
      %2080 = vmatprep.subr.bf16.mxu0 0
      %2081 = vmatpush1.bf16.msra.mxu0 0
      %2082 = vmatprep.subr.bf16.mxu0 0
      %2083 = vmatpush1.bf16.msra.mxu0 0
      %2084 = vmatprep.subr.bf16.mxu0 0
      %2085 = vmatpush1.bf16.msra.mxu0 0
      %2086 = vmatprep.subr.bf16.mxu0 0
      %2087 = vmatpush1.bf16.msra.mxu0 0
      %2088 = vmatprep.subr.bf16.mxu0 0
      %2089 = vmatpush1.bf16.msra.mxu0 0
      %2090 = vmatprep.subr.bf16.mxu0 0
      %2091 = vmatpush1.bf16.msra.mxu0 0
      %2092 = vmatprep.subr.bf16.mxu0 0
      %2093 = vmatpush1.bf16.msra.mxu0 0
      %2094 = vmatprep.subr.bf16.mxu0 0
      %2095 = vmatpush1.bf16.msra.mxu0 0
      %2096 = vmatprep.subr.bf16.mxu0 0
      %2097 = vmatpush1.bf16.msra.mxu0 0
      %2098 = vmatprep.subr.bf16.mxu0 0
      %2099 = vmatpush1.bf16.msra.mxu0 0
      %2100 = vmatprep.subr.bf16.mxu0 0
      %2101 = vmatpush1.bf16.msra.mxu0 0
      %2102 = vmatprep.subr.bf16.mxu0 0
      %2103 = vmatpush1.bf16.msra.mxu0 0
      %2104 = vmatprep.mubr.bf16.mxu0 0
      %2105 = vmatmul.mubr.bf16.gmra.mrb[0].mxu0 %v2070
      %v2106 = vpop.f32.mrb[0].mxu0
      %v2107 = vadd.f32 %v2055, %v2106
      %v2108 = vpop.f32.mrb[0].mxu0
      %v2109 = vpop.f32.mrb[0].mxu0
      %v2110 = vadd.f32 %v2055, %v2109
      %v2111 = vpop.f32.mrb[0].mxu0
      %2112 = vdwg.mxu0
      %v2113 = vadd.f32 %v1035, %v2107
      %v2114 = vadd.f32 %v1036, %v2110
      %v2115 = vld [vmem:[%s1009] sm:$0x1]
      %v2116 = vld [vmem:[%s1012] sm:$0x1]
      %v2117 = vsel %vm1064, %v2113, 0.0
      %2118 = vadd.xlane.f32.xlu0 %v2117
      %v2119 = vpop.xlane.xlu0 %2118
      %v2120 = vsel %vm1064, %v2114, 0.0
      %2121 = vadd.xlane.f32.xlu0 %v2120
      %v2122 = vpop.xlane.xlu0 %2121
      %v2123 = vrcp.pop 32.0
      %v2124 = vmul.f32 %v2119, %v2123
      %v2125 = vmul.f32 %v2122, %v2123
      %v2126 = vsub.f32 %v2113, %v2124
      %v2127 = vsub.f32 %v2114, %v2125
      %v2128 = vmul.f32 %v2126, %v2126
      %v2129 = vmul.f32 %v2127, %v2127
      %v2130 = vsel %vm1064, %v2128, 0.0
      %2131 = vadd.xlane.f32.xlu0 %v2130
      %v2132 = vpop.xlane.xlu0 %2131
      %v2133 = vsel %vm1064, %v2129, 0.0
      %2134 = vadd.xlane.f32.xlu0 %v2133
      %v2135 = vpop.xlane.xlu0 %2134
      %v2136 = vmul.f32 %v2132, %v2123
      %v2137 = vmul.f32 %v2135, %v2123
      %v2138 = vadd.f32 %v2136, 1e-05
      %v2139 = vadd.f32 %v2137, 1e-05
      %v2140 = vrsqrt.pop %v2138
      %v2141 = vrsqrt.pop %v2139
      %v2142 = vmul.f32 %v2126, %v2140
      %v2143 = vmul.f32 %v2127, %v2141
      %v2145 = vlaneseq
      %v2146 = vshrl.u32 %v2145, 7
      %v2147 = vsub.s32 0, %v2146
      %v2148 = vrot.slane %v2115, %v2147
      %v2150 = vmul.f32 %v2142, %v2148
      %v2151 = vmul.f32 %v2143, %v2148
      %v2153 = vlaneseq
      %v2154 = vshrl.u32 %v2153, 7
      %v2155 = vsub.s32 0, %v2154
      %v2156 = vrot.slane %v2116, %v2155
      %v2158 = vadd.f32 %v2150, %v2156
      %v2159 = vadd.f32 %v2151, %v2156
      %v2160 = vpack.c.bf16 %v2159, %v2158
      %v2161 = vld [vmem:[%s971] sm:$0xf]
      %v2162 = vld [vmem:[%s971 + $0x4] sm:$0xf]
      %v2163 = vld [vmem:[%s971 + $0x8] sm:$0xf]
      %v2164 = vld [vmem:[%s971 + $0xc] sm:$0xf]
      %v2165 = vld [vmem:[%s974] sm:$0x1]
      %v2167 = vlaneseq
      %v2168 = vshrl.u32 %v2167, 7
      %v2169 = vsub.s32 0, %v2168
      %v2170 = vrot.slane %v2165, %v2169
      %v2176 = vunpack.c.l.b16 %v2161
      %v2177 = vunpack.c.l.b16 %v2162
      %v2178 = vunpack.c.l.b16 %v2163
      %v2179 = vunpack.c.l.b16 %v2164
      %v2180 = vpack.c.b16 %v2177, %v2176
      %v2181 = vpack.c.b16 %v2179, %v2178
      %v2185 = vsel %vm1064, %v2160, 0
      %2187 = vmatprep.subr.bf16.mxu0 0
      %2188 = vmatpush1.bf16.msra.mxu0 %v2180
      %2189 = vmatprep.subr.bf16.mxu0 0
      %2190 = vmatpush1.bf16.msra.mxu0 %v2181
      %2191 = vmatprep.subr.bf16.mxu0 0
      %2192 = vmatpush1.bf16.msra.mxu0 0
      %2193 = vmatprep.subr.bf16.mxu0 0
      %2194 = vmatpush1.bf16.msra.mxu0 0
      %2195 = vmatprep.subr.bf16.mxu0 0
      %2196 = vmatpush1.bf16.msra.mxu0 0
      %2197 = vmatprep.subr.bf16.mxu0 0
      %2198 = vmatpush1.bf16.msra.mxu0 0
      %2199 = vmatprep.subr.bf16.mxu0 0
      %2200 = vmatpush1.bf16.msra.mxu0 0
      %2201 = vmatprep.subr.bf16.mxu0 0
      %2202 = vmatpush1.bf16.msra.mxu0 0
      %2203 = vmatprep.subr.bf16.mxu0 0
      %2204 = vmatpush1.bf16.msra.mxu0 0
      %2205 = vmatprep.subr.bf16.mxu0 0
      %2206 = vmatpush1.bf16.msra.mxu0 0
      %2207 = vmatprep.subr.bf16.mxu0 0
      %2208 = vmatpush1.bf16.msra.mxu0 0
      %2209 = vmatprep.subr.bf16.mxu0 0
      %2210 = vmatpush1.bf16.msra.mxu0 0
      %2211 = vmatprep.subr.bf16.mxu0 0
      %2212 = vmatpush1.bf16.msra.mxu0 0
      %2213 = vmatprep.subr.bf16.mxu0 0
      %2214 = vmatpush1.bf16.msra.mxu0 0
      %2215 = vmatprep.subr.bf16.mxu0 0
      %2216 = vmatpush1.bf16.msra.mxu0 0
      %2217 = vmatprep.subr.bf16.mxu0 0
      %2218 = vmatpush1.bf16.msra.mxu0 0
      %2219 = vmatprep.mubr.bf16.mxu0 0
      %2220 = vmatmul.mubr.bf16.gmra.mrb[0].mxu0 %v2185
      %v2221 = vpop.f32.mrb[0].mxu0
      %v2222 = vadd.f32 %v2170, %v2221
      %v2223 = vpop.f32.mrb[0].mxu0
      %v2224 = vpop.f32.mrb[0].mxu0
      %v2225 = vadd.f32 %v2170, %v2224
      %v2226 = vpop.f32.mrb[0].mxu0
      %2227 = vdwg.mxu0
      %v2228 = vpack.c.bf16 %v1038, %v1037
      %v2229 = vpack.c.bf16 %v1039, %v1039
      %v2230 = vld [vmem:[%s979] sm:$0xf]
      %v2231 = vld [vmem:[%s979 + $0x4] sm:$0xf]
      %v2232 = vld [vmem:[%s979 + $0x8] sm:$0xf]
      %v2233 = vld [vmem:[%s979 + $0xc] sm:$0xf]
      %v2234 = vld [vmem:[%s982] sm:$0x1]
      %v2236 = vlaneseq
      %v2237 = vshrl.u32 %v2236, 7
      %v2238 = vsub.s32 0, %v2237
      %v2239 = vrot.slane %v2234, %v2238
      %v2245 = vunpack.c.l.b16 %v2230
      %v2246 = vunpack.c.l.b16 %v2231
      %v2247 = vunpack.c.l.b16 %v2232
      %v2248 = vunpack.c.l.b16 %v2233
      %v2249 = vpack.c.b16 %v2246, %v2245
      %v2250 = vpack.c.b16 %v2248, %v2247
      %v2254 = vsel %vm1064, %v2228, 0
      %v2257 = vsel %vm1064, %v2229, 0
      %2259 = vmatprep.subr.bf16.mxu0 0
      %2260 = vmatpush1.bf16.msra.mxu0 %v2249
      %2261 = vmatprep.subr.bf16.mxu0 0
      %2262 = vmatpush1.bf16.msra.mxu0 %v2250
      %2263 = vmatprep.subr.bf16.mxu0 0
      %2264 = vmatpush1.bf16.msra.mxu0 0
      %2265 = vmatprep.subr.bf16.mxu0 0
      %2266 = vmatpush1.bf16.msra.mxu0 0
      %2267 = vmatprep.subr.bf16.mxu0 0
      %2268 = vmatpush1.bf16.msra.mxu0 0
      %2269 = vmatprep.subr.bf16.mxu0 0
      %2270 = vmatpush1.bf16.msra.mxu0 0
      %2271 = vmatprep.subr.bf16.mxu0 0
      %2272 = vmatpush1.bf16.msra.mxu0 0
      %2273 = vmatprep.subr.bf16.mxu0 0
      %2274 = vmatpush1.bf16.msra.mxu0 0
      %2275 = vmatprep.subr.bf16.mxu0 0
      %2276 = vmatpush1.bf16.msra.mxu0 0
      %2277 = vmatprep.subr.bf16.mxu0 0
      %2278 = vmatpush1.bf16.msra.mxu0 0
      %2279 = vmatprep.subr.bf16.mxu0 0
      %2280 = vmatpush1.bf16.msra.mxu0 0
      %2281 = vmatprep.subr.bf16.mxu0 0
      %2282 = vmatpush1.bf16.msra.mxu0 0
      %2283 = vmatprep.subr.bf16.mxu0 0
      %2284 = vmatpush1.bf16.msra.mxu0 0
      %2285 = vmatprep.subr.bf16.mxu0 0
      %2286 = vmatpush1.bf16.msra.mxu0 0
      %2287 = vmatprep.subr.bf16.mxu0 0
      %2288 = vmatpush1.bf16.msra.mxu0 0
      %2289 = vmatprep.subr.bf16.mxu0 0
      %2290 = vmatpush1.bf16.msra.mxu0 0
      %2291 = vmatprep.mubr.bf16.mxu0 0
      %2292 = vmatmul.mubr.bf16.gmra.mrb[0].mxu0 %v2254
      %v2293 = vpop.f32.mrb[0].mxu0
      %v2294 = vadd.f32 %v2239, %v2293
      %v2295 = vpop.f32.mrb[0].mxu0
      %v2296 = vpop.f32.mrb[0].mxu0
      %v2297 = vadd.f32 %v2239, %v2296
      %v2298 = vpop.f32.mrb[0].mxu0
      %2299 = vmatprep.mubr.bf16.mxu0 0
      %2300 = vmatmul.mubr.bf16.gmra.mrb[0].mxu0 %v2257
      %v2301 = vpop.f32.mrb[0].mxu0
      %v2302 = vadd.f32 %v2239, %v2301
      %v2303 = vpop.f32.mrb[0].mxu0
      %v2304 = vpop.f32.mrb[0].mxu0
      %v2305 = vpop.f32.mrb[0].mxu0
      %2306 = vdwg.mxu0
      %v2307 = vld [vmem:[%s987] sm:$0xf]
      %v2308 = vld [vmem:[%s987 + $0x4] sm:$0xf]
      %v2309 = vld [vmem:[%s987 + $0x8] sm:$0xf]
      %v2310 = vld [vmem:[%s987 + $0xc] sm:$0xf]
      %v2311 = vld [vmem:[%s990] sm:$0x1]
      %v2312 = vpack.c.bf16 %v2222, %v2222
      %v2313 = vpack.c.bf16 %v2297, %v2294
      %v2315 = vsel %vm1124, %v2312, 0
      %v2318 = vsel %vm1124, %v2313, 0
      %2320 = vmatprep.subr.bf16.mxu0 0
      %2321 = vmatpush1.bf16.xpose.msra.mxu0 %v2318
      %2322 = vmatprep.subr.bf16.mxu0 0
      %2323 = vmatpush1.bf16.xpose.msra.mxu0 0
      %2324 = vmatprep.subr.bf16.mxu0 0
      %2325 = vmatpush1.bf16.xpose.msra.mxu0 0
      %2326 = vmatprep.subr.bf16.mxu0 0
      %2327 = vmatpush1.bf16.xpose.msra.mxu0 0
      %2328 = vmatprep.subr.bf16.mxu0 0
      %2329 = vmatpush1.bf16.xpose.msra.mxu0 0
      %2330 = vmatprep.subr.bf16.mxu0 0
      %2331 = vmatpush1.bf16.xpose.msra.mxu0 0
      %2332 = vmatprep.subr.bf16.mxu0 0
      %2333 = vmatpush1.bf16.xpose.msra.mxu0 0
      %2334 = vmatprep.subr.bf16.mxu0 0
      %2335 = vmatpush1.bf16.xpose.msra.mxu0 0
      %2336 = vmatprep.subr.bf16.mxu0 0
      %2337 = vmatpush1.bf16.xpose.msra.mxu0 0
      %2338 = vmatprep.subr.bf16.mxu0 0
      %2339 = vmatpush1.bf16.xpose.msra.mxu0 0
      %2340 = vmatprep.subr.bf16.mxu0 0
      %2341 = vmatpush1.bf16.xpose.msra.mxu0 0
      %2342 = vmatprep.subr.bf16.mxu0 0
      %2343 = vmatpush1.bf16.xpose.msra.mxu0 0
      %2344 = vmatprep.subr.bf16.mxu0 0
      %2345 = vmatpush1.bf16.xpose.msra.mxu0 0
      %2346 = vmatprep.subr.bf16.mxu0 0
      %2347 = vmatpush1.bf16.xpose.msra.mxu0 0
      %2348 = vmatprep.subr.bf16.mxu0 0
      %2349 = vmatpush1.bf16.xpose.msra.mxu0 0
      %2350 = vmatprep.subr.bf16.mxu0 0
      %2351 = vmatpush1.bf16.xpose.msra.mxu0 0
      %2352 = vmatprep.mubr.bf16.mxu0 0
      %2353 = vmatmul.mubr.bf16.gmra.mrb[0].mxu0 %v2315
      %v2354 = vpop.f32.mrb[0].mxu0
      %v2355 = vadd.f32 0.0, %v2354
      %v2356 = vpop.f32.mrb[0].mxu0
      %v2357 = vpop.f32.mrb[0].mxu0
      %v2358 = vpop.f32.mrb[0].mxu0
      %2359 = vdwg.mxu0
      %v2360 = vmul.f32 %v2355, 0.35355338
      %vm2361 = vcmask 80896
      %v2362 = vsel %vm2361, %v2360, -inf
      %2363 = vmax.xlane.f32.xlu0 %v2362
      %v2364 = vpop.xlane.xlu0 %2363
      %v2365 = vsub.f32 %v2360, %v2364
      %v2366 = vmul.f32 %v2365, 1.442695
      %v2367 = vpow.pop %v2366
      %v2368 = vsel %vm2361, %v2367, 0.0
      %2369 = vadd.xlane.f32.xlu0 %v2368
      %v2370 = vpop.xlane.xlu0 %2369
      %v2371 = vrcp.pop %v2370
      %v2372 = vmul.f32 %v2367, %v2371
      %v2373 = vpack.c.bf16 %v2372, %v2372
      %2375 = vrot.lane.b32.xlu0 %v2313, 96
      %v2376 = vpop.permute.xlu0 %2375
      %v2378 = vsel %vm2361, %v2373, 0
      %vm2380 = vcmask 1044480
      %v2382 = vsel %vm2380, %v2376, 0
      %2384 = vmatprep.subr.bf16.mxu0 0
      %2385 = vmatpush1.bf16.msra.mxu0 %v2382
      %2386 = vmatprep.subr.bf16.mxu0 0
      %2387 = vmatpush1.bf16.msra.mxu0 0
      %2388 = vmatprep.subr.bf16.mxu0 0
      %2389 = vmatpush1.bf16.msra.mxu0 0
      %2390 = vmatprep.subr.bf16.mxu0 0
      %2391 = vmatpush1.bf16.msra.mxu0 0
      %2392 = vmatprep.subr.bf16.mxu0 0
      %2393 = vmatpush1.bf16.msra.mxu0 0
      %2394 = vmatprep.subr.bf16.mxu0 0
      %2395 = vmatpush1.bf16.msra.mxu0 0
      %2396 = vmatprep.subr.bf16.mxu0 0
      %2397 = vmatpush1.bf16.msra.mxu0 0
      %2398 = vmatprep.subr.bf16.mxu0 0
      %2399 = vmatpush1.bf16.msra.mxu0 0
      %2400 = vmatprep.subr.bf16.mxu0 0
      %2401 = vmatpush1.bf16.msra.mxu0 0
      %2402 = vmatprep.subr.bf16.mxu0 0
      %2403 = vmatpush1.bf16.msra.mxu0 0
      %2404 = vmatprep.subr.bf16.mxu0 0
      %2405 = vmatpush1.bf16.msra.mxu0 0
      %2406 = vmatprep.subr.bf16.mxu0 0
      %2407 = vmatpush1.bf16.msra.mxu0 0
      %2408 = vmatprep.subr.bf16.mxu0 0
      %2409 = vmatpush1.bf16.msra.mxu0 0
      %2410 = vmatprep.subr.bf16.mxu0 0
      %2411 = vmatpush1.bf16.msra.mxu0 0
      %2412 = vmatprep.subr.bf16.mxu0 0
      %2413 = vmatpush1.bf16.msra.mxu0 0
      %2414 = vmatprep.subr.bf16.mxu0 0
      %2415 = vmatpush1.bf16.msra.mxu0 0
      %2416 = vmatprep.mubr.bf16.mxu0 0
      %2417 = vmatmul.mubr.bf16.gmra.mrb[0].mxu0 %v2378
      %v2418 = vpop.f32.mrb[0].mxu0
      %v2419 = vadd.f32 0.0, %v2418
      %v2420 = vpop.f32.mrb[0].mxu0
      %v2421 = vpop.f32.mrb[0].mxu0
      %v2422 = vpop.f32.mrb[0].mxu0
      %2423 = vdwg.mxu0
      %2425 = vrot.lane.b32.xlu0 %v2312, 120
      %v2426 = vpop.permute.xlu0 %2425
      %2427 = vrot.lane.b32.xlu0 %v2313, 120
      %v2428 = vpop.permute.xlu0 %2427
      %v2430 = vsel %vm1124, %v2426, 0
      %v2433 = vsel %vm1124, %v2428, 0
      %2435 = vmatprep.subr.bf16.mxu0 0
      %2436 = vmatpush1.bf16.xpose.msra.mxu0 %v2433
      %2437 = vmatprep.subr.bf16.mxu0 0
      %2438 = vmatpush1.bf16.xpose.msra.mxu0 0
      %2439 = vmatprep.subr.bf16.mxu0 0
      %2440 = vmatpush1.bf16.xpose.msra.mxu0 0
      %2441 = vmatprep.subr.bf16.mxu0 0
      %2442 = vmatpush1.bf16.xpose.msra.mxu0 0
      %2443 = vmatprep.subr.bf16.mxu0 0
      %2444 = vmatpush1.bf16.xpose.msra.mxu0 0
      %2445 = vmatprep.subr.bf16.mxu0 0
      %2446 = vmatpush1.bf16.xpose.msra.mxu0 0
      %2447 = vmatprep.subr.bf16.mxu0 0
      %2448 = vmatpush1.bf16.xpose.msra.mxu0 0
      %2449 = vmatprep.subr.bf16.mxu0 0
      %2450 = vmatpush1.bf16.xpose.msra.mxu0 0
      %2451 = vmatprep.subr.bf16.mxu0 0
      %2452 = vmatpush1.bf16.xpose.msra.mxu0 0
      %2453 = vmatprep.subr.bf16.mxu0 0
      %2454 = vmatpush1.bf16.xpose.msra.mxu0 0
      %2455 = vmatprep.subr.bf16.mxu0 0
      %2456 = vmatpush1.bf16.xpose.msra.mxu0 0
      %2457 = vmatprep.subr.bf16.mxu0 0
      %2458 = vmatpush1.bf16.xpose.msra.mxu0 0
      %2459 = vmatprep.subr.bf16.mxu0 0
      %2460 = vmatpush1.bf16.xpose.msra.mxu0 0
      %2461 = vmatprep.subr.bf16.mxu0 0
      %2462 = vmatpush1.bf16.xpose.msra.mxu0 0
      %2463 = vmatprep.subr.bf16.mxu0 0
      %2464 = vmatpush1.bf16.xpose.msra.mxu0 0
      %2465 = vmatprep.subr.bf16.mxu0 0
      %2466 = vmatpush1.bf16.xpose.msra.mxu0 0
      %2467 = vmatprep.mubr.bf16.mxu0 0
      %2468 = vmatmul.mubr.bf16.gmra.mrb[0].mxu0 %v2430
      %v2469 = vpop.f32.mrb[0].mxu0
      %v2470 = vadd.f32 0.0, %v2469
      %v2471 = vpop.f32.mrb[0].mxu0
      %v2472 = vpop.f32.mrb[0].mxu0
      %v2473 = vpop.f32.mrb[0].mxu0
      %2474 = vdwg.mxu0
      %v2475 = vmul.f32 %v2470, 0.35355338
      %v2476 = vsel %vm2361, %v2475, -inf
      %2477 = vmax.xlane.f32.xlu0 %v2476
      %v2478 = vpop.xlane.xlu0 %2477
      %v2479 = vsub.f32 %v2475, %v2478
      %v2480 = vmul.f32 %v2479, 1.442695
      %v2481 = vpow.pop %v2480
      %v2482 = vsel %vm2361, %v2481, 0.0
      %2483 = vadd.xlane.f32.xlu0 %v2482
      %v2484 = vpop.xlane.xlu0 %2483
      %v2485 = vrcp.pop %v2484
      %v2486 = vmul.f32 %v2481, %v2485
      %v2487 = vpack.c.bf16 %v2486, %v2486
      %2488 = vrot.lane.b32.xlu0 %v2313, 88
      %v2489 = vpop.permute.xlu0 %2488
      %v2491 = vsel %vm2361, %v2487, 0
      %v2494 = vsel %vm2380, %v2489, 0
      %2496 = vmatprep.subr.bf16.mxu0 0
      %2497 = vmatpush1.bf16.msra.mxu0 %v2494
      %2498 = vmatprep.subr.bf16.mxu0 0
      %2499 = vmatpush1.bf16.msra.mxu0 0
      %2500 = vmatprep.subr.bf16.mxu0 0
      %2501 = vmatpush1.bf16.msra.mxu0 0
      %2502 = vmatprep.subr.bf16.mxu0 0
      %2503 = vmatpush1.bf16.msra.mxu0 0
      %2504 = vmatprep.subr.bf16.mxu0 0
      %2505 = vmatpush1.bf16.msra.mxu0 0
      %2506 = vmatprep.subr.bf16.mxu0 0
      %2507 = vmatpush1.bf16.msra.mxu0 0
      %2508 = vmatprep.subr.bf16.mxu0 0
      %2509 = vmatpush1.bf16.msra.mxu0 0
      %2510 = vmatprep.subr.bf16.mxu0 0
      %2511 = vmatpush1.bf16.msra.mxu0 0
      %2512 = vmatprep.subr.bf16.mxu0 0
      %2513 = vmatpush1.bf16.msra.mxu0 0
      %2514 = vmatprep.subr.bf16.mxu0 0
      %2515 = vmatpush1.bf16.msra.mxu0 0
      %2516 = vmatprep.subr.bf16.mxu0 0
      %2517 = vmatpush1.bf16.msra.mxu0 0
      %2518 = vmatprep.subr.bf16.mxu0 0
      %2519 = vmatpush1.bf16.msra.mxu0 0
      %2520 = vmatprep.subr.bf16.mxu0 0
      %2521 = vmatpush1.bf16.msra.mxu0 0
      %2522 = vmatprep.subr.bf16.mxu0 0
      %2523 = vmatpush1.bf16.msra.mxu0 0
      %2524 = vmatprep.subr.bf16.mxu0 0
      %2525 = vmatpush1.bf16.msra.mxu0 0
      %2526 = vmatprep.subr.bf16.mxu0 0
      %2527 = vmatpush1.bf16.msra.mxu0 0
      %2528 = vmatprep.mubr.bf16.mxu0 0
      %2529 = vmatmul.mubr.bf16.gmra.mrb[0].mxu0 %v2491
      %v2530 = vpop.f32.mrb[0].mxu0
      %v2531 = vadd.f32 0.0, %v2530
      %v2532 = vpop.f32.mrb[0].mxu0
      %v2533 = vpop.f32.mrb[0].mxu0
      %v2534 = vpop.f32.mrb[0].mxu0
      %2535 = vdwg.mxu0
      %2536 = vrot.lane.b32.xlu0 %v2312, 112
      %v2537 = vpop.permute.xlu0 %2536
      %2538 = vrot.lane.b32.xlu0 %v2313, 112
      %v2539 = vpop.permute.xlu0 %2538
      %v2541 = vsel %vm1124, %v2537, 0
      %v2544 = vsel %vm1124, %v2539, 0
      %2546 = vmatprep.subr.bf16.mxu0 0
      %2547 = vmatpush1.bf16.xpose.msra.mxu0 %v2544
      %2548 = vmatprep.subr.bf16.mxu0 0
      %2549 = vmatpush1.bf16.xpose.msra.mxu0 0
      %2550 = vmatprep.subr.bf16.mxu0 0
      %2551 = vmatpush1.bf16.xpose.msra.mxu0 0
      %2552 = vmatprep.subr.bf16.mxu0 0
      %2553 = vmatpush1.bf16.xpose.msra.mxu0 0
      %2554 = vmatprep.subr.bf16.mxu0 0
      %2555 = vmatpush1.bf16.xpose.msra.mxu0 0
      %2556 = vmatprep.subr.bf16.mxu0 0
      %2557 = vmatpush1.bf16.xpose.msra.mxu0 0
      %2558 = vmatprep.subr.bf16.mxu0 0
      %2559 = vmatpush1.bf16.xpose.msra.mxu0 0
      %2560 = vmatprep.subr.bf16.mxu0 0
      %2561 = vmatpush1.bf16.xpose.msra.mxu0 0
      %2562 = vmatprep.subr.bf16.mxu0 0
      %2563 = vmatpush1.bf16.xpose.msra.mxu0 0
      %2564 = vmatprep.subr.bf16.mxu0 0
      %2565 = vmatpush1.bf16.xpose.msra.mxu0 0
      %2566 = vmatprep.subr.bf16.mxu0 0
      %2567 = vmatpush1.bf16.xpose.msra.mxu0 0
      %2568 = vmatprep.subr.bf16.mxu0 0
      %2569 = vmatpush1.bf16.xpose.msra.mxu0 0
      %2570 = vmatprep.subr.bf16.mxu0 0
      %2571 = vmatpush1.bf16.xpose.msra.mxu0 0
      %2572 = vmatprep.subr.bf16.mxu0 0
      %2573 = vmatpush1.bf16.xpose.msra.mxu0 0
      %2574 = vmatprep.subr.bf16.mxu0 0
      %2575 = vmatpush1.bf16.xpose.msra.mxu0 0
      %2576 = vmatprep.subr.bf16.mxu0 0
      %2577 = vmatpush1.bf16.xpose.msra.mxu0 0
      %2578 = vmatprep.mubr.bf16.mxu0 0
      %2579 = vmatmul.mubr.bf16.gmra.mrb[0].mxu0 %v2541
      %v2580 = vpop.f32.mrb[0].mxu0
      %v2581 = vadd.f32 0.0, %v2580
      %v2582 = vpop.f32.mrb[0].mxu0
      %v2583 = vpop.f32.mrb[0].mxu0
      %v2584 = vpop.f32.mrb[0].mxu0
      %2585 = vdwg.mxu0
      %v2586 = vmul.f32 %v2581, 0.35355338
      %v2587 = vsel %vm2361, %v2586, -inf
      %2588 = vmax.xlane.f32.xlu0 %v2587
      %v2589 = vpop.xlane.xlu0 %2588
      %v2590 = vsub.f32 %v2586, %v2589
      %v2591 = vmul.f32 %v2590, 1.442695
      %v2592 = vpow.pop %v2591
      %v2593 = vsel %vm2361, %v2592, 0.0
      %2594 = vadd.xlane.f32.xlu0 %v2593
      %v2595 = vpop.xlane.xlu0 %2594
      %v2596 = vrcp.pop %v2595
      %v2597 = vmul.f32 %v2592, %v2596
      %v2598 = vpack.c.bf16 %v2597, %v2597
      %2599 = vrot.lane.b32.xlu0 %v2313, 80
      %v2600 = vpop.permute.xlu0 %2599
      %v2602 = vsel %vm2361, %v2598, 0
      %v2605 = vsel %vm2380, %v2600, 0
      %2607 = vmatprep.subr.bf16.mxu0 0
      %2608 = vmatpush1.bf16.msra.mxu0 %v2605
      %2609 = vmatprep.subr.bf16.mxu0 0
      %2610 = vmatpush1.bf16.msra.mxu0 0
      %2611 = vmatprep.subr.bf16.mxu0 0
      %2612 = vmatpush1.bf16.msra.mxu0 0
      %2613 = vmatprep.subr.bf16.mxu0 0
      %2614 = vmatpush1.bf16.msra.mxu0 0
      %2615 = vmatprep.subr.bf16.mxu0 0
      %2616 = vmatpush1.bf16.msra.mxu0 0
      %2617 = vmatprep.subr.bf16.mxu0 0
      %2618 = vmatpush1.bf16.msra.mxu0 0
      %2619 = vmatprep.subr.bf16.mxu0 0
      %2620 = vmatpush1.bf16.msra.mxu0 0
      %2621 = vmatprep.subr.bf16.mxu0 0
      %2622 = vmatpush1.bf16.msra.mxu0 0
      %2623 = vmatprep.subr.bf16.mxu0 0
      %2624 = vmatpush1.bf16.msra.mxu0 0
      %2625 = vmatprep.subr.bf16.mxu0 0
      %2626 = vmatpush1.bf16.msra.mxu0 0
      %2627 = vmatprep.subr.bf16.mxu0 0
      %2628 = vmatpush1.bf16.msra.mxu0 0
      %2629 = vmatprep.subr.bf16.mxu0 0
      %2630 = vmatpush1.bf16.msra.mxu0 0
      %2631 = vmatprep.subr.bf16.mxu0 0
      %2632 = vmatpush1.bf16.msra.mxu0 0
      %2633 = vmatprep.subr.bf16.mxu0 0
      %2634 = vmatpush1.bf16.msra.mxu0 0
      %2635 = vmatprep.subr.bf16.mxu0 0
      %2636 = vmatpush1.bf16.msra.mxu0 0
      %2637 = vmatprep.subr.bf16.mxu0 0
      %2638 = vmatpush1.bf16.msra.mxu0 0
      %2639 = vmatprep.mubr.bf16.mxu0 0
      %2640 = vmatmul.mubr.bf16.gmra.mrb[0].mxu0 %v2602
      %v2641 = vpop.f32.mrb[0].mxu0
      %v2642 = vadd.f32 0.0, %v2641
      %v2643 = vpop.f32.mrb[0].mxu0
      %v2644 = vpop.f32.mrb[0].mxu0
      %v2645 = vpop.f32.mrb[0].mxu0
      %2646 = vdwg.mxu0
      %2647 = vrot.lane.b32.xlu0 %v2312, 104
      %v2648 = vpop.permute.xlu0 %2647
      %2649 = vrot.lane.b32.xlu0 %v2313, 104
      %v2650 = vpop.permute.xlu0 %2649
      %v2652 = vsel %vm1124, %v2648, 0
      %v2655 = vsel %vm1124, %v2650, 0
      %2657 = vmatprep.subr.bf16.mxu0 0
      %2658 = vmatpush1.bf16.xpose.msra.mxu0 %v2655
      %2659 = vmatprep.subr.bf16.mxu0 0
      %2660 = vmatpush1.bf16.xpose.msra.mxu0 0
      %2661 = vmatprep.subr.bf16.mxu0 0
      %2662 = vmatpush1.bf16.xpose.msra.mxu0 0
      %2663 = vmatprep.subr.bf16.mxu0 0
      %2664 = vmatpush1.bf16.xpose.msra.mxu0 0
      %2665 = vmatprep.subr.bf16.mxu0 0
      %2666 = vmatpush1.bf16.xpose.msra.mxu0 0
      %2667 = vmatprep.subr.bf16.mxu0 0
      %2668 = vmatpush1.bf16.xpose.msra.mxu0 0
      %2669 = vmatprep.subr.bf16.mxu0 0
      %2670 = vmatpush1.bf16.xpose.msra.mxu0 0
      %2671 = vmatprep.subr.bf16.mxu0 0
      %2672 = vmatpush1.bf16.xpose.msra.mxu0 0
      %2673 = vmatprep.subr.bf16.mxu0 0
      %2674 = vmatpush1.bf16.xpose.msra.mxu0 0
      %2675 = vmatprep.subr.bf16.mxu0 0
      %2676 = vmatpush1.bf16.xpose.msra.mxu0 0
      %2677 = vmatprep.subr.bf16.mxu0 0
      %2678 = vmatpush1.bf16.xpose.msra.mxu0 0
      %2679 = vmatprep.subr.bf16.mxu0 0
      %2680 = vmatpush1.bf16.xpose.msra.mxu0 0
      %2681 = vmatprep.subr.bf16.mxu0 0
      %2682 = vmatpush1.bf16.xpose.msra.mxu0 0
      %2683 = vmatprep.subr.bf16.mxu0 0
      %2684 = vmatpush1.bf16.xpose.msra.mxu0 0
      %2685 = vmatprep.subr.bf16.mxu0 0
      %2686 = vmatpush1.bf16.xpose.msra.mxu0 0
      %2687 = vmatprep.subr.bf16.mxu0 0
      %2688 = vmatpush1.bf16.xpose.msra.mxu0 0
      %2689 = vmatprep.mubr.bf16.mxu0 0
      %2690 = vmatmul.mubr.bf16.gmra.mrb[0].mxu0 %v2652
      %v2691 = vpop.f32.mrb[0].mxu0
      %v2692 = vadd.f32 0.0, %v2691
      %v2693 = vpop.f32.mrb[0].mxu0
      %v2694 = vpop.f32.mrb[0].mxu0
      %v2695 = vpop.f32.mrb[0].mxu0
      %2696 = vdwg.mxu0
      %v2697 = vmul.f32 %v2692, 0.35355338
      %v2698 = vsel %vm2361, %v2697, -inf
      %2699 = vmax.xlane.f32.xlu0 %v2698
      %v2700 = vpop.xlane.xlu0 %2699
      %v2701 = vsub.f32 %v2697, %v2700
      %v2702 = vmul.f32 %v2701, 1.442695
      %v2703 = vpow.pop %v2702
      %v2704 = vsel %vm2361, %v2703, 0.0
      %2705 = vadd.xlane.f32.xlu0 %v2704
      %v2706 = vpop.xlane.xlu0 %2705
      %v2707 = vrcp.pop %v2706
      %v2708 = vmul.f32 %v2703, %v2707
      %v2709 = vpack.c.bf16 %v2708, %v2708
      %2710 = vrot.lane.b32.xlu0 %v2313, 72
      %v2711 = vpop.permute.xlu0 %2710
      %v2713 = vsel %vm2361, %v2709, 0
      %v2716 = vsel %vm2380, %v2711, 0
      %2718 = vmatprep.subr.bf16.mxu0 0
      %2719 = vmatpush1.bf16.msra.mxu0 %v2716
      %2720 = vmatprep.subr.bf16.mxu0 0
      %2721 = vmatpush1.bf16.msra.mxu0 0
      %2722 = vmatprep.subr.bf16.mxu0 0
      %2723 = vmatpush1.bf16.msra.mxu0 0
      %2724 = vmatprep.subr.bf16.mxu0 0
      %2725 = vmatpush1.bf16.msra.mxu0 0
      %2726 = vmatprep.subr.bf16.mxu0 0
      %2727 = vmatpush1.bf16.msra.mxu0 0
      %2728 = vmatprep.subr.bf16.mxu0 0
      %2729 = vmatpush1.bf16.msra.mxu0 0
      %2730 = vmatprep.subr.bf16.mxu0 0
      %2731 = vmatpush1.bf16.msra.mxu0 0
      %2732 = vmatprep.subr.bf16.mxu0 0
      %2733 = vmatpush1.bf16.msra.mxu0 0
      %2734 = vmatprep.subr.bf16.mxu0 0
      %2735 = vmatpush1.bf16.msra.mxu0 0
      %2736 = vmatprep.subr.bf16.mxu0 0
      %2737 = vmatpush1.bf16.msra.mxu0 0
      %2738 = vmatprep.subr.bf16.mxu0 0
      %2739 = vmatpush1.bf16.msra.mxu0 0
      %2740 = vmatprep.subr.bf16.mxu0 0
      %2741 = vmatpush1.bf16.msra.mxu0 0
      %2742 = vmatprep.subr.bf16.mxu0 0
      %2743 = vmatpush1.bf16.msra.mxu0 0
      %2744 = vmatprep.subr.bf16.mxu0 0
      %2745 = vmatpush1.bf16.msra.mxu0 0
      %2746 = vmatprep.subr.bf16.mxu0 0
      %2747 = vmatpush1.bf16.msra.mxu0 0
      %2748 = vmatprep.subr.bf16.mxu0 0
      %2749 = vmatpush1.bf16.msra.mxu0 0
      %2750 = vmatprep.mubr.bf16.mxu0 0
      %2751 = vmatmul.mubr.bf16.gmra.mrb[0].mxu0 %v2713
      %v2752 = vpop.f32.mrb[0].mxu0
      %v2753 = vadd.f32 0.0, %v2752
      %v2754 = vpop.f32.mrb[0].mxu0
      %v2755 = vpop.f32.mrb[0].mxu0
      %v2756 = vpop.f32.mrb[0].mxu0
      %2757 = vdwg.mxu0
      %2759 = vrot.lane.b32.xlu0 %v2531, 8
      %v2760 = vpop.permute.xlu0 %2759
      %2763 = vrot.lane.b32.xlu0 %v2642, 16
      %v2764 = vpop.permute.xlu0 %2763
      %2767 = vrot.lane.b32.xlu0 %v2753, 24
      %v2768 = vpop.permute.xlu0 %2767
      %v2770 = vsel %vm1124, %v2419, %v2760
      %v2771 = vsel %vm1583, %v2770, %v2764
      %v2772 = vsel %vm1585, %v2771, %v2768
      %v2773 = vpack.c.bf16 %v2225, %v2225
      %v2774 = vpack.c.bf16 %v2302, %v2297
      %v2776 = vrot.slane %v2774, 1
      %v2778 = vsel %vm1124, %v2773, 0
      %v2781 = vsel %vm1124, %v2776, 0
      %2783 = vmatprep.subr.bf16.mxu0 0
      %2784 = vmatpush1.bf16.xpose.msra.mxu0 %v2781
      %2785 = vmatprep.subr.bf16.mxu0 0
      %2786 = vmatpush1.bf16.xpose.msra.mxu0 0
      %2787 = vmatprep.subr.bf16.mxu0 0
      %2788 = vmatpush1.bf16.xpose.msra.mxu0 0
      %2789 = vmatprep.subr.bf16.mxu0 0
      %2790 = vmatpush1.bf16.xpose.msra.mxu0 0
      %2791 = vmatprep.subr.bf16.mxu0 0
      %2792 = vmatpush1.bf16.xpose.msra.mxu0 0
      %2793 = vmatprep.subr.bf16.mxu0 0
      %2794 = vmatpush1.bf16.xpose.msra.mxu0 0
      %2795 = vmatprep.subr.bf16.mxu0 0
      %2796 = vmatpush1.bf16.xpose.msra.mxu0 0
      %2797 = vmatprep.subr.bf16.mxu0 0
      %2798 = vmatpush1.bf16.xpose.msra.mxu0 0
      %2799 = vmatprep.subr.bf16.mxu0 0
      %2800 = vmatpush1.bf16.xpose.msra.mxu0 0
      %2801 = vmatprep.subr.bf16.mxu0 0
      %2802 = vmatpush1.bf16.xpose.msra.mxu0 0
      %2803 = vmatprep.subr.bf16.mxu0 0
      %2804 = vmatpush1.bf16.xpose.msra.mxu0 0
      %2805 = vmatprep.subr.bf16.mxu0 0
      %2806 = vmatpush1.bf16.xpose.msra.mxu0 0
      %2807 = vmatprep.subr.bf16.mxu0 0
      %2808 = vmatpush1.bf16.xpose.msra.mxu0 0
      %2809 = vmatprep.subr.bf16.mxu0 0
      %2810 = vmatpush1.bf16.xpose.msra.mxu0 0
      %2811 = vmatprep.subr.bf16.mxu0 0
      %2812 = vmatpush1.bf16.xpose.msra.mxu0 0
      %2813 = vmatprep.subr.bf16.mxu0 0
      %2814 = vmatpush1.bf16.xpose.msra.mxu0 0
      %2815 = vmatprep.mubr.bf16.mxu0 0
      %2816 = vmatmul.mubr.bf16.gmra.mrb[0].mxu0 %v2778
      %v2817 = vpop.f32.mrb[0].mxu0
      %v2818 = vadd.f32 0.0, %v2817
      %v2819 = vpop.f32.mrb[0].mxu0
      %v2820 = vpop.f32.mrb[0].mxu0
      %v2821 = vpop.f32.mrb[0].mxu0
      %2822 = vdwg.mxu0
      %v2823 = vmul.f32 %v2818, 0.35355338
      %v2824 = vsel %vm2361, %v2823, -inf
      %2825 = vmax.xlane.f32.xlu0 %v2824
      %v2826 = vpop.xlane.xlu0 %2825
      %v2827 = vsub.f32 %v2823, %v2826
      %v2828 = vmul.f32 %v2827, 1.442695
      %v2829 = vpow.pop %v2828
      %v2830 = vsel %vm2361, %v2829, 0.0
      %2831 = vadd.xlane.f32.xlu0 %v2830
      %v2832 = vpop.xlane.xlu0 %2831
      %v2833 = vrcp.pop %v2832
      %v2834 = vmul.f32 %v2829, %v2833
      %v2835 = vpack.c.bf16 %v2834, %v2834
      %2836 = vrot.lane.b32.xlu0 %v2776, 96
      %v2837 = vpop.permute.xlu0 %2836
      %v2839 = vsel %vm2361, %v2835, 0
      %v2842 = vsel %vm2380, %v2837, 0
      %2844 = vmatprep.subr.bf16.mxu0 0
      %2845 = vmatpush1.bf16.msra.mxu0 %v2842
      %2846 = vmatprep.subr.bf16.mxu0 0
      %2847 = vmatpush1.bf16.msra.mxu0 0
      %2848 = vmatprep.subr.bf16.mxu0 0
      %2849 = vmatpush1.bf16.msra.mxu0 0
      %2850 = vmatprep.subr.bf16.mxu0 0
      %2851 = vmatpush1.bf16.msra.mxu0 0
      %2852 = vmatprep.subr.bf16.mxu0 0
      %2853 = vmatpush1.bf16.msra.mxu0 0
      %2854 = vmatprep.subr.bf16.mxu0 0
      %2855 = vmatpush1.bf16.msra.mxu0 0
      %2856 = vmatprep.subr.bf16.mxu0 0
      %2857 = vmatpush1.bf16.msra.mxu0 0
      %2858 = vmatprep.subr.bf16.mxu0 0
      %2859 = vmatpush1.bf16.msra.mxu0 0
      %2860 = vmatprep.subr.bf16.mxu0 0
      %2861 = vmatpush1.bf16.msra.mxu0 0
      %2862 = vmatprep.subr.bf16.mxu0 0
      %2863 = vmatpush1.bf16.msra.mxu0 0
      %2864 = vmatprep.subr.bf16.mxu0 0
      %2865 = vmatpush1.bf16.msra.mxu0 0
      %2866 = vmatprep.subr.bf16.mxu0 0
      %2867 = vmatpush1.bf16.msra.mxu0 0
      %2868 = vmatprep.subr.bf16.mxu0 0
      %2869 = vmatpush1.bf16.msra.mxu0 0
      %2870 = vmatprep.subr.bf16.mxu0 0
      %2871 = vmatpush1.bf16.msra.mxu0 0
      %2872 = vmatprep.subr.bf16.mxu0 0
      %2873 = vmatpush1.bf16.msra.mxu0 0
      %2874 = vmatprep.subr.bf16.mxu0 0
      %2875 = vmatpush1.bf16.msra.mxu0 0
      %2876 = vmatprep.mubr.bf16.mxu0 0
      %2877 = vmatmul.mubr.bf16.gmra.mrb[0].mxu0 %v2839
      %v2878 = vpop.f32.mrb[0].mxu0
      %v2879 = vadd.f32 0.0, %v2878
      %v2880 = vpop.f32.mrb[0].mxu0
      %v2881 = vpop.f32.mrb[0].mxu0
      %v2882 = vpop.f32.mrb[0].mxu0
      %2883 = vdwg.mxu0
      %2885 = vrot.lane.b32.xlu0 %v2773, 120
      %v2886 = vpop.permute.xlu0 %2885
      %2887 = vrot.lane.b32.xlu0 %v2776, 120
      %v2888 = vpop.permute.xlu0 %2887
      %v2890 = vsel %vm1124, %v2886, 0
      %v2893 = vsel %vm1124, %v2888, 0
      %2895 = vmatprep.subr.bf16.mxu0 0
      %2896 = vmatpush1.bf16.xpose.msra.mxu0 %v2893
      %2897 = vmatprep.subr.bf16.mxu0 0
      %2898 = vmatpush1.bf16.xpose.msra.mxu0 0
      %2899 = vmatprep.subr.bf16.mxu0 0
      %2900 = vmatpush1.bf16.xpose.msra.mxu0 0
      %2901 = vmatprep.subr.bf16.mxu0 0
      %2902 = vmatpush1.bf16.xpose.msra.mxu0 0
      %2903 = vmatprep.subr.bf16.mxu0 0
      %2904 = vmatpush1.bf16.xpose.msra.mxu0 0
      %2905 = vmatprep.subr.bf16.mxu0 0
      %2906 = vmatpush1.bf16.xpose.msra.mxu0 0
      %2907 = vmatprep.subr.bf16.mxu0 0
      %2908 = vmatpush1.bf16.xpose.msra.mxu0 0
      %2909 = vmatprep.subr.bf16.mxu0 0
      %2910 = vmatpush1.bf16.xpose.msra.mxu0 0
      %2911 = vmatprep.subr.bf16.mxu0 0
      %2912 = vmatpush1.bf16.xpose.msra.mxu0 0
      %2913 = vmatprep.subr.bf16.mxu0 0
      %2914 = vmatpush1.bf16.xpose.msra.mxu0 0
      %2915 = vmatprep.subr.bf16.mxu0 0
      %2916 = vmatpush1.bf16.xpose.msra.mxu0 0
      %2917 = vmatprep.subr.bf16.mxu0 0
      %2918 = vmatpush1.bf16.xpose.msra.mxu0 0
      %2919 = vmatprep.subr.bf16.mxu0 0
      %2920 = vmatpush1.bf16.xpose.msra.mxu0 0
      %2921 = vmatprep.subr.bf16.mxu0 0
      %2922 = vmatpush1.bf16.xpose.msra.mxu0 0
      %2923 = vmatprep.subr.bf16.mxu0 0
      %2924 = vmatpush1.bf16.xpose.msra.mxu0 0
      %2925 = vmatprep.subr.bf16.mxu0 0
      %2926 = vmatpush1.bf16.xpose.msra.mxu0 0
      %2927 = vmatprep.mubr.bf16.mxu0 0
      %2928 = vmatmul.mubr.bf16.gmra.mrb[0].mxu0 %v2890
      %v2929 = vpop.f32.mrb[0].mxu0
      %v2930 = vadd.f32 0.0, %v2929
      %v2931 = vpop.f32.mrb[0].mxu0
      %v2932 = vpop.f32.mrb[0].mxu0
      %v2933 = vpop.f32.mrb[0].mxu0
      %2934 = vdwg.mxu0
      %v2935 = vmul.f32 %v2930, 0.35355338
      %v2936 = vsel %vm2361, %v2935, -inf
      %2937 = vmax.xlane.f32.xlu0 %v2936
      %v2938 = vpop.xlane.xlu0 %2937
      %v2939 = vsub.f32 %v2935, %v2938
      %v2940 = vmul.f32 %v2939, 1.442695
      %v2941 = vpow.pop %v2940
      %v2942 = vsel %vm2361, %v2941, 0.0
      %2943 = vadd.xlane.f32.xlu0 %v2942
      %v2944 = vpop.xlane.xlu0 %2943
      %v2945 = vrcp.pop %v2944
      %v2946 = vmul.f32 %v2941, %v2945
      %v2947 = vpack.c.bf16 %v2946, %v2946
      %2948 = vrot.lane.b32.xlu0 %v2776, 88
      %v2949 = vpop.permute.xlu0 %2948
      %v2951 = vsel %vm2361, %v2947, 0
      %v2954 = vsel %vm2380, %v2949, 0
      %2956 = vmatprep.subr.bf16.mxu0 0
      %2957 = vmatpush1.bf16.msra.mxu0 %v2954
      %2958 = vmatprep.subr.bf16.mxu0 0
      %2959 = vmatpush1.bf16.msra.mxu0 0
      %2960 = vmatprep.subr.bf16.mxu0 0
      %2961 = vmatpush1.bf16.msra.mxu0 0
      %2962 = vmatprep.subr.bf16.mxu0 0
      %2963 = vmatpush1.bf16.msra.mxu0 0
      %2964 = vmatprep.subr.bf16.mxu0 0
      %2965 = vmatpush1.bf16.msra.mxu0 0
      %2966 = vmatprep.subr.bf16.mxu0 0
      %2967 = vmatpush1.bf16.msra.mxu0 0
      %2968 = vmatprep.subr.bf16.mxu0 0
      %2969 = vmatpush1.bf16.msra.mxu0 0
      %2970 = vmatprep.subr.bf16.mxu0 0
      %2971 = vmatpush1.bf16.msra.mxu0 0
      %2972 = vmatprep.subr.bf16.mxu0 0
      %2973 = vmatpush1.bf16.msra.mxu0 0
      %2974 = vmatprep.subr.bf16.mxu0 0
      %2975 = vmatpush1.bf16.msra.mxu0 0
      %2976 = vmatprep.subr.bf16.mxu0 0
      %2977 = vmatpush1.bf16.msra.mxu0 0
      %2978 = vmatprep.subr.bf16.mxu0 0
      %2979 = vmatpush1.bf16.msra.mxu0 0
      %2980 = vmatprep.subr.bf16.mxu0 0
      %2981 = vmatpush1.bf16.msra.mxu0 0
      %2982 = vmatprep.subr.bf16.mxu0 0
      %2983 = vmatpush1.bf16.msra.mxu0 0
      %2984 = vmatprep.subr.bf16.mxu0 0
      %2985 = vmatpush1.bf16.msra.mxu0 0
      %2986 = vmatprep.subr.bf16.mxu0 0
      %2987 = vmatpush1.bf16.msra.mxu0 0
      %2988 = vmatprep.mubr.bf16.mxu0 0
      %2989 = vmatmul.mubr.bf16.gmra.mrb[0].mxu0 %v2951
      %v2990 = vpop.f32.mrb[0].mxu0
      %v2991 = vadd.f32 0.0, %v2990
      %v2992 = vpop.f32.mrb[0].mxu0
      %v2993 = vpop.f32.mrb[0].mxu0
      %v2994 = vpop.f32.mrb[0].mxu0
      %2995 = vdwg.mxu0
      %2996 = vrot.lane.b32.xlu0 %v2773, 112
      %v2997 = vpop.permute.xlu0 %2996
      %2998 = vrot.lane.b32.xlu0 %v2776, 112
      %v2999 = vpop.permute.xlu0 %2998
      %v3001 = vsel %vm1124, %v2997, 0
      %v3004 = vsel %vm1124, %v2999, 0
      %3006 = vmatprep.subr.bf16.mxu0 0
      %3007 = vmatpush1.bf16.xpose.msra.mxu0 %v3004
      %3008 = vmatprep.subr.bf16.mxu0 0
      %3009 = vmatpush1.bf16.xpose.msra.mxu0 0
      %3010 = vmatprep.subr.bf16.mxu0 0
      %3011 = vmatpush1.bf16.xpose.msra.mxu0 0
      %3012 = vmatprep.subr.bf16.mxu0 0
      %3013 = vmatpush1.bf16.xpose.msra.mxu0 0
      %3014 = vmatprep.subr.bf16.mxu0 0
      %3015 = vmatpush1.bf16.xpose.msra.mxu0 0
      %3016 = vmatprep.subr.bf16.mxu0 0
      %3017 = vmatpush1.bf16.xpose.msra.mxu0 0
      %3018 = vmatprep.subr.bf16.mxu0 0
      %3019 = vmatpush1.bf16.xpose.msra.mxu0 0
      %3020 = vmatprep.subr.bf16.mxu0 0
      %3021 = vmatpush1.bf16.xpose.msra.mxu0 0
      %3022 = vmatprep.subr.bf16.mxu0 0
      %3023 = vmatpush1.bf16.xpose.msra.mxu0 0
      %3024 = vmatprep.subr.bf16.mxu0 0
      %3025 = vmatpush1.bf16.xpose.msra.mxu0 0
      %3026 = vmatprep.subr.bf16.mxu0 0
      %3027 = vmatpush1.bf16.xpose.msra.mxu0 0
      %3028 = vmatprep.subr.bf16.mxu0 0
      %3029 = vmatpush1.bf16.xpose.msra.mxu0 0
      %3030 = vmatprep.subr.bf16.mxu0 0
      %3031 = vmatpush1.bf16.xpose.msra.mxu0 0
      %3032 = vmatprep.subr.bf16.mxu0 0
      %3033 = vmatpush1.bf16.xpose.msra.mxu0 0
      %3034 = vmatprep.subr.bf16.mxu0 0
      %3035 = vmatpush1.bf16.xpose.msra.mxu0 0
      %3036 = vmatprep.subr.bf16.mxu0 0
      %3037 = vmatpush1.bf16.xpose.msra.mxu0 0
      %3038 = vmatprep.mubr.bf16.mxu0 0
      %3039 = vmatmul.mubr.bf16.gmra.mrb[0].mxu0 %v3001
      %v3040 = vpop.f32.mrb[0].mxu0
      %v3041 = vadd.f32 0.0, %v3040
      %v3042 = vpop.f32.mrb[0].mxu0
      %v3043 = vpop.f32.mrb[0].mxu0
      %v3044 = vpop.f32.mrb[0].mxu0
      %3045 = vdwg.mxu0
      %v3046 = vmul.f32 %v3041, 0.35355338
      %v3047 = vsel %vm2361, %v3046, -inf
      %3048 = vmax.xlane.f32.xlu0 %v3047
      %v3049 = vpop.xlane.xlu0 %3048
      %v3050 = vsub.f32 %v3046, %v3049
      %v3051 = vmul.f32 %v3050, 1.442695
      %v3052 = vpow.pop %v3051
      %v3053 = vsel %vm2361, %v3052, 0.0
      %3054 = vadd.xlane.f32.xlu0 %v3053
      %v3055 = vpop.xlane.xlu0 %3054
      %v3056 = vrcp.pop %v3055
      %v3057 = vmul.f32 %v3052, %v3056
      %v3058 = vpack.c.bf16 %v3057, %v3057
      %3059 = vrot.lane.b32.xlu0 %v2776, 80
      %v3060 = vpop.permute.xlu0 %3059
      %v3062 = vsel %vm2361, %v3058, 0
      %v3065 = vsel %vm2380, %v3060, 0
      %3067 = vmatprep.subr.bf16.mxu0 0
      %3068 = vmatpush1.bf16.msra.mxu0 %v3065
      %3069 = vmatprep.subr.bf16.mxu0 0
      %3070 = vmatpush1.bf16.msra.mxu0 0
      %3071 = vmatprep.subr.bf16.mxu0 0
      %3072 = vmatpush1.bf16.msra.mxu0 0
      %3073 = vmatprep.subr.bf16.mxu0 0
      %3074 = vmatpush1.bf16.msra.mxu0 0
      %3075 = vmatprep.subr.bf16.mxu0 0
      %3076 = vmatpush1.bf16.msra.mxu0 0
      %3077 = vmatprep.subr.bf16.mxu0 0
      %3078 = vmatpush1.bf16.msra.mxu0 0
      %3079 = vmatprep.subr.bf16.mxu0 0
      %3080 = vmatpush1.bf16.msra.mxu0 0
      %3081 = vmatprep.subr.bf16.mxu0 0
      %3082 = vmatpush1.bf16.msra.mxu0 0
      %3083 = vmatprep.subr.bf16.mxu0 0
      %3084 = vmatpush1.bf16.msra.mxu0 0
      %3085 = vmatprep.subr.bf16.mxu0 0
      %3086 = vmatpush1.bf16.msra.mxu0 0
      %3087 = vmatprep.subr.bf16.mxu0 0
      %3088 = vmatpush1.bf16.msra.mxu0 0
      %3089 = vmatprep.subr.bf16.mxu0 0
      %3090 = vmatpush1.bf16.msra.mxu0 0
      %3091 = vmatprep.subr.bf16.mxu0 0
      %3092 = vmatpush1.bf16.msra.mxu0 0
      %3093 = vmatprep.subr.bf16.mxu0 0
      %3094 = vmatpush1.bf16.msra.mxu0 0
      %3095 = vmatprep.subr.bf16.mxu0 0
      %3096 = vmatpush1.bf16.msra.mxu0 0
      %3097 = vmatprep.subr.bf16.mxu0 0
      %3098 = vmatpush1.bf16.msra.mxu0 0
      %3099 = vmatprep.mubr.bf16.mxu0 0
      %3100 = vmatmul.mubr.bf16.gmra.mrb[0].mxu0 %v3062
      %v3101 = vpop.f32.mrb[0].mxu0
      %v3102 = vadd.f32 0.0, %v3101
      %v3103 = vpop.f32.mrb[0].mxu0
      %v3104 = vpop.f32.mrb[0].mxu0
      %v3105 = vpop.f32.mrb[0].mxu0
      %3106 = vdwg.mxu0
      %3107 = vrot.lane.b32.xlu0 %v2773, 104
      %v3108 = vpop.permute.xlu0 %3107
      %3109 = vrot.lane.b32.xlu0 %v2776, 104
      %v3110 = vpop.permute.xlu0 %3109
      %v3112 = vsel %vm1124, %v3108, 0
      %v3115 = vsel %vm1124, %v3110, 0
      %3117 = vmatprep.subr.bf16.mxu0 0
      %3118 = vmatpush1.bf16.xpose.msra.mxu0 %v3115
      %3119 = vmatprep.subr.bf16.mxu0 0
      %3120 = vmatpush1.bf16.xpose.msra.mxu0 0
      %3121 = vmatprep.subr.bf16.mxu0 0
      %3122 = vmatpush1.bf16.xpose.msra.mxu0 0
      %3123 = vmatprep.subr.bf16.mxu0 0
      %3124 = vmatpush1.bf16.xpose.msra.mxu0 0
      %3125 = vmatprep.subr.bf16.mxu0 0
      %3126 = vmatpush1.bf16.xpose.msra.mxu0 0
      %3127 = vmatprep.subr.bf16.mxu0 0
      %3128 = vmatpush1.bf16.xpose.msra.mxu0 0
      %3129 = vmatprep.subr.bf16.mxu0 0
      %3130 = vmatpush1.bf16.xpose.msra.mxu0 0
      %3131 = vmatprep.subr.bf16.mxu0 0
      %3132 = vmatpush1.bf16.xpose.msra.mxu0 0
      %3133 = vmatprep.subr.bf16.mxu0 0
      %3134 = vmatpush1.bf16.xpose.msra.mxu0 0
      %3135 = vmatprep.subr.bf16.mxu0 0
      %3136 = vmatpush1.bf16.xpose.msra.mxu0 0
      %3137 = vmatprep.subr.bf16.mxu0 0
      %3138 = vmatpush1.bf16.xpose.msra.mxu0 0
      %3139 = vmatprep.subr.bf16.mxu0 0
      %3140 = vmatpush1.bf16.xpose.msra.mxu0 0
      %3141 = vmatprep.subr.bf16.mxu0 0
      %3142 = vmatpush1.bf16.xpose.msra.mxu0 0
      %3143 = vmatprep.subr.bf16.mxu0 0
      %3144 = vmatpush1.bf16.xpose.msra.mxu0 0
      %3145 = vmatprep.subr.bf16.mxu0 0
      %3146 = vmatpush1.bf16.xpose.msra.mxu0 0
      %3147 = vmatprep.subr.bf16.mxu0 0
      %3148 = vmatpush1.bf16.xpose.msra.mxu0 0
      %3149 = vmatprep.mubr.bf16.mxu0 0
      %3150 = vmatmul.mubr.bf16.gmra.mrb[0].mxu0 %v3112
      %v3151 = vpop.f32.mrb[0].mxu0
      %v3152 = vadd.f32 0.0, %v3151
      %v3153 = vpop.f32.mrb[0].mxu0
      %v3154 = vpop.f32.mrb[0].mxu0
      %v3155 = vpop.f32.mrb[0].mxu0
      %3156 = vdwg.mxu0
      %v3157 = vmul.f32 %v3152, 0.35355338
      %v3158 = vsel %vm2361, %v3157, -inf
      %3159 = vmax.xlane.f32.xlu0 %v3158
      %v3160 = vpop.xlane.xlu0 %3159
      %v3161 = vsub.f32 %v3157, %v3160
      %v3162 = vmul.f32 %v3161, 1.442695
      %v3163 = vpow.pop %v3162
      %v3164 = vsel %vm2361, %v3163, 0.0
      %3165 = vadd.xlane.f32.xlu0 %v3164
      %v3166 = vpop.xlane.xlu0 %3165
      %v3167 = vrcp.pop %v3166
      %v3168 = vmul.f32 %v3163, %v3167
      %v3169 = vpack.c.bf16 %v3168, %v3168
      %3170 = vrot.lane.b32.xlu0 %v2776, 72
      %v3171 = vpop.permute.xlu0 %3170
      %v3173 = vsel %vm2361, %v3169, 0
      %v3176 = vsel %vm2380, %v3171, 0
      %3178 = vmatprep.subr.bf16.mxu0 0
      %3179 = vmatpush1.bf16.msra.mxu0 %v3176
      %3180 = vmatprep.subr.bf16.mxu0 0
      %3181 = vmatpush1.bf16.msra.mxu0 0
      %3182 = vmatprep.subr.bf16.mxu0 0
      %3183 = vmatpush1.bf16.msra.mxu0 0
      %3184 = vmatprep.subr.bf16.mxu0 0
      %3185 = vmatpush1.bf16.msra.mxu0 0
      %3186 = vmatprep.subr.bf16.mxu0 0
      %3187 = vmatpush1.bf16.msra.mxu0 0
      %3188 = vmatprep.subr.bf16.mxu0 0
      %3189 = vmatpush1.bf16.msra.mxu0 0
      %3190 = vmatprep.subr.bf16.mxu0 0
      %3191 = vmatpush1.bf16.msra.mxu0 0
      %3192 = vmatprep.subr.bf16.mxu0 0
      %3193 = vmatpush1.bf16.msra.mxu0 0
      %3194 = vmatprep.subr.bf16.mxu0 0
      %3195 = vmatpush1.bf16.msra.mxu0 0
      %3196 = vmatprep.subr.bf16.mxu0 0
      %3197 = vmatpush1.bf16.msra.mxu0 0
      %3198 = vmatprep.subr.bf16.mxu0 0
      %3199 = vmatpush1.bf16.msra.mxu0 0
      %3200 = vmatprep.subr.bf16.mxu0 0
      %3201 = vmatpush1.bf16.msra.mxu0 0
      %3202 = vmatprep.subr.bf16.mxu0 0
      %3203 = vmatpush1.bf16.msra.mxu0 0
      %3204 = vmatprep.subr.bf16.mxu0 0
      %3205 = vmatpush1.bf16.msra.mxu0 0
      %3206 = vmatprep.subr.bf16.mxu0 0
      %3207 = vmatpush1.bf16.msra.mxu0 0
      %3208 = vmatprep.subr.bf16.mxu0 0
      %3209 = vmatpush1.bf16.msra.mxu0 0
      %3210 = vmatprep.mubr.bf16.mxu0 0
      %3211 = vmatmul.mubr.bf16.gmra.mrb[0].mxu0 %v3173
      %v3212 = vpop.f32.mrb[0].mxu0
      %v3213 = vadd.f32 0.0, %v3212
      %v3214 = vpop.f32.mrb[0].mxu0
      %v3215 = vpop.f32.mrb[0].mxu0
      %v3216 = vpop.f32.mrb[0].mxu0
      %3217 = vdwg.mxu0
      %3219 = vrot.lane.b32.xlu0 %v2991, 8
      %v3220 = vpop.permute.xlu0 %3219
      %3223 = vrot.lane.b32.xlu0 %v3102, 16
      %v3224 = vpop.permute.xlu0 %3223
      %3227 = vrot.lane.b32.xlu0 %v3213, 24
      %v3228 = vpop.permute.xlu0 %3227
      %v3230 = vsel %vm1124, %v2879, %v3220
      %v3231 = vsel %vm1583, %v3230, %v3224
      %v3232 = vsel %vm1585, %v3231, %v3228
      %v3233 = vpack.c.bf16 %v3232, %v2772
      %v3235 = vlaneseq
      %v3236 = vshrl.u32 %v3235, 7
      %v3237 = vsub.s32 0, %v3236
      %v3238 = vrot.slane %v2311, %v3237
      %v3244 = vunpack.c.l.b16 %v2307
      %v3245 = vunpack.c.l.b16 %v2308
      %v3246 = vunpack.c.l.b16 %v2309
      %v3247 = vunpack.c.l.b16 %v2310
      %v3248 = vpack.c.b16 %v3245, %v3244
      %v3249 = vpack.c.b16 %v3247, %v3246
      %v3253 = vsel %vm1064, %v3233, 0
      %3255 = vmatprep.subr.bf16.mxu0 0
      %3256 = vmatpush1.bf16.msra.mxu0 %v3248
      %3257 = vmatprep.subr.bf16.mxu0 0
      %3258 = vmatpush1.bf16.msra.mxu0 %v3249
      %3259 = vmatprep.subr.bf16.mxu0 0
      %3260 = vmatpush1.bf16.msra.mxu0 0
      %3261 = vmatprep.subr.bf16.mxu0 0
      %3262 = vmatpush1.bf16.msra.mxu0 0
      %3263 = vmatprep.subr.bf16.mxu0 0
      %3264 = vmatpush1.bf16.msra.mxu0 0
      %3265 = vmatprep.subr.bf16.mxu0 0
      %3266 = vmatpush1.bf16.msra.mxu0 0
      %3267 = vmatprep.subr.bf16.mxu0 0
      %3268 = vmatpush1.bf16.msra.mxu0 0
      %3269 = vmatprep.subr.bf16.mxu0 0
      %3270 = vmatpush1.bf16.msra.mxu0 0
      %3271 = vmatprep.subr.bf16.mxu0 0
      %3272 = vmatpush1.bf16.msra.mxu0 0
      %3273 = vmatprep.subr.bf16.mxu0 0
      %3274 = vmatpush1.bf16.msra.mxu0 0
      %3275 = vmatprep.subr.bf16.mxu0 0
      %3276 = vmatpush1.bf16.msra.mxu0 0
      %3277 = vmatprep.subr.bf16.mxu0 0
      %3278 = vmatpush1.bf16.msra.mxu0 0
      %3279 = vmatprep.subr.bf16.mxu0 0
      %3280 = vmatpush1.bf16.msra.mxu0 0
      %3281 = vmatprep.subr.bf16.mxu0 0
      %3282 = vmatpush1.bf16.msra.mxu0 0
      %3283 = vmatprep.subr.bf16.mxu0 0
      %3284 = vmatpush1.bf16.msra.mxu0 0
      %3285 = vmatprep.subr.bf16.mxu0 0
      %3286 = vmatpush1.bf16.msra.mxu0 0
      %3287 = vmatprep.mubr.bf16.mxu0 0
      %3288 = vmatmul.mubr.bf16.gmra.mrb[0].mxu0 %v3253
      %v3289 = vpop.f32.mrb[0].mxu0
      %v3290 = vadd.f32 %v3238, %v3289
      %v3291 = vpop.f32.mrb[0].mxu0
      %v3292 = vpop.f32.mrb[0].mxu0
      %v3293 = vadd.f32 %v3238, %v3292
      %v3294 = vpop.f32.mrb[0].mxu0
      %3295 = vdwg.mxu0
      %v3296 = vadd.f32 %v2158, %v3290
      %v3297 = vadd.f32 %v2159, %v3293
      %v3298 = vld [vmem:[%s1015] sm:$0x1]
      %v3299 = vld [vmem:[%s1018] sm:$0x1]
      %v3300 = vsel %vm1064, %v3296, 0.0
      %3301 = vadd.xlane.f32.xlu0 %v3300
      %v3302 = vpop.xlane.xlu0 %3301
      %v3303 = vsel %vm1064, %v3297, 0.0
      %3304 = vadd.xlane.f32.xlu0 %v3303
      %v3305 = vpop.xlane.xlu0 %3304
      %v3306 = vmul.f32 %v3302, %v2123
      %v3307 = vmul.f32 %v3305, %v2123
      %v3308 = vsub.f32 %v3296, %v3306
      %v3309 = vsub.f32 %v3297, %v3307
      %v3310 = vmul.f32 %v3308, %v3308
      %v3311 = vmul.f32 %v3309, %v3309
      %v3312 = vsel %vm1064, %v3310, 0.0
      %3313 = vadd.xlane.f32.xlu0 %v3312
      %v3314 = vpop.xlane.xlu0 %3313
      %v3315 = vsel %vm1064, %v3311, 0.0
      %3316 = vadd.xlane.f32.xlu0 %v3315
      %v3317 = vpop.xlane.xlu0 %3316
      %v3318 = vmul.f32 %v3314, %v2123
      %v3319 = vmul.f32 %v3317, %v2123
      %v3320 = vadd.f32 %v3318, 1e-05
      %v3321 = vadd.f32 %v3319, 1e-05
      %v3322 = vrsqrt.pop %v3320
      %v3323 = vrsqrt.pop %v3321
      %v3324 = vmul.f32 %v3308, %v3322
      %v3325 = vmul.f32 %v3309, %v3323
      %v3327 = vlaneseq
      %v3328 = vshrl.u32 %v3327, 7
      %v3329 = vsub.s32 0, %v3328
      %v3330 = vrot.slane %v3298, %v3329
      %v3332 = vmul.f32 %v3324, %v3330
      %v3333 = vmul.f32 %v3325, %v3330
      %v3335 = vlaneseq
      %v3336 = vshrl.u32 %v3335, 7
      %v3337 = vsub.s32 0, %v3336
      %v3338 = vrot.slane %v3299, %v3337
      %v3340 = vadd.f32 %v3332, %v3338
      %v3341 = vadd.f32 %v3333, %v3338
      %v3342 = vpack.c.bf16 %v3341, %v3340
      %v3343 = vld [vmem:[%s995] sm:$0xf]
      %v3344 = vld [vmem:[%s995 + $0x4] sm:$0xf]
      %v3345 = vld [vmem:[%s995 + $0x8] sm:$0xf]
      %v3346 = vld [vmem:[%s995 + $0xc] sm:$0xf]
      %v3347 = vld [vmem:[%s998] sm:$0x1]
      %v3349 = vlaneseq
      %v3350 = vshrl.u32 %v3349, 7
      %v3351 = vsub.s32 0, %v3350
      %v3352 = vrot.slane %v3347, %v3351
      %v3358 = vunpack.c.l.b16 %v3343
      %v3359 = vunpack.c.l.b16 %v3344
      %v3360 = vunpack.c.l.b16 %v3345
      %v3361 = vunpack.c.l.b16 %v3346
      %v3362 = vpack.c.b16 %v3359, %v3358
      %v3363 = vpack.c.b16 %v3361, %v3360
      %v3367 = vsel %vm1064, %v3342, 0
      %3369 = vmatprep.subr.bf16.mxu0 0
      %3370 = vmatpush1.bf16.msra.mxu0 %v3362
      %3371 = vmatprep.subr.bf16.mxu0 0
      %3372 = vmatpush1.bf16.msra.mxu0 %v3363
      %3373 = vmatprep.subr.bf16.mxu0 0
      %3374 = vmatpush1.bf16.msra.mxu0 0
      %3375 = vmatprep.subr.bf16.mxu0 0
      %3376 = vmatpush1.bf16.msra.mxu0 0
      %3377 = vmatprep.subr.bf16.mxu0 0
      %3378 = vmatpush1.bf16.msra.mxu0 0
      %3379 = vmatprep.subr.bf16.mxu0 0
      %3380 = vmatpush1.bf16.msra.mxu0 0
      %3381 = vmatprep.subr.bf16.mxu0 0
      %3382 = vmatpush1.bf16.msra.mxu0 0
      %3383 = vmatprep.subr.bf16.mxu0 0
      %3384 = vmatpush1.bf16.msra.mxu0 0
      %3385 = vmatprep.subr.bf16.mxu0 0
      %3386 = vmatpush1.bf16.msra.mxu0 0
      %3387 = vmatprep.subr.bf16.mxu0 0
      %3388 = vmatpush1.bf16.msra.mxu0 0
      %3389 = vmatprep.subr.bf16.mxu0 0
      %3390 = vmatpush1.bf16.msra.mxu0 0
      %3391 = vmatprep.subr.bf16.mxu0 0
      %3392 = vmatpush1.bf16.msra.mxu0 0
      %3393 = vmatprep.subr.bf16.mxu0 0
      %3394 = vmatpush1.bf16.msra.mxu0 0
      %3395 = vmatprep.subr.bf16.mxu0 0
      %3396 = vmatpush1.bf16.msra.mxu0 0
      %3397 = vmatprep.subr.bf16.mxu0 0
      %3398 = vmatpush1.bf16.msra.mxu0 0
      %3399 = vmatprep.subr.bf16.mxu0 0
      %3400 = vmatpush1.bf16.msra.mxu0 0
      %3401 = vmatprep.mubr.bf16.mxu0 0
      %3402 = vmatmul.mubr.bf16.gmra.mrb[0].mxu0 %v3367
      %v3403 = vpop.f32.mrb[0].mxu0
      %v3404 = vadd.f32 %v3352, %v3403
      %v3405 = vpop.f32.mrb[0].mxu0
      %v3406 = vpop.f32.mrb[0].mxu0
      %v3407 = vadd.f32 %v3352, %v3406
      %v3408 = vpop.f32.mrb[0].mxu0
      %3409 = vdwg.mxu0
      %v3410 = vmax.f32 %v3404, 0.0
      %v3411 = vmax.f32 %v3407, 0.0
      %v3412 = vpack.c.bf16 %v3411, %v3410
      %v3413 = vld [vmem:[%s1003] sm:$0xf]
      %v3414 = vld [vmem:[%s1003 + $0x4] sm:$0xf]
      %v3415 = vld [vmem:[%s1003 + $0x8] sm:$0xf]
      %v3416 = vld [vmem:[%s1003 + $0xc] sm:$0xf]
      %v3417 = vld [vmem:[%s1003 + $0x10] sm:$0xf]
      %v3418 = vld [vmem:[%s1003 + $0x14] sm:$0xf]
      %v3419 = vld [vmem:[%s1003 + $0x18] sm:$0xf]
      %v3420 = vld [vmem:[%s1003 + $0x1c] sm:$0xf]
      %v3421 = vld [vmem:[%s1006] sm:$0x1]
      %v3423 = vlaneseq
      %v3424 = vshrl.u32 %v3423, 7
      %v3425 = vsub.s32 0, %v3424
      %v3426 = vrot.slane %v3421, %v3425
      %v3436 = vunpack.c.l.b16 %v3413
      %v3437 = vunpack.c.l.b16 %v3414
      %v3438 = vunpack.c.l.b16 %v3415
      %v3439 = vunpack.c.l.b16 %v3416
      %v3440 = vunpack.c.l.b16 %v3417
      %v3441 = vunpack.c.l.b16 %v3418
      %v3442 = vunpack.c.l.b16 %v3419
      %v3443 = vunpack.c.l.b16 %v3420
      %v3444 = vpack.c.b16 %v3437, %v3436
      %v3445 = vpack.c.b16 %v3439, %v3438
      %v3446 = vpack.c.b16 %v3441, %v3440
      %v3447 = vpack.c.b16 %v3443, %v3442
      %vm3452 = vcmask 523264
      %v3454 = vsel %vm3452, %v3412, 0
      %3456 = vmatprep.subr.bf16.mxu0 0
      %3457 = vmatpush1.bf16.msra.mxu0 %v3444
      %3458 = vmatprep.subr.bf16.mxu0 0
      %3459 = vmatpush1.bf16.msra.mxu0 %v3445
      %3460 = vmatprep.subr.bf16.mxu0 0
      %3461 = vmatpush1.bf16.msra.mxu0 %v3446
      %3462 = vmatprep.subr.bf16.mxu0 0
      %3463 = vmatpush1.bf16.msra.mxu0 %v3447
      %3464 = vmatprep.subr.bf16.mxu0 0
      %3465 = vmatpush1.bf16.msra.mxu0 0
      %3466 = vmatprep.subr.bf16.mxu0 0
      %3467 = vmatpush1.bf16.msra.mxu0 0
      %3468 = vmatprep.subr.bf16.mxu0 0
      %3469 = vmatpush1.bf16.msra.mxu0 0
      %3470 = vmatprep.subr.bf16.mxu0 0
      %3471 = vmatpush1.bf16.msra.mxu0 0
      %3472 = vmatprep.subr.bf16.mxu0 0
      %3473 = vmatpush1.bf16.msra.mxu0 0
      %3474 = vmatprep.subr.bf16.mxu0 0
      %3475 = vmatpush1.bf16.msra.mxu0 0
      %3476 = vmatprep.subr.bf16.mxu0 0
      %3477 = vmatpush1.bf16.msra.mxu0 0
      %3478 = vmatprep.subr.bf16.mxu0 0
      %3479 = vmatpush1.bf16.msra.mxu0 0
      %3480 = vmatprep.subr.bf16.mxu0 0
      %3481 = vmatpush1.bf16.msra.mxu0 0
      %3482 = vmatprep.subr.bf16.mxu0 0
      %3483 = vmatpush1.bf16.msra.mxu0 0
      %3484 = vmatprep.subr.bf16.mxu0 0
      %3485 = vmatpush1.bf16.msra.mxu0 0
      %3486 = vmatprep.subr.bf16.mxu0 0
      %3487 = vmatpush1.bf16.msra.mxu0 0
      %3488 = vmatprep.mubr.bf16.mxu0 0
      %3489 = vmatmul.mubr.bf16.gmra.mrb[0].mxu0 %v3454
      %v3490 = vpop.f32.mrb[0].mxu0
      %v3491 = vadd.f32 %v3426, %v3490
      %v3492 = vpop.f32.mrb[0].mxu0
      %v3493 = vpop.f32.mrb[0].mxu0
      %v3494 = vadd.f32 %v3426, %v3493
      %v3495 = vpop.f32.mrb[0].mxu0
      %3496 = vdwg.mxu0
      %v3497 = vadd.f32 %v3340, %v3491
      %v3498 = vadd.f32 %v3341, %v3494
      %v3499 = vld [vmem:[%s1021] sm:$0x1]
      %v3500 = vld [vmem:[%s1024] sm:$0x1]
      %v3501 = vsel %vm1064, %v3497, 0.0
      %3502 = vadd.xlane.f32.xlu0 %v3501
      %v3503 = vpop.xlane.xlu0 %3502
      %v3504 = vsel %vm1064, %v3498, 0.0
      %3505 = vadd.xlane.f32.xlu0 %v3504
      %v3506 = vpop.xlane.xlu0 %3505
      %v3507 = vmul.f32 %v3503, %v2123
      %v3508 = vmul.f32 %v3506, %v2123
      %v3509 = vsub.f32 %v3497, %v3507
      %v3510 = vsub.f32 %v3498, %v3508
      %v3511 = vmul.f32 %v3509, %v3509
      %v3512 = vmul.f32 %v3510, %v3510
      %v3513 = vsel %vm1064, %v3511, 0.0
      %3514 = vadd.xlane.f32.xlu0 %v3513
      %v3515 = vpop.xlane.xlu0 %3514
      %v3516 = vsel %vm1064, %v3512, 0.0
      %3517 = vadd.xlane.f32.xlu0 %v3516
      %v3518 = vpop.xlane.xlu0 %3517
      %v3519 = vmul.f32 %v3515, %v2123
      %v3520 = vmul.f32 %v3518, %v2123
      %v3521 = vadd.f32 %v3519, 1e-05
      %v3522 = vadd.f32 %v3520, 1e-05
      %v3523 = vrsqrt.pop %v3521
      %v3524 = vrsqrt.pop %v3522
      %v3525 = vmul.f32 %v3509, %v3523
      %v3526 = vmul.f32 %v3510, %v3524
      %v3528 = vlaneseq
      %v3529 = vshrl.u32 %v3528, 7
      %v3530 = vsub.s32 0, %v3529
      %v3531 = vrot.slane %v3499, %v3530
      %v3533 = vmul.f32 %v3525, %v3531
      %v3534 = vmul.f32 %v3526, %v3531
      %v3536 = vlaneseq
      %v3537 = vshrl.u32 %v3536, 7
      %v3538 = vsub.s32 0, %v3537
      %v3539 = vrot.slane %v3500, %v3538
      %v3541 = vadd.f32 %v3533, %v3539
      %v3542 = vadd.f32 %v3534, %v3539
      %3543 = vst.msk [vmem:[#allocation2] sm:$0xff] %vm1064, %v3541
      %3544 = vst.msk [vmem:[#allocation2 + $0x8] sm:$0xff] %vm1064, %v3542
      %p3545 = scmp.eq.s32.totalorder %s35, 1
      // Predicated region
      $region121: #{my_transformer_forward.3} parent=115 // pred_check
        %p3546 = pneg %p3545
      $region122: #{my_transformer_forward.3} parent=115 // pred_check_branch
        %3548 = sbr.rel (%p3546) target = $region124
      $region123: #{my_transformer_forward.3} parent=115 // pred_region
        %v3549 = vld [vmem:[%s22] sm:$0x1]
        %v3550 = vld [vmem:[%s23] sm:$0x1]
        %v3551 = vsel %vm1064, %v3541, 0.0
        %3552 = vadd.xlane.f32.xlu0 %v3551
        %v3553 = vpop.xlane.xlu0 %3552
        %v3554 = vsel %vm1064, %v3542, 0.0
        %3555 = vadd.xlane.f32.xlu0 %v3554
        %v3556 = vpop.xlane.xlu0 %3555
        %v3557 = vmul.f32 %v3553, %v2123
        %v3558 = vmul.f32 %v3556, %v2123
        %v3559 = vsub.f32 %v3541, %v3557
        %v3560 = vsub.f32 %v3542, %v3558
        %v3561 = vmul.f32 %v3559, %v3559
        %v3562 = vmul.f32 %v3560, %v3560
        %v3563 = vsel %vm1064, %v3561, 0.0
        %3564 = vadd.xlane.f32.xlu0 %v3563
        %v3565 = vpop.xlane.xlu0 %3564
        %v3566 = vsel %vm1064, %v3562, 0.0
        %3567 = vadd.xlane.f32.xlu0 %v3566
        %v3568 = vpop.xlane.xlu0 %3567
        %v3569 = vmul.f32 %v3565, %v2123
        %v3570 = vmul.f32 %v3568, %v2123
        %v3571 = vadd.f32 %v3569, 1e-05
        %v3572 = vadd.f32 %v3570, 1e-05
        %v3573 = vrsqrt.pop %v3571
        %v3574 = vrsqrt.pop %v3572
        %v3575 = vmul.f32 %v3559, %v3573
        %v3576 = vmul.f32 %v3560, %v3574
        %v3578 = vlaneseq
        %v3579 = vshrl.u32 %v3578, 7
        %v3580 = vsub.s32 0, %v3579
        %v3581 = vrot.slane %v3549, %v3580
        %v3583 = vmul.f32 %v3575, %v3581
        %v3584 = vmul.f32 %v3576, %v3581
        %v3586 = vlaneseq
        %v3587 = vshrl.u32 %v3586, 7
        %v3588 = vsub.s32 0, %v3587
        %v3589 = vrot.slane %v3550, %v3588
        %v3591 = vadd.f32 %v3583, %v3589
        %v3592 = vadd.f32 %v3584, %v3589
        %3593 = vst.msk [vmem:[%s24] sm:$0xff] %vm1064, %v3591
        %3594 = vst.msk [vmem:[%s24 + $0x8] sm:$0xff] %vm1064, %v3592
      $region124: #{my_transformer_forward.3} parent=115 // pred_fallthru
        _
      // Predicated region
      $region125: #{my_transformer_forward.3} parent=115 // pred_check
        %p3595 = pneg %p652
      $region126: #{my_transformer_forward.3} parent=115 // pred_check_branch
        %3597 = sbr.rel (%p3595) target = $region128
      $region127: #{my_transformer_forward.3} parent=115 // pred_region
        _
      $region128: #{my_transformer_forward.3} parent=115 // pred_fallthru
        _
      // Predicated region
      $region129: #{my_transformer_forward.3} parent=115 // pred_check
        %p3598 = pneg %p652
      $region130: #{my_transformer_forward.3} parent=115 // pred_check_branch
        %3600 = sbr.rel (%p3598) target = $region132
      $region131: #{my_transformer_forward.3} parent=115 // pred_region
        _
      $region132: #{my_transformer_forward.3} parent=115 // pred_fallthru
        _
    $region116: #{my_transformer_forward.3} parent=5 // pred_fallthru
      _
    %p3601 = scmp.le.s32.totalorder 2, %s30
    // Predicated region
    $region133: #{my_transformer_forward.3} parent=5 // pred_check
      %p3602 = pneg %p3601
    $region134: #{my_transformer_forward.3} parent=5 // pred_check_branch
      %3604 = sbr.rel (%p3602) target = $region136
    $region135: #{my_transformer_forward.3} parent=5 // pred_region
      %s3605 = ssub.s32 %s30, 2
    $region136: #{my_transformer_forward.3} parent=5 // pred_fallthru
      _
  $region6: #{my_transformer_forward.3} parent=0 // loop_footer
    %s34 = sadd.s32 1, %s30
  $region7: #{my_transformer_forward.3} parent=0 // loop_footer_branch
    %29 = sbr.rel target = $region3
  $region8: #{my_transformer_forward.3} parent=0 // loop_exit
    _

</llo_original>
